<compile_context>
chip_gen: v7x
topology: tpu7x:2x2x1
jax: 0.10.0
libtpu: 0.0.40
codegen_flags: <defaults>
</compile_context>

<pallas_src>
import functools

import jax
import jax.numpy as jnp
from jax.experimental import pallas as pl
from jax.experimental.pallas import tpu as pltpu

EPS = 1e-5          # nn.BatchNorm2d default eps
LANE = 128          # TPU lane width
BF16_SUB = 16       # bf16 sublane tile height (packed) -> aligned reshapes


# ------------------------------ small helpers ------------------------------ #

def _round_up(n, m):
    return ((n + m - 1) // m) * m


def _pad_axis(a, axis, target):
    pad = target - a.shape[axis]
    if pad == 0:
        return a
    widths = [(0, 0)] * a.ndim
    widths[axis] = (0, pad)
    return jnp.pad(a, widths)


def _row(v, cout_p):
    return _pad_axis(v.reshape(1, -1).astype(jnp.float32), 1, cout_p)


def _conv_w(w, cin_p, cout_p):
    """PyTorch conv weight (Cout, Cin, kh, kw) -> (kh, kw, Cin_p, Cout_p) bf16."""
    wt = jnp.transpose(w, (2, 3, 1, 0)).astype(jnp.float32)
    wt = _pad_axis(_pad_axis(wt, 2, cin_p), 3, cout_p)
    return wt.astype(jnp.bfloat16)


def _vmem_limit_bytes():
    cap = 0
    try:
        cap = int(pltpu.get_tpu_info().vmem_capacity_bytes)
    except Exception:
        cap = 0
    if cap >= 128 * 1024 * 1024:
        return 96 * 1024 * 1024          # v5e / v6e: 128 MiB physical
    if cap >= 64 * 1024 * 1024:
        return 48 * 1024 * 1024          # v7x: 64 MiB physical, keep headroom
    return 32 * 1024 * 1024              # unknown -> safe default


def _compiler_params():
    return pltpu.CompilerParams(
        dimension_semantics=("parallel",),           # batch axis (megacore on v7x)
        vmem_limit_bytes=_vmem_limit_bytes())


# ----------------------------- Pallas kernels ------------------------------ #

def _conv3x3_stats_kernel(xpad_ref, w_ref, y_ref, sum_ref, ssq_ref, *,
                          out_h, out_w):
    """3x3 conv (padding=1) of one image + per-image sum / sum-of-squares.

    xpad_ref: (1, Hp, Wp, Cin) bf16; valid data in the top-left (out_h, out_w)
              corner, >=2 zero margin rows/cols at the bottom/right.
    w_ref   : (3, 3, Cin, Cout) bf16
    y_ref   : (1, out_h, out_w, Cout) bf16 out (no conv bias: cancels in BN)
    sum_ref : (1, 1, Cout) f32 out
    ssq_ref : (1, 1, Cout) f32 out
    """
    Hp = xpad_ref.shape[1]
    Wp = xpad_ref.shape[2]
    Cin = xpad_ref.shape[3]
    Cout = w_ref.shape[3]
    total = Hp * Wp

    # one lane-aligned bf16 matrix shared by all 9 taps (no per-tap slice/cast)
    x = xpad_ref[0].reshape(total, Cin)

    acc = jnp.zeros((total, Cout), jnp.float32)
    for dy in range(3):
        for dx in range(3):
            z = jnp.dot(x, w_ref[dy, dx], preferred_element_type=jnp.float32)
            s = (dy - 1) * Wp + (dx - 1)                  # tap offset in rows
            if s != 0:
                # rolled[r] = z[(r + s) mod total]; wrapped rows land in the
                # zero margin -> identical to zero padding.
                z = pltpu.roll(z, shift=(-s) % total, axis=0)
            acc = acc + z

    y = acc.reshape(Hp, Wp, Cout)[:out_h, :out_w, :]      # valid region, f32
    y_ref[0] = y.astype(y_ref.dtype)
    sum_ref[...] = jnp.sum(y, axis=(0, 1)).reshape(1, 1, Cout)
    ssq_ref[...] = jnp.sum(y * y, axis=(0, 1)).reshape(1, 1, Cout)


def _bn1_relu_temb_kernel(y_ref, scale_ref, shift_ref, tb_ref, h_ref):
    """h1 = relu(bn1(conv1)) + time_emb, written into the zero-margined padded
    bf16 buffer that conv2 consumes directly (no XLA pad round-trip)."""
    H, W = y_ref.shape[1], y_ref.shape[2]
    Hp, Wp, Cp = h_ref.shape[1], h_ref.shape[2], h_ref.shape[3]
    y = y_ref[0].astype(jnp.float32)                              # (H, W, Cp)
    h = jnp.maximum(y * scale_ref[...] + shift_ref[...], 0.0) + tb_ref[0]
    h_ref[0, 0:H, 0:W, :] = h.astype(h_ref.dtype)
    h_ref[0, H:Hp, :, :] = jnp.zeros((Hp - H, Wp, Cp), h_ref.dtype)
    h_ref[0, 0:H, W:Wp, :] = jnp.zeros((H, Wp - W, Cp), h_ref.dtype)


def _bn2_proj_relu_kernel(y_ref, scale_ref, shift_ref, xres_ref, wr_ref, br_ref,
                          out_ref):
    """out = relu(bn2(conv2) + res_conv(x))  (1x1 projection residual)."""
    H, W, Cp = y_ref.shape[1], y_ref.shape[2], y_ref.shape[3]
    Cin = xres_ref.shape[3]
    res = jnp.dot(xres_ref[0].reshape(H * W, Cin), wr_ref[...],
                  preferred_element_type=jnp.float32) + br_ref[...]
    res = res.reshape(H, W, Cp)
    y = y_ref[0].astype(jnp.float32)
    out_ref[0] = jnp.maximum(y * scale_ref[...] + shift_ref[...] + res, 0.0)


def _bn2_add_relu_kernel(y_ref, scale_ref, shift_ref, xres_ref, out_ref):
    """out = relu(bn2(conv2) + x)  (identity residual: direct add)."""
    y = y_ref[0].astype(jnp.float32)
    res = xres_ref[0].astype(jnp.float32)
    out_ref[0] = jnp.maximum(y * scale_ref[...] + shift_ref[...] + res, 0.0)


# ------------------------------ pallas_call glue ---------------------------- #

def _conv3x3_stats(xpad, w, out_h, out_w):
    B, Hp, Wp, Cin = xpad.shape
    Cout = w.shape[3]
    kernel = functools.partial(_conv3x3_stats_kernel, out_h=out_h, out_w=out_w)
    return pl.pallas_call(
        kernel,
        grid=(B,),
        in_specs=[
            pl.BlockSpec((1, Hp, Wp, Cin), lambda i: (i, 0, 0, 0)),
            pl.BlockSpec((3, 3, Cin, Cout), lambda i: (0, 0, 0, 0)),
        ],
        out_specs=(
            pl.BlockSpec((1, out_h, out_w, Cout), lambda i: (i, 0, 0, 0)),
            pl.BlockSpec((1, 1, Cout), lambda i: (i, 0, 0)),
            pl.BlockSpec((1, 1, Cout), lambda i: (i, 0, 0)),
        ),
        out_shape=(
            jax.ShapeDtypeStruct((B, out_h, out_w, Cout), jnp.bfloat16),
            jax.ShapeDtypeStruct((B, 1, Cout), jnp.float32),
            jax.ShapeDtypeStruct((B, 1, Cout), jnp.float32),
        ),
        compiler_params=_compiler_params(),
    )(xpad, w)


def _bn1_relu_temb(y, scale, shift, tb, hp, wp):
    B, H, W, Cp = y.shape
    return pl.pallas_call(
        _bn1_relu_temb_kernel,
        grid=(B,),
        in_specs=[
            pl.BlockSpec((1, H, W, Cp), lambda i: (i, 0, 0, 0)),
            pl.BlockSpec((1, Cp), lambda i: (0, 0)),
            pl.BlockSpec((1, Cp), lambda i: (0, 0)),
            pl.BlockSpec((1, 1, Cp), lambda i: (i, 0, 0)),
        ],
        out_specs=pl.BlockSpec((1, hp, wp, Cp), lambda i: (i, 0, 0, 0)),
        out_shape=jax.ShapeDtypeStruct((B, hp, wp, Cp), jnp.bfloat16),
        compiler_params=_compiler_params(),
    )(y, scale, shift, tb)


def _bn2_proj_relu(y, scale, shift, xres, wr, br):
    B, H, W, Cp = y.shape
    Cin = xres.shape[3]
    return pl.pallas_call(
        _bn2_proj_relu_kernel,
        grid=(B,),
        in_specs=[
            pl.BlockSpec((1, H, W, Cp), lambda i: (i, 0, 0, 0)),
            pl.BlockSpec((1, Cp), lambda i: (0, 0)),
            pl.BlockSpec((1, Cp), lambda i: (0, 0)),
            pl.BlockSpec((1, H, W, Cin), lambda i: (i, 0, 0, 0)),
            pl.BlockSpec((Cin, Cp), lambda i: (0, 0)),
            pl.BlockSpec((1, Cp), lambda i: (0, 0)),
        ],
        out_specs=pl.BlockSpec((1, H, W, Cp), lambda i: (i, 0, 0, 0)),
        out_shape=jax.ShapeDtypeStruct((B, H, W, Cp), jnp.float32),
        compiler_params=_compiler_params(),
    )(y, scale, shift, xres, wr, br)


def _bn2_add_relu(y, scale, shift, xres):
    B, H, W, Cp = y.shape
    return pl.pallas_call(
        _bn2_add_relu_kernel,
        grid=(B,),
        in_specs=[
            pl.BlockSpec((1, H, W, Cp), lambda i: (i, 0, 0, 0)),
            pl.BlockSpec((1, Cp), lambda i: (0, 0)),
            pl.BlockSpec((1, Cp), lambda i: (0, 0)),
            pl.BlockSpec((1, H, W, Cp), lambda i: (i, 0, 0, 0)),
        ],
        out_specs=pl.BlockSpec((1, H, W, Cp), lambda i: (i, 0, 0, 0)),
        out_shape=jax.ShapeDtypeStruct((B, H, W, Cp), jnp.float32),
        compiler_params=_compiler_params(),
    )(y, scale, shift, xres)


# --------------------------- param / BN helpers ------------------------------ #

def _bn_fold(s, q, gamma, beta, count):
    """Fold training-mode BN (batch stats, biased var) + affine into scale/shift.
    s, q: (B, 1, Cp) per-image sum / sum-of-squares; gamma/beta: (1, Cp)."""
    mean = jnp.sum(s, axis=0) / count                 # (1, Cp)
    ex2 = jnp.sum(q, axis=0) / count
    var = jnp.maximum(ex2 - mean * mean, 0.0)
    inv = jax.lax.rsqrt(var + EPS)
    scale = inv * gamma
    shift = beta - mean * scale
    return scale, shift


def init_params(key, in_channels, out_channels, time_emb_dim):
    ks = jax.random.split(key, 8)
    p = {}
    p["w1"] = 0.1 * jax.random.normal(ks[0], (out_channels, in_channels, 3, 3), jnp.float32)
    p["b1"] = 0.1 * jax.random.normal(ks[1], (out_channels,), jnp.float32)
    p["w2"] = 0.1 * jax.random.normal(ks[2], (out_channels, out_channels, 3, 3), jnp.float32)
    p["b2"] = 0.1 * jax.random.normal(ks[3], (out_channels,), jnp.float32)
    p["bn1_g"] = jnp.ones((out_channels,), jnp.float32)   # PyTorch BN default init
    p["bn1_b"] = jnp.zeros((out_channels,), jnp.float32)
    p["bn2_g"] = jnp.ones((out_channels,), jnp.float32)
    p["bn2_b"] = jnp.zeros((out_channels,), jnp.float32)
    p["wt"] = 0.1 * jax.random.normal(ks[4], (out_channels, time_emb_dim), jnp.float32)
    p["bt"] = 0.1 * jax.random.normal(ks[5], (out_channels,), jnp.float32)
    if in_channels != out_channels:
        p["wr"] = 0.1 * jax.random.normal(ks[6], (out_channels, in_channels, 1, 1), jnp.float32)
        p["br"] = 0.1 * jax.random.normal(ks[7], (out_channels,), jnp.float32)
    else:
        p["wr"] = None
    return p


# --------------------------------- forward ---------------------------------- #

@jax.jit
def residual_block_forward(x_nchw, t_emb, params):
    """Matches ResidualBlock.forward(x, t_emb); x: (B, Cin, H, W), t_emb: (B, T)."""
    x = jnp.transpose(x_nchw, (0, 2, 3, 1)).astype(jnp.float32)        # NHWC
    B, H, W, Cin = x.shape
    Cout = params["w1"].shape[0]
    Cinp = _round_up(Cin, LANE)
    Coutp = _round_up(Cout, LANE)
    Hp = H + 2                                   # >= 2 zero rows below data
    Wp = _round_up(W + 2, BF16_SUB)              # >= 2 zero cols; aligned reshape

    # weights / per-channel params, channel-padded to lane multiples
    w1 = _conv_w(params["w1"], Cinp, Coutp)
    w2 = _conv_w(params["w2"], Coutp, Coutp)
    g1, be1 = _row(params["bn1_g"], Coutp), _row(params["bn1_b"], Coutp)
    g2, be2 = _row(params["bn2_g"], Coutp), _row(params["bn2_b"], Coutp)
    # NOTE: conv biases (b1, b2) cancel exactly under training-mode BatchNorm
    # (they only shift the batch mean) -> intentionally unused (dead work).

    # time-embedding projection hoisted to one tiny XLA matmul: (B, 1, Coutp)
    wt = _pad_axis(params["wt"].T.astype(jnp.float32), 1, Coutp)       # (T, Coutp)
    bt = _row(params["bt"], Coutp)
    tb = (t_emb.astype(jnp.float32) @ wt + bt).reshape(B, 1, Coutp)

    # channel-pad + cast to bf16 once; zero margin (bottom/right) once
    xc = _pad_axis(x, 3, Cinp).astype(jnp.bfloat16)                    # (B,H,W,Cinp)
    xpad = jnp.pad(xc, ((0, 0), (0, Hp - H), (0, Wp - W), (0, 0)))     # (B,Hp,Wp,Cinp)

    count = B * H * W

    # stage 1: conv1 (+ batch stats) -> bn1 + relu + temb (padded bf16 output)
    y1, s1, q1 = _conv3x3_stats(xpad, w1, H, W)
    sc1, sh1 = _bn_fold(s1, q1, g1, be1, count)
    h1pad = _bn1_relu_temb(y1, sc1, sh1, tb, Hp, Wp)                   # (B,Hp,Wp,Coutp)

    # stage 2: conv2 (+ batch stats) -> bn2 + residual + relu
    y2, s2, q2 = _conv3x3_stats(h1pad, w2, H, W)
    sc2, sh2 = _bn_fold(s2, q2, g2, be2, count)

    if params.get("wr") is not None:                                   # 1x1 res conv
        wr = params["wr"][:, :, 0, 0].T.astype(jnp.float32)            # (Cin, Cout)
        wr = _pad_axis(_pad_axis(wr, 0, Cinp), 1, Coutp).astype(jnp.bfloat16)
        br = _row(params["br"], Coutp)
        out = _bn2_proj_relu(y2, sc2, sh2, xc, wr, br)
    else:                                                              # nn.Identity
        out = _bn2_add_relu(y2, sc2, sh2, xc)

    out = out[:, :, :, :Cout]
    return jnp.transpose(out, (0, 3, 1, 2))                            # back to NCHW


# ------------------------------ XLA reference -------------------------------- #

@jax.jit
def reference_forward(x, t_emb, params):
    """Pure-XLA reference with PyTorch semantics (training-mode BN, conv biases)."""
    def conv3x3(v, w, b):
        y = jax.lax.conv_general_dilated(
            v, w, (1, 1), ((1, 1), (1, 1)),
            dimension_numbers=("NCHW", "OIHW", "NCHW"))
        return y + b.reshape(1, -1, 1, 1)

    def bn(y, g, b):
        mean = jnp.mean(y, axis=(0, 2, 3), keepdims=True)
        var = jnp.var(y, axis=(0, 2, 3), keepdims=True)        # biased, like BN
        return (y - mean) * jax.lax.rsqrt(var + EPS) * g.reshape(1, -1, 1, 1) \
            + b.reshape(1, -1, 1, 1)

    h = jnp.maximum(bn(conv3x3(x, params["w1"], params["b1"]),
                       params["bn1_g"], params["bn1_b"]), 0.0)
    h = h + (t_emb @ params["wt"].T + params["bt"])[:, :, None, None]
    h = bn(conv3x3(h, params["w2"], params["b2"]),
           params["bn2_g"], params["bn2_b"])
    if params.get("wr") is not None:
        res = jax.lax.conv_general_dilated(
            x, params["wr"], (1, 1), ((0, 0), (0, 0)),
            dimension_numbers=("NCHW", "OIHW", "NCHW"))
        res = res + params["br"].reshape(1, -1, 1, 1)
    else:
        res = x
    return jnp.maximum(h + res, 0.0)


if __name__ == "__main__":
    key = jax.random.PRNGKey(0)
    k_x, k_t, k_p = jax.random.split(key, 3)

    B, Cin, Cout, H, W, Tdim = 2, 4, 8, 16, 16, 32
    x = jax.random.normal(k_x, (B, Cin, H, W), jnp.float32)
    t_emb = jax.random.normal(k_t, (B, Tdim), jnp.float32)
    params = init_params(k_p, Cin, Cout, Tdim)

    out = jax.block_until_ready(residual_block_forward(x, t_emb, params))
    assert out.shape == (B, Cout, H, W), out.shape
    assert bool(jnp.all(out >= 0.0))              # final ReLU
    assert bool(jnp.all(jnp.isfinite(out)))
    ref = reference_forward(x, t_emb, params)
    err = float(jnp.max(jnp.abs(out - ref)))
    assert err < 0.15, f"max abs err vs reference (proj branch): {err}"

    # also exercise the identity-residual branch (in_channels == out_channels)
    params_id = init_params(jax.random.PRNGKey(1), Cout, Cout, Tdim)
    x2 = jax.random.normal(k_x, (B, Cout, H, W), jnp.float32)
    out2 = jax.block_until_ready(residual_block_forward(x2, t_emb, params_id))
    assert out2.shape == (B, Cout, H, W), out2.shape
    assert bool(jnp.all(out2 >= 0.0))
    assert bool(jnp.all(jnp.isfinite(out2)))
    ref2 = reference_forward(x2, t_emb, params_id)
    err2 = float(jnp.max(jnp.abs(out2 - ref2)))
    assert err2 < 0.15, f"max abs err vs reference (identity branch): {err2}"

    print("KERNEL_OK")
</pallas_src>

<mosaic_0001>
module attributes {stable_mosaic.version = 11 : i64} {
  func.func @_conv3x3_stats_kernel(%arg0: i32, %arg1: memref<1x18x32x128xbf16, #tpu.memory_space<vmem>>, %arg2: memref<3x3x128x128xbf16, #tpu.memory_space<vmem>>, %arg3: memref<1x16x16x128xbf16, #tpu.memory_space<vmem>>, %arg4: memref<1x1x128xf32, #tpu.memory_space<vmem>>, %arg5: memref<1x1x128xf32, #tpu.memory_space<vmem>>) attributes {dimension_semantics = [#tpu.dimension_semantics<parallel>], iteration_bounds = array<i64: 2>, scalar_prefetch = 0 : i64, scratch_operands = 0 : i64, tpu.core_type = #tpu.core_type<tc>, window_params = [{transform_indices = @transform_0, window_bounds = array<i64: 1, 18, 32, 128>}, {pipeline_mode = #tpu.pipeline_mode<synchronous>, transform_indices = @transform_1, window_bounds = array<i64: 3, 3, 128, 128>}, {transform_indices = @transform_2, window_bounds = array<i64: 1, 16, 16, 128>}, {transform_indices = @transform_3, window_bounds = array<i64: 1, 1, 128>}, {transform_indices = @transform_4, window_bounds = array<i64: 1, 1, 128>}]} {
    %c0 = arith.constant 0 : index
    %c0_0 = arith.constant 0 : index
    %c0_1 = arith.constant 0 : index
    %c0_2 = arith.constant 0 : index
    %0 = vector.load %arg1[%c0, %c0_0, %c0_1, %c0_2] : memref<1x18x32x128xbf16, #tpu.memory_space<vmem>>, vector<1x18x32x128xbf16>
    %1 = vector.shape_cast %0 : vector<1x18x32x128xbf16> to vector<18x32x128xbf16>
    %2 = vector.shape_cast %1 : vector<18x32x128xbf16> to vector<576x128xbf16>
    %cst = arith.constant 0.000000e+00 : f32
    %3 = vector.broadcast %cst : f32 to vector<576x128xf32>
    %c0_3 = arith.constant 0 : index
    %c0_4 = arith.constant 0 : index
    %c0_5 = arith.constant 0 : index
    %c0_6 = arith.constant 0 : index
    %4 = vector.load %arg2[%c0_3, %c0_4, %c0_5, %c0_6] : memref<3x3x128x128xbf16, #tpu.memory_space<vmem>>, vector<1x1x128x128xbf16>
    %5 = vector.shape_cast %4 : vector<1x1x128x128xbf16> to vector<128x128xbf16>
    %cst_7 = arith.constant dense<0.000000e+00> : vector<576x128xf32>
    %6 = tpu.matmul %2, %5, %cst_7 {dimension_numbers = #tpu.dot_dimension_numbers<[1], [0], [0], [1], [0, 0, 1, 1], [], []>} : vector<576x128xbf16>, vector<128x128xbf16>, vector<576x128xf32> -> vector<576x128xf32>
    %c33_i32 = arith.constant 33 : i32
    %7 = tpu.dynamic_rotate %6 by %c33_i32 dim 0 : vector<576x128xf32>, i32 -> vector<576x128xf32>
    %8 = arith.addf %3, %7 : vector<576x128xf32>
    %c0_8 = arith.constant 0 : index
    %c1 = arith.constant 1 : index
    %c0_9 = arith.constant 0 : index
    %c0_10 = arith.constant 0 : index
    %9 = vector.load %arg2[%c0_8, %c1, %c0_9, %c0_10] : memref<3x3x128x128xbf16, #tpu.memory_space<vmem>>, vector<1x1x128x128xbf16>
    %10 = vector.shape_cast %9 : vector<1x1x128x128xbf16> to vector<128x128xbf16>
    %cst_11 = arith.constant dense<0.000000e+00> : vector<576x128xf32>
    %11 = tpu.matmul %2, %10, %cst_11 {dimension_numbers = #tpu.dot_dimension_numbers<[1], [0], [0], [1], [0, 0, 1, 1], [], []>} : vector<576x128xbf16>, vector<128x128xbf16>, vector<576x128xf32> -> vector<576x128xf32>
    %c32_i32 = arith.constant 32 : i32
    %12 = tpu.dynamic_rotate %11 by %c32_i32 dim 0 : vector<576x128xf32>, i32 -> vector<576x128xf32>
    %13 = arith.addf %8, %12 : vector<576x128xf32>
    %c0_12 = arith.constant 0 : index
    %c2 = arith.constant 2 : index
    %c0_13 = arith.constant 0 : index
    %c0_14 = arith.constant 0 : index
    %14 = vector.load %arg2[%c0_12, %c2, %c0_13, %c0_14] : memref<3x3x128x128xbf16, #tpu.memory_space<vmem>>, vector<1x1x128x128xbf16>
    %15 = vector.shape_cast %14 : vector<1x1x128x128xbf16> to vector<128x128xbf16>
    %cst_15 = arith.constant dense<0.000000e+00> : vector<576x128xf32>
    %16 = tpu.matmul %2, %15, %cst_15 {dimension_numbers = #tpu.dot_dimension_numbers<[1], [0], [0], [1], [0, 0, 1, 1], [], []>} : vector<576x128xbf16>, vector<128x128xbf16>, vector<576x128xf32> -> vector<576x128xf32>
    %c31_i32 = arith.constant 31 : i32
    %17 = tpu.dynamic_rotate %16 by %c31_i32 dim 0 : vector<576x128xf32>, i32 -> vector<576x128xf32>
    %18 = arith.addf %13, %17 : vector<576x128xf32>
    %c1_16 = arith.constant 1 : index
    %c0_17 = arith.constant 0 : index
    %c0_18 = arith.constant 0 : index
    %c0_19 = arith.constant 0 : index
    %19 = vector.load %arg2[%c1_16, %c0_17, %c0_18, %c0_19] : memref<3x3x128x128xbf16, #tpu.memory_space<vmem>>, vector<1x1x128x128xbf16>
    %20 = vector.shape_cast %19 : vector<1x1x128x128xbf16> to vector<128x128xbf16>
    %cst_20 = arith.constant dense<0.000000e+00> : vector<576x128xf32>
    %21 = tpu.matmul %2, %20, %cst_20 {dimension_numbers = #tpu.dot_dimension_numbers<[1], [0], [0], [1], [0, 0, 1, 1], [], []>} : vector<576x128xbf16>, vector<128x128xbf16>, vector<576x128xf32> -> vector<576x128xf32>
    %c1_i32 = arith.constant 1 : i32
    %22 = tpu.dynamic_rotate %21 by %c1_i32 dim 0 : vector<576x128xf32>, i32 -> vector<576x128xf32>
    %23 = arith.addf %18, %22 : vector<576x128xf32>
    %c1_21 = arith.constant 1 : index
    %c1_22 = arith.constant 1 : index
    %c0_23 = arith.constant 0 : index
    %c0_24 = arith.constant 0 : index
    %24 = vector.load %arg2[%c1_21, %c1_22, %c0_23, %c0_24] : memref<3x3x128x128xbf16, #tpu.memory_space<vmem>>, vector<1x1x128x128xbf16>
    %25 = vector.shape_cast %24 : vector<1x1x128x128xbf16> to vector<128x128xbf16>
    %cst_25 = arith.constant dense<0.000000e+00> : vector<576x128xf32>
    %26 = tpu.matmul %2, %25, %cst_25 {dimension_numbers = #tpu.dot_dimension_numbers<[1], [0], [0], [1], [0, 0, 1, 1], [], []>} : vector<576x128xbf16>, vector<128x128xbf16>, vector<576x128xf32> -> vector<576x128xf32>
    %27 = arith.addf %23, %26 : vector<576x128xf32>
    %c1_26 = arith.constant 1 : index
    %c2_27 = arith.constant 2 : index
    %c0_28 = arith.constant 0 : index
    %c0_29 = arith.constant 0 : index
    %28 = vector.load %arg2[%c1_26, %c2_27, %c0_28, %c0_29] : memref<3x3x128x128xbf16, #tpu.memory_space<vmem>>, vector<1x1x128x128xbf16>
    %29 = vector.shape_cast %28 : vector<1x1x128x128xbf16> to vector<128x128xbf16>
    %cst_30 = arith.constant dense<0.000000e+00> : vector<576x128xf32>
    %30 = tpu.matmul %2, %29, %cst_30 {dimension_numbers = #tpu.dot_dimension_numbers<[1], [0], [0], [1], [0, 0, 1, 1], [], []>} : vector<576x128xbf16>, vector<128x128xbf16>, vector<576x128xf32> -> vector<576x128xf32>
    %c575_i32 = arith.constant 575 : i32
    %31 = tpu.dynamic_rotate %30 by %c575_i32 dim 0 : vector<576x128xf32>, i32 -> vector<576x128xf32>
    %32 = arith.addf %27, %31 : vector<576x128xf32>
    %c2_31 = arith.constant 2 : index
    %c0_32 = arith.constant 0 : index
    %c0_33 = arith.constant 0 : index
    %c0_34 = arith.constant 0 : index
    %33 = vector.load %arg2[%c2_31, %c0_32, %c0_33, %c0_34] : memref<3x3x128x128xbf16, #tpu.memory_space<vmem>>, vector<1x1x128x128xbf16>
    %34 = vector.shape_cast %33 : vector<1x1x128x128xbf16> to vector<128x128xbf16>
    %cst_35 = arith.constant dense<0.000000e+00> : vector<576x128xf32>
    %35 = tpu.matmul %2, %34, %cst_35 {dimension_numbers = #tpu.dot_dimension_numbers<[1], [0], [0], [1], [0, 0, 1, 1], [], []>} : vector<576x128xbf16>, vector<128x128xbf16>, vector<576x128xf32> -> vector<576x128xf32>
    %c545_i32 = arith.constant 545 : i32
    %36 = tpu.dynamic_rotate %35 by %c545_i32 dim 0 : vector<576x128xf32>, i32 -> vector<576x128xf32>
    %37 = arith.addf %32, %36 : vector<576x128xf32>
    %c2_36 = arith.constant 2 : index
    %c1_37 = arith.constant 1 : index
    %c0_38 = arith.constant 0 : index
    %c0_39 = arith.constant 0 : index
    %38 = vector.load %arg2[%c2_36, %c1_37, %c0_38, %c0_39] : memref<3x3x128x128xbf16, #tpu.memory_space<vmem>>, vector<1x1x128x128xbf16>
    %39 = vector.shape_cast %38 : vector<1x1x128x128xbf16> to vector<128x128xbf16>
    %cst_40 = arith.constant dense<0.000000e+00> : vector<576x128xf32>
    %40 = tpu.matmul %2, %39, %cst_40 {dimension_numbers = #tpu.dot_dimension_numbers<[1], [0], [0], [1], [0, 0, 1, 1], [], []>} : vector<576x128xbf16>, vector<128x128xbf16>, vector<576x128xf32> -> vector<576x128xf32>
    %c544_i32 = arith.constant 544 : i32
    %41 = tpu.dynamic_rotate %40 by %c544_i32 dim 0 : vector<576x128xf32>, i32 -> vector<576x128xf32>
    %42 = arith.addf %37, %41 : vector<576x128xf32>
    %c2_41 = arith.constant 2 : index
    %c2_42 = arith.constant 2 : index
    %c0_43 = arith.constant 0 : index
    %c0_44 = arith.constant 0 : index
    %43 = vector.load %arg2[%c2_41, %c2_42, %c0_43, %c0_44] : memref<3x3x128x128xbf16, #tpu.memory_space<vmem>>, vector<1x1x128x128xbf16>
    %44 = vector.shape_cast %43 : vector<1x1x128x128xbf16> to vector<128x128xbf16>
    %cst_45 = arith.constant dense<0.000000e+00> : vector<576x128xf32>
    %45 = tpu.matmul %2, %44, %cst_45 {dimension_numbers = #tpu.dot_dimension_numbers<[1], [0], [0], [1], [0, 0, 1, 1], [], []>} : vector<576x128xbf16>, vector<128x128xbf16>, vector<576x128xf32> -> vector<576x128xf32>
    %c543_i32 = arith.constant 543 : i32
    %46 = tpu.dynamic_rotate %45 by %c543_i32 dim 0 : vector<576x128xf32>, i32 -> vector<576x128xf32>
    %47 = arith.addf %42, %46 : vector<576x128xf32>
    %48 = vector.shape_cast %47 : vector<576x128xf32> to vector<18x32x128xf32>
    %49 = vector.extract_strided_slice %48 {offsets = [0, 0, 0], sizes = [16, 16, 128], strides = [1, 1, 1]} : vector<18x32x128xf32> to vector<16x16x128xf32>
    %50 = arith.truncf %49 : vector<16x16x128xf32> to vector<16x16x128xbf16>
    %c0_46 = arith.constant 0 : index
    %c0_47 = arith.constant 0 : index
    %c0_48 = arith.constant 0 : index
    %c0_49 = arith.constant 0 : index
    %51 = vector.load %arg3[%c0_46, %c0_47, %c0_48, %c0_49] : memref<1x16x16x128xbf16, #tpu.memory_space<vmem>>, vector<1x16x16x128xbf16>
    %52 = vector.shape_cast %51 : vector<1x16x16x128xbf16> to vector<16x16x128xbf16>
    %53 = vector.shape_cast %50 : vector<16x16x128xbf16> to vector<1x16x16x128xbf16>
    tpu.vector_store %arg3[%c0_46, %c0_47, %c0_48, %c0_49], %53 {strides = array<i32>} : memref<1x16x16x128xbf16, #tpu.memory_space<vmem>>, vector<1x16x16x128xbf16>,
    %cst_50 = arith.constant dense<0.000000e+00> : vector<128xf32>
    %54 = vector.multi_reduction <add>, %49, %cst_50 [0, 1] : vector<16x16x128xf32> to vector<128xf32>
    %55 = vector.shape_cast %54 : vector<128xf32> to vector<1x1x128xf32>
    %c0_51 = arith.constant 0 : index
    %c0_52 = arith.constant 0 : index
    %c0_53 = arith.constant 0 : index
    %56 = vector.load %arg4[%c0_51, %c0_52, %c0_53] : memref<1x1x128xf32, #tpu.memory_space<vmem>>, vector<1x1x128xf32>
    tpu.vector_store %arg4[%c0_51, %c0_52, %c0_53], %55 {strides = array<i32>} : memref<1x1x128xf32, #tpu.memory_space<vmem>>, vector<1x1x128xf32>,
    %57 = arith.mulf %49, %49 : vector<16x16x128xf32>
    %cst_54 = arith.constant dense<0.000000e+00> : vector<128xf32>
    %58 = vector.multi_reduction <add>, %57, %cst_54 [0, 1] : vector<16x16x128xf32> to vector<128xf32>
    %59 = vector.shape_cast %58 : vector<128xf32> to vector<1x1x128xf32>
    %c0_55 = arith.constant 0 : index
    %c0_56 = arith.constant 0 : index
    %c0_57 = arith.constant 0 : index
    %60 = vector.load %arg5[%c0_55, %c0_56, %c0_57] : memref<1x1x128xf32, #tpu.memory_space<vmem>>, vector<1x1x128xf32>
    tpu.vector_store %arg5[%c0_55, %c0_56, %c0_57], %59 {strides = array<i32>} : memref<1x1x128xf32, #tpu.memory_space<vmem>>, vector<1x1x128xf32>,
    return
  }
  func.func @transform_0(%arg0: i32) -> (i32, i32, i32, i32) {
    %c0_i32 = arith.constant 0 : i32
    %c0_i32_0 = arith.constant 0 : i32
    %c0_i32_1 = arith.constant 0 : i32
    %c0_i32_2 = arith.constant 0 : i32
    return %arg0, %c0_i32, %c0_i32_0, %c0_i32_1 : i32, i32, i32, i32
  }
  func.func @transform_1(%arg0: i32) -> (i32, i32, i32, i32) {
    %c0_i32 = arith.constant 0 : i32
    %c0_i32_0 = arith.constant 0 : i32
    %c0_i32_1 = arith.constant 0 : i32
    %c0_i32_2 = arith.constant 0 : i32
    %c0_i32_3 = arith.constant 0 : i32
    return %c0_i32, %c0_i32_0, %c0_i32_1, %c0_i32_2 : i32, i32, i32, i32
  }
  func.func @transform_2(%arg0: i32) -> (i32, i32, i32, i32) {
    %c0_i32 = arith.constant 0 : i32
    %c0_i32_0 = arith.constant 0 : i32
    %c0_i32_1 = arith.constant 0 : i32
    %c0_i32_2 = arith.constant 0 : i32
    return %arg0, %c0_i32, %c0_i32_0, %c0_i32_1 : i32, i32, i32, i32
  }
  func.func @transform_3(%arg0: i32) -> (i32, i32, i32) {
    %c0_i32 = arith.constant 0 : i32
    %c0_i32_0 = arith.constant 0 : i32
    %c0_i32_1 = arith.constant 0 : i32
    return %arg0, %c0_i32, %c0_i32_0 : i32, i32, i32
  }
  func.func @transform_4(%arg0: i32) -> (i32, i32, i32) {
    %c0_i32 = arith.constant 0 : i32
    %c0_i32_0 = arith.constant 0 : i32
    %c0_i32_1 = arith.constant 0 : i32
    return %arg0, %c0_i32, %c0_i32_0 : i32, i32, i32
  }
}

module attributes {stable_mosaic.version = 11 : i64} {
  func.func @_bn1_relu_temb_kernel(%arg0: i32, %arg1: memref<1x16x16x128xbf16, #tpu.memory_space<vmem>>, %arg2: memref<1x128xf32, #tpu.memory_space<vmem>>, %arg3: memref<1x128xf32, #tpu.memory_space<vmem>>, %arg4: memref<1x1x128xf32, #tpu.memory_space<vmem>>, %arg5: memref<1x18x32x128xbf16, #tpu.memory_space<vmem>>) attributes {dimension_semantics = [#tpu.dimension_semantics<parallel>], iteration_bounds = array<i64: 2>, scalar_prefetch = 0 : i64, scratch_operands = 0 : i64, tpu.core_type = #tpu.core_type<tc>, window_params = [{transform_indices = @transform_0, window_bounds = array<i64: 1, 16, 16, 128>}, {pipeline_mode = #tpu.pipeline_mode<synchronous>, transform_indices = @transform_1, window_bounds = array<i64: 1, 128>}, {pipeline_mode = #tpu.pipeline_mode<synchronous>, transform_indices = @transform_2, window_bounds = array<i64: 1, 128>}, {transform_indices = @transform_3, window_bounds = array<i64: 1, 1, 128>}, {transform_indices = @transform_4, window_bounds = array<i64: 1, 18, 32, 128>}]} {
    %c0 = arith.constant 0 : index
    %c0_0 = arith.constant 0 : index
    %c0_1 = arith.constant 0 : index
    %c0_2 = arith.constant 0 : index
    %0 = vector.load %arg1[%c0, %c0_0, %c0_1, %c0_2] : memref<1x16x16x128xbf16, #tpu.memory_space<vmem>>, vector<1x16x16x128xbf16>
    %1 = vector.shape_cast %0 : vector<1x16x16x128xbf16> to vector<16x16x128xbf16>
    %2 = arith.extf %1 : vector<16x16x128xbf16> to vector<16x16x128xf32>
    %c0_3 = arith.constant 0 : index
    %c0_4 = arith.constant 0 : index
    %3 = vector.load %arg2[%c0_3, %c0_4] : memref<1x128xf32, #tpu.memory_space<vmem>>, vector<1x128xf32>
    %4 = vector.shape_cast %3 : vector<1x128xf32> to vector<1x1x128xf32>
    %5 = vector.broadcast %4 : vector<1x1x128xf32> to vector<16x16x128xf32>
    %6 = arith.mulf %2, %5 : vector<16x16x128xf32>
    %c0_5 = arith.constant 0 : index
    %c0_6 = arith.constant 0 : index
    %7 = vector.load %arg3[%c0_5, %c0_6] : memref<1x128xf32, #tpu.memory_space<vmem>>, vector<1x128xf32>
    %8 = vector.shape_cast %7 : vector<1x128xf32> to vector<1x1x128xf32>
    %9 = vector.broadcast %8 : vector<1x1x128xf32> to vector<16x16x128xf32>
    %10 = arith.addf %6, %9 : vector<16x16x128xf32>
    %cst = arith.constant 0.000000e+00 : f32
    %11 = vector.broadcast %cst : f32 to vector<16x16x128xf32>
    %12 = arith.maximumf %10, %11 : vector<16x16x128xf32>
    %c0_7 = arith.constant 0 : index
    %c0_8 = arith.constant 0 : index
    %c0_9 = arith.constant 0 : index
    %13 = vector.load %arg4[%c0_7, %c0_8, %c0_9] : memref<1x1x128xf32, #tpu.memory_space<vmem>>, vector<1x1x128xf32>
    %14 = vector.shape_cast %13 : vector<1x1x128xf32> to vector<1x128xf32>
    %15 = vector.shape_cast %14 : vector<1x128xf32> to vector<1x1x128xf32>
    %16 = vector.broadcast %15 : vector<1x1x128xf32> to vector<16x16x128xf32>
    %17 = arith.addf %12, %16 : vector<16x16x128xf32>
    %18 = arith.truncf %17 : vector<16x16x128xf32> to vector<16x16x128xbf16>
    %c0_10 = arith.constant 0 : index
    %c0_11 = arith.constant 0 : index
    %c0_12 = arith.constant 0 : index
    %c0_13 = arith.constant 0 : index
    %19 = vector.load %arg5[%c0_10, %c0_11, %c0_12, %c0_13] : memref<1x18x32x128xbf16, #tpu.memory_space<vmem>>, vector<1x16x16x128xbf16>
    %20 = vector.shape_cast %19 : vector<1x16x16x128xbf16> to vector<16x16x128xbf16>
    %21 = vector.shape_cast %18 : vector<16x16x128xbf16> to vector<1x16x16x128xbf16>
    tpu.vector_store %arg5[%c0_10, %c0_11, %c0_12, %c0_13], %21 {strides = array<i32>} : memref<1x18x32x128xbf16, #tpu.memory_space<vmem>>, vector<1x16x16x128xbf16>,
    %cst_14 = arith.constant 0.000000e+00 : bf16
    %22 = vector.broadcast %cst_14 : bf16 to vector<2x32x128xbf16>
    %c0_15 = arith.constant 0 : index
    %c16 = arith.constant 16 : index
    %c0_16 = arith.constant 0 : index
    %c0_17 = arith.constant 0 : index
    %23 = vector.load %arg5[%c0_15, %c16, %c0_16, %c0_17] : memref<1x18x32x128xbf16, #tpu.memory_space<vmem>>, vector<1x2x32x128xbf16>
    %24 = vector.shape_cast %23 : vector<1x2x32x128xbf16> to vector<2x32x128xbf16>
    %25 = vector.shape_cast %22 : vector<2x32x128xbf16> to vector<1x2x32x128xbf16>
    tpu.vector_store %arg5[%c0_15, %c16, %c0_16, %c0_17], %25 {strides = array<i32>} : memref<1x18x32x128xbf16, #tpu.memory_space<vmem>>, vector<1x2x32x128xbf16>,
    %cst_18 = arith.constant 0.000000e+00 : bf16
    %26 = vector.broadcast %cst_18 : bf16 to vector<16x16x128xbf16>
    %c0_19 = arith.constant 0 : index
    %c0_20 = arith.constant 0 : index
    %c16_21 = arith.constant 16 : index
    %c0_22 = arith.constant 0 : index
    %27 = vector.load %arg5[%c0_19, %c0_20, %c16_21, %c0_22] : memref<1x18x32x128xbf16, #tpu.memory_space<vmem>>, vector<1x16x16x128xbf16>
    %28 = vector.shape_cast %27 : vector<1x16x16x128xbf16> to vector<16x16x128xbf16>
    %29 = vector.shape_cast %26 : vector<16x16x128xbf16> to vector<1x16x16x128xbf16>
    tpu.vector_store %arg5[%c0_19, %c0_20, %c16_21, %c0_22], %29 {strides = array<i32>} : memref<1x18x32x128xbf16, #tpu.memory_space<vmem>>, vector<1x16x16x128xbf16>,
    return
  }
  func.func @transform_0(%arg0: i32) -> (i32, i32, i32, i32) {
    %c0_i32 = arith.constant 0 : i32
    %c0_i32_0 = arith.constant 0 : i32
    %c0_i32_1 = arith.constant 0 : i32
    %c0_i32_2 = arith.constant 0 : i32
    return %arg0, %c0_i32, %c0_i32_0, %c0_i32_1 : i32, i32, i32, i32
  }
  func.func @transform_1(%arg0: i32) -> (i32, i32) {
    %c0_i32 = arith.constant 0 : i32
    %c0_i32_0 = arith.constant 0 : i32
    %c0_i32_1 = arith.constant 0 : i32
    return %c0_i32, %c0_i32_0 : i32, i32
  }
  func.func @transform_2(%arg0: i32) -> (i32, i32) {
    %c0_i32 = arith.constant 0 : i32
    %c0_i32_0 = arith.constant 0 : i32
    %c0_i32_1 = arith.constant 0 : i32
    return %c0_i32, %c0_i32_0 : i32, i32
  }
  func.func @transform_3(%arg0: i32) -> (i32, i32, i32) {
    %c0_i32 = arith.constant 0 : i32
    %c0_i32_0 = arith.constant 0 : i32
    %c0_i32_1 = arith.constant 0 : i32
    return %arg0, %c0_i32, %c0_i32_0 : i32, i32, i32
  }
  func.func @transform_4(%arg0: i32) -> (i32, i32, i32, i32) {
    %c0_i32 = arith.constant 0 : i32
    %c0_i32_0 = arith.constant 0 : i32
    %c0_i32_1 = arith.constant 0 : i32
    %c0_i32_2 = arith.constant 0 : i32
    return %arg0, %c0_i32, %c0_i32_0, %c0_i32_1 : i32, i32, i32, i32
  }
}

module attributes {stable_mosaic.version = 11 : i64} {
  func.func @_bn2_proj_relu_kernel(%arg0: i32, %arg1: memref<1x16x16x128xbf16, #tpu.memory_space<vmem>>, %arg2: memref<1x128xf32, #tpu.memory_space<vmem>>, %arg3: memref<1x128xf32, #tpu.memory_space<vmem>>, %arg4: memref<1x16x16x128xbf16, #tpu.memory_space<vmem>>, %arg5: memref<128x128xbf16, #tpu.memory_space<vmem>>, %arg6: memref<1x128xf32, #tpu.memory_space<vmem>>, %arg7: memref<1x16x16x128xf32, #tpu.memory_space<vmem>>) attributes {dimension_semantics = [#tpu.dimension_semantics<parallel>], iteration_bounds = array<i64: 2>, scalar_prefetch = 0 : i64, scratch_operands = 0 : i64, tpu.core_type = #tpu.core_type<tc>, window_params = [{transform_indices = @transform_0, window_bounds = array<i64: 1, 16, 16, 128>}, {pipeline_mode = #tpu.pipeline_mode<synchronous>, transform_indices = @transform_1, window_bounds = array<i64: 1, 128>}, {pipeline_mode = #tpu.pipeline_mode<synchronous>, transform_indices = @transform_2, window_bounds = array<i64: 1, 128>}, {transform_indices = @transform_3, window_bounds = array<i64: 1, 16, 16, 128>}, {pipeline_mode = #tpu.pipeline_mode<synchronous>, transform_indices = @transform_4, window_bounds = array<i64: 128, 128>}, {pipeline_mode = #tpu.pipeline_mode<synchronous>, transform_indices = @transform_5, window_bounds = array<i64: 1, 128>}, {transform_indices = @transform_6, window_bounds = array<i64: 1, 16, 16, 128>}]} {
    %c0 = arith.constant 0 : index
    %c0_0 = arith.constant 0 : index
    %c0_1 = arith.constant 0 : index
    %c0_2 = arith.constant 0 : index
    %0 = vector.load %arg4[%c0, %c0_0, %c0_1, %c0_2] : memref<1x16x16x128xbf16, #tpu.memory_space<vmem>>, vector<1x16x16x128xbf16>
    %1 = vector.shape_cast %0 : vector<1x16x16x128xbf16> to vector<16x16x128xbf16>
    %2 = vector.shape_cast %1 : vector<16x16x128xbf16> to vector<256x128xbf16>
    %c0_3 = arith.constant 0 : index
    %c0_4 = arith.constant 0 : index
    %3 = vector.load %arg5[%c0_3, %c0_4] : memref<128x128xbf16, #tpu.memory_space<vmem>>, vector<128x128xbf16>
    %cst = arith.constant dense<0.000000e+00> : vector<256x128xf32>
    %4 = tpu.matmul %2, %3, %cst {dimension_numbers = #tpu.dot_dimension_numbers<[1], [0], [0], [1], [0, 0, 1, 1], [], []>} : vector<256x128xbf16>, vector<128x128xbf16>, vector<256x128xf32> -> vector<256x128xf32>
    %c0_5 = arith.constant 0 : index
    %c0_6 = arith.constant 0 : index
    %5 = vector.load %arg6[%c0_5, %c0_6] : memref<1x128xf32, #tpu.memory_space<vmem>>, vector<1x128xf32>
    %6 = vector.broadcast %5 : vector<1x128xf32> to vector<256x128xf32>
    %7 = arith.addf %4, %6 : vector<256x128xf32>
    %8 = vector.shape_cast %7 : vector<256x128xf32> to vector<16x16x128xf32>
    %c0_7 = arith.constant 0 : index
    %c0_8 = arith.constant 0 : index
    %c0_9 = arith.constant 0 : index
    %c0_10 = arith.constant 0 : index
    %9 = vector.load %arg1[%c0_7, %c0_8, %c0_9, %c0_10] : memref<1x16x16x128xbf16, #tpu.memory_space<vmem>>, vector<1x16x16x128xbf16>
    %10 = vector.shape_cast %9 : vector<1x16x16x128xbf16> to vector<16x16x128xbf16>
    %11 = arith.extf %10 : vector<16x16x128xbf16> to vector<16x16x128xf32>
    %c0_11 = arith.constant 0 : index
    %c0_12 = arith.constant 0 : index
    %12 = vector.load %arg2[%c0_11, %c0_12] : memref<1x128xf32, #tpu.memory_space<vmem>>, vector<1x128xf32>
    %13 = vector.shape_cast %12 : vector<1x128xf32> to vector<1x1x128xf32>
    %14 = vector.broadcast %13 : vector<1x1x128xf32> to vector<16x16x128xf32>
    %15 = arith.mulf %11, %14 : vector<16x16x128xf32>
    %c0_13 = arith.constant 0 : index
    %c0_14 = arith.constant 0 : index
    %16 = vector.load %arg3[%c0_13, %c0_14] : memref<1x128xf32, #tpu.memory_space<vmem>>, vector<1x128xf32>
    %17 = vector.shape_cast %16 : vector<1x128xf32> to vector<1x1x128xf32>
    %18 = vector.broadcast %17 : vector<1x1x128xf32> to vector<16x16x128xf32>
    %19 = arith.addf %15, %18 : vector<16x16x128xf32>
    %20 = arith.addf %19, %8 : vector<16x16x128xf32>
    %cst_15 = arith.constant 0.000000e+00 : f32
    %21 = vector.broadcast %cst_15 : f32 to vector<16x16x128xf32>
    %22 = arith.maximumf %20, %21 : vector<16x16x128xf32>
    %c0_16 = arith.constant 0 : index
    %c0_17 = arith.constant 0 : index
    %c0_18 = arith.constant 0 : index
    %c0_19 = arith.constant 0 : index
    %23 = vector.load %arg7[%c0_16, %c0_17, %c0_18, %c0_19] : memref<1x16x16x128xf32, #tpu.memory_space<vmem>>, vector<1x16x16x128xf32>
    %24 = vector.shape_cast %23 : vector<1x16x16x128xf32> to vector<16x16x128xf32>
    %25 = vector.shape_cast %22 : vector<16x16x128xf32> to vector<1x16x16x128xf32>
    tpu.vector_store %arg7[%c0_16, %c0_17, %c0_18, %c0_19], %25 {strides = array<i32>} : memref<1x16x16x128xf32, #tpu.memory_space<vmem>>, vector<1x16x16x128xf32>,
    return
  }
  func.func @transform_0(%arg0: i32) -> (i32, i32, i32, i32) {
    %c0_i32 = arith.constant 0 : i32
    %c0_i32_0 = arith.constant 0 : i32
    %c0_i32_1 = arith.constant 0 : i32
    %c0_i32_2 = arith.constant 0 : i32
    return %arg0, %c0_i32, %c0_i32_0, %c0_i32_1 : i32, i32, i32, i32
  }
  func.func @transform_1(%arg0: i32) -> (i32, i32) {
    %c0_i32 = arith.constant 0 : i32
    %c0_i32_0 = arith.constant 0 : i32
    %c0_i32_1 = arith.constant 0 : i32
    return %c0_i32, %c0_i32_0 : i32, i32
  }
  func.func @transform_2(%arg0: i32) -> (i32, i32) {
    %c0_i32 = arith.constant 0 : i32
    %c0_i32_0 = arith.constant 0 : i32
    %c0_i32_1 = arith.constant 0 : i32
    return %c0_i32, %c0_i32_0 : i32, i32
  }
  func.func @transform_3(%arg0: i32) -> (i32, i32, i32, i32) {
    %c0_i32 = arith.constant 0 : i32
    %c0_i32_0 = arith.constant 0 : i32
    %c0_i32_1 = arith.constant 0 : i32
    %c0_i32_2 = arith.constant 0 : i32
    return %arg0, %c0_i32, %c0_i32_0, %c0_i32_1 : i32, i32, i32, i32
  }
  func.func @transform_4(%arg0: i32) -> (i32, i32) {
    %c0_i32 = arith.constant 0 : i32
    %c0_i32_0 = arith.constant 0 : i32
    %c0_i32_1 = arith.constant 0 : i32
    return %c0_i32, %c0_i32_0 : i32, i32
  }
  func.func @transform_5(%arg0: i32) -> (i32, i32) {
    %c0_i32 = arith.constant 0 : i32
    %c0_i32_0 = arith.constant 0 : i32
    %c0_i32_1 = arith.constant 0 : i32
    return %c0_i32, %c0_i32_0 : i32, i32
  }
  func.func @transform_6(%arg0: i32) -> (i32, i32, i32, i32) {
    %c0_i32 = arith.constant 0 : i32
    %c0_i32_0 = arith.constant 0 : i32
    %c0_i32_1 = arith.constant 0 : i32
    %c0_i32_2 = arith.constant 0 : i32
    return %arg0, %c0_i32, %c0_i32_0, %c0_i32_1 : i32, i32, i32, i32
  }
}

</mosaic_0001>

<llo_original>
// kernel: residual_block_forward.5
$region0: #{residual_block_forward.5}
  #allocation0 [shape = 'u32[]', space=smem, size = 0x4, offset = 0x4, fixed_abs, tag = 'smem constant byte address 0x4 - core index']
  #allocation1 [shape = 'u32[144,128]{1,0:T(1,128)}', space=vmem, size = 0x12000, scoped, tag = 'internal scratch']
  %s0 = inlined_call_operand.vmem [shape: bf16[2,16,16,128], index: 0, kind: input, shape index: {}]
  %s1 = inlined_call_operand.vmem [shape: f32[1,128], index: 1, kind: input, shape index: {}]
  %s2 = inlined_call_operand.vmem [shape: f32[1,128], index: 2, kind: input, shape index: {}]
  %s3 = inlined_call_operand.vmem [shape: f32[2,1,128], index: 3, kind: input, shape index: {}]
  %s4 = inlined_call_operand.vmem [shape: bf16[2,18,32,128], index: 4, kind: output, shape index: {}]
  %s5 = sld [smem:[#allocation0]]
  $region49: #{residual_block_forward.5} parent=0
    _
  %s7 = ssub.s32 1, %s5
  %s8 = scalar_select 0, %s7, %s5
  loop: start=0, step=1, limit=4
  $region2: #{residual_block_forward.5} parent=0 // loop_pre_header
    _
  $region3: #{residual_block_forward.5} parent=0 // loop_header
    %s10 = sphi 0, %s14
    %p11 = scmp.ge.s32.totalorder %s10, 4
    %s20 = sphi 0, %s22
    %s23 = sphi 0, %s20
    %s24 = sphi 0, %s23
    %s40 = sphi 0, %s24
    %s44 = sphi 0, %s44
    %s46 = sphi 0, %s44
    %s47 = sphi 0, %s46
    %s61 = sphi 0, %s47
    %s65 = sphi 0, %s65
    %s67 = sphi 0, %s65
    %s68 = sphi 0, %s67
    %s82 = sphi 0, %s68
    %s88 = sphi 0, %s90
    %s91 = sphi 0, %s88
    %s92 = sphi 0, %s91
    %s108 = sphi 0, %s92
    %s114 = sphi 0, %s116
    %s117 = sphi 0, %s114
    %s118 = sphi 0, %s117
    %s134 = sphi 0, %s118
  $region4: #{residual_block_forward.5} parent=0 // loop_header_branch
    %13 = sbr.rel (%p11) target = $region8
  $region5: #{residual_block_forward.5} parent=0 // loop_body
    %s15 = ssub.s32 %s10, 1
    %s16 = ssub.s32 %s10, 2
    %s17 = sadd.s32 %s10, 1
    %s18 = ssub.s32 %s10, %s17
    %p19 = scmp.eq.s32.totalorder %s18, 0
    %s21 = sadd.s32 %s20, 1
    %s22 = scalar_select %p19, %s20, %s21
    %p25 = pneg %p19
    %p26 = scmp.eq.s32.totalorder %s10, 1
    %p27 = por %p25, %p26
    %p28 = scmp.ne.s32.totalorder %s20, %s23
    %p29 = scmp.eq.s32.totalorder %s10, 0
    %p30 = por %p28, %p29
    %p31 = scmp.ne.s32.totalorder %s20, %s23
    %p32 = scmp.eq.s32.totalorder %s15, 1
    %p33 = por %p31, %p32
    %p34 = scmp.ne.s32.totalorder %s23, %s24
    %p35 = scmp.eq.s32.totalorder %s15, 0
    %p36 = por %p34, %p35
    %p37 = scmp.ne.s32.totalorder %s23, %s24
    %p38 = scmp.eq.s32.totalorder %s16, 1
    %p39 = por %p37, %p38
    %p41 = scmp.ne.s32.totalorder %s24, %s40
    %p42 = scmp.eq.s32.totalorder %s16, 0
    %p43 = por %p41, %p42
    %s45 = sadd.s32 %s44, 1
    %p48 = scmp.eq.s32.totalorder %s10, 1
    %p49 = scmp.ne.s32.totalorder %s44, %s46
    %p50 = scmp.eq.s32.totalorder %s10, 0
    %p51 = por %p49, %p50
    %p52 = scmp.ne.s32.totalorder %s44, %s46
    %p53 = scmp.eq.s32.totalorder %s15, 1
    %p54 = por %p52, %p53
    %p55 = scmp.ne.s32.totalorder %s46, %s47
    %p56 = scmp.eq.s32.totalorder %s15, 0
    %p57 = por %p55, %p56
    %p58 = scmp.ne.s32.totalorder %s46, %s47
    %p59 = scmp.eq.s32.totalorder %s16, 1
    %p60 = por %p58, %p59
    %p62 = scmp.ne.s32.totalorder %s47, %s61
    %p63 = scmp.eq.s32.totalorder %s16, 0
    %p64 = por %p62, %p63
    %s66 = sadd.s32 %s65, 1
    %p69 = scmp.eq.s32.totalorder %s10, 1
    %p70 = scmp.ne.s32.totalorder %s65, %s67
    %p71 = scmp.eq.s32.totalorder %s10, 0
    %p72 = por %p70, %p71
    %p73 = scmp.ne.s32.totalorder %s65, %s67
    %p74 = scmp.eq.s32.totalorder %s15, 1
    %p75 = por %p73, %p74
    %p76 = scmp.ne.s32.totalorder %s67, %s68
    %p77 = scmp.eq.s32.totalorder %s15, 0
    %p78 = por %p76, %p77
    %p79 = scmp.ne.s32.totalorder %s67, %s68
    %p80 = scmp.eq.s32.totalorder %s16, 1
    %p81 = por %p79, %p80
    %p83 = scmp.ne.s32.totalorder %s68, %s82
    %p84 = scmp.eq.s32.totalorder %s16, 0
    %p85 = por %p83, %p84
    %s86 = ssub.s32 %s10, %s17
    %p87 = scmp.eq.s32.totalorder %s86, 0
    %s89 = sadd.s32 %s88, 1
    %s90 = scalar_select %p87, %s88, %s89
    %p93 = pneg %p87
    %p94 = scmp.eq.s32.totalorder %s10, 1
    %p95 = por %p93, %p94
    %p96 = scmp.ne.s32.totalorder %s88, %s91
    %p97 = scmp.eq.s32.totalorder %s10, 0
    %p98 = por %p96, %p97
    %p99 = scmp.ne.s32.totalorder %s88, %s91
    %p100 = scmp.eq.s32.totalorder %s15, 1
    %p101 = por %p99, %p100
    %p102 = scmp.ne.s32.totalorder %s91, %s92
    %p103 = scmp.eq.s32.totalorder %s15, 0
    %p104 = por %p102, %p103
    %p105 = scmp.ne.s32.totalorder %s91, %s92
    %p106 = scmp.eq.s32.totalorder %s16, 1
    %p107 = por %p105, %p106
    %p109 = scmp.ne.s32.totalorder %s92, %s108
    %p110 = scmp.eq.s32.totalorder %s16, 0
    %p111 = por %p109, %p110
    %s112 = ssub.s32 %s10, %s17
    %p113 = scmp.eq.s32.totalorder %s112, 0
    %s115 = sadd.s32 %s114, 1
    %s116 = scalar_select %p113, %s114, %s115
    %p119 = pneg %p113
    %p120 = scmp.eq.s32.totalorder %s10, 1
    %p121 = por %p119, %p120
    %p122 = scmp.ne.s32.totalorder %s114, %s117
    %p123 = scmp.eq.s32.totalorder %s10, 0
    %p124 = por %p122, %p123
    %p125 = scmp.ne.s32.totalorder %s114, %s117
    %p126 = scmp.eq.s32.totalorder %s15, 1
    %p127 = por %p125, %p126
    %p128 = scmp.ne.s32.totalorder %s117, %s118
    %p129 = scmp.eq.s32.totalorder %s15, 0
    %p130 = por %p128, %p129
    %p131 = scmp.ne.s32.totalorder %s117, %s118
    %p132 = scmp.eq.s32.totalorder %s16, 1
    %p133 = por %p131, %p132
    %p135 = scmp.ne.s32.totalorder %s118, %s134
    %p136 = scmp.eq.s32.totalorder %s16, 0
    %p137 = por %p135, %p136
    %p138 = scmp.le.s32.totalorder 1, %s10
    %p139 = scmp.lt.s32.totalorder %s10, 3
    %p140 = pnand %p138, %p139
    %p141 = pneg %p140
    // Predicated region
    $region9: #{residual_block_forward.5} parent=5 // pred_check
      _
    $region10: #{residual_block_forward.5} parent=5 // pred_check_branch
      %143 = sbr.rel (%p140) target = $region12
    $region11: #{residual_block_forward.5} parent=5 // pred_region
      %s144 = ssub.s32 %s10, 1
      // Predicated region
      $region13: #{residual_block_forward.5} parent=11 // pred_check
        %p145 = pneg %p57
      $region14: #{residual_block_forward.5} parent=11 // pred_check_branch
        %147 = sbr.rel (%p145) target = $region16
      $region15: #{residual_block_forward.5} parent=11 // pred_region
        _
      $region16: #{residual_block_forward.5} parent=11 // pred_fallthru
        _
      // Predicated region
      $region17: #{residual_block_forward.5} parent=11 // pred_check
        %p148 = pneg %p78
      $region18: #{residual_block_forward.5} parent=11 // pred_check_branch
        %150 = sbr.rel (%p148) target = $region20
      $region19: #{residual_block_forward.5} parent=11 // pred_region
        _
      $region20: #{residual_block_forward.5} parent=11 // pred_fallthru
        _
    $region12: #{residual_block_forward.5} parent=5 // pred_fallthru
      _
    %p151 = scmp.lt.s32.totalorder %s10, 2
    // Predicated region
    $region21: #{residual_block_forward.5} parent=5 // pred_check
      %p152 = pneg %p151
    $region22: #{residual_block_forward.5} parent=5 // pred_check_branch
      %154 = sbr.rel (%p152) target = $region24
    $region23: #{residual_block_forward.5} parent=5 // pred_region
      // Predicated region
      $region25: #{residual_block_forward.5} parent=23 // pred_check
        %p155 = pneg %p30
      $region26: #{residual_block_forward.5} parent=23 // pred_check_branch
        %157 = sbr.rel (%p155) target = $region28
      $region27: #{residual_block_forward.5} parent=23 // pred_region
        %p158 = scmp.lt.s32.totalorder %s10, 1
        %s159 = scalar_select %p158, %s10, 1
        %s160 = smul.addr %s159, 32
        %s161 = smul.addr %s160, 4
        %s162 = scalar_lea.vmem %s0, %s161
      $region28: #{residual_block_forward.5} parent=23 // pred_fallthru
        _
      // Predicated region
      $region29: #{residual_block_forward.5} parent=23 // pred_check
        %p163 = pneg %p98
      $region30: #{residual_block_forward.5} parent=23 // pred_check_branch
        %165 = sbr.rel (%p163) target = $region32
      $region31: #{residual_block_forward.5} parent=23 // pred_region
        %p166 = scmp.lt.s32.totalorder %s10, 1
        %s167 = scalar_select %p166, %s10, 1
        %s168 = scalar_lea.vmem %s3, %s167
      $region32: #{residual_block_forward.5} parent=23 // pred_fallthru
        _
    $region24: #{residual_block_forward.5} parent=5 // pred_fallthru
      _
    %p169 = scmp.le.s32.totalorder 1, %s10
    %p170 = scmp.lt.s32.totalorder %s10, 3
    %p171 = pnand %p169, %p170
    %p172 = pneg %p171
    // Predicated region
    $region33: #{residual_block_forward.5} parent=5 // pred_check
      _
    $region34: #{residual_block_forward.5} parent=5 // pred_check_branch
      %174 = sbr.rel (%p171) target = $region36
    $region35: #{residual_block_forward.5} parent=5 // pred_region
      %s175 = ssub.s32 %s10, 1
      %p176 = scmp.lt.s32.totalorder %s15, 1
      %s177 = scalar_select %p176, %s15, 1
      %s178 = smul.addr %s177, 32
      %s179 = smul.addr %s178, 4
      %s180 = scalar_lea.vmem %s0, %s179
      %p181 = pneg %p36
      %p182 = pneg %p33
      %p183 = pneg %p57
      %p184 = pneg %p54
      %p185 = pneg %p78
      %p186 = pneg %p75
      %p187 = scmp.lt.s32.totalorder %s15, 1
      %s188 = scalar_select %p187, %s15, 1
      %s189 = scalar_lea.vmem %s3, %s188
      %p190 = pneg %p104
      %p191 = pneg %p101
      %p192 = pneg %p130
      %p193 = pneg %p127
      %p194 = scmp.lt.s32.totalorder %s15, 1
      %s195 = scalar_select %p194, %s15, 1
      %s196 = smul.addr %s195, 72
      %s197 = smul.addr %s196, 4
      %s198 = scalar_lea.vmem %s4, %s197
      %p199 = scmp.lt.s32.totalorder %s15, 1
      %s200 = scalar_select %p199, %s15, 1
      %s201 = smul.addr %s200, 32
      %s202 = smul.addr %s201, 4
      %s203 = scalar_lea.vmem %s0, %s202
      %p204 = scmp.lt.s32.totalorder %s15, 1
      %s205 = scalar_select %p204, %s15, 1
      %s206 = scalar_lea.vmem %s3, %s205
      %p207 = scmp.lt.s32.totalorder %s15, 1
      %s208 = scalar_select %p207, %s15, 1
      %s209 = smul.addr %s208, 72
      %s210 = smul.addr %s209, 4
      %s211 = scalar_lea.vmem %s4, %s210
      %v213 = vld [vmem:[%s203] sm:$0xf]
      %v214 = vld [vmem:[%s203 + $0x4] sm:$0xf]
      %v215 = vld [vmem:[%s203 + $0x8] sm:$0xf]
      %v216 = vld [vmem:[%s203 + $0xc] sm:$0xf]
      %v217 = vld [vmem:[%s203 + $0x10] sm:$0xf]
      %v218 = vld [vmem:[%s203 + $0x14] sm:$0xf]
      %v219 = vld [vmem:[%s203 + $0x18] sm:$0xf]
      %v220 = vld [vmem:[%s203 + $0x1c] sm:$0xf]
      %v221 = vld [vmem:[%s203 + $0x20] sm:$0xf]
      %v222 = vld [vmem:[%s203 + $0x24] sm:$0xf]
      %v223 = vld [vmem:[%s203 + $0x28] sm:$0xf]
      %v224 = vld [vmem:[%s203 + $0x2c] sm:$0xf]
      %v225 = vld [vmem:[%s203 + $0x30] sm:$0xf]
      %v226 = vld [vmem:[%s203 + $0x34] sm:$0xf]
      %v227 = vld [vmem:[%s203 + $0x38] sm:$0xf]
      %v228 = vld [vmem:[%s203 + $0x3c] sm:$0xf]
      %v229 = vld [vmem:[%s203 + $0x40] sm:$0xf]
      %v230 = vld [vmem:[%s203 + $0x44] sm:$0xf]
      %v231 = vld [vmem:[%s203 + $0x48] sm:$0xf]
      %v232 = vld [vmem:[%s203 + $0x4c] sm:$0xf]
      %v233 = vld [vmem:[%s203 + $0x50] sm:$0xf]
      %v234 = vld [vmem:[%s203 + $0x54] sm:$0xf]
      %v235 = vld [vmem:[%s203 + $0x58] sm:$0xf]
      %v236 = vld [vmem:[%s203 + $0x5c] sm:$0xf]
      %v237 = vld [vmem:[%s203 + $0x60] sm:$0xf]
      %v238 = vld [vmem:[%s203 + $0x64] sm:$0xf]
      %v239 = vld [vmem:[%s203 + $0x68] sm:$0xf]
      %v240 = vld [vmem:[%s203 + $0x6c] sm:$0xf]
      %v241 = vld [vmem:[%s203 + $0x70] sm:$0xf]
      %v242 = vld [vmem:[%s203 + $0x74] sm:$0xf]
      %v243 = vld [vmem:[%s203 + $0x78] sm:$0xf]
      %v244 = vld [vmem:[%s203 + $0x7c] sm:$0xf]
      %v245 = vunpack.c.l.bf16 %v213
      %v246 = vunpack.c.l.bf16 %v214
      %v247 = vunpack.c.l.bf16 %v215
      %v248 = vunpack.c.l.bf16 %v216
      %v249 = vunpack.c.l.bf16 %v217
      %v250 = vunpack.c.l.bf16 %v218
      %v251 = vunpack.c.l.bf16 %v219
      %v252 = vunpack.c.l.bf16 %v220
      %v253 = vunpack.c.l.bf16 %v221
      %v254 = vunpack.c.l.bf16 %v222
      %v255 = vunpack.c.l.bf16 %v223
      %v256 = vunpack.c.l.bf16 %v224
      %v257 = vunpack.c.l.bf16 %v225
      %v258 = vunpack.c.l.bf16 %v226
      %v259 = vunpack.c.l.bf16 %v227
      %v260 = vunpack.c.l.bf16 %v228
      %v261 = vunpack.c.l.bf16 %v229
      %v262 = vunpack.c.l.bf16 %v230
      %v263 = vunpack.c.l.bf16 %v231
      %v264 = vunpack.c.l.bf16 %v232
      %v265 = vunpack.c.l.bf16 %v233
      %v266 = vunpack.c.l.bf16 %v234
      %v267 = vunpack.c.l.bf16 %v235
      %v268 = vunpack.c.l.bf16 %v236
      %v269 = vunpack.c.l.bf16 %v237
      %v270 = vunpack.c.l.bf16 %v238
      %v271 = vunpack.c.l.bf16 %v239
      %v272 = vunpack.c.l.bf16 %v240
      %v273 = vunpack.c.l.bf16 %v241
      %v274 = vunpack.c.l.bf16 %v242
      %v275 = vunpack.c.l.bf16 %v243
      %v276 = vunpack.c.l.bf16 %v244
      %v277 = vld [vmem:[%s1] sm:$0x1]
      %v279 = vlaneseq
      %v280 = vshrl.u32 %v279, 7
      %v281 = vsub.s32 0, %v280
      %v282 = vrot.slane %v277, %v281
      %v284 = vmul.f32 %v245, %v282
      %v285 = vmul.f32 %v246, %v282
      %v286 = vmul.f32 %v247, %v282
      %v287 = vmul.f32 %v248, %v282
      %v288 = vmul.f32 %v249, %v282
      %v289 = vmul.f32 %v250, %v282
      %v290 = vmul.f32 %v251, %v282
      %v291 = vmul.f32 %v252, %v282
      %v292 = vmul.f32 %v253, %v282
      %v293 = vmul.f32 %v254, %v282
      %v294 = vmul.f32 %v255, %v282
      %v295 = vmul.f32 %v256, %v282
      %v296 = vmul.f32 %v257, %v282
      %v297 = vmul.f32 %v258, %v282
      %v298 = vmul.f32 %v259, %v282
      %v299 = vmul.f32 %v260, %v282
      %v300 = vmul.f32 %v261, %v282
      %v301 = vmul.f32 %v262, %v282
      %v302 = vmul.f32 %v263, %v282
      %v303 = vmul.f32 %v264, %v282
      %v304 = vmul.f32 %v265, %v282
      %v305 = vmul.f32 %v266, %v282
      %v306 = vmul.f32 %v267, %v282
      %v307 = vmul.f32 %v268, %v282
      %v308 = vmul.f32 %v269, %v282
      %v309 = vmul.f32 %v270, %v282
      %v310 = vmul.f32 %v271, %v282
      %v311 = vmul.f32 %v272, %v282
      %v312 = vmul.f32 %v273, %v282
      %v313 = vmul.f32 %v274, %v282
      %v314 = vmul.f32 %v275, %v282
      %v315 = vmul.f32 %v276, %v282
      %v316 = vld [vmem:[%s2] sm:$0x1]
      %v318 = vlaneseq
      %v319 = vshrl.u32 %v318, 7
      %v320 = vsub.s32 0, %v319
      %v321 = vrot.slane %v316, %v320
      %v323 = vadd.f32 %v284, %v321
      %v324 = vadd.f32 %v285, %v321
      %v325 = vadd.f32 %v286, %v321
      %v326 = vadd.f32 %v287, %v321
      %v327 = vadd.f32 %v288, %v321
      %v328 = vadd.f32 %v289, %v321
      %v329 = vadd.f32 %v290, %v321
      %v330 = vadd.f32 %v291, %v321
      %v331 = vadd.f32 %v292, %v321
      %v332 = vadd.f32 %v293, %v321
      %v333 = vadd.f32 %v294, %v321
      %v334 = vadd.f32 %v295, %v321
      %v335 = vadd.f32 %v296, %v321
      %v336 = vadd.f32 %v297, %v321
      %v337 = vadd.f32 %v298, %v321
      %v338 = vadd.f32 %v299, %v321
      %v339 = vadd.f32 %v300, %v321
      %v340 = vadd.f32 %v301, %v321
      %v341 = vadd.f32 %v302, %v321
      %v342 = vadd.f32 %v303, %v321
      %v343 = vadd.f32 %v304, %v321
      %v344 = vadd.f32 %v305, %v321
      %v345 = vadd.f32 %v306, %v321
      %v346 = vadd.f32 %v307, %v321
      %v347 = vadd.f32 %v308, %v321
      %v348 = vadd.f32 %v309, %v321
      %v349 = vadd.f32 %v310, %v321
      %v350 = vadd.f32 %v311, %v321
      %v351 = vadd.f32 %v312, %v321
      %v352 = vadd.f32 %v313, %v321
      %v353 = vadd.f32 %v314, %v321
      %v354 = vadd.f32 %v315, %v321
      %v355 = vmax.f32 %v323, 0.0
      %v356 = vmax.f32 %v324, 0.0
      %v357 = vmax.f32 %v325, 0.0
      %v358 = vmax.f32 %v326, 0.0
      %v359 = vmax.f32 %v327, 0.0
      %v360 = vmax.f32 %v328, 0.0
      %v361 = vmax.f32 %v329, 0.0
      %v362 = vmax.f32 %v330, 0.0
      %v363 = vmax.f32 %v331, 0.0
      %v364 = vmax.f32 %v332, 0.0
      %v365 = vmax.f32 %v333, 0.0
      %v366 = vmax.f32 %v334, 0.0
      %v367 = vmax.f32 %v335, 0.0
      %v368 = vmax.f32 %v336, 0.0
      %v369 = vmax.f32 %v337, 0.0
      %v370 = vmax.f32 %v338, 0.0
      %v371 = vmax.f32 %v339, 0.0
      %v372 = vmax.f32 %v340, 0.0
      %v373 = vmax.f32 %v341, 0.0
      %v374 = vmax.f32 %v342, 0.0
      %v375 = vmax.f32 %v343, 0.0
      %v376 = vmax.f32 %v344, 0.0
      %v377 = vmax.f32 %v345, 0.0
      %v378 = vmax.f32 %v346, 0.0
      %v379 = vmax.f32 %v347, 0.0
      %v380 = vmax.f32 %v348, 0.0
      %v381 = vmax.f32 %v349, 0.0
      %v382 = vmax.f32 %v350, 0.0
      %v383 = vmax.f32 %v351, 0.0
      %v384 = vmax.f32 %v352, 0.0
      %v385 = vmax.f32 %v353, 0.0
      %v386 = vmax.f32 %v354, 0.0
      %v387 = vld [vmem:[%s206] sm:$0x1]
      %v389 = vlaneseq
      %v390 = vshrl.u32 %v389, 7
      %v391 = vsub.s32 0, %v390
      %v392 = vrot.slane %v387, %v391
      %v394 = vadd.f32 %v355, %v392
      %v395 = vadd.f32 %v356, %v392
      %v396 = vadd.f32 %v357, %v392
      %v397 = vadd.f32 %v358, %v392
      %v398 = vadd.f32 %v359, %v392
      %v399 = vadd.f32 %v360, %v392
      %v400 = vadd.f32 %v361, %v392
      %v401 = vadd.f32 %v362, %v392
      %v402 = vadd.f32 %v363, %v392
      %v403 = vadd.f32 %v364, %v392
      %v404 = vadd.f32 %v365, %v392
      %v405 = vadd.f32 %v366, %v392
      %v406 = vadd.f32 %v367, %v392
      %v407 = vadd.f32 %v368, %v392
      %v408 = vadd.f32 %v369, %v392
      %v409 = vadd.f32 %v370, %v392
      %v410 = vadd.f32 %v371, %v392
      %v411 = vadd.f32 %v372, %v392
      %v412 = vadd.f32 %v373, %v392
      %v413 = vadd.f32 %v374, %v392
      %v414 = vadd.f32 %v375, %v392
      %v415 = vadd.f32 %v376, %v392
      %v416 = vadd.f32 %v377, %v392
      %v417 = vadd.f32 %v378, %v392
      %v418 = vadd.f32 %v379, %v392
      %v419 = vadd.f32 %v380, %v392
      %v420 = vadd.f32 %v381, %v392
      %v421 = vadd.f32 %v382, %v392
      %v422 = vadd.f32 %v383, %v392
      %v423 = vadd.f32 %v384, %v392
      %v424 = vadd.f32 %v385, %v392
      %v425 = vadd.f32 %v386, %v392
      %v426 = vpack.c.bf16 %v395, %v394
      %v427 = vpack.c.bf16 %v397, %v396
      %v428 = vpack.c.bf16 %v399, %v398
      %v429 = vpack.c.bf16 %v401, %v400
      %v430 = vpack.c.bf16 %v403, %v402
      %v431 = vpack.c.bf16 %v405, %v404
      %v432 = vpack.c.bf16 %v407, %v406
      %v433 = vpack.c.bf16 %v409, %v408
      %v434 = vpack.c.bf16 %v411, %v410
      %v435 = vpack.c.bf16 %v413, %v412
      %v436 = vpack.c.bf16 %v415, %v414
      %v437 = vpack.c.bf16 %v417, %v416
      %v438 = vpack.c.bf16 %v419, %v418
      %v439 = vpack.c.bf16 %v421, %v420
      %v440 = vpack.c.bf16 %v423, %v422
      %v441 = vpack.c.bf16 %v425, %v424
      %v458 = vunpack.c.l.b16 %v426
      %v459 = vunpack.c.h.b16 %v426
      %v460 = vunpack.c.l.b16 %v427
      %v461 = vunpack.c.h.b16 %v427
      %v462 = vunpack.c.l.b16 %v428
      %v463 = vunpack.c.h.b16 %v428
      %v464 = vunpack.c.l.b16 %v429
      %v465 = vunpack.c.h.b16 %v429
      %v466 = vunpack.c.l.b16 %v430
      %v467 = vunpack.c.h.b16 %v430
      %v468 = vunpack.c.l.b16 %v431
      %v469 = vunpack.c.h.b16 %v431
      %v470 = vunpack.c.l.b16 %v432
      %v471 = vunpack.c.h.b16 %v432
      %v472 = vunpack.c.l.b16 %v433
      %v473 = vunpack.c.h.b16 %v433
      %v474 = vunpack.c.l.b16 %v434
      %v475 = vunpack.c.h.b16 %v434
      %v476 = vunpack.c.l.b16 %v435
      %v477 = vunpack.c.h.b16 %v435
      %v478 = vunpack.c.l.b16 %v436
      %v479 = vunpack.c.h.b16 %v436
      %v480 = vunpack.c.l.b16 %v437
      %v481 = vunpack.c.h.b16 %v437
      %v482 = vunpack.c.l.b16 %v438
      %v483 = vunpack.c.h.b16 %v438
      %v484 = vunpack.c.l.b16 %v439
      %v485 = vunpack.c.h.b16 %v439
      %v486 = vunpack.c.l.b16 %v440
      %v487 = vunpack.c.h.b16 %v440
      %v488 = vunpack.c.l.b16 %v441
      %v489 = vunpack.c.h.b16 %v441
      %v490 = vpack.c.b16 %v458, %v458
      %v491 = vpack.c.b16 %v459, %v459
      %v492 = vpack.c.b16 %v460, %v460
      %v493 = vpack.c.b16 %v461, %v461
      %v494 = vpack.c.b16 %v462, %v462
      %v495 = vpack.c.b16 %v463, %v463
      %v496 = vpack.c.b16 %v464, %v464
      %v497 = vpack.c.b16 %v465, %v465
      %v498 = vpack.c.b16 %v466, %v466
      %v499 = vpack.c.b16 %v467, %v467
      %v500 = vpack.c.b16 %v468, %v468
      %v501 = vpack.c.b16 %v469, %v469
      %v502 = vpack.c.b16 %v470, %v470
      %v503 = vpack.c.b16 %v471, %v471
      %v504 = vpack.c.b16 %v472, %v472
      %v505 = vpack.c.b16 %v473, %v473
      %v506 = vpack.c.b16 %v474, %v474
      %v507 = vpack.c.b16 %v475, %v475
      %v508 = vpack.c.b16 %v476, %v476
      %v509 = vpack.c.b16 %v477, %v477
      %v510 = vpack.c.b16 %v478, %v478
      %v511 = vpack.c.b16 %v479, %v479
      %v512 = vpack.c.b16 %v480, %v480
      %v513 = vpack.c.b16 %v481, %v481
      %v514 = vpack.c.b16 %v482, %v482
      %v515 = vpack.c.b16 %v483, %v483
      %v516 = vpack.c.b16 %v484, %v484
      %v517 = vpack.c.b16 %v485, %v485
      %v518 = vpack.c.b16 %v486, %v486
      %v519 = vpack.c.b16 %v487, %v487
      %v520 = vpack.c.b16 %v488, %v488
      %v521 = vpack.c.b16 %v489, %v489
      %554 = vst [vmem:[%s211] sm:$0xf] %v490
      %555 = vst [vmem:[%s211 + $0x4] sm:$0xf] %v491
      %556 = vst [vmem:[%s211 + $0x10] sm:$0xf] %v492
      %557 = vst [vmem:[%s211 + $0x14] sm:$0xf] %v493
      %558 = vst [vmem:[%s211 + $0x20] sm:$0xf] %v494
      %559 = vst [vmem:[%s211 + $0x24] sm:$0xf] %v495
      %560 = vst [vmem:[%s211 + $0x30] sm:$0xf] %v496
      %561 = vst [vmem:[%s211 + $0x34] sm:$0xf] %v497
      %562 = vst [vmem:[%s211 + $0x40] sm:$0xf] %v498
      %563 = vst [vmem:[%s211 + $0x44] sm:$0xf] %v499
      %564 = vst [vmem:[%s211 + $0x50] sm:$0xf] %v500
      %565 = vst [vmem:[%s211 + $0x54] sm:$0xf] %v501
      %566 = vst [vmem:[%s211 + $0x60] sm:$0xf] %v502
      %567 = vst [vmem:[%s211 + $0x64] sm:$0xf] %v503
      %568 = vst [vmem:[%s211 + $0x70] sm:$0xf] %v504
      %569 = vst [vmem:[%s211 + $0x74] sm:$0xf] %v505
      %570 = vst [vmem:[%s211 + $0x80] sm:$0xf] %v506
      %571 = vst [vmem:[%s211 + $0x84] sm:$0xf] %v507
      %572 = vst [vmem:[%s211 + $0x90] sm:$0xf] %v508
      %573 = vst [vmem:[%s211 + $0x94] sm:$0xf] %v509
      %574 = vst [vmem:[%s211 + $0xa0] sm:$0xf] %v510
      %575 = vst [vmem:[%s211 + $0xa4] sm:$0xf] %v511
      %576 = vst [vmem:[%s211 + $0xb0] sm:$0xf] %v512
      %577 = vst [vmem:[%s211 + $0xb4] sm:$0xf] %v513
      %578 = vst [vmem:[%s211 + $0xc0] sm:$0xf] %v514
      %579 = vst [vmem:[%s211 + $0xc4] sm:$0xf] %v515
      %580 = vst [vmem:[%s211 + $0xd0] sm:$0xf] %v516
      %581 = vst [vmem:[%s211 + $0xd4] sm:$0xf] %v517
      %582 = vst [vmem:[%s211 + $0xe0] sm:$0xf] %v518
      %583 = vst [vmem:[%s211 + $0xe4] sm:$0xf] %v519
      %584 = vst [vmem:[%s211 + $0xf0] sm:$0xf] %v520
      %585 = vst [vmem:[%s211 + $0xf4] sm:$0xf] %v521
      %s586 = scalar_lea.vmem %s211, 256
      %587 = vst [vmem:[%s586] sm:$0xf] 0
      %588 = vst [vmem:[%s586 + $0x4] sm:$0xf] 0
      %589 = vst [vmem:[%s586 + $0x8] sm:$0xf] 0
      %590 = vst [vmem:[%s586 + $0xc] sm:$0xf] 0
      %591 = vst [vmem:[%s586 + $0x10] sm:$0xf] 0
      %592 = vst [vmem:[%s586 + $0x14] sm:$0xf] 0
      %593 = vst [vmem:[%s586 + $0x18] sm:$0xf] 0
      %594 = vst [vmem:[%s586 + $0x1c] sm:$0xf] 0
      %595 = vst [vmem:[%s211 + $0x8] sm:$0xf] 0
      %596 = vst [vmem:[%s211 + $0xc] sm:$0xf] 0
      %597 = vst [vmem:[%s211 + $0x18] sm:$0xf] 0
      %598 = vst [vmem:[%s211 + $0x1c] sm:$0xf] 0
      %599 = vst [vmem:[%s211 + $0x28] sm:$0xf] 0
      %600 = vst [vmem:[%s211 + $0x2c] sm:$0xf] 0
      %601 = vst [vmem:[%s211 + $0x38] sm:$0xf] 0
      %602 = vst [vmem:[%s211 + $0x3c] sm:$0xf] 0
      %603 = vst [vmem:[%s211 + $0x48] sm:$0xf] 0
      %604 = vst [vmem:[%s211 + $0x4c] sm:$0xf] 0
      %605 = vst [vmem:[%s211 + $0x58] sm:$0xf] 0
      %606 = vst [vmem:[%s211 + $0x5c] sm:$0xf] 0
      %607 = vst [vmem:[%s211 + $0x68] sm:$0xf] 0
      %608 = vst [vmem:[%s211 + $0x6c] sm:$0xf] 0
      %609 = vst [vmem:[%s211 + $0x78] sm:$0xf] 0
      %610 = vst [vmem:[%s211 + $0x7c] sm:$0xf] 0
      %611 = vst [vmem:[%s211 + $0x88] sm:$0xf] 0
      %612 = vst [vmem:[%s211 + $0x8c] sm:$0xf] 0
      %613 = vst [vmem:[%s211 + $0x98] sm:$0xf] 0
      %614 = vst [vmem:[%s211 + $0x9c] sm:$0xf] 0
      %615 = vst [vmem:[%s211 + $0xa8] sm:$0xf] 0
      %616 = vst [vmem:[%s211 + $0xac] sm:$0xf] 0
      %617 = vst [vmem:[%s211 + $0xb8] sm:$0xf] 0
      %618 = vst [vmem:[%s211 + $0xbc] sm:$0xf] 0
      %619 = vst [vmem:[%s211 + $0xc8] sm:$0xf] 0
      %620 = vst [vmem:[%s211 + $0xcc] sm:$0xf] 0
      %621 = vst [vmem:[%s211 + $0xd8] sm:$0xf] 0
      %622 = vst [vmem:[%s211 + $0xdc] sm:$0xf] 0
      %623 = vst [vmem:[%s211 + $0xe8] sm:$0xf] 0
      %624 = vst [vmem:[%s211 + $0xec] sm:$0xf] 0
      %625 = vst [vmem:[%s211 + $0xf8] sm:$0xf] 0
      %626 = vst [vmem:[%s211 + $0xfc] sm:$0xf] 0
      %p627 = scmp.lt.s32.totalorder %s15, 1
      %s628 = scalar_select %p627, %s15, 1
      %s629 = smul.addr %s628, 72
      %s630 = smul.addr %s629, 4
      %s631 = scalar_lea.vmem %s4, %s630
      // Predicated region
      $region37: #{residual_block_forward.5} parent=35 // pred_check
        %p632 = pneg %p127
      $region38: #{residual_block_forward.5} parent=35 // pred_check_branch
        %634 = sbr.rel (%p632) target = $region40
      $region39: #{residual_block_forward.5} parent=35 // pred_region
        _
      $region40: #{residual_block_forward.5} parent=35 // pred_fallthru
        _
    $region36: #{residual_block_forward.5} parent=5 // pred_fallthru
      _
    %p635 = scmp.le.s32.totalorder 2, %s10
    // Predicated region
    $region41: #{residual_block_forward.5} parent=5 // pred_check
      %p636 = pneg %p635
    $region42: #{residual_block_forward.5} parent=5 // pred_check_branch
      %638 = sbr.rel (%p636) target = $region44
    $region43: #{residual_block_forward.5} parent=5 // pred_region
      %s639 = ssub.s32 %s10, 2
      // Predicated region
      $region45: #{residual_block_forward.5} parent=43 // pred_check
        %p640 = pneg %p133
      $region46: #{residual_block_forward.5} parent=43 // pred_check_branch
        %642 = sbr.rel (%p640) target = $region48
      $region47: #{residual_block_forward.5} parent=43 // pred_region
        %p643 = scmp.lt.s32.totalorder %s16, 1
        %s644 = scalar_select %p643, %s16, 1
        %s645 = smul.addr %s644, 72
        %s646 = smul.addr %s645, 4
        %s647 = scalar_lea.vmem %s4, %s646
      $region48: #{residual_block_forward.5} parent=43 // pred_fallthru
        _
    $region44: #{residual_block_forward.5} parent=5 // pred_fallthru
      _
  $region6: #{residual_block_forward.5} parent=0 // loop_footer
    %s14 = sadd.s32 1, %s10
  $region7: #{residual_block_forward.5} parent=0 // loop_footer_branch
    %9 = sbr.rel target = $region3
  $region8: #{residual_block_forward.5} parent=0 // loop_exit
    _

// kernel: residual_block_forward.7
$region0: #{residual_block_forward.7}
  #allocation0 [shape = 'u32[]', space=smem, size = 0x4, offset = 0x4, fixed_abs, tag = 'smem constant byte address 0x4 - core index']
  #allocation1 [shape = 'u32[144,128]{1,0:T(1,128)}', space=vmem, size = 0x12000, scoped, tag = 'internal scratch']
  %s0 = inlined_call_operand.vmem [shape: bf16[2,16,16,128], index: 0, kind: input, shape index: {}]
  %s1 = inlined_call_operand.vmem [shape: f32[1,128], index: 1, kind: input, shape index: {}]
  %s2 = inlined_call_operand.vmem [shape: f32[1,128], index: 2, kind: input, shape index: {}]
  %s3 = inlined_call_operand.vmem [shape: bf16[2,16,16,128], index: 3, kind: input, shape index: {}]
  %s4 = inlined_call_operand.vmem [shape: bf16[128,128], index: 4, kind: input, shape index: {}]
  %s5 = inlined_call_operand.vmem [shape: f32[1,128], index: 5, kind: input, shape index: {}]
  %s6 = inlined_call_operand.vmem [shape: f32[2,16,16,128], index: 6, kind: output, shape index: {}]
  %s7 = sld [smem:[#allocation0]]
  $region57: #{residual_block_forward.7} parent=0
    _
  %s9 = ssub.s32 1, %s7
  %s10 = scalar_select 0, %s9, %s7
  loop: start=0, step=1, limit=4
  $region2: #{residual_block_forward.7} parent=0 // loop_pre_header
    _
  $region3: #{residual_block_forward.7} parent=0 // loop_header
    %s12 = sphi 0, %s16
    %p13 = scmp.ge.s32.totalorder %s12, 4
    %s22 = sphi 0, %s24
    %s25 = sphi 0, %s22
    %s26 = sphi 0, %s25
    %s42 = sphi 0, %s26
    %s46 = sphi 0, %s46
    %s48 = sphi 0, %s46
    %s49 = sphi 0, %s48
    %s63 = sphi 0, %s49
    %s67 = sphi 0, %s67
    %s69 = sphi 0, %s67
    %s70 = sphi 0, %s69
    %s84 = sphi 0, %s70
    %s90 = sphi 0, %s92
    %s93 = sphi 0, %s90
    %s94 = sphi 0, %s93
    %s110 = sphi 0, %s94
    %s114 = sphi 0, %s114
    %s116 = sphi 0, %s114
    %s117 = sphi 0, %s116
    %s131 = sphi 0, %s117
    %s135 = sphi 0, %s135
    %s137 = sphi 0, %s135
    %s138 = sphi 0, %s137
    %s152 = sphi 0, %s138
    %s158 = sphi 0, %s160
    %s161 = sphi 0, %s158
    %s162 = sphi 0, %s161
    %s178 = sphi 0, %s162
  $region4: #{residual_block_forward.7} parent=0 // loop_header_branch
    %15 = sbr.rel (%p13) target = $region8
  $region5: #{residual_block_forward.7} parent=0 // loop_body
    %s17 = ssub.s32 %s12, 1
    %s18 = ssub.s32 %s12, 2
    %s19 = sadd.s32 %s12, 1
    %s20 = ssub.s32 %s12, %s19
    %p21 = scmp.eq.s32.totalorder %s20, 0
    %s23 = sadd.s32 %s22, 1
    %s24 = scalar_select %p21, %s22, %s23
    %p27 = pneg %p21
    %p28 = scmp.eq.s32.totalorder %s12, 1
    %p29 = por %p27, %p28
    %p30 = scmp.ne.s32.totalorder %s22, %s25
    %p31 = scmp.eq.s32.totalorder %s12, 0
    %p32 = por %p30, %p31
    %p33 = scmp.ne.s32.totalorder %s22, %s25
    %p34 = scmp.eq.s32.totalorder %s17, 1
    %p35 = por %p33, %p34
    %p36 = scmp.ne.s32.totalorder %s25, %s26
    %p37 = scmp.eq.s32.totalorder %s17, 0
    %p38 = por %p36, %p37
    %p39 = scmp.ne.s32.totalorder %s25, %s26
    %p40 = scmp.eq.s32.totalorder %s18, 1
    %p41 = por %p39, %p40
    %p43 = scmp.ne.s32.totalorder %s26, %s42
    %p44 = scmp.eq.s32.totalorder %s18, 0
    %p45 = por %p43, %p44
    %s47 = sadd.s32 %s46, 1
    %p50 = scmp.eq.s32.totalorder %s12, 1
    %p51 = scmp.ne.s32.totalorder %s46, %s48
    %p52 = scmp.eq.s32.totalorder %s12, 0
    %p53 = por %p51, %p52
    %p54 = scmp.ne.s32.totalorder %s46, %s48
    %p55 = scmp.eq.s32.totalorder %s17, 1
    %p56 = por %p54, %p55
    %p57 = scmp.ne.s32.totalorder %s48, %s49
    %p58 = scmp.eq.s32.totalorder %s17, 0
    %p59 = por %p57, %p58
    %p60 = scmp.ne.s32.totalorder %s48, %s49
    %p61 = scmp.eq.s32.totalorder %s18, 1
    %p62 = por %p60, %p61
    %p64 = scmp.ne.s32.totalorder %s49, %s63
    %p65 = scmp.eq.s32.totalorder %s18, 0
    %p66 = por %p64, %p65
    %s68 = sadd.s32 %s67, 1
    %p71 = scmp.eq.s32.totalorder %s12, 1
    %p72 = scmp.ne.s32.totalorder %s67, %s69
    %p73 = scmp.eq.s32.totalorder %s12, 0
    %p74 = por %p72, %p73
    %p75 = scmp.ne.s32.totalorder %s67, %s69
    %p76 = scmp.eq.s32.totalorder %s17, 1
    %p77 = por %p75, %p76
    %p78 = scmp.ne.s32.totalorder %s69, %s70
    %p79 = scmp.eq.s32.totalorder %s17, 0
    %p80 = por %p78, %p79
    %p81 = scmp.ne.s32.totalorder %s69, %s70
    %p82 = scmp.eq.s32.totalorder %s18, 1
    %p83 = por %p81, %p82
    %p85 = scmp.ne.s32.totalorder %s70, %s84
    %p86 = scmp.eq.s32.totalorder %s18, 0
    %p87 = por %p85, %p86
    %s88 = ssub.s32 %s12, %s19
    %p89 = scmp.eq.s32.totalorder %s88, 0
    %s91 = sadd.s32 %s90, 1
    %s92 = scalar_select %p89, %s90, %s91
    %p95 = pneg %p89
    %p96 = scmp.eq.s32.totalorder %s12, 1
    %p97 = por %p95, %p96
    %p98 = scmp.ne.s32.totalorder %s90, %s93
    %p99 = scmp.eq.s32.totalorder %s12, 0
    %p100 = por %p98, %p99
    %p101 = scmp.ne.s32.totalorder %s90, %s93
    %p102 = scmp.eq.s32.totalorder %s17, 1
    %p103 = por %p101, %p102
    %p104 = scmp.ne.s32.totalorder %s93, %s94
    %p105 = scmp.eq.s32.totalorder %s17, 0
    %p106 = por %p104, %p105
    %p107 = scmp.ne.s32.totalorder %s93, %s94
    %p108 = scmp.eq.s32.totalorder %s18, 1
    %p109 = por %p107, %p108
    %p111 = scmp.ne.s32.totalorder %s94, %s110
    %p112 = scmp.eq.s32.totalorder %s18, 0
    %p113 = por %p111, %p112
    %s115 = sadd.s32 %s114, 1
    %p118 = scmp.eq.s32.totalorder %s12, 1
    %p119 = scmp.ne.s32.totalorder %s114, %s116
    %p120 = scmp.eq.s32.totalorder %s12, 0
    %p121 = por %p119, %p120
    %p122 = scmp.ne.s32.totalorder %s114, %s116
    %p123 = scmp.eq.s32.totalorder %s17, 1
    %p124 = por %p122, %p123
    %p125 = scmp.ne.s32.totalorder %s116, %s117
    %p126 = scmp.eq.s32.totalorder %s17, 0
    %p127 = por %p125, %p126
    %p128 = scmp.ne.s32.totalorder %s116, %s117
    %p129 = scmp.eq.s32.totalorder %s18, 1
    %p130 = por %p128, %p129
    %p132 = scmp.ne.s32.totalorder %s117, %s131
    %p133 = scmp.eq.s32.totalorder %s18, 0
    %p134 = por %p132, %p133
    %s136 = sadd.s32 %s135, 1
    %p139 = scmp.eq.s32.totalorder %s12, 1
    %p140 = scmp.ne.s32.totalorder %s135, %s137
    %p141 = scmp.eq.s32.totalorder %s12, 0
    %p142 = por %p140, %p141
    %p143 = scmp.ne.s32.totalorder %s135, %s137
    %p144 = scmp.eq.s32.totalorder %s17, 1
    %p145 = por %p143, %p144
    %p146 = scmp.ne.s32.totalorder %s137, %s138
    %p147 = scmp.eq.s32.totalorder %s17, 0
    %p148 = por %p146, %p147
    %p149 = scmp.ne.s32.totalorder %s137, %s138
    %p150 = scmp.eq.s32.totalorder %s18, 1
    %p151 = por %p149, %p150
    %p153 = scmp.ne.s32.totalorder %s138, %s152
    %p154 = scmp.eq.s32.totalorder %s18, 0
    %p155 = por %p153, %p154
    %s156 = ssub.s32 %s12, %s19
    %p157 = scmp.eq.s32.totalorder %s156, 0
    %s159 = sadd.s32 %s158, 1
    %s160 = scalar_select %p157, %s158, %s159
    %p163 = pneg %p157
    %p164 = scmp.eq.s32.totalorder %s12, 1
    %p165 = por %p163, %p164
    %p166 = scmp.ne.s32.totalorder %s158, %s161
    %p167 = scmp.eq.s32.totalorder %s12, 0
    %p168 = por %p166, %p167
    %p169 = scmp.ne.s32.totalorder %s158, %s161
    %p170 = scmp.eq.s32.totalorder %s17, 1
    %p171 = por %p169, %p170
    %p172 = scmp.ne.s32.totalorder %s161, %s162
    %p173 = scmp.eq.s32.totalorder %s17, 0
    %p174 = por %p172, %p173
    %p175 = scmp.ne.s32.totalorder %s161, %s162
    %p176 = scmp.eq.s32.totalorder %s18, 1
    %p177 = por %p175, %p176
    %p179 = scmp.ne.s32.totalorder %s162, %s178
    %p180 = scmp.eq.s32.totalorder %s18, 0
    %p181 = por %p179, %p180
    %p182 = scmp.le.s32.totalorder 1, %s12
    %p183 = scmp.lt.s32.totalorder %s12, 3
    %p184 = pnand %p182, %p183
    %p185 = pneg %p184
    // Predicated region
    $region9: #{residual_block_forward.7} parent=5 // pred_check
      _
    $region10: #{residual_block_forward.7} parent=5 // pred_check_branch
      %187 = sbr.rel (%p184) target = $region12
    $region11: #{residual_block_forward.7} parent=5 // pred_region
      %s188 = ssub.s32 %s12, 1
      // Predicated region
      $region13: #{residual_block_forward.7} parent=11 // pred_check
        %p189 = pneg %p59
      $region14: #{residual_block_forward.7} parent=11 // pred_check_branch
        %191 = sbr.rel (%p189) target = $region16
      $region15: #{residual_block_forward.7} parent=11 // pred_region
        _
      $region16: #{residual_block_forward.7} parent=11 // pred_fallthru
        _
      // Predicated region
      $region17: #{residual_block_forward.7} parent=11 // pred_check
        %p192 = pneg %p80
      $region18: #{residual_block_forward.7} parent=11 // pred_check_branch
        %194 = sbr.rel (%p192) target = $region20
      $region19: #{residual_block_forward.7} parent=11 // pred_region
        _
      $region20: #{residual_block_forward.7} parent=11 // pred_fallthru
        _
      // Predicated region
      $region21: #{residual_block_forward.7} parent=11 // pred_check
        %p195 = pneg %p127
      $region22: #{residual_block_forward.7} parent=11 // pred_check_branch
        %197 = sbr.rel (%p195) target = $region24
      $region23: #{residual_block_forward.7} parent=11 // pred_region
        _
      $region24: #{residual_block_forward.7} parent=11 // pred_fallthru
        _
      // Predicated region
      $region25: #{residual_block_forward.7} parent=11 // pred_check
        %p198 = pneg %p148
      $region26: #{residual_block_forward.7} parent=11 // pred_check_branch
        %200 = sbr.rel (%p198) target = $region28
      $region27: #{residual_block_forward.7} parent=11 // pred_region
        _
      $region28: #{residual_block_forward.7} parent=11 // pred_fallthru
        _
    $region12: #{residual_block_forward.7} parent=5 // pred_fallthru
      _
    %p201 = scmp.lt.s32.totalorder %s12, 2
    // Predicated region
    $region29: #{residual_block_forward.7} parent=5 // pred_check
      %p202 = pneg %p201
    $region30: #{residual_block_forward.7} parent=5 // pred_check_branch
      %204 = sbr.rel (%p202) target = $region32
    $region31: #{residual_block_forward.7} parent=5 // pred_region
      // Predicated region
      $region33: #{residual_block_forward.7} parent=31 // pred_check
        %p205 = pneg %p32
      $region34: #{residual_block_forward.7} parent=31 // pred_check_branch
        %207 = sbr.rel (%p205) target = $region36
      $region35: #{residual_block_forward.7} parent=31 // pred_region
        %p208 = scmp.lt.s32.totalorder %s12, 1
        %s209 = scalar_select %p208, %s12, 1
        %s210 = smul.addr %s209, 32
        %s211 = smul.addr %s210, 4
        %s212 = scalar_lea.vmem %s0, %s211
      $region36: #{residual_block_forward.7} parent=31 // pred_fallthru
        _
      // Predicated region
      $region37: #{residual_block_forward.7} parent=31 // pred_check
        %p213 = pneg %p100
      $region38: #{residual_block_forward.7} parent=31 // pred_check_branch
        %215 = sbr.rel (%p213) target = $region40
      $region39: #{residual_block_forward.7} parent=31 // pred_region
        %p216 = scmp.lt.s32.totalorder %s12, 1
        %s217 = scalar_select %p216, %s12, 1
        %s218 = smul.addr %s217, 32
        %s219 = smul.addr %s218, 4
        %s220 = scalar_lea.vmem %s3, %s219
      $region40: #{residual_block_forward.7} parent=31 // pred_fallthru
        _
    $region32: #{residual_block_forward.7} parent=5 // pred_fallthru
      _
    %p221 = scmp.le.s32.totalorder 1, %s12
    %p222 = scmp.lt.s32.totalorder %s12, 3
    %p223 = pnand %p221, %p222
    %p224 = pneg %p223
    // Predicated region
    $region41: #{residual_block_forward.7} parent=5 // pred_check
      _
    $region42: #{residual_block_forward.7} parent=5 // pred_check_branch
      %226 = sbr.rel (%p223) target = $region44
    $region43: #{residual_block_forward.7} parent=5 // pred_region
      %s227 = ssub.s32 %s12, 1
      %p228 = scmp.lt.s32.totalorder %s17, 1
      %s229 = scalar_select %p228, %s17, 1
      %s230 = smul.addr %s229, 32
      %s231 = smul.addr %s230, 4
      %s232 = scalar_lea.vmem %s0, %s231
      %p233 = pneg %p38
      %p234 = pneg %p35
      %p235 = pneg %p59
      %p236 = pneg %p56
      %p237 = pneg %p80
      %p238 = pneg %p77
      %p239 = scmp.lt.s32.totalorder %s17, 1
      %s240 = scalar_select %p239, %s17, 1
      %s241 = smul.addr %s240, 32
      %s242 = smul.addr %s241, 4
      %s243 = scalar_lea.vmem %s3, %s242
      %p244 = pneg %p106
      %p245 = pneg %p103
      %p246 = pneg %p127
      %p247 = pneg %p124
      %p248 = pneg %p148
      %p249 = pneg %p145
      %p250 = pneg %p174
      %p251 = pneg %p171
      %p252 = scmp.lt.s32.totalorder %s17, 1
      %s253 = scalar_select %p252, %s17, 1
      %s254 = smul.addr %s253, 32
      %s255 = smul.addr %s254, 8
      %s256 = scalar_lea.vmem %s6, %s255
      %p257 = scmp.lt.s32.totalorder %s17, 1
      %s258 = scalar_select %p257, %s17, 1
      %s259 = smul.addr %s258, 32
      %s260 = smul.addr %s259, 4
      %s261 = scalar_lea.vmem %s0, %s260
      %p262 = scmp.lt.s32.totalorder %s17, 1
      %s263 = scalar_select %p262, %s17, 1
      %s264 = smul.addr %s263, 32
      %s265 = smul.addr %s264, 4
      %s266 = scalar_lea.vmem %s3, %s265
      %p267 = scmp.lt.s32.totalorder %s17, 1
      %s268 = scalar_select %p267, %s17, 1
      %s269 = smul.addr %s268, 32
      %s270 = smul.addr %s269, 8
      %s271 = scalar_lea.vmem %s6, %s270
      %v273 = vld [vmem:[%s266] sm:$0xf]
      %v274 = vld [vmem:[%s266 + $0x4] sm:$0xf]
      %v275 = vld [vmem:[%s266 + $0x8] sm:$0xf]
      %v276 = vld [vmem:[%s266 + $0xc] sm:$0xf]
      %v277 = vld [vmem:[%s266 + $0x10] sm:$0xf]
      %v278 = vld [vmem:[%s266 + $0x14] sm:$0xf]
      %v279 = vld [vmem:[%s266 + $0x18] sm:$0xf]
      %v280 = vld [vmem:[%s266 + $0x1c] sm:$0xf]
      %v281 = vld [vmem:[%s266 + $0x20] sm:$0xf]
      %v282 = vld [vmem:[%s266 + $0x24] sm:$0xf]
      %v283 = vld [vmem:[%s266 + $0x28] sm:$0xf]
      %v284 = vld [vmem:[%s266 + $0x2c] sm:$0xf]
      %v285 = vld [vmem:[%s266 + $0x30] sm:$0xf]
      %v286 = vld [vmem:[%s266 + $0x34] sm:$0xf]
      %v287 = vld [vmem:[%s266 + $0x38] sm:$0xf]
      %v288 = vld [vmem:[%s266 + $0x3c] sm:$0xf]
      %v289 = vld [vmem:[%s266 + $0x40] sm:$0xf]
      %v290 = vld [vmem:[%s266 + $0x44] sm:$0xf]
      %v291 = vld [vmem:[%s266 + $0x48] sm:$0xf]
      %v292 = vld [vmem:[%s266 + $0x4c] sm:$0xf]
      %v293 = vld [vmem:[%s266 + $0x50] sm:$0xf]
      %v294 = vld [vmem:[%s266 + $0x54] sm:$0xf]
      %v295 = vld [vmem:[%s266 + $0x58] sm:$0xf]
      %v296 = vld [vmem:[%s266 + $0x5c] sm:$0xf]
      %v297 = vld [vmem:[%s266 + $0x60] sm:$0xf]
      %v298 = vld [vmem:[%s266 + $0x64] sm:$0xf]
      %v299 = vld [vmem:[%s266 + $0x68] sm:$0xf]
      %v300 = vld [vmem:[%s266 + $0x6c] sm:$0xf]
      %v301 = vld [vmem:[%s266 + $0x70] sm:$0xf]
      %v302 = vld [vmem:[%s266 + $0x74] sm:$0xf]
      %v303 = vld [vmem:[%s266 + $0x78] sm:$0xf]
      %v304 = vld [vmem:[%s266 + $0x7c] sm:$0xf]
      %v305 = vld [vmem:[%s4] sm:$0xf]
      %v306 = vld [vmem:[%s4 + $0x4] sm:$0xf]
      %v307 = vld [vmem:[%s4 + $0x8] sm:$0xf]
      %v308 = vld [vmem:[%s4 + $0xc] sm:$0xf]
      %v309 = vld [vmem:[%s4 + $0x10] sm:$0xf]
      %v310 = vld [vmem:[%s4 + $0x14] sm:$0xf]
      %v311 = vld [vmem:[%s4 + $0x18] sm:$0xf]
      %v312 = vld [vmem:[%s4 + $0x1c] sm:$0xf]
      %v313 = vld [vmem:[%s4 + $0x20] sm:$0xf]
      %v314 = vld [vmem:[%s4 + $0x24] sm:$0xf]
      %v315 = vld [vmem:[%s4 + $0x28] sm:$0xf]
      %v316 = vld [vmem:[%s4 + $0x2c] sm:$0xf]
      %v317 = vld [vmem:[%s4 + $0x30] sm:$0xf]
      %v318 = vld [vmem:[%s4 + $0x34] sm:$0xf]
      %v319 = vld [vmem:[%s4 + $0x38] sm:$0xf]
      %v320 = vld [vmem:[%s4 + $0x3c] sm:$0xf]
      %v321 = vld [vmem:[%s5] sm:$0x1]
      %v323 = vlaneseq
      %v324 = vshrl.u32 %v323, 7
      %v325 = vsub.s32 0, %v324
      %v326 = vrot.slane %v321, %v325
      %v360 = vunpack.c.l.b16 %v273
      %v361 = vunpack.c.l.b16 %v274
      %v362 = vunpack.c.l.b16 %v275
      %v363 = vunpack.c.l.b16 %v276
      %v364 = vunpack.c.l.b16 %v277
      %v365 = vunpack.c.l.b16 %v278
      %v366 = vunpack.c.l.b16 %v279
      %v367 = vunpack.c.l.b16 %v280
      %v368 = vunpack.c.l.b16 %v281
      %v369 = vunpack.c.l.b16 %v282
      %v370 = vunpack.c.l.b16 %v283
      %v371 = vunpack.c.l.b16 %v284
      %v372 = vunpack.c.l.b16 %v285
      %v373 = vunpack.c.l.b16 %v286
      %v374 = vunpack.c.l.b16 %v287
      %v375 = vunpack.c.l.b16 %v288
      %v376 = vunpack.c.l.b16 %v289
      %v377 = vunpack.c.l.b16 %v290
      %v378 = vunpack.c.l.b16 %v291
      %v379 = vunpack.c.l.b16 %v292
      %v380 = vunpack.c.l.b16 %v293
      %v381 = vunpack.c.l.b16 %v294
      %v382 = vunpack.c.l.b16 %v295
      %v383 = vunpack.c.l.b16 %v296
      %v384 = vunpack.c.l.b16 %v297
      %v385 = vunpack.c.l.b16 %v298
      %v386 = vunpack.c.l.b16 %v299
      %v387 = vunpack.c.l.b16 %v300
      %v388 = vunpack.c.l.b16 %v301
      %v389 = vunpack.c.l.b16 %v302
      %v390 = vunpack.c.l.b16 %v303
      %v391 = vunpack.c.l.b16 %v304
      %v392 = vpack.c.b16 %v361, %v360
      %v393 = vpack.c.b16 %v363, %v362
      %v394 = vpack.c.b16 %v365, %v364
      %v395 = vpack.c.b16 %v367, %v366
      %v396 = vpack.c.b16 %v369, %v368
      %v397 = vpack.c.b16 %v371, %v370
      %v398 = vpack.c.b16 %v373, %v372
      %v399 = vpack.c.b16 %v375, %v374
      %v400 = vpack.c.b16 %v377, %v376
      %v401 = vpack.c.b16 %v379, %v378
      %v402 = vpack.c.b16 %v381, %v380
      %v403 = vpack.c.b16 %v383, %v382
      %v404 = vpack.c.b16 %v385, %v384
      %v405 = vpack.c.b16 %v387, %v386
      %v406 = vpack.c.b16 %v389, %v388
      %v407 = vpack.c.b16 %v391, %v390
      %v440 = vunpack.c.l.b16 %v305
      %v441 = vunpack.c.l.b16 %v306
      %v442 = vunpack.c.l.b16 %v307
      %v443 = vunpack.c.l.b16 %v308
      %v444 = vunpack.c.l.b16 %v309
      %v445 = vunpack.c.l.b16 %v310
      %v446 = vunpack.c.l.b16 %v311
      %v447 = vunpack.c.l.b16 %v312
      %v448 = vunpack.c.l.b16 %v313
      %v449 = vunpack.c.l.b16 %v314
      %v450 = vunpack.c.l.b16 %v315
      %v451 = vunpack.c.l.b16 %v316
      %v452 = vunpack.c.l.b16 %v317
      %v453 = vunpack.c.l.b16 %v318
      %v454 = vunpack.c.l.b16 %v319
      %v455 = vunpack.c.l.b16 %v320
      %v456 = vpack.c.b16 %v441, %v440
      %v457 = vpack.c.b16 %v443, %v442
      %v458 = vpack.c.b16 %v445, %v444
      %v459 = vpack.c.b16 %v447, %v446
      %v460 = vpack.c.b16 %v449, %v448
      %v461 = vpack.c.b16 %v451, %v450
      %v462 = vpack.c.b16 %v453, %v452
      %v463 = vpack.c.b16 %v455, %v454
      %472 = vmatprep.subr.bf16.mxu0 0
      %473 = vmatpush1.bf16.msra.mxu0 %v456
      %474 = vmatprep.subr.bf16.mxu0 0
      %475 = vmatpush1.bf16.msra.mxu0 %v457
      %476 = vmatprep.subr.bf16.mxu0 0
      %477 = vmatpush1.bf16.msra.mxu0 %v458
      %478 = vmatprep.subr.bf16.mxu0 0
      %479 = vmatpush1.bf16.msra.mxu0 %v459
      %480 = vmatprep.subr.bf16.mxu0 0
      %481 = vmatpush1.bf16.msra.mxu0 %v460
      %482 = vmatprep.subr.bf16.mxu0 0
      %483 = vmatpush1.bf16.msra.mxu0 %v461
      %484 = vmatprep.subr.bf16.mxu0 0
      %485 = vmatpush1.bf16.msra.mxu0 %v462
      %486 = vmatprep.subr.bf16.mxu0 0
      %487 = vmatpush1.bf16.msra.mxu0 %v463
      %488 = vmatprep.subr.bf16.mxu0 0
      %489 = vmatpush1.bf16.msra.mxu0 0
      %490 = vmatprep.subr.bf16.mxu0 0
      %491 = vmatpush1.bf16.msra.mxu0 0
      %492 = vmatprep.subr.bf16.mxu0 0
      %493 = vmatpush1.bf16.msra.mxu0 0
      %494 = vmatprep.subr.bf16.mxu0 0
      %495 = vmatpush1.bf16.msra.mxu0 0
      %496 = vmatprep.subr.bf16.mxu0 0
      %497 = vmatpush1.bf16.msra.mxu0 0
      %498 = vmatprep.subr.bf16.mxu0 0
      %499 = vmatpush1.bf16.msra.mxu0 0
      %500 = vmatprep.subr.bf16.mxu0 0
      %501 = vmatpush1.bf16.msra.mxu0 0
      %502 = vmatprep.subr.bf16.mxu0 0
      %503 = vmatpush1.bf16.msra.mxu0 0
      %504 = vmatprep.mubr.bf16.mxu0 0
      %505 = vmatmul.mubr.bf16.gmra.mrb[0].mxu0 %v392
      %v506 = vpop.f32.mrb[0].mxu0
      %v507 = vadd.f32 %v326, %v506
      %v508 = vpop.f32.mrb[0].mxu0
      %v509 = vpop.f32.mrb[0].mxu0
      %v510 = vadd.f32 %v326, %v509
      %v511 = vpop.f32.mrb[0].mxu0
      %512 = vmatprep.mubr.bf16.mxu0 0
      %513 = vmatmul.mubr.bf16.gmra.mrb[0].mxu0 %v393
      %v514 = vpop.f32.mrb[0].mxu0
      %v515 = vadd.f32 %v326, %v514
      %v516 = vpop.f32.mrb[0].mxu0
      %v517 = vpop.f32.mrb[0].mxu0
      %v518 = vadd.f32 %v326, %v517
      %v519 = vpop.f32.mrb[0].mxu0
      %520 = vmatprep.mubr.bf16.mxu0 0
      %521 = vmatmul.mubr.bf16.gmra.mrb[0].mxu0 %v394
      %v522 = vpop.f32.mrb[0].mxu0
      %v523 = vadd.f32 %v326, %v522
      %v524 = vpop.f32.mrb[0].mxu0
      %v525 = vpop.f32.mrb[0].mxu0
      %v526 = vadd.f32 %v326, %v525
      %v527 = vpop.f32.mrb[0].mxu0
      %528 = vmatprep.mubr.bf16.mxu0 0
      %529 = vmatmul.mubr.bf16.gmra.mrb[0].mxu0 %v395
      %v530 = vpop.f32.mrb[0].mxu0
      %v531 = vadd.f32 %v326, %v530
      %v532 = vpop.f32.mrb[0].mxu0
      %v533 = vpop.f32.mrb[0].mxu0
      %v534 = vadd.f32 %v326, %v533
      %v535 = vpop.f32.mrb[0].mxu0
      %536 = vmatprep.mubr.bf16.mxu0 0
      %537 = vmatmul.mubr.bf16.gmra.mrb[0].mxu0 %v396
      %v538 = vpop.f32.mrb[0].mxu0
      %v539 = vadd.f32 %v326, %v538
      %v540 = vpop.f32.mrb[0].mxu0
      %v541 = vpop.f32.mrb[0].mxu0
      %v542 = vadd.f32 %v326, %v541
      %v543 = vpop.f32.mrb[0].mxu0
      %544 = vmatprep.mubr.bf16.mxu0 0
      %545 = vmatmul.mubr.bf16.gmra.mrb[0].mxu0 %v397
      %v546 = vpop.f32.mrb[0].mxu0
      %v547 = vadd.f32 %v326, %v546
      %v548 = vpop.f32.mrb[0].mxu0
      %v549 = vpop.f32.mrb[0].mxu0
      %v550 = vadd.f32 %v326, %v549
      %v551 = vpop.f32.mrb[0].mxu0
      %552 = vmatprep.mubr.bf16.mxu0 0
      %553 = vmatmul.mubr.bf16.gmra.mrb[0].mxu0 %v398
      %v554 = vpop.f32.mrb[0].mxu0
      %v555 = vadd.f32 %v326, %v554
      %v556 = vpop.f32.mrb[0].mxu0
      %v557 = vpop.f32.mrb[0].mxu0
      %v558 = vadd.f32 %v326, %v557
      %v559 = vpop.f32.mrb[0].mxu0
      %560 = vmatprep.mubr.bf16.mxu0 0
      %561 = vmatmul.mubr.bf16.gmra.mrb[0].mxu0 %v399
      %v562 = vpop.f32.mrb[0].mxu0
      %v563 = vadd.f32 %v326, %v562
      %v564 = vpop.f32.mrb[0].mxu0
      %v565 = vpop.f32.mrb[0].mxu0
      %v566 = vadd.f32 %v326, %v565
      %v567 = vpop.f32.mrb[0].mxu0
      %568 = vmatprep.mubr.bf16.mxu0 0
      %569 = vmatmul.mubr.bf16.gmra.mrb[0].mxu0 %v400
      %v570 = vpop.f32.mrb[0].mxu0
      %v571 = vadd.f32 %v326, %v570
      %v572 = vpop.f32.mrb[0].mxu0
      %v573 = vpop.f32.mrb[0].mxu0
      %v574 = vadd.f32 %v326, %v573
      %v575 = vpop.f32.mrb[0].mxu0
      %576 = vmatprep.mubr.bf16.mxu0 0
      %577 = vmatmul.mubr.bf16.gmra.mrb[0].mxu0 %v401
      %v578 = vpop.f32.mrb[0].mxu0
      %v579 = vadd.f32 %v326, %v578
      %v580 = vpop.f32.mrb[0].mxu0
      %v581 = vpop.f32.mrb[0].mxu0
      %v582 = vadd.f32 %v326, %v581
      %v583 = vpop.f32.mrb[0].mxu0
      %584 = vmatprep.mubr.bf16.mxu0 0
      %585 = vmatmul.mubr.bf16.gmra.mrb[0].mxu0 %v402
      %v586 = vpop.f32.mrb[0].mxu0
      %v587 = vadd.f32 %v326, %v586
      %v588 = vpop.f32.mrb[0].mxu0
      %v589 = vpop.f32.mrb[0].mxu0
      %v590 = vadd.f32 %v326, %v589
      %v591 = vpop.f32.mrb[0].mxu0
      %592 = vmatprep.mubr.bf16.mxu0 0
      %593 = vmatmul.mubr.bf16.gmra.mrb[0].mxu0 %v403
      %v594 = vpop.f32.mrb[0].mxu0
      %v595 = vadd.f32 %v326, %v594
      %v596 = vpop.f32.mrb[0].mxu0
      %v597 = vpop.f32.mrb[0].mxu0
      %v598 = vadd.f32 %v326, %v597
      %v599 = vpop.f32.mrb[0].mxu0
      %600 = vmatprep.mubr.bf16.mxu0 0
      %601 = vmatmul.mubr.bf16.gmra.mrb[0].mxu0 %v404
      %v602 = vpop.f32.mrb[0].mxu0
      %v603 = vadd.f32 %v326, %v602
      %v604 = vpop.f32.mrb[0].mxu0
      %v605 = vpop.f32.mrb[0].mxu0
      %v606 = vadd.f32 %v326, %v605
      %v607 = vpop.f32.mrb[0].mxu0
      %608 = vmatprep.mubr.bf16.mxu0 0
      %609 = vmatmul.mubr.bf16.gmra.mrb[0].mxu0 %v405
      %v610 = vpop.f32.mrb[0].mxu0
      %v611 = vadd.f32 %v326, %v610
      %v612 = vpop.f32.mrb[0].mxu0
      %v613 = vpop.f32.mrb[0].mxu0
      %v614 = vadd.f32 %v326, %v613
      %v615 = vpop.f32.mrb[0].mxu0
      %616 = vmatprep.mubr.bf16.mxu0 0
      %617 = vmatmul.mubr.bf16.gmra.mrb[0].mxu0 %v406
      %v618 = vpop.f32.mrb[0].mxu0
      %v619 = vadd.f32 %v326, %v618
      %v620 = vpop.f32.mrb[0].mxu0
      %v621 = vpop.f32.mrb[0].mxu0
      %v622 = vadd.f32 %v326, %v621
      %v623 = vpop.f32.mrb[0].mxu0
      %624 = vmatprep.mubr.bf16.mxu0 0
      %625 = vmatmul.mubr.bf16.gmra.mrb[0].mxu0 %v407
      %v626 = vpop.f32.mrb[0].mxu0
      %v627 = vadd.f32 %v326, %v626
      %v628 = vpop.f32.mrb[0].mxu0
      %v629 = vpop.f32.mrb[0].mxu0
      %v630 = vadd.f32 %v326, %v629
      %v631 = vpop.f32.mrb[0].mxu0
      %632 = vdwg.mxu0
      %v633 = vld [vmem:[%s261] sm:$0xf]
      %v634 = vld [vmem:[%s261 + $0x4] sm:$0xf]
      %v635 = vld [vmem:[%s261 + $0x8] sm:$0xf]
      %v636 = vld [vmem:[%s261 + $0xc] sm:$0xf]
      %v637 = vld [vmem:[%s261 + $0x10] sm:$0xf]
      %v638 = vld [vmem:[%s261 + $0x14] sm:$0xf]
      %v639 = vld [vmem:[%s261 + $0x18] sm:$0xf]
      %v640 = vld [vmem:[%s261 + $0x1c] sm:$0xf]
      %v641 = vld [vmem:[%s261 + $0x20] sm:$0xf]
      %v642 = vld [vmem:[%s261 + $0x24] sm:$0xf]
      %v643 = vld [vmem:[%s261 + $0x28] sm:$0xf]
      %v644 = vld [vmem:[%s261 + $0x2c] sm:$0xf]
      %v645 = vld [vmem:[%s261 + $0x30] sm:$0xf]
      %v646 = vld [vmem:[%s261 + $0x34] sm:$0xf]
      %v647 = vld [vmem:[%s261 + $0x38] sm:$0xf]
      %v648 = vld [vmem:[%s261 + $0x3c] sm:$0xf]
      %v649 = vld [vmem:[%s261 + $0x40] sm:$0xf]
      %v650 = vld [vmem:[%s261 + $0x44] sm:$0xf]
      %v651 = vld [vmem:[%s261 + $0x48] sm:$0xf]
      %v652 = vld [vmem:[%s261 + $0x4c] sm:$0xf]
      %v653 = vld [vmem:[%s261 + $0x50] sm:$0xf]
      %v654 = vld [vmem:[%s261 + $0x54] sm:$0xf]
      %v655 = vld [vmem:[%s261 + $0x58] sm:$0xf]
      %v656 = vld [vmem:[%s261 + $0x5c] sm:$0xf]
      %v657 = vld [vmem:[%s261 + $0x60] sm:$0xf]
      %v658 = vld [vmem:[%s261 + $0x64] sm:$0xf]
      %v659 = vld [vmem:[%s261 + $0x68] sm:$0xf]
      %v660 = vld [vmem:[%s261 + $0x6c] sm:$0xf]
      %v661 = vld [vmem:[%s261 + $0x70] sm:$0xf]
      %v662 = vld [vmem:[%s261 + $0x74] sm:$0xf]
      %v663 = vld [vmem:[%s261 + $0x78] sm:$0xf]
      %v664 = vld [vmem:[%s261 + $0x7c] sm:$0xf]
      %v665 = vunpack.c.l.bf16 %v633
      %v666 = vunpack.c.l.bf16 %v634
      %v667 = vunpack.c.l.bf16 %v635
      %v668 = vunpack.c.l.bf16 %v636
      %v669 = vunpack.c.l.bf16 %v637
      %v670 = vunpack.c.l.bf16 %v638
      %v671 = vunpack.c.l.bf16 %v639
      %v672 = vunpack.c.l.bf16 %v640
      %v673 = vunpack.c.l.bf16 %v641
      %v674 = vunpack.c.l.bf16 %v642
      %v675 = vunpack.c.l.bf16 %v643
      %v676 = vunpack.c.l.bf16 %v644
      %v677 = vunpack.c.l.bf16 %v645
      %v678 = vunpack.c.l.bf16 %v646
      %v679 = vunpack.c.l.bf16 %v647
      %v680 = vunpack.c.l.bf16 %v648
      %v681 = vunpack.c.l.bf16 %v649
      %v682 = vunpack.c.l.bf16 %v650
      %v683 = vunpack.c.l.bf16 %v651
      %v684 = vunpack.c.l.bf16 %v652
      %v685 = vunpack.c.l.bf16 %v653
      %v686 = vunpack.c.l.bf16 %v654
      %v687 = vunpack.c.l.bf16 %v655
      %v688 = vunpack.c.l.bf16 %v656
      %v689 = vunpack.c.l.bf16 %v657
      %v690 = vunpack.c.l.bf16 %v658
      %v691 = vunpack.c.l.bf16 %v659
      %v692 = vunpack.c.l.bf16 %v660
      %v693 = vunpack.c.l.bf16 %v661
      %v694 = vunpack.c.l.bf16 %v662
      %v695 = vunpack.c.l.bf16 %v663
      %v696 = vunpack.c.l.bf16 %v664
      %v697 = vld [vmem:[%s1] sm:$0x1]
      %v699 = vlaneseq
      %v700 = vshrl.u32 %v699, 7
      %v701 = vsub.s32 0, %v700
      %v702 = vrot.slane %v697, %v701
      %v704 = vmul.f32 %v665, %v702
      %v705 = vmul.f32 %v666, %v702
      %v706 = vmul.f32 %v667, %v702
      %v707 = vmul.f32 %v668, %v702
      %v708 = vmul.f32 %v669, %v702
      %v709 = vmul.f32 %v670, %v702
      %v710 = vmul.f32 %v671, %v702
      %v711 = vmul.f32 %v672, %v702
      %v712 = vmul.f32 %v673, %v702
      %v713 = vmul.f32 %v674, %v702
      %v714 = vmul.f32 %v675, %v702
      %v715 = vmul.f32 %v676, %v702
      %v716 = vmul.f32 %v677, %v702
      %v717 = vmul.f32 %v678, %v702
      %v718 = vmul.f32 %v679, %v702
      %v719 = vmul.f32 %v680, %v702
      %v720 = vmul.f32 %v681, %v702
      %v721 = vmul.f32 %v682, %v702
      %v722 = vmul.f32 %v683, %v702
      %v723 = vmul.f32 %v684, %v702
      %v724 = vmul.f32 %v685, %v702
      %v725 = vmul.f32 %v686, %v702
      %v726 = vmul.f32 %v687, %v702
      %v727 = vmul.f32 %v688, %v702
      %v728 = vmul.f32 %v689, %v702
      %v729 = vmul.f32 %v690, %v702
      %v730 = vmul.f32 %v691, %v702
      %v731 = vmul.f32 %v692, %v702
      %v732 = vmul.f32 %v693, %v702
      %v733 = vmul.f32 %v694, %v702
      %v734 = vmul.f32 %v695, %v702
      %v735 = vmul.f32 %v696, %v702
      %v736 = vld [vmem:[%s2] sm:$0x1]
      %v738 = vlaneseq
      %v739 = vshrl.u32 %v738, 7
      %v740 = vsub.s32 0, %v739
      %v741 = vrot.slane %v736, %v740
      %v743 = vadd.f32 %v704, %v741
      %v744 = vadd.f32 %v705, %v741
      %v745 = vadd.f32 %v706, %v741
      %v746 = vadd.f32 %v707, %v741
      %v747 = vadd.f32 %v708, %v741
      %v748 = vadd.f32 %v709, %v741
      %v749 = vadd.f32 %v710, %v741
      %v750 = vadd.f32 %v711, %v741
      %v751 = vadd.f32 %v712, %v741
      %v752 = vadd.f32 %v713, %v741
      %v753 = vadd.f32 %v714, %v741
      %v754 = vadd.f32 %v715, %v741
      %v755 = vadd.f32 %v716, %v741
      %v756 = vadd.f32 %v717, %v741
      %v757 = vadd.f32 %v718, %v741
      %v758 = vadd.f32 %v719, %v741
      %v759 = vadd.f32 %v720, %v741
      %v760 = vadd.f32 %v721, %v741
      %v761 = vadd.f32 %v722, %v741
      %v762 = vadd.f32 %v723, %v741
      %v763 = vadd.f32 %v724, %v741
      %v764 = vadd.f32 %v725, %v741
      %v765 = vadd.f32 %v726, %v741
      %v766 = vadd.f32 %v727, %v741
      %v767 = vadd.f32 %v728, %v741
      %v768 = vadd.f32 %v729, %v741
      %v769 = vadd.f32 %v730, %v741
      %v770 = vadd.f32 %v731, %v741
      %v771 = vadd.f32 %v732, %v741
      %v772 = vadd.f32 %v733, %v741
      %v773 = vadd.f32 %v734, %v741
      %v774 = vadd.f32 %v735, %v741
      %v775 = vadd.f32 %v743, %v507
      %v776 = vadd.f32 %v744, %v510
      %v777 = vadd.f32 %v745, %v515
      %v778 = vadd.f32 %v746, %v518
      %v779 = vadd.f32 %v747, %v523
      %v780 = vadd.f32 %v748, %v526
      %v781 = vadd.f32 %v749, %v531
      %v782 = vadd.f32 %v750, %v534
      %v783 = vadd.f32 %v751, %v539
      %v784 = vadd.f32 %v752, %v542
      %v785 = vadd.f32 %v753, %v547
      %v786 = vadd.f32 %v754, %v550
      %v787 = vadd.f32 %v755, %v555
      %v788 = vadd.f32 %v756, %v558
      %v789 = vadd.f32 %v757, %v563
      %v790 = vadd.f32 %v758, %v566
      %v791 = vadd.f32 %v759, %v571
      %v792 = vadd.f32 %v760, %v574
      %v793 = vadd.f32 %v761, %v579
      %v794 = vadd.f32 %v762, %v582
      %v795 = vadd.f32 %v763, %v587
      %v796 = vadd.f32 %v764, %v590
      %v797 = vadd.f32 %v765, %v595
      %v798 = vadd.f32 %v766, %v598
      %v799 = vadd.f32 %v767, %v603
      %v800 = vadd.f32 %v768, %v606
      %v801 = vadd.f32 %v769, %v611
      %v802 = vadd.f32 %v770, %v614
      %v803 = vadd.f32 %v771, %v619
      %v804 = vadd.f32 %v772, %v622
      %v805 = vadd.f32 %v773, %v627
      %v806 = vadd.f32 %v774, %v630
      %v807 = vmax.f32 %v775, 0.0
      %v808 = vmax.f32 %v776, 0.0
      %v809 = vmax.f32 %v777, 0.0
      %v810 = vmax.f32 %v778, 0.0
      %v811 = vmax.f32 %v779, 0.0
      %v812 = vmax.f32 %v780, 0.0
      %v813 = vmax.f32 %v781, 0.0
      %v814 = vmax.f32 %v782, 0.0
      %v815 = vmax.f32 %v783, 0.0
      %v816 = vmax.f32 %v784, 0.0
      %v817 = vmax.f32 %v785, 0.0
      %v818 = vmax.f32 %v786, 0.0
      %v819 = vmax.f32 %v787, 0.0
      %v820 = vmax.f32 %v788, 0.0
      %v821 = vmax.f32 %v789, 0.0
      %v822 = vmax.f32 %v790, 0.0
      %v823 = vmax.f32 %v791, 0.0
      %v824 = vmax.f32 %v792, 0.0
      %v825 = vmax.f32 %v793, 0.0
      %v826 = vmax.f32 %v794, 0.0
      %v827 = vmax.f32 %v795, 0.0
      %v828 = vmax.f32 %v796, 0.0
      %v829 = vmax.f32 %v797, 0.0
      %v830 = vmax.f32 %v798, 0.0
      %v831 = vmax.f32 %v799, 0.0
      %v832 = vmax.f32 %v800, 0.0
      %v833 = vmax.f32 %v801, 0.0
      %v834 = vmax.f32 %v802, 0.0
      %v835 = vmax.f32 %v803, 0.0
      %v836 = vmax.f32 %v804, 0.0
      %v837 = vmax.f32 %v805, 0.0
      %v838 = vmax.f32 %v806, 0.0
      %839 = vst [vmem:[%s271] sm:$0xff] %v807
      %840 = vst [vmem:[%s271 + $0x8] sm:$0xff] %v808
      %841 = vst [vmem:[%s271 + $0x10] sm:$0xff] %v809
      %842 = vst [vmem:[%s271 + $0x18] sm:$0xff] %v810
      %843 = vst [vmem:[%s271 + $0x20] sm:$0xff] %v811
      %844 = vst [vmem:[%s271 + $0x28] sm:$0xff] %v812
      %845 = vst [vmem:[%s271 + $0x30] sm:$0xff] %v813
      %846 = vst [vmem:[%s271 + $0x38] sm:$0xff] %v814
      %847 = vst [vmem:[%s271 + $0x40] sm:$0xff] %v815
      %848 = vst [vmem:[%s271 + $0x48] sm:$0xff] %v816
      %849 = vst [vmem:[%s271 + $0x50] sm:$0xff] %v817
      %850 = vst [vmem:[%s271 + $0x58] sm:$0xff] %v818
      %851 = vst [vmem:[%s271 + $0x60] sm:$0xff] %v819
      %852 = vst [vmem:[%s271 + $0x68] sm:$0xff] %v820
      %853 = vst [vmem:[%s271 + $0x70] sm:$0xff] %v821
      %854 = vst [vmem:[%s271 + $0x78] sm:$0xff] %v822
      %855 = vst [vmem:[%s271 + $0x80] sm:$0xff] %v823
      %856 = vst [vmem:[%s271 + $0x88] sm:$0xff] %v824
      %857 = vst [vmem:[%s271 + $0x90] sm:$0xff] %v825
      %858 = vst [vmem:[%s271 + $0x98] sm:$0xff] %v826
      %859 = vst [vmem:[%s271 + $0xa0] sm:$0xff] %v827
      %860 = vst [vmem:[%s271 + $0xa8] sm:$0xff] %v828
      %861 = vst [vmem:[%s271 + $0xb0] sm:$0xff] %v829
      %862 = vst [vmem:[%s271 + $0xb8] sm:$0xff] %v830
      %863 = vst [vmem:[%s271 + $0xc0] sm:$0xff] %v831
      %864 = vst [vmem:[%s271 + $0xc8] sm:$0xff] %v832
      %865 = vst [vmem:[%s271 + $0xd0] sm:$0xff] %v833
      %866 = vst [vmem:[%s271 + $0xd8] sm:$0xff] %v834
      %867 = vst [vmem:[%s271 + $0xe0] sm:$0xff] %v835
      %868 = vst [vmem:[%s271 + $0xe8] sm:$0xff] %v836
      %869 = vst [vmem:[%s271 + $0xf0] sm:$0xff] %v837
      %870 = vst [vmem:[%s271 + $0xf8] sm:$0xff] %v838
      %p871 = scmp.lt.s32.totalorder %s17, 1
      %s872 = scalar_select %p871, %s17, 1
      %s873 = smul.addr %s872, 32
      %s874 = smul.addr %s873, 8
      %s875 = scalar_lea.vmem %s6, %s874
      // Predicated region
      $region45: #{residual_block_forward.7} parent=43 // pred_check
        %p876 = pneg %p171
      $region46: #{residual_block_forward.7} parent=43 // pred_check_branch
        %878 = sbr.rel (%p876) target = $region48
      $region47: #{residual_block_forward.7} parent=43 // pred_region
        _
      $region48: #{residual_block_forward.7} parent=43 // pred_fallthru
        _
    $region44: #{residual_block_forward.7} parent=5 // pred_fallthru
      _
    %p879 = scmp.le.s32.totalorder 2, %s12
    // Predicated region
    $region49: #{residual_block_forward.7} parent=5 // pred_check
      %p880 = pneg %p879
    $region50: #{residual_block_forward.7} parent=5 // pred_check_branch
      %882 = sbr.rel (%p880) target = $region52
    $region51: #{residual_block_forward.7} parent=5 // pred_region
      %s883 = ssub.s32 %s12, 2
      // Predicated region
      $region53: #{residual_block_forward.7} parent=51 // pred_check
        %p884 = pneg %p177
      $region54: #{residual_block_forward.7} parent=51 // pred_check_branch
        %886 = sbr.rel (%p884) target = $region56
      $region55: #{residual_block_forward.7} parent=51 // pred_region
        %p887 = scmp.lt.s32.totalorder %s18, 1
        %s888 = scalar_select %p887, %s18, 1
        %s889 = smul.addr %s888, 32
        %s890 = smul.addr %s889, 8
        %s891 = scalar_lea.vmem %s6, %s890
      $region56: #{residual_block_forward.7} parent=51 // pred_fallthru
        _
    $region52: #{residual_block_forward.7} parent=5 // pred_fallthru
      _
  $region6: #{residual_block_forward.7} parent=0 // loop_footer
    %s16 = sadd.s32 1, %s12
  $region7: #{residual_block_forward.7} parent=0 // loop_footer_branch
    %11 = sbr.rel target = $region3
  $region8: #{residual_block_forward.7} parent=0 // loop_exit
    _

// kernel: residual_block_forward.4
$region0: #{residual_block_forward.4}
  #allocation0 [shape = 'u32[]', space=smem, size = 0x4, offset = 0x4, fixed_abs, tag = 'smem constant byte address 0x4 - core index']
  #allocation1 [shape = 'u32[144,128]{1,0:T(1,128)}', space=vmem, size = 0x12000, scoped, tag = 'internal scratch']
  %s0 = inlined_call_operand.vmem [shape: bf16[2,18,32,128], index: 0, kind: input, shape index: {}]
  %s1 = inlined_call_operand.vmem [shape: bf16[3,3,128,128], index: 1, kind: input, shape index: {}]
  %s2 = inlined_call_operand.vmem [shape: bf16[2,16,16,128], index: 2, kind: output, shape index: {0}]
  %s3 = inlined_call_operand.vmem [shape: f32[2,1,128], index: 3, kind: output, shape index: {1}]
  %s4 = inlined_call_operand.vmem [shape: f32[2,1,128], index: 4, kind: output, shape index: {2}]
  %5 = xla_tuple %s2, %s3, %s4
  %s6 = sld [smem:[#allocation0]]
  $region57: #{residual_block_forward.4} parent=0
    _
  %s8 = ssub.s32 1, %s6
  %s9 = scalar_select 0, %s8, %s6
  loop: start=0, step=1, limit=4
  $region2: #{residual_block_forward.4} parent=0 // loop_pre_header
    _
  $region3: #{residual_block_forward.4} parent=0 // loop_header
    %s11 = sphi 0, %s15
    %p12 = scmp.ge.s32.totalorder %s11, 4
    %s21 = sphi 0, %s23
    %s24 = sphi 0, %s21
    %s25 = sphi 0, %s24
    %s41 = sphi 0, %s25
    %s45 = sphi 0, %s45
    %s47 = sphi 0, %s45
    %s48 = sphi 0, %s47
    %s62 = sphi 0, %s48
    %s68 = sphi 0, %s70
    %s71 = sphi 0, %s68
    %s72 = sphi 0, %s71
    %s88 = sphi 0, %s72
    %s94 = sphi 0, %s96
    %s97 = sphi 0, %s94
    %s98 = sphi 0, %s97
    %s114 = sphi 0, %s98
    %s120 = sphi 0, %s122
    %s123 = sphi 0, %s120
    %s124 = sphi 0, %s123
    %s140 = sphi 0, %s124
  $region4: #{residual_block_forward.4} parent=0 // loop_header_branch
    %14 = sbr.rel (%p12) target = $region8
  $region5: #{residual_block_forward.4} parent=0 // loop_body
    %s16 = ssub.s32 %s11, 1
    %s17 = ssub.s32 %s11, 2
    %s18 = sadd.s32 %s11, 1
    %s19 = ssub.s32 %s11, %s18
    %p20 = scmp.eq.s32.totalorder %s19, 0
    %s22 = sadd.s32 %s21, 1
    %s23 = scalar_select %p20, %s21, %s22
    %p26 = pneg %p20
    %p27 = scmp.eq.s32.totalorder %s11, 1
    %p28 = por %p26, %p27
    %p29 = scmp.ne.s32.totalorder %s21, %s24
    %p30 = scmp.eq.s32.totalorder %s11, 0
    %p31 = por %p29, %p30
    %p32 = scmp.ne.s32.totalorder %s21, %s24
    %p33 = scmp.eq.s32.totalorder %s16, 1
    %p34 = por %p32, %p33
    %p35 = scmp.ne.s32.totalorder %s24, %s25
    %p36 = scmp.eq.s32.totalorder %s16, 0
    %p37 = por %p35, %p36
    %p38 = scmp.ne.s32.totalorder %s24, %s25
    %p39 = scmp.eq.s32.totalorder %s17, 1
    %p40 = por %p38, %p39
    %p42 = scmp.ne.s32.totalorder %s25, %s41
    %p43 = scmp.eq.s32.totalorder %s17, 0
    %p44 = por %p42, %p43
    %s46 = sadd.s32 %s45, 1
    %p49 = scmp.eq.s32.totalorder %s11, 1
    %p50 = scmp.ne.s32.totalorder %s45, %s47
    %p51 = scmp.eq.s32.totalorder %s11, 0
    %p52 = por %p50, %p51
    %p53 = scmp.ne.s32.totalorder %s45, %s47
    %p54 = scmp.eq.s32.totalorder %s16, 1
    %p55 = por %p53, %p54
    %p56 = scmp.ne.s32.totalorder %s47, %s48
    %p57 = scmp.eq.s32.totalorder %s16, 0
    %p58 = por %p56, %p57
    %p59 = scmp.ne.s32.totalorder %s47, %s48
    %p60 = scmp.eq.s32.totalorder %s17, 1
    %p61 = por %p59, %p60
    %p63 = scmp.ne.s32.totalorder %s48, %s62
    %p64 = scmp.eq.s32.totalorder %s17, 0
    %p65 = por %p63, %p64
    %s66 = ssub.s32 %s11, %s18
    %p67 = scmp.eq.s32.totalorder %s66, 0
    %s69 = sadd.s32 %s68, 1
    %s70 = scalar_select %p67, %s68, %s69
    %p73 = pneg %p67
    %p74 = scmp.eq.s32.totalorder %s11, 1
    %p75 = por %p73, %p74
    %p76 = scmp.ne.s32.totalorder %s68, %s71
    %p77 = scmp.eq.s32.totalorder %s11, 0
    %p78 = por %p76, %p77
    %p79 = scmp.ne.s32.totalorder %s68, %s71
    %p80 = scmp.eq.s32.totalorder %s16, 1
    %p81 = por %p79, %p80
    %p82 = scmp.ne.s32.totalorder %s71, %s72
    %p83 = scmp.eq.s32.totalorder %s16, 0
    %p84 = por %p82, %p83
    %p85 = scmp.ne.s32.totalorder %s71, %s72
    %p86 = scmp.eq.s32.totalorder %s17, 1
    %p87 = por %p85, %p86
    %p89 = scmp.ne.s32.totalorder %s72, %s88
    %p90 = scmp.eq.s32.totalorder %s17, 0
    %p91 = por %p89, %p90
    %s92 = ssub.s32 %s11, %s18
    %p93 = scmp.eq.s32.totalorder %s92, 0
    %s95 = sadd.s32 %s94, 1
    %s96 = scalar_select %p93, %s94, %s95
    %p99 = pneg %p93
    %p100 = scmp.eq.s32.totalorder %s11, 1
    %p101 = por %p99, %p100
    %p102 = scmp.ne.s32.totalorder %s94, %s97
    %p103 = scmp.eq.s32.totalorder %s11, 0
    %p104 = por %p102, %p103
    %p105 = scmp.ne.s32.totalorder %s94, %s97
    %p106 = scmp.eq.s32.totalorder %s16, 1
    %p107 = por %p105, %p106
    %p108 = scmp.ne.s32.totalorder %s97, %s98
    %p109 = scmp.eq.s32.totalorder %s16, 0
    %p110 = por %p108, %p109
    %p111 = scmp.ne.s32.totalorder %s97, %s98
    %p112 = scmp.eq.s32.totalorder %s17, 1
    %p113 = por %p111, %p112
    %p115 = scmp.ne.s32.totalorder %s98, %s114
    %p116 = scmp.eq.s32.totalorder %s17, 0
    %p117 = por %p115, %p116
    %s118 = ssub.s32 %s11, %s18
    %p119 = scmp.eq.s32.totalorder %s118, 0
    %s121 = sadd.s32 %s120, 1
    %s122 = scalar_select %p119, %s120, %s121
    %p125 = pneg %p119
    %p126 = scmp.eq.s32.totalorder %s11, 1
    %p127 = por %p125, %p126
    %p128 = scmp.ne.s32.totalorder %s120, %s123
    %p129 = scmp.eq.s32.totalorder %s11, 0
    %p130 = por %p128, %p129
    %p131 = scmp.ne.s32.totalorder %s120, %s123
    %p132 = scmp.eq.s32.totalorder %s16, 1
    %p133 = por %p131, %p132
    %p134 = scmp.ne.s32.totalorder %s123, %s124
    %p135 = scmp.eq.s32.totalorder %s16, 0
    %p136 = por %p134, %p135
    %p137 = scmp.ne.s32.totalorder %s123, %s124
    %p138 = scmp.eq.s32.totalorder %s17, 1
    %p139 = por %p137, %p138
    %p141 = scmp.ne.s32.totalorder %s124, %s140
    %p142 = scmp.eq.s32.totalorder %s17, 0
    %p143 = por %p141, %p142
    %p144 = scmp.le.s32.totalorder 1, %s11
    %p145 = scmp.lt.s32.totalorder %s11, 3
    %p146 = pnand %p144, %p145
    %p147 = pneg %p146
    // Predicated region
    $region9: #{residual_block_forward.4} parent=5 // pred_check
      _
    $region10: #{residual_block_forward.4} parent=5 // pred_check_branch
      %149 = sbr.rel (%p146) target = $region12
    $region11: #{residual_block_forward.4} parent=5 // pred_region
      %s150 = ssub.s32 %s11, 1
      // Predicated region
      $region13: #{residual_block_forward.4} parent=11 // pred_check
        %p151 = pneg %p58
      $region14: #{residual_block_forward.4} parent=11 // pred_check_branch
        %153 = sbr.rel (%p151) target = $region16
      $region15: #{residual_block_forward.4} parent=11 // pred_region
        _
      $region16: #{residual_block_forward.4} parent=11 // pred_fallthru
        _
    $region12: #{residual_block_forward.4} parent=5 // pred_fallthru
      _
    %p154 = scmp.lt.s32.totalorder %s11, 2
    // Predicated region
    $region17: #{residual_block_forward.4} parent=5 // pred_check
      %p155 = pneg %p154
    $region18: #{residual_block_forward.4} parent=5 // pred_check_branch
      %157 = sbr.rel (%p155) target = $region20
    $region19: #{residual_block_forward.4} parent=5 // pred_region
      // Predicated region
      $region21: #{residual_block_forward.4} parent=19 // pred_check
        %p158 = pneg %p31
      $region22: #{residual_block_forward.4} parent=19 // pred_check_branch
        %160 = sbr.rel (%p158) target = $region24
      $region23: #{residual_block_forward.4} parent=19 // pred_region
        %p161 = scmp.lt.s32.totalorder %s11, 1
        %s162 = scalar_select %p161, %s11, 1
        %s163 = smul.addr %s162, 72
        %s164 = smul.addr %s163, 4
        %s165 = scalar_lea.vmem %s0, %s164
      $region24: #{residual_block_forward.4} parent=19 // pred_fallthru
        _
    $region20: #{residual_block_forward.4} parent=5 // pred_fallthru
      _
    %p166 = scmp.le.s32.totalorder 1, %s11
    %p167 = scmp.lt.s32.totalorder %s11, 3
    %p168 = pnand %p166, %p167
    %p169 = pneg %p168
    // Predicated region
    $region25: #{residual_block_forward.4} parent=5 // pred_check
      _
    $region26: #{residual_block_forward.4} parent=5 // pred_check_branch
      %171 = sbr.rel (%p168) target = $region28
    $region27: #{residual_block_forward.4} parent=5 // pred_region
      %s172 = ssub.s32 %s11, 1
      %p173 = scmp.lt.s32.totalorder %s16, 1
      %s174 = scalar_select %p173, %s16, 1
      %s175 = smul.addr %s174, 72
      %s176 = smul.addr %s175, 4
      %s177 = scalar_lea.vmem %s0, %s176
      %p178 = pneg %p37
      %p179 = pneg %p34
      %p180 = pneg %p58
      %p181 = pneg %p55
      %p182 = pneg %p84
      %p183 = pneg %p81
      %p184 = scmp.lt.s32.totalorder %s16, 1
      %s185 = scalar_select %p184, %s16, 1
      %s186 = smul.addr %s185, 32
      %s187 = smul.addr %s186, 4
      %s188 = scalar_lea.vmem %s2, %s187
      %p189 = pneg %p110
      %p190 = pneg %p107
      %p191 = scmp.lt.s32.totalorder %s16, 1
      %s192 = scalar_select %p191, %s16, 1
      %s193 = scalar_lea.vmem %s3, %s192
      %p194 = pneg %p136
      %p195 = pneg %p133
      %p196 = scmp.lt.s32.totalorder %s16, 1
      %s197 = scalar_select %p196, %s16, 1
      %s198 = scalar_lea.vmem %s4, %s197
      %p199 = scmp.lt.s32.totalorder %s16, 1
      %s200 = scalar_select %p199, %s16, 1
      %s201 = smul.addr %s200, 72
      %s202 = smul.addr %s201, 4
      %s203 = scalar_lea.vmem %s0, %s202
      %p204 = scmp.lt.s32.totalorder %s16, 1
      %s205 = scalar_select %p204, %s16, 1
      %s206 = smul.addr %s205, 32
      %s207 = smul.addr %s206, 4
      %s208 = scalar_lea.vmem %s2, %s207
      %p209 = scmp.lt.s32.totalorder %s16, 1
      %s210 = scalar_select %p209, %s16, 1
      %s211 = scalar_lea.vmem %s3, %s210
      %p212 = scmp.lt.s32.totalorder %s16, 1
      %s213 = scalar_select %p212, %s16, 1
      %s214 = scalar_lea.vmem %s4, %s213
      %v216 = vld [vmem:[%s203] sm:$0xf]
      %v217 = vld [vmem:[%s203 + $0x4] sm:$0xf]
      %v218 = vld [vmem:[%s203 + $0x8] sm:$0xf]
      %v219 = vld [vmem:[%s203 + $0xc] sm:$0xf]
      %v220 = vld [vmem:[%s203 + $0x10] sm:$0xf]
      %v221 = vld [vmem:[%s203 + $0x14] sm:$0xf]
      %v222 = vld [vmem:[%s203 + $0x18] sm:$0xf]
      %v223 = vld [vmem:[%s203 + $0x1c] sm:$0xf]
      %v224 = vld [vmem:[%s203 + $0x20] sm:$0xf]
      %v225 = vld [vmem:[%s203 + $0x24] sm:$0xf]
      %v226 = vld [vmem:[%s203 + $0x28] sm:$0xf]
      %v227 = vld [vmem:[%s203 + $0x2c] sm:$0xf]
      %v228 = vld [vmem:[%s203 + $0x30] sm:$0xf]
      %v229 = vld [vmem:[%s203 + $0x34] sm:$0xf]
      %v230 = vld [vmem:[%s203 + $0x38] sm:$0xf]
      %v231 = vld [vmem:[%s203 + $0x3c] sm:$0xf]
      %v232 = vld [vmem:[%s203 + $0x40] sm:$0xf]
      %v233 = vld [vmem:[%s203 + $0x44] sm:$0xf]
      %v234 = vld [vmem:[%s203 + $0x48] sm:$0xf]
      %v235 = vld [vmem:[%s203 + $0x4c] sm:$0xf]
      %v236 = vld [vmem:[%s203 + $0x50] sm:$0xf]
      %v237 = vld [vmem:[%s203 + $0x54] sm:$0xf]
      %v238 = vld [vmem:[%s203 + $0x58] sm:$0xf]
      %v239 = vld [vmem:[%s203 + $0x5c] sm:$0xf]
      %v240 = vld [vmem:[%s203 + $0x60] sm:$0xf]
      %v241 = vld [vmem:[%s203 + $0x64] sm:$0xf]
      %v242 = vld [vmem:[%s203 + $0x68] sm:$0xf]
      %v243 = vld [vmem:[%s203 + $0x6c] sm:$0xf]
      %v244 = vld [vmem:[%s203 + $0x70] sm:$0xf]
      %v245 = vld [vmem:[%s203 + $0x74] sm:$0xf]
      %v246 = vld [vmem:[%s203 + $0x78] sm:$0xf]
      %v247 = vld [vmem:[%s203 + $0x7c] sm:$0xf]
      %v248 = vld [vmem:[%s203 + $0x80] sm:$0xf]
      %v249 = vld [vmem:[%s203 + $0x84] sm:$0xf]
      %v250 = vld [vmem:[%s203 + $0x88] sm:$0xf]
      %v251 = vld [vmem:[%s203 + $0x8c] sm:$0xf]
      %v252 = vld [vmem:[%s203 + $0x90] sm:$0xf]
      %v253 = vld [vmem:[%s203 + $0x94] sm:$0xf]
      %v254 = vld [vmem:[%s203 + $0x98] sm:$0xf]
      %v255 = vld [vmem:[%s203 + $0x9c] sm:$0xf]
      %v256 = vld [vmem:[%s203 + $0xa0] sm:$0xf]
      %v257 = vld [vmem:[%s203 + $0xa4] sm:$0xf]
      %v258 = vld [vmem:[%s203 + $0xa8] sm:$0xf]
      %v259 = vld [vmem:[%s203 + $0xac] sm:$0xf]
      %v260 = vld [vmem:[%s203 + $0xb0] sm:$0xf]
      %v261 = vld [vmem:[%s203 + $0xb4] sm:$0xf]
      %v262 = vld [vmem:[%s203 + $0xb8] sm:$0xf]
      %v263 = vld [vmem:[%s203 + $0xbc] sm:$0xf]
      %v264 = vld [vmem:[%s203 + $0xc0] sm:$0xf]
      %v265 = vld [vmem:[%s203 + $0xc4] sm:$0xf]
      %v266 = vld [vmem:[%s203 + $0xc8] sm:$0xf]
      %v267 = vld [vmem:[%s203 + $0xcc] sm:$0xf]
      %v268 = vld [vmem:[%s203 + $0xd0] sm:$0xf]
      %v269 = vld [vmem:[%s203 + $0xd4] sm:$0xf]
      %v270 = vld [vmem:[%s203 + $0xd8] sm:$0xf]
      %v271 = vld [vmem:[%s203 + $0xdc] sm:$0xf]
      %v272 = vld [vmem:[%s203 + $0xe0] sm:$0xf]
      %v273 = vld [vmem:[%s203 + $0xe4] sm:$0xf]
      %v274 = vld [vmem:[%s203 + $0xe8] sm:$0xf]
      %v275 = vld [vmem:[%s203 + $0xec] sm:$0xf]
      %v276 = vld [vmem:[%s203 + $0xf0] sm:$0xf]
      %v277 = vld [vmem:[%s203 + $0xf4] sm:$0xf]
      %v278 = vld [vmem:[%s203 + $0xf8] sm:$0xf]
      %v279 = vld [vmem:[%s203 + $0xfc] sm:$0xf]
      %v280 = vld [vmem:[%s203 + $0x100] sm:$0xf]
      %v281 = vld [vmem:[%s203 + $0x104] sm:$0xf]
      %v282 = vld [vmem:[%s203 + $0x108] sm:$0xf]
      %v283 = vld [vmem:[%s203 + $0x10c] sm:$0xf]
      %v284 = vld [vmem:[%s203 + $0x110] sm:$0xf]
      %v285 = vld [vmem:[%s203 + $0x114] sm:$0xf]
      %v286 = vld [vmem:[%s203 + $0x118] sm:$0xf]
      %v287 = vld [vmem:[%s203 + $0x11c] sm:$0xf]
      %v288 = vld [vmem:[%s1] sm:$0xf]
      %v289 = vld [vmem:[%s1 + $0x4] sm:$0xf]
      %v290 = vld [vmem:[%s1 + $0x8] sm:$0xf]
      %v291 = vld [vmem:[%s1 + $0xc] sm:$0xf]
      %v292 = vld [vmem:[%s1 + $0x10] sm:$0xf]
      %v293 = vld [vmem:[%s1 + $0x14] sm:$0xf]
      %v294 = vld [vmem:[%s1 + $0x18] sm:$0xf]
      %v295 = vld [vmem:[%s1 + $0x1c] sm:$0xf]
      %v296 = vld [vmem:[%s1 + $0x20] sm:$0xf]
      %v297 = vld [vmem:[%s1 + $0x24] sm:$0xf]
      %v298 = vld [vmem:[%s1 + $0x28] sm:$0xf]
      %v299 = vld [vmem:[%s1 + $0x2c] sm:$0xf]
      %v300 = vld [vmem:[%s1 + $0x30] sm:$0xf]
      %v301 = vld [vmem:[%s1 + $0x34] sm:$0xf]
      %v302 = vld [vmem:[%s1 + $0x38] sm:$0xf]
      %v303 = vld [vmem:[%s1 + $0x3c] sm:$0xf]
      %v376 = vunpack.c.l.b16 %v216
      %v377 = vunpack.c.l.b16 %v217
      %v378 = vunpack.c.l.b16 %v218
      %v379 = vunpack.c.l.b16 %v219
      %v380 = vunpack.c.l.b16 %v220
      %v381 = vunpack.c.l.b16 %v221
      %v382 = vunpack.c.l.b16 %v222
      %v383 = vunpack.c.l.b16 %v223
      %v384 = vunpack.c.l.b16 %v224
      %v385 = vunpack.c.l.b16 %v225
      %v386 = vunpack.c.l.b16 %v226
      %v387 = vunpack.c.l.b16 %v227
      %v388 = vunpack.c.l.b16 %v228
      %v389 = vunpack.c.l.b16 %v229
      %v390 = vunpack.c.l.b16 %v230
      %v391 = vunpack.c.l.b16 %v231
      %v392 = vunpack.c.l.b16 %v232
      %v393 = vunpack.c.l.b16 %v233
      %v394 = vunpack.c.l.b16 %v234
      %v395 = vunpack.c.l.b16 %v235
      %v396 = vunpack.c.l.b16 %v236
      %v397 = vunpack.c.l.b16 %v237
      %v398 = vunpack.c.l.b16 %v238
      %v399 = vunpack.c.l.b16 %v239
      %v400 = vunpack.c.l.b16 %v240
      %v401 = vunpack.c.l.b16 %v241
      %v402 = vunpack.c.l.b16 %v242
      %v403 = vunpack.c.l.b16 %v243
      %v404 = vunpack.c.l.b16 %v244
      %v405 = vunpack.c.l.b16 %v245
      %v406 = vunpack.c.l.b16 %v246
      %v407 = vunpack.c.l.b16 %v247
      %v408 = vunpack.c.l.b16 %v248
      %v409 = vunpack.c.l.b16 %v249
      %v410 = vunpack.c.l.b16 %v250
      %v411 = vunpack.c.l.b16 %v251
      %v412 = vunpack.c.l.b16 %v252
      %v413 = vunpack.c.l.b16 %v253
      %v414 = vunpack.c.l.b16 %v254
      %v415 = vunpack.c.l.b16 %v255
      %v416 = vunpack.c.l.b16 %v256
      %v417 = vunpack.c.l.b16 %v257
      %v418 = vunpack.c.l.b16 %v258
      %v419 = vunpack.c.l.b16 %v259
      %v420 = vunpack.c.l.b16 %v260
      %v421 = vunpack.c.l.b16 %v261
      %v422 = vunpack.c.l.b16 %v262
      %v423 = vunpack.c.l.b16 %v263
      %v424 = vunpack.c.l.b16 %v264
      %v425 = vunpack.c.l.b16 %v265
      %v426 = vunpack.c.l.b16 %v266
      %v427 = vunpack.c.l.b16 %v267
      %v428 = vunpack.c.l.b16 %v268
      %v429 = vunpack.c.l.b16 %v269
      %v430 = vunpack.c.l.b16 %v270
      %v431 = vunpack.c.l.b16 %v271
      %v432 = vunpack.c.l.b16 %v272
      %v433 = vunpack.c.l.b16 %v273
      %v434 = vunpack.c.l.b16 %v274
      %v435 = vunpack.c.l.b16 %v275
      %v436 = vunpack.c.l.b16 %v276
      %v437 = vunpack.c.l.b16 %v277
      %v438 = vunpack.c.l.b16 %v278
      %v439 = vunpack.c.l.b16 %v279
      %v440 = vunpack.c.l.b16 %v280
      %v441 = vunpack.c.l.b16 %v281
      %v442 = vunpack.c.l.b16 %v282
      %v443 = vunpack.c.l.b16 %v283
      %v444 = vunpack.c.l.b16 %v284
      %v445 = vunpack.c.l.b16 %v285
      %v446 = vunpack.c.l.b16 %v286
      %v447 = vunpack.c.l.b16 %v287
      %v448 = vpack.c.b16 %v377, %v376
      %v449 = vpack.c.b16 %v379, %v378
      %v450 = vpack.c.b16 %v381, %v380
      %v451 = vpack.c.b16 %v383, %v382
      %v452 = vpack.c.b16 %v385, %v384
      %v453 = vpack.c.b16 %v387, %v386
      %v454 = vpack.c.b16 %v389, %v388
      %v455 = vpack.c.b16 %v391, %v390
      %v456 = vpack.c.b16 %v393, %v392
      %v457 = vpack.c.b16 %v395, %v394
      %v458 = vpack.c.b16 %v397, %v396
      %v459 = vpack.c.b16 %v399, %v398
      %v460 = vpack.c.b16 %v401, %v400
      %v461 = vpack.c.b16 %v403, %v402
      %v462 = vpack.c.b16 %v405, %v404
      %v463 = vpack.c.b16 %v407, %v406
      %v464 = vpack.c.b16 %v409, %v408
      %v465 = vpack.c.b16 %v411, %v410
      %v466 = vpack.c.b16 %v413, %v412
      %v467 = vpack.c.b16 %v415, %v414
      %v468 = vpack.c.b16 %v417, %v416
      %v469 = vpack.c.b16 %v419, %v418
      %v470 = vpack.c.b16 %v421, %v420
      %v471 = vpack.c.b16 %v423, %v422
      %v472 = vpack.c.b16 %v425, %v424
      %v473 = vpack.c.b16 %v427, %v426
      %v474 = vpack.c.b16 %v429, %v428
      %v475 = vpack.c.b16 %v431, %v430
      %v476 = vpack.c.b16 %v433, %v432
      %v477 = vpack.c.b16 %v435, %v434
      %v478 = vpack.c.b16 %v437, %v436
      %v479 = vpack.c.b16 %v439, %v438
      %v480 = vpack.c.b16 %v441, %v440
      %v481 = vpack.c.b16 %v443, %v442
      %v482 = vpack.c.b16 %v445, %v444
      %v483 = vpack.c.b16 %v447, %v446
      %v536 = vunpack.c.l.b16 %v288
      %v537 = vunpack.c.l.b16 %v289
      %v538 = vunpack.c.l.b16 %v290
      %v539 = vunpack.c.l.b16 %v291
      %v540 = vunpack.c.l.b16 %v292
      %v541 = vunpack.c.l.b16 %v293
      %v542 = vunpack.c.l.b16 %v294
      %v543 = vunpack.c.l.b16 %v295
      %v544 = vunpack.c.l.b16 %v296
      %v545 = vunpack.c.l.b16 %v297
      %v546 = vunpack.c.l.b16 %v298
      %v547 = vunpack.c.l.b16 %v299
      %v548 = vunpack.c.l.b16 %v300
      %v549 = vunpack.c.l.b16 %v301
      %v550 = vunpack.c.l.b16 %v302
      %v551 = vunpack.c.l.b16 %v303
      %v552 = vpack.c.b16 %v537, %v536
      %v553 = vpack.c.b16 %v539, %v538
      %v554 = vpack.c.b16 %v541, %v540
      %v555 = vpack.c.b16 %v543, %v542
      %v556 = vpack.c.b16 %v545, %v544
      %v557 = vpack.c.b16 %v547, %v546
      %v558 = vpack.c.b16 %v549, %v548
      %v559 = vpack.c.b16 %v551, %v550
      %568 = vmatprep.subr.bf16.mxu0 0
      %569 = vmatpush1.bf16.msra.mxu0 %v552
      %570 = vmatprep.subr.bf16.mxu0 0
      %571 = vmatpush1.bf16.msra.mxu0 %v553
      %572 = vmatprep.subr.bf16.mxu0 0
      %573 = vmatpush1.bf16.msra.mxu0 %v554
      %574 = vmatprep.subr.bf16.mxu0 0
      %575 = vmatpush1.bf16.msra.mxu0 %v555
      %576 = vmatprep.subr.bf16.mxu0 0
      %577 = vmatpush1.bf16.msra.mxu0 %v556
      %578 = vmatprep.subr.bf16.mxu0 0
      %579 = vmatpush1.bf16.msra.mxu0 %v557
      %580 = vmatprep.subr.bf16.mxu0 0
      %581 = vmatpush1.bf16.msra.mxu0 %v558
      %582 = vmatprep.subr.bf16.mxu0 0
      %583 = vmatpush1.bf16.msra.mxu0 %v559
      %584 = vmatprep.subr.bf16.mxu0 0
      %585 = vmatpush1.bf16.msra.mxu0 0
      %586 = vmatprep.subr.bf16.mxu0 0
      %587 = vmatpush1.bf16.msra.mxu0 0
      %588 = vmatprep.subr.bf16.mxu0 0
      %589 = vmatpush1.bf16.msra.mxu0 0
      %590 = vmatprep.subr.bf16.mxu0 0
      %591 = vmatpush1.bf16.msra.mxu0 0
      %592 = vmatprep.subr.bf16.mxu0 0
      %593 = vmatpush1.bf16.msra.mxu0 0
      %594 = vmatprep.subr.bf16.mxu0 0
      %595 = vmatpush1.bf16.msra.mxu0 0
      %596 = vmatprep.subr.bf16.mxu0 0
      %597 = vmatpush1.bf16.msra.mxu0 0
      %598 = vmatprep.subr.bf16.mxu0 0
      %599 = vmatpush1.bf16.msra.mxu0 0
      %600 = vmatprep.mubr.bf16.mxu0 0
      %601 = vmatmul.mubr.bf16.gmra.mrb[0].mxu0 %v448
      %v602 = vpop.f32.mrb[0].mxu0
      %v603 = vadd.f32 0.0, %v602
      %v604 = vpop.f32.mrb[0].mxu0
      %v605 = vpop.f32.mrb[0].mxu0
      %v606 = vadd.f32 0.0, %v605
      %v607 = vpop.f32.mrb[0].mxu0
      %608 = vmatprep.mubr.bf16.mxu0 0
      %609 = vmatmul.mubr.bf16.gmra.mrb[0].mxu0 %v449
      %v610 = vpop.f32.mrb[0].mxu0
      %v611 = vpop.f32.mrb[0].mxu0
      %v612 = vpop.f32.mrb[0].mxu0
      %v613 = vadd.f32 0.0, %v612
      %v614 = vpop.f32.mrb[0].mxu0
      %615 = vmatprep.mubr.bf16.mxu0 0
      %616 = vmatmul.mubr.bf16.gmra.mrb[0].mxu0 %v450
      %v617 = vpop.f32.mrb[0].mxu0
      %v618 = vadd.f32 0.0, %v617
      %v619 = vpop.f32.mrb[0].mxu0
      %v620 = vpop.f32.mrb[0].mxu0
      %v621 = vadd.f32 0.0, %v620
      %v622 = vpop.f32.mrb[0].mxu0
      %623 = vmatprep.mubr.bf16.mxu0 0
      %624 = vmatmul.mubr.bf16.gmra.mrb[0].mxu0 %v451
      %v625 = vpop.f32.mrb[0].mxu0
      %v626 = vpop.f32.mrb[0].mxu0
      %v627 = vpop.f32.mrb[0].mxu0
      %v628 = vadd.f32 0.0, %v627
      %v629 = vpop.f32.mrb[0].mxu0
      %630 = vmatprep.mubr.bf16.mxu0 0
      %631 = vmatmul.mubr.bf16.gmra.mrb[0].mxu0 %v452
      %v632 = vpop.f32.mrb[0].mxu0
      %v633 = vadd.f32 0.0, %v632
      %v634 = vpop.f32.mrb[0].mxu0
      %v635 = vpop.f32.mrb[0].mxu0
      %v636 = vadd.f32 0.0, %v635
      %v637 = vpop.f32.mrb[0].mxu0
      %638 = vmatprep.mubr.bf16.mxu0 0
      %639 = vmatmul.mubr.bf16.gmra.mrb[0].mxu0 %v453
      %v640 = vpop.f32.mrb[0].mxu0
      %v641 = vpop.f32.mrb[0].mxu0
      %v642 = vpop.f32.mrb[0].mxu0
      %v643 = vadd.f32 0.0, %v642
      %v644 = vpop.f32.mrb[0].mxu0
      %645 = vmatprep.mubr.bf16.mxu0 0
      %646 = vmatmul.mubr.bf16.gmra.mrb[0].mxu0 %v454
      %v647 = vpop.f32.mrb[0].mxu0
      %v648 = vadd.f32 0.0, %v647
      %v649 = vpop.f32.mrb[0].mxu0
      %v650 = vpop.f32.mrb[0].mxu0
      %v651 = vadd.f32 0.0, %v650
      %v652 = vpop.f32.mrb[0].mxu0
      %653 = vmatprep.mubr.bf16.mxu0 0
      %654 = vmatmul.mubr.bf16.gmra.mrb[0].mxu0 %v455
      %v655 = vpop.f32.mrb[0].mxu0
      %v656 = vpop.f32.mrb[0].mxu0
      %v657 = vpop.f32.mrb[0].mxu0
      %v658 = vadd.f32 0.0, %v657
      %v659 = vpop.f32.mrb[0].mxu0
      %660 = vmatprep.mubr.bf16.mxu0 0
      %661 = vmatmul.mubr.bf16.gmra.mrb[0].mxu0 %v456
      %v662 = vpop.f32.mrb[0].mxu0
      %v663 = vadd.f32 0.0, %v662
      %v664 = vpop.f32.mrb[0].mxu0
      %v665 = vpop.f32.mrb[0].mxu0
      %v666 = vadd.f32 0.0, %v665
      %v667 = vpop.f32.mrb[0].mxu0
      %668 = vmatprep.mubr.bf16.mxu0 0
      %669 = vmatmul.mubr.bf16.gmra.mrb[0].mxu0 %v457
      %v670 = vpop.f32.mrb[0].mxu0
      %v671 = vpop.f32.mrb[0].mxu0
      %v672 = vpop.f32.mrb[0].mxu0
      %v673 = vadd.f32 0.0, %v672
      %v674 = vpop.f32.mrb[0].mxu0
      %675 = vmatprep.mubr.bf16.mxu0 0
      %676 = vmatmul.mubr.bf16.gmra.mrb[0].mxu0 %v458
      %v677 = vpop.f32.mrb[0].mxu0
      %v678 = vadd.f32 0.0, %v677
      %v679 = vpop.f32.mrb[0].mxu0
      %v680 = vpop.f32.mrb[0].mxu0
      %v681 = vadd.f32 0.0, %v680
      %v682 = vpop.f32.mrb[0].mxu0
      %683 = vmatprep.mubr.bf16.mxu0 0
      %684 = vmatmul.mubr.bf16.gmra.mrb[0].mxu0 %v459
      %v685 = vpop.f32.mrb[0].mxu0
      %v686 = vpop.f32.mrb[0].mxu0
      %v687 = vpop.f32.mrb[0].mxu0
      %v688 = vadd.f32 0.0, %v687
      %v689 = vpop.f32.mrb[0].mxu0
      %690 = vmatprep.mubr.bf16.mxu0 0
      %691 = vmatmul.mubr.bf16.gmra.mrb[0].mxu0 %v460
      %v692 = vpop.f32.mrb[0].mxu0
      %v693 = vadd.f32 0.0, %v692
      %v694 = vpop.f32.mrb[0].mxu0
      %v695 = vpop.f32.mrb[0].mxu0
      %v696 = vadd.f32 0.0, %v695
      %v697 = vpop.f32.mrb[0].mxu0
      %698 = vmatprep.mubr.bf16.mxu0 0
      %699 = vmatmul.mubr.bf16.gmra.mrb[0].mxu0 %v461
      %v700 = vpop.f32.mrb[0].mxu0
      %v701 = vpop.f32.mrb[0].mxu0
      %v702 = vpop.f32.mrb[0].mxu0
      %v703 = vadd.f32 0.0, %v702
      %v704 = vpop.f32.mrb[0].mxu0
      %705 = vmatprep.mubr.bf16.mxu0 0
      %706 = vmatmul.mubr.bf16.gmra.mrb[0].mxu0 %v462
      %v707 = vpop.f32.mrb[0].mxu0
      %v708 = vadd.f32 0.0, %v707
      %v709 = vpop.f32.mrb[0].mxu0
      %v710 = vpop.f32.mrb[0].mxu0
      %v711 = vadd.f32 0.0, %v710
      %v712 = vpop.f32.mrb[0].mxu0
      %713 = vmatprep.mubr.bf16.mxu0 0
      %714 = vmatmul.mubr.bf16.gmra.mrb[0].mxu0 %v463
      %v715 = vpop.f32.mrb[0].mxu0
      %v716 = vpop.f32.mrb[0].mxu0
      %v717 = vpop.f32.mrb[0].mxu0
      %v718 = vadd.f32 0.0, %v717
      %v719 = vpop.f32.mrb[0].mxu0
      %720 = vmatprep.mubr.bf16.mxu0 0
      %721 = vmatmul.mubr.bf16.gmra.mrb[0].mxu0 %v464
      %v722 = vpop.f32.mrb[0].mxu0
      %v723 = vadd.f32 0.0, %v722
      %v724 = vpop.f32.mrb[0].mxu0
      %v725 = vpop.f32.mrb[0].mxu0
      %v726 = vadd.f32 0.0, %v725
      %v727 = vpop.f32.mrb[0].mxu0
      %728 = vmatprep.mubr.bf16.mxu0 0
      %729 = vmatmul.mubr.bf16.gmra.mrb[0].mxu0 %v465
      %v730 = vpop.f32.mrb[0].mxu0
      %v731 = vpop.f32.mrb[0].mxu0
      %v732 = vpop.f32.mrb[0].mxu0
      %v733 = vadd.f32 0.0, %v732
      %v734 = vpop.f32.mrb[0].mxu0
      %735 = vmatprep.mubr.bf16.mxu0 0
      %736 = vmatmul.mubr.bf16.gmra.mrb[0].mxu0 %v466
      %v737 = vpop.f32.mrb[0].mxu0
      %v738 = vadd.f32 0.0, %v737
      %v739 = vpop.f32.mrb[0].mxu0
      %v740 = vpop.f32.mrb[0].mxu0
      %v741 = vadd.f32 0.0, %v740
      %v742 = vpop.f32.mrb[0].mxu0
      %743 = vmatprep.mubr.bf16.mxu0 0
      %744 = vmatmul.mubr.bf16.gmra.mrb[0].mxu0 %v467
      %v745 = vpop.f32.mrb[0].mxu0
      %v746 = vpop.f32.mrb[0].mxu0
      %v747 = vpop.f32.mrb[0].mxu0
      %v748 = vadd.f32 0.0, %v747
      %v749 = vpop.f32.mrb[0].mxu0
      %750 = vmatprep.mubr.bf16.mxu0 0
      %751 = vmatmul.mubr.bf16.gmra.mrb[0].mxu0 %v468
      %v752 = vpop.f32.mrb[0].mxu0
      %v753 = vadd.f32 0.0, %v752
      %v754 = vpop.f32.mrb[0].mxu0
      %v755 = vpop.f32.mrb[0].mxu0
      %v756 = vadd.f32 0.0, %v755
      %v757 = vpop.f32.mrb[0].mxu0
      %758 = vmatprep.mubr.bf16.mxu0 0
      %759 = vmatmul.mubr.bf16.gmra.mrb[0].mxu0 %v469
      %v760 = vpop.f32.mrb[0].mxu0
      %v761 = vpop.f32.mrb[0].mxu0
      %v762 = vpop.f32.mrb[0].mxu0
      %v763 = vadd.f32 0.0, %v762
      %v764 = vpop.f32.mrb[0].mxu0
      %765 = vmatprep.mubr.bf16.mxu0 0
      %766 = vmatmul.mubr.bf16.gmra.mrb[0].mxu0 %v470
      %v767 = vpop.f32.mrb[0].mxu0
      %v768 = vadd.f32 0.0, %v767
      %v769 = vpop.f32.mrb[0].mxu0
      %v770 = vpop.f32.mrb[0].mxu0
      %v771 = vadd.f32 0.0, %v770
      %v772 = vpop.f32.mrb[0].mxu0
      %773 = vmatprep.mubr.bf16.mxu0 0
      %774 = vmatmul.mubr.bf16.gmra.mrb[0].mxu0 %v471
      %v775 = vpop.f32.mrb[0].mxu0
      %v776 = vpop.f32.mrb[0].mxu0
      %v777 = vpop.f32.mrb[0].mxu0
      %v778 = vadd.f32 0.0, %v777
      %v779 = vpop.f32.mrb[0].mxu0
      %780 = vmatprep.mubr.bf16.mxu0 0
      %781 = vmatmul.mubr.bf16.gmra.mrb[0].mxu0 %v472
      %v782 = vpop.f32.mrb[0].mxu0
      %v783 = vadd.f32 0.0, %v782
      %v784 = vpop.f32.mrb[0].mxu0
      %v785 = vpop.f32.mrb[0].mxu0
      %v786 = vadd.f32 0.0, %v785
      %v787 = vpop.f32.mrb[0].mxu0
      %788 = vmatprep.mubr.bf16.mxu0 0
      %789 = vmatmul.mubr.bf16.gmra.mrb[0].mxu0 %v473
      %v790 = vpop.f32.mrb[0].mxu0
      %v791 = vpop.f32.mrb[0].mxu0
      %v792 = vpop.f32.mrb[0].mxu0
      %v793 = vadd.f32 0.0, %v792
      %v794 = vpop.f32.mrb[0].mxu0
      %795 = vmatprep.mubr.bf16.mxu0 0
      %796 = vmatmul.mubr.bf16.gmra.mrb[0].mxu0 %v474
      %v797 = vpop.f32.mrb[0].mxu0
      %v798 = vadd.f32 0.0, %v797
      %v799 = vpop.f32.mrb[0].mxu0
      %v800 = vpop.f32.mrb[0].mxu0
      %v801 = vadd.f32 0.0, %v800
      %v802 = vpop.f32.mrb[0].mxu0
      %803 = vmatprep.mubr.bf16.mxu0 0
      %804 = vmatmul.mubr.bf16.gmra.mrb[0].mxu0 %v475
      %v805 = vpop.f32.mrb[0].mxu0
      %v806 = vpop.f32.mrb[0].mxu0
      %v807 = vpop.f32.mrb[0].mxu0
      %v808 = vadd.f32 0.0, %v807
      %v809 = vpop.f32.mrb[0].mxu0
      %810 = vmatprep.mubr.bf16.mxu0 0
      %811 = vmatmul.mubr.bf16.gmra.mrb[0].mxu0 %v476
      %v812 = vpop.f32.mrb[0].mxu0
      %v813 = vadd.f32 0.0, %v812
      %v814 = vpop.f32.mrb[0].mxu0
      %v815 = vpop.f32.mrb[0].mxu0
      %v816 = vadd.f32 0.0, %v815
      %v817 = vpop.f32.mrb[0].mxu0
      %818 = vmatprep.mubr.bf16.mxu0 0
      %819 = vmatmul.mubr.bf16.gmra.mrb[0].mxu0 %v477
      %v820 = vpop.f32.mrb[0].mxu0
      %v821 = vpop.f32.mrb[0].mxu0
      %v822 = vpop.f32.mrb[0].mxu0
      %v823 = vpop.f32.mrb[0].mxu0
      %824 = vmatprep.mubr.bf16.mxu0 0
      %825 = vmatmul.mubr.bf16.gmra.mrb[0].mxu0 %v478
      %v826 = vpop.f32.mrb[0].mxu0
      %v827 = vpop.f32.mrb[0].mxu0
      %v828 = vpop.f32.mrb[0].mxu0
      %v829 = vpop.f32.mrb[0].mxu0
      %830 = vmatprep.mubr.bf16.mxu0 0
      %831 = vmatmul.mubr.bf16.gmra.mrb[0].mxu0 %v479
      %v832 = vpop.f32.mrb[0].mxu0
      %v833 = vpop.f32.mrb[0].mxu0
      %v834 = vpop.f32.mrb[0].mxu0
      %v835 = vpop.f32.mrb[0].mxu0
      %836 = vmatprep.mubr.bf16.mxu0 0
      %837 = vmatmul.mubr.bf16.gmra.mrb[0].mxu0 %v480
      %v838 = vpop.f32.mrb[0].mxu0
      %v839 = vpop.f32.mrb[0].mxu0
      %v840 = vpop.f32.mrb[0].mxu0
      %v841 = vpop.f32.mrb[0].mxu0
      %842 = vmatprep.mubr.bf16.mxu0 0
      %843 = vmatmul.mubr.bf16.gmra.mrb[0].mxu0 %v481
      %v844 = vpop.f32.mrb[0].mxu0
      %v845 = vpop.f32.mrb[0].mxu0
      %v846 = vpop.f32.mrb[0].mxu0
      %v847 = vadd.f32 0.0, %v846
      %v848 = vpop.f32.mrb[0].mxu0
      %849 = vmatprep.mubr.bf16.mxu0 0
      %850 = vmatmul.mubr.bf16.gmra.mrb[0].mxu0 %v482
      %v851 = vpop.f32.mrb[0].mxu0
      %v852 = vadd.f32 0.0, %v851
      %v853 = vpop.f32.mrb[0].mxu0
      %v854 = vpop.f32.mrb[0].mxu0
      %v855 = vadd.f32 0.0, %v854
      %v856 = vpop.f32.mrb[0].mxu0
      %857 = vmatprep.mubr.bf16.mxu0 0
      %858 = vmatmul.mubr.bf16.gmra.mrb[0].mxu0 %v483
      %v859 = vpop.f32.mrb[0].mxu0
      %v860 = vpop.f32.mrb[0].mxu0
      %v861 = vpop.f32.mrb[0].mxu0
      %v862 = vadd.f32 0.0, %v861
      %v863 = vpop.f32.mrb[0].mxu0
      %864 = vdwg.mxu0
      %v865 = vrot.slane %v603, 7
      %v866 = vrot.slane %v606, 7
      %v867 = vrot.slane %v613, 7
      %v868 = vrot.slane %v618, 7
      %v869 = vrot.slane %v621, 7
      %v870 = vrot.slane %v628, 7
      %v871 = vrot.slane %v633, 7
      %v872 = vrot.slane %v636, 7
      %v873 = vrot.slane %v643, 7
      %v874 = vrot.slane %v648, 7
      %v875 = vrot.slane %v651, 7
      %v876 = vrot.slane %v658, 7
      %v877 = vrot.slane %v663, 7
      %v878 = vrot.slane %v666, 7
      %v879 = vrot.slane %v673, 7
      %v880 = vrot.slane %v678, 7
      %v881 = vrot.slane %v681, 7
      %v882 = vrot.slane %v688, 7
      %v883 = vrot.slane %v693, 7
      %v884 = vrot.slane %v696, 7
      %v885 = vrot.slane %v703, 7
      %v886 = vrot.slane %v708, 7
      %v887 = vrot.slane %v711, 7
      %v888 = vrot.slane %v718, 7
      %v889 = vrot.slane %v723, 7
      %v890 = vrot.slane %v726, 7
      %v891 = vrot.slane %v733, 7
      %v892 = vrot.slane %v738, 7
      %v893 = vrot.slane %v741, 7
      %v894 = vrot.slane %v748, 7
      %v895 = vrot.slane %v753, 7
      %v896 = vrot.slane %v756, 7
      %v897 = vrot.slane %v763, 7
      %v898 = vrot.slane %v768, 7
      %v899 = vrot.slane %v771, 7
      %v900 = vrot.slane %v778, 7
      %v901 = vrot.slane %v783, 7
      %v902 = vrot.slane %v786, 7
      %v903 = vrot.slane %v793, 7
      %v904 = vrot.slane %v798, 7
      %v905 = vrot.slane %v801, 7
      %v906 = vrot.slane %v808, 7
      %v907 = vrot.slane %v813, 7
      %v908 = vrot.slane %v816, 7
      %v909 = vrot.slane %v847, 7
      %v910 = vrot.slane %v852, 7
      %v911 = vrot.slane %v855, 7
      %v912 = vrot.slane %v862, 7
      %v913 = vlaneseq
      %v914 = vshrl.u32 %v913, 7
      %vm915 = vcmp.lt.s32.totalorder %v914, 1
      %v916 = vsel %vm915, %v910, %v911
      %v917 = vsel %vm915, %v909, %v910
      %v918 = vsel %vm915, %v907, %v908
      %v919 = vsel %vm915, %v906, %v907
      %v920 = vsel %vm915, %v904, %v905
      %v921 = vsel %vm915, %v903, %v904
      %v922 = vsel %vm915, %v901, %v902
      %v923 = vsel %vm915, %v900, %v901
      %v924 = vsel %vm915, %v898, %v899
      %v925 = vsel %vm915, %v897, %v898
      %v926 = vsel %vm915, %v895, %v896
      %v927 = vsel %vm915, %v894, %v895
      %v928 = vsel %vm915, %v892, %v893
      %v929 = vsel %vm915, %v891, %v892
      %v930 = vsel %vm915, %v889, %v890
      %v931 = vsel %vm915, %v888, %v889
      %v932 = vsel %vm915, %v886, %v887
      %v933 = vsel %vm915, %v885, %v886
      %v934 = vsel %vm915, %v883, %v884
      %v935 = vsel %vm915, %v882, %v883
      %v936 = vsel %vm915, %v880, %v881
      %v937 = vsel %vm915, %v879, %v880
      %v938 = vsel %vm915, %v877, %v878
      %v939 = vsel %vm915, %v876, %v877
      %v940 = vsel %vm915, %v874, %v875
      %v941 = vsel %vm915, %v873, %v874
      %v942 = vsel %vm915, %v871, %v872
      %v943 = vsel %vm915, %v870, %v871
      %v944 = vsel %vm915, %v868, %v869
      %v945 = vsel %vm915, %v867, %v868
      %v946 = vsel %vm915, %v865, %v866
      %v947 = vsel %vm915, %v912, %v865
      %v948 = vadd.f32 %v917, 0.0
      %v949 = vadd.f32 %v916, 0.0
      %v950 = vadd.f32 %v947, 0.0
      %v951 = vadd.f32 %v946, 0.0
      %v952 = vadd.f32 %v945, 0.0
      %v953 = vadd.f32 %v944, 0.0
      %v954 = vadd.f32 %v943, 0.0
      %v955 = vadd.f32 %v942, 0.0
      %v956 = vadd.f32 %v941, 0.0
      %v957 = vadd.f32 %v940, 0.0
      %v958 = vadd.f32 %v939, 0.0
      %v959 = vadd.f32 %v938, 0.0
      %v960 = vadd.f32 %v937, 0.0
      %v961 = vadd.f32 %v936, 0.0
      %v962 = vadd.f32 %v935, 0.0
      %v963 = vadd.f32 %v934, 0.0
      %v964 = vadd.f32 %v933, 0.0
      %v965 = vadd.f32 %v932, 0.0
      %v966 = vadd.f32 %v931, 0.0
      %v967 = vadd.f32 %v930, 0.0
      %v968 = vadd.f32 %v929, 0.0
      %v969 = vadd.f32 %v928, 0.0
      %v970 = vadd.f32 %v927, 0.0
      %v971 = vadd.f32 %v926, 0.0
      %v972 = vadd.f32 %v925, 0.0
      %v973 = vadd.f32 %v924, 0.0
      %v974 = vadd.f32 %v923, 0.0
      %v975 = vadd.f32 %v922, 0.0
      %v976 = vadd.f32 %v921, 0.0
      %v977 = vadd.f32 %v920, 0.0
      %v978 = vadd.f32 %v919, 0.0
      %v979 = vadd.f32 %v918, 0.0
      %s980 = scalar_lea.vmem %s1, 64
      %v981 = vld [vmem:[%s980] sm:$0xf]
      %v982 = vld [vmem:[%s980 + $0x4] sm:$0xf]
      %v983 = vld [vmem:[%s980 + $0x8] sm:$0xf]
      %v984 = vld [vmem:[%s980 + $0xc] sm:$0xf]
      %v985 = vld [vmem:[%s980 + $0x10] sm:$0xf]
      %v986 = vld [vmem:[%s980 + $0x14] sm:$0xf]
      %v987 = vld [vmem:[%s980 + $0x18] sm:$0xf]
      %v988 = vld [vmem:[%s980 + $0x1c] sm:$0xf]
      %v989 = vld [vmem:[%s980 + $0x20] sm:$0xf]
      %v990 = vld [vmem:[%s980 + $0x24] sm:$0xf]
      %v991 = vld [vmem:[%s980 + $0x28] sm:$0xf]
      %v992 = vld [vmem:[%s980 + $0x2c] sm:$0xf]
      %v993 = vld [vmem:[%s980 + $0x30] sm:$0xf]
      %v994 = vld [vmem:[%s980 + $0x34] sm:$0xf]
      %v995 = vld [vmem:[%s980 + $0x38] sm:$0xf]
      %v996 = vld [vmem:[%s980 + $0x3c] sm:$0xf]
      %v1013 = vunpack.c.l.b16 %v981
      %v1014 = vunpack.c.l.b16 %v982
      %v1015 = vunpack.c.l.b16 %v983
      %v1016 = vunpack.c.l.b16 %v984
      %v1017 = vunpack.c.l.b16 %v985
      %v1018 = vunpack.c.l.b16 %v986
      %v1019 = vunpack.c.l.b16 %v987
      %v1020 = vunpack.c.l.b16 %v988
      %v1021 = vunpack.c.l.b16 %v989
      %v1022 = vunpack.c.l.b16 %v990
      %v1023 = vunpack.c.l.b16 %v991
      %v1024 = vunpack.c.l.b16 %v992
      %v1025 = vunpack.c.l.b16 %v993
      %v1026 = vunpack.c.l.b16 %v994
      %v1027 = vunpack.c.l.b16 %v995
      %v1028 = vunpack.c.l.b16 %v996
      %v1029 = vpack.c.b16 %v1014, %v1013
      %v1030 = vpack.c.b16 %v1016, %v1015
      %v1031 = vpack.c.b16 %v1018, %v1017
      %v1032 = vpack.c.b16 %v1020, %v1019
      %v1033 = vpack.c.b16 %v1022, %v1021
      %v1034 = vpack.c.b16 %v1024, %v1023
      %v1035 = vpack.c.b16 %v1026, %v1025
      %v1036 = vpack.c.b16 %v1028, %v1027
      %1045 = vmatprep.subr.bf16.mxu0 0
      %1046 = vmatpush1.bf16.msra.mxu0 %v1029
      %1047 = vmatprep.subr.bf16.mxu0 0
      %1048 = vmatpush1.bf16.msra.mxu0 %v1030
      %1049 = vmatprep.subr.bf16.mxu0 0
      %1050 = vmatpush1.bf16.msra.mxu0 %v1031
      %1051 = vmatprep.subr.bf16.mxu0 0
      %1052 = vmatpush1.bf16.msra.mxu0 %v1032
      %1053 = vmatprep.subr.bf16.mxu0 0
      %1054 = vmatpush1.bf16.msra.mxu0 %v1033
      %1055 = vmatprep.subr.bf16.mxu0 0
      %1056 = vmatpush1.bf16.msra.mxu0 %v1034
      %1057 = vmatprep.subr.bf16.mxu0 0
      %1058 = vmatpush1.bf16.msra.mxu0 %v1035
      %1059 = vmatprep.subr.bf16.mxu0 0
      %1060 = vmatpush1.bf16.msra.mxu0 %v1036
      %1061 = vmatprep.subr.bf16.mxu0 0
      %1062 = vmatpush1.bf16.msra.mxu0 0
      %1063 = vmatprep.subr.bf16.mxu0 0
      %1064 = vmatpush1.bf16.msra.mxu0 0
      %1065 = vmatprep.subr.bf16.mxu0 0
      %1066 = vmatpush1.bf16.msra.mxu0 0
      %1067 = vmatprep.subr.bf16.mxu0 0
      %1068 = vmatpush1.bf16.msra.mxu0 0
      %1069 = vmatprep.subr.bf16.mxu0 0
      %1070 = vmatpush1.bf16.msra.mxu0 0
      %1071 = vmatprep.subr.bf16.mxu0 0
      %1072 = vmatpush1.bf16.msra.mxu0 0
      %1073 = vmatprep.subr.bf16.mxu0 0
      %1074 = vmatpush1.bf16.msra.mxu0 0
      %1075 = vmatprep.subr.bf16.mxu0 0
      %1076 = vmatpush1.bf16.msra.mxu0 0
      %1077 = vmatprep.mubr.bf16.mxu0 0
      %1078 = vmatmul.mubr.bf16.gmra.mrb[0].mxu0 %v448
      %v1079 = vpop.f32.mrb[0].mxu0
      %v1080 = vadd.f32 0.0, %v1079
      %v1081 = vpop.f32.mrb[0].mxu0
      %v1082 = vpop.f32.mrb[0].mxu0
      %v1083 = vadd.f32 0.0, %v1082
      %v1084 = vpop.f32.mrb[0].mxu0
      %1085 = vmatprep.mubr.bf16.mxu0 0
      %1086 = vmatmul.mubr.bf16.gmra.mrb[0].mxu0 %v449
      %v1087 = vpop.f32.mrb[0].mxu0
      %v1088 = vpop.f32.mrb[0].mxu0
      %v1089 = vpop.f32.mrb[0].mxu0
      %v1090 = vpop.f32.mrb[0].mxu0
      %1091 = vmatprep.mubr.bf16.mxu0 0
      %1092 = vmatmul.mubr.bf16.gmra.mrb[0].mxu0 %v450
      %v1093 = vpop.f32.mrb[0].mxu0
      %v1094 = vadd.f32 0.0, %v1093
      %v1095 = vpop.f32.mrb[0].mxu0
      %v1096 = vpop.f32.mrb[0].mxu0
      %v1097 = vadd.f32 0.0, %v1096
      %v1098 = vpop.f32.mrb[0].mxu0
      %1099 = vmatprep.mubr.bf16.mxu0 0
      %1100 = vmatmul.mubr.bf16.gmra.mrb[0].mxu0 %v451
      %v1101 = vpop.f32.mrb[0].mxu0
      %v1102 = vpop.f32.mrb[0].mxu0
      %v1103 = vpop.f32.mrb[0].mxu0
      %v1104 = vpop.f32.mrb[0].mxu0
      %1105 = vmatprep.mubr.bf16.mxu0 0
      %1106 = vmatmul.mubr.bf16.gmra.mrb[0].mxu0 %v452
      %v1107 = vpop.f32.mrb[0].mxu0
      %v1108 = vadd.f32 0.0, %v1107
      %v1109 = vpop.f32.mrb[0].mxu0
      %v1110 = vpop.f32.mrb[0].mxu0
      %v1111 = vadd.f32 0.0, %v1110
      %v1112 = vpop.f32.mrb[0].mxu0
      %1113 = vmatprep.mubr.bf16.mxu0 0
      %1114 = vmatmul.mubr.bf16.gmra.mrb[0].mxu0 %v453
      %v1115 = vpop.f32.mrb[0].mxu0
      %v1116 = vpop.f32.mrb[0].mxu0
      %v1117 = vpop.f32.mrb[0].mxu0
      %v1118 = vpop.f32.mrb[0].mxu0
      %1119 = vmatprep.mubr.bf16.mxu0 0
      %1120 = vmatmul.mubr.bf16.gmra.mrb[0].mxu0 %v454
      %v1121 = vpop.f32.mrb[0].mxu0
      %v1122 = vadd.f32 0.0, %v1121
      %v1123 = vpop.f32.mrb[0].mxu0
      %v1124 = vpop.f32.mrb[0].mxu0
      %v1125 = vadd.f32 0.0, %v1124
      %v1126 = vpop.f32.mrb[0].mxu0
      %1127 = vmatprep.mubr.bf16.mxu0 0
      %1128 = vmatmul.mubr.bf16.gmra.mrb[0].mxu0 %v455
      %v1129 = vpop.f32.mrb[0].mxu0
      %v1130 = vpop.f32.mrb[0].mxu0
      %v1131 = vpop.f32.mrb[0].mxu0
      %v1132 = vpop.f32.mrb[0].mxu0
      %1133 = vmatprep.mubr.bf16.mxu0 0
      %1134 = vmatmul.mubr.bf16.gmra.mrb[0].mxu0 %v456
      %v1135 = vpop.f32.mrb[0].mxu0
      %v1136 = vadd.f32 0.0, %v1135
      %v1137 = vpop.f32.mrb[0].mxu0
      %v1138 = vpop.f32.mrb[0].mxu0
      %v1139 = vadd.f32 0.0, %v1138
      %v1140 = vpop.f32.mrb[0].mxu0
      %1141 = vmatprep.mubr.bf16.mxu0 0
      %1142 = vmatmul.mubr.bf16.gmra.mrb[0].mxu0 %v457
      %v1143 = vpop.f32.mrb[0].mxu0
      %v1144 = vpop.f32.mrb[0].mxu0
      %v1145 = vpop.f32.mrb[0].mxu0
      %v1146 = vpop.f32.mrb[0].mxu0
      %1147 = vmatprep.mubr.bf16.mxu0 0
      %1148 = vmatmul.mubr.bf16.gmra.mrb[0].mxu0 %v458
      %v1149 = vpop.f32.mrb[0].mxu0
      %v1150 = vadd.f32 0.0, %v1149
      %v1151 = vpop.f32.mrb[0].mxu0
      %v1152 = vpop.f32.mrb[0].mxu0
      %v1153 = vadd.f32 0.0, %v1152
      %v1154 = vpop.f32.mrb[0].mxu0
      %1155 = vmatprep.mubr.bf16.mxu0 0
      %1156 = vmatmul.mubr.bf16.gmra.mrb[0].mxu0 %v459
      %v1157 = vpop.f32.mrb[0].mxu0
      %v1158 = vpop.f32.mrb[0].mxu0
      %v1159 = vpop.f32.mrb[0].mxu0
      %v1160 = vpop.f32.mrb[0].mxu0
      %1161 = vmatprep.mubr.bf16.mxu0 0
      %1162 = vmatmul.mubr.bf16.gmra.mrb[0].mxu0 %v460
      %v1163 = vpop.f32.mrb[0].mxu0
      %v1164 = vadd.f32 0.0, %v1163
      %v1165 = vpop.f32.mrb[0].mxu0
      %v1166 = vpop.f32.mrb[0].mxu0
      %v1167 = vadd.f32 0.0, %v1166
      %v1168 = vpop.f32.mrb[0].mxu0
      %1169 = vmatprep.mubr.bf16.mxu0 0
      %1170 = vmatmul.mubr.bf16.gmra.mrb[0].mxu0 %v461
      %v1171 = vpop.f32.mrb[0].mxu0
      %v1172 = vpop.f32.mrb[0].mxu0
      %v1173 = vpop.f32.mrb[0].mxu0
      %v1174 = vpop.f32.mrb[0].mxu0
      %1175 = vmatprep.mubr.bf16.mxu0 0
      %1176 = vmatmul.mubr.bf16.gmra.mrb[0].mxu0 %v462
      %v1177 = vpop.f32.mrb[0].mxu0
      %v1178 = vadd.f32 0.0, %v1177
      %v1179 = vpop.f32.mrb[0].mxu0
      %v1180 = vpop.f32.mrb[0].mxu0
      %v1181 = vadd.f32 0.0, %v1180
      %v1182 = vpop.f32.mrb[0].mxu0
      %1183 = vmatprep.mubr.bf16.mxu0 0
      %1184 = vmatmul.mubr.bf16.gmra.mrb[0].mxu0 %v463
      %v1185 = vpop.f32.mrb[0].mxu0
      %v1186 = vpop.f32.mrb[0].mxu0
      %v1187 = vpop.f32.mrb[0].mxu0
      %v1188 = vpop.f32.mrb[0].mxu0
      %1189 = vmatprep.mubr.bf16.mxu0 0
      %1190 = vmatmul.mubr.bf16.gmra.mrb[0].mxu0 %v464
      %v1191 = vpop.f32.mrb[0].mxu0
      %v1192 = vadd.f32 0.0, %v1191
      %v1193 = vpop.f32.mrb[0].mxu0
      %v1194 = vpop.f32.mrb[0].mxu0
      %v1195 = vadd.f32 0.0, %v1194
      %v1196 = vpop.f32.mrb[0].mxu0
      %1197 = vmatprep.mubr.bf16.mxu0 0
      %1198 = vmatmul.mubr.bf16.gmra.mrb[0].mxu0 %v465
      %v1199 = vpop.f32.mrb[0].mxu0
      %v1200 = vpop.f32.mrb[0].mxu0
      %v1201 = vpop.f32.mrb[0].mxu0
      %v1202 = vpop.f32.mrb[0].mxu0
      %1203 = vmatprep.mubr.bf16.mxu0 0
      %1204 = vmatmul.mubr.bf16.gmra.mrb[0].mxu0 %v466
      %v1205 = vpop.f32.mrb[0].mxu0
      %v1206 = vadd.f32 0.0, %v1205
      %v1207 = vpop.f32.mrb[0].mxu0
      %v1208 = vpop.f32.mrb[0].mxu0
      %v1209 = vadd.f32 0.0, %v1208
      %v1210 = vpop.f32.mrb[0].mxu0
      %1211 = vmatprep.mubr.bf16.mxu0 0
      %1212 = vmatmul.mubr.bf16.gmra.mrb[0].mxu0 %v467
      %v1213 = vpop.f32.mrb[0].mxu0
      %v1214 = vpop.f32.mrb[0].mxu0
      %v1215 = vpop.f32.mrb[0].mxu0
      %v1216 = vpop.f32.mrb[0].mxu0
      %1217 = vmatprep.mubr.bf16.mxu0 0
      %1218 = vmatmul.mubr.bf16.gmra.mrb[0].mxu0 %v468
      %v1219 = vpop.f32.mrb[0].mxu0
      %v1220 = vadd.f32 0.0, %v1219
      %v1221 = vpop.f32.mrb[0].mxu0
      %v1222 = vpop.f32.mrb[0].mxu0
      %v1223 = vadd.f32 0.0, %v1222
      %v1224 = vpop.f32.mrb[0].mxu0
      %1225 = vmatprep.mubr.bf16.mxu0 0
      %1226 = vmatmul.mubr.bf16.gmra.mrb[0].mxu0 %v469
      %v1227 = vpop.f32.mrb[0].mxu0
      %v1228 = vpop.f32.mrb[0].mxu0
      %v1229 = vpop.f32.mrb[0].mxu0
      %v1230 = vpop.f32.mrb[0].mxu0
      %1231 = vmatprep.mubr.bf16.mxu0 0
      %1232 = vmatmul.mubr.bf16.gmra.mrb[0].mxu0 %v470
      %v1233 = vpop.f32.mrb[0].mxu0
      %v1234 = vadd.f32 0.0, %v1233
      %v1235 = vpop.f32.mrb[0].mxu0
      %v1236 = vpop.f32.mrb[0].mxu0
      %v1237 = vadd.f32 0.0, %v1236
      %v1238 = vpop.f32.mrb[0].mxu0
      %1239 = vmatprep.mubr.bf16.mxu0 0
      %1240 = vmatmul.mubr.bf16.gmra.mrb[0].mxu0 %v471
      %v1241 = vpop.f32.mrb[0].mxu0
      %v1242 = vpop.f32.mrb[0].mxu0
      %v1243 = vpop.f32.mrb[0].mxu0
      %v1244 = vpop.f32.mrb[0].mxu0
      %1245 = vmatprep.mubr.bf16.mxu0 0
      %1246 = vmatmul.mubr.bf16.gmra.mrb[0].mxu0 %v472
      %v1247 = vpop.f32.mrb[0].mxu0
      %v1248 = vadd.f32 0.0, %v1247
      %v1249 = vpop.f32.mrb[0].mxu0
      %v1250 = vpop.f32.mrb[0].mxu0
      %v1251 = vadd.f32 0.0, %v1250
      %v1252 = vpop.f32.mrb[0].mxu0
      %1253 = vmatprep.mubr.bf16.mxu0 0
      %1254 = vmatmul.mubr.bf16.gmra.mrb[0].mxu0 %v473
      %v1255 = vpop.f32.mrb[0].mxu0
      %v1256 = vpop.f32.mrb[0].mxu0
      %v1257 = vpop.f32.mrb[0].mxu0
      %v1258 = vpop.f32.mrb[0].mxu0
      %1259 = vmatprep.mubr.bf16.mxu0 0
      %1260 = vmatmul.mubr.bf16.gmra.mrb[0].mxu0 %v474
      %v1261 = vpop.f32.mrb[0].mxu0
      %v1262 = vadd.f32 0.0, %v1261
      %v1263 = vpop.f32.mrb[0].mxu0
      %v1264 = vpop.f32.mrb[0].mxu0
      %v1265 = vadd.f32 0.0, %v1264
      %v1266 = vpop.f32.mrb[0].mxu0
      %1267 = vmatprep.mubr.bf16.mxu0 0
      %1268 = vmatmul.mubr.bf16.gmra.mrb[0].mxu0 %v475
      %v1269 = vpop.f32.mrb[0].mxu0
      %v1270 = vpop.f32.mrb[0].mxu0
      %v1271 = vpop.f32.mrb[0].mxu0
      %v1272 = vpop.f32.mrb[0].mxu0
      %1273 = vmatprep.mubr.bf16.mxu0 0
      %1274 = vmatmul.mubr.bf16.gmra.mrb[0].mxu0 %v476
      %v1275 = vpop.f32.mrb[0].mxu0
      %v1276 = vadd.f32 0.0, %v1275
      %v1277 = vpop.f32.mrb[0].mxu0
      %v1278 = vpop.f32.mrb[0].mxu0
      %v1279 = vadd.f32 0.0, %v1278
      %v1280 = vpop.f32.mrb[0].mxu0
      %1281 = vmatprep.mubr.bf16.mxu0 0
      %1282 = vmatmul.mubr.bf16.gmra.mrb[0].mxu0 %v477
      %v1283 = vpop.f32.mrb[0].mxu0
      %v1284 = vpop.f32.mrb[0].mxu0
      %v1285 = vpop.f32.mrb[0].mxu0
      %v1286 = vpop.f32.mrb[0].mxu0
      %1287 = vmatprep.mubr.bf16.mxu0 0
      %1288 = vmatmul.mubr.bf16.gmra.mrb[0].mxu0 %v478
      %v1289 = vpop.f32.mrb[0].mxu0
      %v1290 = vpop.f32.mrb[0].mxu0
      %v1291 = vpop.f32.mrb[0].mxu0
      %v1292 = vpop.f32.mrb[0].mxu0
      %1293 = vmatprep.mubr.bf16.mxu0 0
      %1294 = vmatmul.mubr.bf16.gmra.mrb[0].mxu0 %v479
      %v1295 = vpop.f32.mrb[0].mxu0
      %v1296 = vpop.f32.mrb[0].mxu0
      %v1297 = vpop.f32.mrb[0].mxu0
      %v1298 = vpop.f32.mrb[0].mxu0
      %1299 = vmatprep.mubr.bf16.mxu0 0
      %1300 = vmatmul.mubr.bf16.gmra.mrb[0].mxu0 %v480
      %v1301 = vpop.f32.mrb[0].mxu0
      %v1302 = vpop.f32.mrb[0].mxu0
      %v1303 = vpop.f32.mrb[0].mxu0
      %v1304 = vpop.f32.mrb[0].mxu0
      %1305 = vmatprep.mubr.bf16.mxu0 0
      %1306 = vmatmul.mubr.bf16.gmra.mrb[0].mxu0 %v481
      %v1307 = vpop.f32.mrb[0].mxu0
      %v1308 = vpop.f32.mrb[0].mxu0
      %v1309 = vpop.f32.mrb[0].mxu0
      %v1310 = vpop.f32.mrb[0].mxu0
      %1311 = vmatprep.mubr.bf16.mxu0 0
      %1312 = vmatmul.mubr.bf16.gmra.mrb[0].mxu0 %v482
      %v1313 = vpop.f32.mrb[0].mxu0
      %v1314 = vadd.f32 0.0, %v1313
      %v1315 = vpop.f32.mrb[0].mxu0
      %v1316 = vpop.f32.mrb[0].mxu0
      %v1317 = vadd.f32 0.0, %v1316
      %v1318 = vpop.f32.mrb[0].mxu0
      %1319 = vmatprep.mubr.bf16.mxu0 0
      %1320 = vmatmul.mubr.bf16.gmra.mrb[0].mxu0 %v483
      %v1321 = vpop.f32.mrb[0].mxu0
      %v1322 = vpop.f32.mrb[0].mxu0
      %v1323 = vpop.f32.mrb[0].mxu0
      %v1324 = vpop.f32.mrb[0].mxu0
      %1325 = vdwg.mxu0
      %v1326 = vadd.f32 %v948, %v1314
      %v1327 = vadd.f32 %v949, %v1317
      %v1328 = vadd.f32 %v950, %v1080
      %v1329 = vadd.f32 %v951, %v1083
      %v1330 = vadd.f32 %v952, %v1094
      %v1331 = vadd.f32 %v953, %v1097
      %v1332 = vadd.f32 %v954, %v1108
      %v1333 = vadd.f32 %v955, %v1111
      %v1334 = vadd.f32 %v956, %v1122
      %v1335 = vadd.f32 %v957, %v1125
      %v1336 = vadd.f32 %v958, %v1136
      %v1337 = vadd.f32 %v959, %v1139
      %v1338 = vadd.f32 %v960, %v1150
      %v1339 = vadd.f32 %v961, %v1153
      %v1340 = vadd.f32 %v962, %v1164
      %v1341 = vadd.f32 %v963, %v1167
      %v1342 = vadd.f32 %v964, %v1178
      %v1343 = vadd.f32 %v965, %v1181
      %v1344 = vadd.f32 %v966, %v1192
      %v1345 = vadd.f32 %v967, %v1195
      %v1346 = vadd.f32 %v968, %v1206
      %v1347 = vadd.f32 %v969, %v1209
      %v1348 = vadd.f32 %v970, %v1220
      %v1349 = vadd.f32 %v971, %v1223
      %v1350 = vadd.f32 %v972, %v1234
      %v1351 = vadd.f32 %v973, %v1237
      %v1352 = vadd.f32 %v974, %v1248
      %v1353 = vadd.f32 %v975, %v1251
      %v1354 = vadd.f32 %v976, %v1262
      %v1355 = vadd.f32 %v977, %v1265
      %v1356 = vadd.f32 %v978, %v1276
      %v1357 = vadd.f32 %v979, %v1279
      %s1358 = scalar_lea.vmem %s1, 128
      %v1359 = vld [vmem:[%s1358] sm:$0xf]
      %v1360 = vld [vmem:[%s1358 + $0x4] sm:$0xf]
      %v1361 = vld [vmem:[%s1358 + $0x8] sm:$0xf]
      %v1362 = vld [vmem:[%s1358 + $0xc] sm:$0xf]
      %v1363 = vld [vmem:[%s1358 + $0x10] sm:$0xf]
      %v1364 = vld [vmem:[%s1358 + $0x14] sm:$0xf]
      %v1365 = vld [vmem:[%s1358 + $0x18] sm:$0xf]
      %v1366 = vld [vmem:[%s1358 + $0x1c] sm:$0xf]
      %v1367 = vld [vmem:[%s1358 + $0x20] sm:$0xf]
      %v1368 = vld [vmem:[%s1358 + $0x24] sm:$0xf]
      %v1369 = vld [vmem:[%s1358 + $0x28] sm:$0xf]
      %v1370 = vld [vmem:[%s1358 + $0x2c] sm:$0xf]
      %v1371 = vld [vmem:[%s1358 + $0x30] sm:$0xf]
      %v1372 = vld [vmem:[%s1358 + $0x34] sm:$0xf]
      %v1373 = vld [vmem:[%s1358 + $0x38] sm:$0xf]
      %v1374 = vld [vmem:[%s1358 + $0x3c] sm:$0xf]
      %v1391 = vunpack.c.l.b16 %v1359
      %v1392 = vunpack.c.l.b16 %v1360
      %v1393 = vunpack.c.l.b16 %v1361
      %v1394 = vunpack.c.l.b16 %v1362
      %v1395 = vunpack.c.l.b16 %v1363
      %v1396 = vunpack.c.l.b16 %v1364
      %v1397 = vunpack.c.l.b16 %v1365
      %v1398 = vunpack.c.l.b16 %v1366
      %v1399 = vunpack.c.l.b16 %v1367
      %v1400 = vunpack.c.l.b16 %v1368
      %v1401 = vunpack.c.l.b16 %v1369
      %v1402 = vunpack.c.l.b16 %v1370
      %v1403 = vunpack.c.l.b16 %v1371
      %v1404 = vunpack.c.l.b16 %v1372
      %v1405 = vunpack.c.l.b16 %v1373
      %v1406 = vunpack.c.l.b16 %v1374
      %v1407 = vpack.c.b16 %v1392, %v1391
      %v1408 = vpack.c.b16 %v1394, %v1393
      %v1409 = vpack.c.b16 %v1396, %v1395
      %v1410 = vpack.c.b16 %v1398, %v1397
      %v1411 = vpack.c.b16 %v1400, %v1399
      %v1412 = vpack.c.b16 %v1402, %v1401
      %v1413 = vpack.c.b16 %v1404, %v1403
      %v1414 = vpack.c.b16 %v1406, %v1405
      %1423 = vmatprep.subr.bf16.mxu0 0
      %1424 = vmatpush1.bf16.msra.mxu0 %v1407
      %1425 = vmatprep.subr.bf16.mxu0 0
      %1426 = vmatpush1.bf16.msra.mxu0 %v1408
      %1427 = vmatprep.subr.bf16.mxu0 0
      %1428 = vmatpush1.bf16.msra.mxu0 %v1409
      %1429 = vmatprep.subr.bf16.mxu0 0
      %1430 = vmatpush1.bf16.msra.mxu0 %v1410
      %1431 = vmatprep.subr.bf16.mxu0 0
      %1432 = vmatpush1.bf16.msra.mxu0 %v1411
      %1433 = vmatprep.subr.bf16.mxu0 0
      %1434 = vmatpush1.bf16.msra.mxu0 %v1412
      %1435 = vmatprep.subr.bf16.mxu0 0
      %1436 = vmatpush1.bf16.msra.mxu0 %v1413
      %1437 = vmatprep.subr.bf16.mxu0 0
      %1438 = vmatpush1.bf16.msra.mxu0 %v1414
      %1439 = vmatprep.subr.bf16.mxu0 0
      %1440 = vmatpush1.bf16.msra.mxu0 0
      %1441 = vmatprep.subr.bf16.mxu0 0
      %1442 = vmatpush1.bf16.msra.mxu0 0
      %1443 = vmatprep.subr.bf16.mxu0 0
      %1444 = vmatpush1.bf16.msra.mxu0 0
      %1445 = vmatprep.subr.bf16.mxu0 0
      %1446 = vmatpush1.bf16.msra.mxu0 0
      %1447 = vmatprep.subr.bf16.mxu0 0
      %1448 = vmatpush1.bf16.msra.mxu0 0
      %1449 = vmatprep.subr.bf16.mxu0 0
      %1450 = vmatpush1.bf16.msra.mxu0 0
      %1451 = vmatprep.subr.bf16.mxu0 0
      %1452 = vmatpush1.bf16.msra.mxu0 0
      %1453 = vmatprep.subr.bf16.mxu0 0
      %1454 = vmatpush1.bf16.msra.mxu0 0
      %1455 = vmatprep.mubr.bf16.mxu0 0
      %1456 = vmatmul.mubr.bf16.gmra.mrb[0].mxu0 %v448
      %v1457 = vpop.f32.mrb[0].mxu0
      %v1458 = vadd.f32 0.0, %v1457
      %v1459 = vpop.f32.mrb[0].mxu0
      %v1460 = vpop.f32.mrb[0].mxu0
      %v1461 = vadd.f32 0.0, %v1460
      %v1462 = vpop.f32.mrb[0].mxu0
      %1463 = vmatprep.mubr.bf16.mxu0 0
      %1464 = vmatmul.mubr.bf16.gmra.mrb[0].mxu0 %v449
      %v1465 = vpop.f32.mrb[0].mxu0
      %v1466 = vadd.f32 0.0, %v1465
      %v1467 = vpop.f32.mrb[0].mxu0
      %v1468 = vpop.f32.mrb[0].mxu0
      %v1469 = vpop.f32.mrb[0].mxu0
      %1470 = vmatprep.mubr.bf16.mxu0 0
      %1471 = vmatmul.mubr.bf16.gmra.mrb[0].mxu0 %v450
      %v1472 = vpop.f32.mrb[0].mxu0
      %v1473 = vadd.f32 0.0, %v1472
      %v1474 = vpop.f32.mrb[0].mxu0
      %v1475 = vpop.f32.mrb[0].mxu0
      %v1476 = vadd.f32 0.0, %v1475
      %v1477 = vpop.f32.mrb[0].mxu0
      %1478 = vmatprep.mubr.bf16.mxu0 0
      %1479 = vmatmul.mubr.bf16.gmra.mrb[0].mxu0 %v451
      %v1480 = vpop.f32.mrb[0].mxu0
      %v1481 = vadd.f32 0.0, %v1480
      %v1482 = vpop.f32.mrb[0].mxu0
      %v1483 = vpop.f32.mrb[0].mxu0
      %v1484 = vpop.f32.mrb[0].mxu0
      %1485 = vmatprep.mubr.bf16.mxu0 0
      %1486 = vmatmul.mubr.bf16.gmra.mrb[0].mxu0 %v452
      %v1487 = vpop.f32.mrb[0].mxu0
      %v1488 = vadd.f32 0.0, %v1487
      %v1489 = vpop.f32.mrb[0].mxu0
      %v1490 = vpop.f32.mrb[0].mxu0
      %v1491 = vadd.f32 0.0, %v1490
      %v1492 = vpop.f32.mrb[0].mxu0
      %1493 = vmatprep.mubr.bf16.mxu0 0
      %1494 = vmatmul.mubr.bf16.gmra.mrb[0].mxu0 %v453
      %v1495 = vpop.f32.mrb[0].mxu0
      %v1496 = vadd.f32 0.0, %v1495
      %v1497 = vpop.f32.mrb[0].mxu0
      %v1498 = vpop.f32.mrb[0].mxu0
      %v1499 = vpop.f32.mrb[0].mxu0
      %1500 = vmatprep.mubr.bf16.mxu0 0
      %1501 = vmatmul.mubr.bf16.gmra.mrb[0].mxu0 %v454
      %v1502 = vpop.f32.mrb[0].mxu0
      %v1503 = vadd.f32 0.0, %v1502
      %v1504 = vpop.f32.mrb[0].mxu0
      %v1505 = vpop.f32.mrb[0].mxu0
      %v1506 = vadd.f32 0.0, %v1505
      %v1507 = vpop.f32.mrb[0].mxu0
      %1508 = vmatprep.mubr.bf16.mxu0 0
      %1509 = vmatmul.mubr.bf16.gmra.mrb[0].mxu0 %v455
      %v1510 = vpop.f32.mrb[0].mxu0
      %v1511 = vadd.f32 0.0, %v1510
      %v1512 = vpop.f32.mrb[0].mxu0
      %v1513 = vpop.f32.mrb[0].mxu0
      %v1514 = vpop.f32.mrb[0].mxu0
      %1515 = vmatprep.mubr.bf16.mxu0 0
      %1516 = vmatmul.mubr.bf16.gmra.mrb[0].mxu0 %v456
      %v1517 = vpop.f32.mrb[0].mxu0
      %v1518 = vadd.f32 0.0, %v1517
      %v1519 = vpop.f32.mrb[0].mxu0
      %v1520 = vpop.f32.mrb[0].mxu0
      %v1521 = vadd.f32 0.0, %v1520
      %v1522 = vpop.f32.mrb[0].mxu0
      %1523 = vmatprep.mubr.bf16.mxu0 0
      %1524 = vmatmul.mubr.bf16.gmra.mrb[0].mxu0 %v457
      %v1525 = vpop.f32.mrb[0].mxu0
      %v1526 = vadd.f32 0.0, %v1525
      %v1527 = vpop.f32.mrb[0].mxu0
      %v1528 = vpop.f32.mrb[0].mxu0
      %v1529 = vpop.f32.mrb[0].mxu0
      %1530 = vmatprep.mubr.bf16.mxu0 0
      %1531 = vmatmul.mubr.bf16.gmra.mrb[0].mxu0 %v458
      %v1532 = vpop.f32.mrb[0].mxu0
      %v1533 = vadd.f32 0.0, %v1532
      %v1534 = vpop.f32.mrb[0].mxu0
      %v1535 = vpop.f32.mrb[0].mxu0
      %v1536 = vadd.f32 0.0, %v1535
      %v1537 = vpop.f32.mrb[0].mxu0
      %1538 = vmatprep.mubr.bf16.mxu0 0
      %1539 = vmatmul.mubr.bf16.gmra.mrb[0].mxu0 %v459
      %v1540 = vpop.f32.mrb[0].mxu0
      %v1541 = vadd.f32 0.0, %v1540
      %v1542 = vpop.f32.mrb[0].mxu0
      %v1543 = vpop.f32.mrb[0].mxu0
      %v1544 = vpop.f32.mrb[0].mxu0
      %1545 = vmatprep.mubr.bf16.mxu0 0
      %1546 = vmatmul.mubr.bf16.gmra.mrb[0].mxu0 %v460
      %v1547 = vpop.f32.mrb[0].mxu0
      %v1548 = vadd.f32 0.0, %v1547
      %v1549 = vpop.f32.mrb[0].mxu0
      %v1550 = vpop.f32.mrb[0].mxu0
      %v1551 = vadd.f32 0.0, %v1550
      %v1552 = vpop.f32.mrb[0].mxu0
      %1553 = vmatprep.mubr.bf16.mxu0 0
      %1554 = vmatmul.mubr.bf16.gmra.mrb[0].mxu0 %v461
      %v1555 = vpop.f32.mrb[0].mxu0
      %v1556 = vadd.f32 0.0, %v1555
      %v1557 = vpop.f32.mrb[0].mxu0
      %v1558 = vpop.f32.mrb[0].mxu0
      %v1559 = vpop.f32.mrb[0].mxu0
      %1560 = vmatprep.mubr.bf16.mxu0 0
      %1561 = vmatmul.mubr.bf16.gmra.mrb[0].mxu0 %v462
      %v1562 = vpop.f32.mrb[0].mxu0
      %v1563 = vadd.f32 0.0, %v1562
      %v1564 = vpop.f32.mrb[0].mxu0
      %v1565 = vpop.f32.mrb[0].mxu0
      %v1566 = vadd.f32 0.0, %v1565
      %v1567 = vpop.f32.mrb[0].mxu0
      %1568 = vmatprep.mubr.bf16.mxu0 0
      %1569 = vmatmul.mubr.bf16.gmra.mrb[0].mxu0 %v463
      %v1570 = vpop.f32.mrb[0].mxu0
      %v1571 = vadd.f32 0.0, %v1570
      %v1572 = vpop.f32.mrb[0].mxu0
      %v1573 = vpop.f32.mrb[0].mxu0
      %v1574 = vpop.f32.mrb[0].mxu0
      %1575 = vmatprep.mubr.bf16.mxu0 0
      %1576 = vmatmul.mubr.bf16.gmra.mrb[0].mxu0 %v464
      %v1577 = vpop.f32.mrb[0].mxu0
      %v1578 = vadd.f32 0.0, %v1577
      %v1579 = vpop.f32.mrb[0].mxu0
      %v1580 = vpop.f32.mrb[0].mxu0
      %v1581 = vadd.f32 0.0, %v1580
      %v1582 = vpop.f32.mrb[0].mxu0
      %1583 = vmatprep.mubr.bf16.mxu0 0
      %1584 = vmatmul.mubr.bf16.gmra.mrb[0].mxu0 %v465
      %v1585 = vpop.f32.mrb[0].mxu0
      %v1586 = vadd.f32 0.0, %v1585
      %v1587 = vpop.f32.mrb[0].mxu0
      %v1588 = vpop.f32.mrb[0].mxu0
      %v1589 = vpop.f32.mrb[0].mxu0
      %1590 = vmatprep.mubr.bf16.mxu0 0
      %1591 = vmatmul.mubr.bf16.gmra.mrb[0].mxu0 %v466
      %v1592 = vpop.f32.mrb[0].mxu0
      %v1593 = vadd.f32 0.0, %v1592
      %v1594 = vpop.f32.mrb[0].mxu0
      %v1595 = vpop.f32.mrb[0].mxu0
      %v1596 = vadd.f32 0.0, %v1595
      %v1597 = vpop.f32.mrb[0].mxu0
      %1598 = vmatprep.mubr.bf16.mxu0 0
      %1599 = vmatmul.mubr.bf16.gmra.mrb[0].mxu0 %v467
      %v1600 = vpop.f32.mrb[0].mxu0
      %v1601 = vadd.f32 0.0, %v1600
      %v1602 = vpop.f32.mrb[0].mxu0
      %v1603 = vpop.f32.mrb[0].mxu0
      %v1604 = vpop.f32.mrb[0].mxu0
      %1605 = vmatprep.mubr.bf16.mxu0 0
      %1606 = vmatmul.mubr.bf16.gmra.mrb[0].mxu0 %v468
      %v1607 = vpop.f32.mrb[0].mxu0
      %v1608 = vadd.f32 0.0, %v1607
      %v1609 = vpop.f32.mrb[0].mxu0
      %v1610 = vpop.f32.mrb[0].mxu0
      %v1611 = vadd.f32 0.0, %v1610
      %v1612 = vpop.f32.mrb[0].mxu0
      %1613 = vmatprep.mubr.bf16.mxu0 0
      %1614 = vmatmul.mubr.bf16.gmra.mrb[0].mxu0 %v469
      %v1615 = vpop.f32.mrb[0].mxu0
      %v1616 = vadd.f32 0.0, %v1615
      %v1617 = vpop.f32.mrb[0].mxu0
      %v1618 = vpop.f32.mrb[0].mxu0
      %v1619 = vpop.f32.mrb[0].mxu0
      %1620 = vmatprep.mubr.bf16.mxu0 0
      %1621 = vmatmul.mubr.bf16.gmra.mrb[0].mxu0 %v470
      %v1622 = vpop.f32.mrb[0].mxu0
      %v1623 = vadd.f32 0.0, %v1622
      %v1624 = vpop.f32.mrb[0].mxu0
      %v1625 = vpop.f32.mrb[0].mxu0
      %v1626 = vadd.f32 0.0, %v1625
      %v1627 = vpop.f32.mrb[0].mxu0
      %1628 = vmatprep.mubr.bf16.mxu0 0
      %1629 = vmatmul.mubr.bf16.gmra.mrb[0].mxu0 %v471
      %v1630 = vpop.f32.mrb[0].mxu0
      %v1631 = vadd.f32 0.0, %v1630
      %v1632 = vpop.f32.mrb[0].mxu0
      %v1633 = vpop.f32.mrb[0].mxu0
      %v1634 = vpop.f32.mrb[0].mxu0
      %1635 = vmatprep.mubr.bf16.mxu0 0
      %1636 = vmatmul.mubr.bf16.gmra.mrb[0].mxu0 %v472
      %v1637 = vpop.f32.mrb[0].mxu0
      %v1638 = vadd.f32 0.0, %v1637
      %v1639 = vpop.f32.mrb[0].mxu0
      %v1640 = vpop.f32.mrb[0].mxu0
      %v1641 = vadd.f32 0.0, %v1640
      %v1642 = vpop.f32.mrb[0].mxu0
      %1643 = vmatprep.mubr.bf16.mxu0 0
      %1644 = vmatmul.mubr.bf16.gmra.mrb[0].mxu0 %v473
      %v1645 = vpop.f32.mrb[0].mxu0
      %v1646 = vadd.f32 0.0, %v1645
      %v1647 = vpop.f32.mrb[0].mxu0
      %v1648 = vpop.f32.mrb[0].mxu0
      %v1649 = vpop.f32.mrb[0].mxu0
      %1650 = vmatprep.mubr.bf16.mxu0 0
      %1651 = vmatmul.mubr.bf16.gmra.mrb[0].mxu0 %v474
      %v1652 = vpop.f32.mrb[0].mxu0
      %v1653 = vadd.f32 0.0, %v1652
      %v1654 = vpop.f32.mrb[0].mxu0
      %v1655 = vpop.f32.mrb[0].mxu0
      %v1656 = vadd.f32 0.0, %v1655
      %v1657 = vpop.f32.mrb[0].mxu0
      %1658 = vmatprep.mubr.bf16.mxu0 0
      %1659 = vmatmul.mubr.bf16.gmra.mrb[0].mxu0 %v475
      %v1660 = vpop.f32.mrb[0].mxu0
      %v1661 = vadd.f32 0.0, %v1660
      %v1662 = vpop.f32.mrb[0].mxu0
      %v1663 = vpop.f32.mrb[0].mxu0
      %v1664 = vpop.f32.mrb[0].mxu0
      %1665 = vmatprep.mubr.bf16.mxu0 0
      %1666 = vmatmul.mubr.bf16.gmra.mrb[0].mxu0 %v476
      %v1667 = vpop.f32.mrb[0].mxu0
      %v1668 = vadd.f32 0.0, %v1667
      %v1669 = vpop.f32.mrb[0].mxu0
      %v1670 = vpop.f32.mrb[0].mxu0
      %v1671 = vadd.f32 0.0, %v1670
      %v1672 = vpop.f32.mrb[0].mxu0
      %1673 = vmatprep.mubr.bf16.mxu0 0
      %1674 = vmatmul.mubr.bf16.gmra.mrb[0].mxu0 %v477
      %v1675 = vpop.f32.mrb[0].mxu0
      %v1676 = vadd.f32 0.0, %v1675
      %v1677 = vpop.f32.mrb[0].mxu0
      %v1678 = vpop.f32.mrb[0].mxu0
      %v1679 = vpop.f32.mrb[0].mxu0
      %1680 = vmatprep.mubr.bf16.mxu0 0
      %1681 = vmatmul.mubr.bf16.gmra.mrb[0].mxu0 %v478
      %v1682 = vpop.f32.mrb[0].mxu0
      %v1683 = vpop.f32.mrb[0].mxu0
      %v1684 = vpop.f32.mrb[0].mxu0
      %v1685 = vpop.f32.mrb[0].mxu0
      %1686 = vmatprep.mubr.bf16.mxu0 0
      %1687 = vmatmul.mubr.bf16.gmra.mrb[0].mxu0 %v479
      %v1688 = vpop.f32.mrb[0].mxu0
      %v1689 = vpop.f32.mrb[0].mxu0
      %v1690 = vpop.f32.mrb[0].mxu0
      %v1691 = vpop.f32.mrb[0].mxu0
      %1692 = vmatprep.mubr.bf16.mxu0 0
      %1693 = vmatmul.mubr.bf16.gmra.mrb[0].mxu0 %v480
      %v1694 = vpop.f32.mrb[0].mxu0
      %v1695 = vpop.f32.mrb[0].mxu0
      %v1696 = vpop.f32.mrb[0].mxu0
      %v1697 = vpop.f32.mrb[0].mxu0
      %1698 = vmatprep.mubr.bf16.mxu0 0
      %1699 = vmatmul.mubr.bf16.gmra.mrb[0].mxu0 %v481
      %v1700 = vpop.f32.mrb[0].mxu0
      %v1701 = vpop.f32.mrb[0].mxu0
      %v1702 = vpop.f32.mrb[0].mxu0
      %v1703 = vpop.f32.mrb[0].mxu0
      %1704 = vmatprep.mubr.bf16.mxu0 0
      %1705 = vmatmul.mubr.bf16.gmra.mrb[0].mxu0 %v482
      %v1706 = vpop.f32.mrb[0].mxu0
      %v1707 = vadd.f32 0.0, %v1706
      %v1708 = vpop.f32.mrb[0].mxu0
      %v1709 = vpop.f32.mrb[0].mxu0
      %v1710 = vadd.f32 0.0, %v1709
      %v1711 = vpop.f32.mrb[0].mxu0
      %1712 = vmatprep.mubr.bf16.mxu0 0
      %1713 = vmatmul.mubr.bf16.gmra.mrb[0].mxu0 %v483
      %v1714 = vpop.f32.mrb[0].mxu0
      %v1715 = vadd.f32 0.0, %v1714
      %v1716 = vpop.f32.mrb[0].mxu0
      %v1717 = vpop.f32.mrb[0].mxu0
      %v1718 = vpop.f32.mrb[0].mxu0
      %1719 = vdwg.mxu0
      %v1720 = vrot.slane %v1458, 1
      %v1721 = vrot.slane %v1461, 1
      %v1722 = vrot.slane %v1466, 1
      %v1723 = vrot.slane %v1473, 1
      %v1724 = vrot.slane %v1476, 1
      %v1725 = vrot.slane %v1481, 1
      %v1726 = vrot.slane %v1488, 1
      %v1727 = vrot.slane %v1491, 1
      %v1728 = vrot.slane %v1496, 1
      %v1729 = vrot.slane %v1503, 1
      %v1730 = vrot.slane %v1506, 1
      %v1731 = vrot.slane %v1511, 1
      %v1732 = vrot.slane %v1518, 1
      %v1733 = vrot.slane %v1521, 1
      %v1734 = vrot.slane %v1526, 1
      %v1735 = vrot.slane %v1533, 1
      %v1736 = vrot.slane %v1536, 1
      %v1737 = vrot.slane %v1541, 1
      %v1738 = vrot.slane %v1548, 1
      %v1739 = vrot.slane %v1551, 1
      %v1740 = vrot.slane %v1556, 1
      %v1741 = vrot.slane %v1563, 1
      %v1742 = vrot.slane %v1566, 1
      %v1743 = vrot.slane %v1571, 1
      %v1744 = vrot.slane %v1578, 1
      %v1745 = vrot.slane %v1581, 1
      %v1746 = vrot.slane %v1586, 1
      %v1747 = vrot.slane %v1593, 1
      %v1748 = vrot.slane %v1596, 1
      %v1749 = vrot.slane %v1601, 1
      %v1750 = vrot.slane %v1608, 1
      %v1751 = vrot.slane %v1611, 1
      %v1752 = vrot.slane %v1616, 1
      %v1753 = vrot.slane %v1623, 1
      %v1754 = vrot.slane %v1626, 1
      %v1755 = vrot.slane %v1631, 1
      %v1756 = vrot.slane %v1638, 1
      %v1757 = vrot.slane %v1641, 1
      %v1758 = vrot.slane %v1646, 1
      %v1759 = vrot.slane %v1653, 1
      %v1760 = vrot.slane %v1656, 1
      %v1761 = vrot.slane %v1661, 1
      %v1762 = vrot.slane %v1668, 1
      %v1763 = vrot.slane %v1671, 1
      %v1764 = vrot.slane %v1676, 1
      %v1765 = vrot.slane %v1707, 1
      %v1766 = vrot.slane %v1710, 1
      %v1767 = vrot.slane %v1715, 1
      %vm1768 = vcmp.lt.s32.totalorder %v914, 7
      %v1769 = vsel %vm1768, %v1766, %v1767
      %v1770 = vsel %vm1768, %v1765, %v1766
      %v1771 = vsel %vm1768, %v1763, %v1764
      %v1772 = vsel %vm1768, %v1762, %v1763
      %v1773 = vsel %vm1768, %v1760, %v1761
      %v1774 = vsel %vm1768, %v1759, %v1760
      %v1775 = vsel %vm1768, %v1757, %v1758
      %v1776 = vsel %vm1768, %v1756, %v1757
      %v1777 = vsel %vm1768, %v1754, %v1755
      %v1778 = vsel %vm1768, %v1753, %v1754
      %v1779 = vsel %vm1768, %v1751, %v1752
      %v1780 = vsel %vm1768, %v1750, %v1751
      %v1781 = vsel %vm1768, %v1748, %v1749
      %v1782 = vsel %vm1768, %v1747, %v1748
      %v1783 = vsel %vm1768, %v1745, %v1746
      %v1784 = vsel %vm1768, %v1744, %v1745
      %v1785 = vsel %vm1768, %v1742, %v1743
      %v1786 = vsel %vm1768, %v1741, %v1742
      %v1787 = vsel %vm1768, %v1739, %v1740
      %v1788 = vsel %vm1768, %v1738, %v1739
      %v1789 = vsel %vm1768, %v1736, %v1737
      %v1790 = vsel %vm1768, %v1735, %v1736
      %v1791 = vsel %vm1768, %v1733, %v1734
      %v1792 = vsel %vm1768, %v1732, %v1733
      %v1793 = vsel %vm1768, %v1730, %v1731
      %v1794 = vsel %vm1768, %v1729, %v1730
      %v1795 = vsel %vm1768, %v1727, %v1728
      %v1796 = vsel %vm1768, %v1726, %v1727
      %v1797 = vsel %vm1768, %v1724, %v1725
      %v1798 = vsel %vm1768, %v1723, %v1724
      %v1799 = vsel %vm1768, %v1721, %v1722
      %v1800 = vsel %vm1768, %v1720, %v1721
      %v1801 = vadd.f32 %v1326, %v1770
      %v1802 = vadd.f32 %v1327, %v1769
      %v1803 = vadd.f32 %v1328, %v1800
      %v1804 = vadd.f32 %v1329, %v1799
      %v1805 = vadd.f32 %v1330, %v1798
      %v1806 = vadd.f32 %v1331, %v1797
      %v1807 = vadd.f32 %v1332, %v1796
      %v1808 = vadd.f32 %v1333, %v1795
      %v1809 = vadd.f32 %v1334, %v1794
      %v1810 = vadd.f32 %v1335, %v1793
      %v1811 = vadd.f32 %v1336, %v1792
      %v1812 = vadd.f32 %v1337, %v1791
      %v1813 = vadd.f32 %v1338, %v1790
      %v1814 = vadd.f32 %v1339, %v1789
      %v1815 = vadd.f32 %v1340, %v1788
      %v1816 = vadd.f32 %v1341, %v1787
      %v1817 = vadd.f32 %v1342, %v1786
      %v1818 = vadd.f32 %v1343, %v1785
      %v1819 = vadd.f32 %v1344, %v1784
      %v1820 = vadd.f32 %v1345, %v1783
      %v1821 = vadd.f32 %v1346, %v1782
      %v1822 = vadd.f32 %v1347, %v1781
      %v1823 = vadd.f32 %v1348, %v1780
      %v1824 = vadd.f32 %v1349, %v1779
      %v1825 = vadd.f32 %v1350, %v1778
      %v1826 = vadd.f32 %v1351, %v1777
      %v1827 = vadd.f32 %v1352, %v1776
      %v1828 = vadd.f32 %v1353, %v1775
      %v1829 = vadd.f32 %v1354, %v1774
      %v1830 = vadd.f32 %v1355, %v1773
      %v1831 = vadd.f32 %v1356, %v1772
      %v1832 = vadd.f32 %v1357, %v1771
      %s1833 = scalar_lea.vmem %s1, 192
      %v1834 = vld [vmem:[%s1833] sm:$0xf]
      %v1835 = vld [vmem:[%s1833 + $0x4] sm:$0xf]
      %v1836 = vld [vmem:[%s1833 + $0x8] sm:$0xf]
      %v1837 = vld [vmem:[%s1833 + $0xc] sm:$0xf]
      %v1838 = vld [vmem:[%s1833 + $0x10] sm:$0xf]
      %v1839 = vld [vmem:[%s1833 + $0x14] sm:$0xf]
      %v1840 = vld [vmem:[%s1833 + $0x18] sm:$0xf]
      %v1841 = vld [vmem:[%s1833 + $0x1c] sm:$0xf]
      %v1842 = vld [vmem:[%s1833 + $0x20] sm:$0xf]
      %v1843 = vld [vmem:[%s1833 + $0x24] sm:$0xf]
      %v1844 = vld [vmem:[%s1833 + $0x28] sm:$0xf]
      %v1845 = vld [vmem:[%s1833 + $0x2c] sm:$0xf]
      %v1846 = vld [vmem:[%s1833 + $0x30] sm:$0xf]
      %v1847 = vld [vmem:[%s1833 + $0x34] sm:$0xf]
      %v1848 = vld [vmem:[%s1833 + $0x38] sm:$0xf]
      %v1849 = vld [vmem:[%s1833 + $0x3c] sm:$0xf]
      %v1866 = vunpack.c.l.b16 %v1834
      %v1867 = vunpack.c.l.b16 %v1835
      %v1868 = vunpack.c.l.b16 %v1836
      %v1869 = vunpack.c.l.b16 %v1837
      %v1870 = vunpack.c.l.b16 %v1838
      %v1871 = vunpack.c.l.b16 %v1839
      %v1872 = vunpack.c.l.b16 %v1840
      %v1873 = vunpack.c.l.b16 %v1841
      %v1874 = vunpack.c.l.b16 %v1842
      %v1875 = vunpack.c.l.b16 %v1843
      %v1876 = vunpack.c.l.b16 %v1844
      %v1877 = vunpack.c.l.b16 %v1845
      %v1878 = vunpack.c.l.b16 %v1846
      %v1879 = vunpack.c.l.b16 %v1847
      %v1880 = vunpack.c.l.b16 %v1848
      %v1881 = vunpack.c.l.b16 %v1849
      %v1882 = vpack.c.b16 %v1867, %v1866
      %v1883 = vpack.c.b16 %v1869, %v1868
      %v1884 = vpack.c.b16 %v1871, %v1870
      %v1885 = vpack.c.b16 %v1873, %v1872
      %v1886 = vpack.c.b16 %v1875, %v1874
      %v1887 = vpack.c.b16 %v1877, %v1876
      %v1888 = vpack.c.b16 %v1879, %v1878
      %v1889 = vpack.c.b16 %v1881, %v1880
      %1898 = vmatprep.subr.bf16.mxu0 0
      %1899 = vmatpush1.bf16.msra.mxu0 %v1882
      %1900 = vmatprep.subr.bf16.mxu0 0
      %1901 = vmatpush1.bf16.msra.mxu0 %v1883
      %1902 = vmatprep.subr.bf16.mxu0 0
      %1903 = vmatpush1.bf16.msra.mxu0 %v1884
      %1904 = vmatprep.subr.bf16.mxu0 0
      %1905 = vmatpush1.bf16.msra.mxu0 %v1885
      %1906 = vmatprep.subr.bf16.mxu0 0
      %1907 = vmatpush1.bf16.msra.mxu0 %v1886
      %1908 = vmatprep.subr.bf16.mxu0 0
      %1909 = vmatpush1.bf16.msra.mxu0 %v1887
      %1910 = vmatprep.subr.bf16.mxu0 0
      %1911 = vmatpush1.bf16.msra.mxu0 %v1888
      %1912 = vmatprep.subr.bf16.mxu0 0
      %1913 = vmatpush1.bf16.msra.mxu0 %v1889
      %1914 = vmatprep.subr.bf16.mxu0 0
      %1915 = vmatpush1.bf16.msra.mxu0 0
      %1916 = vmatprep.subr.bf16.mxu0 0
      %1917 = vmatpush1.bf16.msra.mxu0 0
      %1918 = vmatprep.subr.bf16.mxu0 0
      %1919 = vmatpush1.bf16.msra.mxu0 0
      %1920 = vmatprep.subr.bf16.mxu0 0
      %1921 = vmatpush1.bf16.msra.mxu0 0
      %1922 = vmatprep.subr.bf16.mxu0 0
      %1923 = vmatpush1.bf16.msra.mxu0 0
      %1924 = vmatprep.subr.bf16.mxu0 0
      %1925 = vmatpush1.bf16.msra.mxu0 0
      %1926 = vmatprep.subr.bf16.mxu0 0
      %1927 = vmatpush1.bf16.msra.mxu0 0
      %1928 = vmatprep.subr.bf16.mxu0 0
      %1929 = vmatpush1.bf16.msra.mxu0 0
      %1930 = vmatprep.mubr.bf16.mxu0 0
      %1931 = vmatmul.mubr.bf16.gmra.mrb[0].mxu0 %v448
      %v1932 = vpop.f32.mrb[0].mxu0
      %v1933 = vadd.f32 0.0, %v1932
      %v1934 = vpop.f32.mrb[0].mxu0
      %v1935 = vpop.f32.mrb[0].mxu0
      %v1936 = vadd.f32 0.0, %v1935
      %v1937 = vpop.f32.mrb[0].mxu0
      %1938 = vmatprep.mubr.bf16.mxu0 0
      %1939 = vmatmul.mubr.bf16.gmra.mrb[0].mxu0 %v449
      %v1940 = vpop.f32.mrb[0].mxu0
      %v1941 = vpop.f32.mrb[0].mxu0
      %v1942 = vpop.f32.mrb[0].mxu0
      %v1943 = vadd.f32 0.0, %v1942
      %v1944 = vpop.f32.mrb[0].mxu0
      %1945 = vmatprep.mubr.bf16.mxu0 0
      %1946 = vmatmul.mubr.bf16.gmra.mrb[0].mxu0 %v450
      %v1947 = vpop.f32.mrb[0].mxu0
      %v1948 = vadd.f32 0.0, %v1947
      %v1949 = vpop.f32.mrb[0].mxu0
      %v1950 = vpop.f32.mrb[0].mxu0
      %v1951 = vadd.f32 0.0, %v1950
      %v1952 = vpop.f32.mrb[0].mxu0
      %1953 = vmatprep.mubr.bf16.mxu0 0
      %1954 = vmatmul.mubr.bf16.gmra.mrb[0].mxu0 %v451
      %v1955 = vpop.f32.mrb[0].mxu0
      %v1956 = vpop.f32.mrb[0].mxu0
      %v1957 = vpop.f32.mrb[0].mxu0
      %v1958 = vadd.f32 0.0, %v1957
      %v1959 = vpop.f32.mrb[0].mxu0
      %1960 = vmatprep.mubr.bf16.mxu0 0
      %1961 = vmatmul.mubr.bf16.gmra.mrb[0].mxu0 %v452
      %v1962 = vpop.f32.mrb[0].mxu0
      %v1963 = vadd.f32 0.0, %v1962
      %v1964 = vpop.f32.mrb[0].mxu0
      %v1965 = vpop.f32.mrb[0].mxu0
      %v1966 = vadd.f32 0.0, %v1965
      %v1967 = vpop.f32.mrb[0].mxu0
      %1968 = vmatprep.mubr.bf16.mxu0 0
      %1969 = vmatmul.mubr.bf16.gmra.mrb[0].mxu0 %v453
      %v1970 = vpop.f32.mrb[0].mxu0
      %v1971 = vpop.f32.mrb[0].mxu0
      %v1972 = vpop.f32.mrb[0].mxu0
      %v1973 = vadd.f32 0.0, %v1972
      %v1974 = vpop.f32.mrb[0].mxu0
      %1975 = vmatprep.mubr.bf16.mxu0 0
      %1976 = vmatmul.mubr.bf16.gmra.mrb[0].mxu0 %v454
      %v1977 = vpop.f32.mrb[0].mxu0
      %v1978 = vadd.f32 0.0, %v1977
      %v1979 = vpop.f32.mrb[0].mxu0
      %v1980 = vpop.f32.mrb[0].mxu0
      %v1981 = vadd.f32 0.0, %v1980
      %v1982 = vpop.f32.mrb[0].mxu0
      %1983 = vmatprep.mubr.bf16.mxu0 0
      %1984 = vmatmul.mubr.bf16.gmra.mrb[0].mxu0 %v455
      %v1985 = vpop.f32.mrb[0].mxu0
      %v1986 = vpop.f32.mrb[0].mxu0
      %v1987 = vpop.f32.mrb[0].mxu0
      %v1988 = vadd.f32 0.0, %v1987
      %v1989 = vpop.f32.mrb[0].mxu0
      %1990 = vmatprep.mubr.bf16.mxu0 0
      %1991 = vmatmul.mubr.bf16.gmra.mrb[0].mxu0 %v456
      %v1992 = vpop.f32.mrb[0].mxu0
      %v1993 = vadd.f32 0.0, %v1992
      %v1994 = vpop.f32.mrb[0].mxu0
      %v1995 = vpop.f32.mrb[0].mxu0
      %v1996 = vadd.f32 0.0, %v1995
      %v1997 = vpop.f32.mrb[0].mxu0
      %1998 = vmatprep.mubr.bf16.mxu0 0
      %1999 = vmatmul.mubr.bf16.gmra.mrb[0].mxu0 %v457
      %v2000 = vpop.f32.mrb[0].mxu0
      %v2001 = vpop.f32.mrb[0].mxu0
      %v2002 = vpop.f32.mrb[0].mxu0
      %v2003 = vadd.f32 0.0, %v2002
      %v2004 = vpop.f32.mrb[0].mxu0
      %2005 = vmatprep.mubr.bf16.mxu0 0
      %2006 = vmatmul.mubr.bf16.gmra.mrb[0].mxu0 %v458
      %v2007 = vpop.f32.mrb[0].mxu0
      %v2008 = vadd.f32 0.0, %v2007
      %v2009 = vpop.f32.mrb[0].mxu0
      %v2010 = vpop.f32.mrb[0].mxu0
      %v2011 = vadd.f32 0.0, %v2010
      %v2012 = vpop.f32.mrb[0].mxu0
      %2013 = vmatprep.mubr.bf16.mxu0 0
      %2014 = vmatmul.mubr.bf16.gmra.mrb[0].mxu0 %v459
      %v2015 = vpop.f32.mrb[0].mxu0
      %v2016 = vpop.f32.mrb[0].mxu0
      %v2017 = vpop.f32.mrb[0].mxu0
      %v2018 = vadd.f32 0.0, %v2017
      %v2019 = vpop.f32.mrb[0].mxu0
      %2020 = vmatprep.mubr.bf16.mxu0 0
      %2021 = vmatmul.mubr.bf16.gmra.mrb[0].mxu0 %v460
      %v2022 = vpop.f32.mrb[0].mxu0
      %v2023 = vadd.f32 0.0, %v2022
      %v2024 = vpop.f32.mrb[0].mxu0
      %v2025 = vpop.f32.mrb[0].mxu0
      %v2026 = vadd.f32 0.0, %v2025
      %v2027 = vpop.f32.mrb[0].mxu0
      %2028 = vmatprep.mubr.bf16.mxu0 0
      %2029 = vmatmul.mubr.bf16.gmra.mrb[0].mxu0 %v461
      %v2030 = vpop.f32.mrb[0].mxu0
      %v2031 = vpop.f32.mrb[0].mxu0
      %v2032 = vpop.f32.mrb[0].mxu0
      %v2033 = vadd.f32 0.0, %v2032
      %v2034 = vpop.f32.mrb[0].mxu0
      %2035 = vmatprep.mubr.bf16.mxu0 0
      %2036 = vmatmul.mubr.bf16.gmra.mrb[0].mxu0 %v462
      %v2037 = vpop.f32.mrb[0].mxu0
      %v2038 = vadd.f32 0.0, %v2037
      %v2039 = vpop.f32.mrb[0].mxu0
      %v2040 = vpop.f32.mrb[0].mxu0
      %v2041 = vadd.f32 0.0, %v2040
      %v2042 = vpop.f32.mrb[0].mxu0
      %2043 = vmatprep.mubr.bf16.mxu0 0
      %2044 = vmatmul.mubr.bf16.gmra.mrb[0].mxu0 %v463
      %v2045 = vpop.f32.mrb[0].mxu0
      %v2046 = vpop.f32.mrb[0].mxu0
      %v2047 = vpop.f32.mrb[0].mxu0
      %v2048 = vadd.f32 0.0, %v2047
      %v2049 = vpop.f32.mrb[0].mxu0
      %2050 = vmatprep.mubr.bf16.mxu0 0
      %2051 = vmatmul.mubr.bf16.gmra.mrb[0].mxu0 %v464
      %v2052 = vpop.f32.mrb[0].mxu0
      %v2053 = vadd.f32 0.0, %v2052
      %v2054 = vpop.f32.mrb[0].mxu0
      %v2055 = vpop.f32.mrb[0].mxu0
      %v2056 = vadd.f32 0.0, %v2055
      %v2057 = vpop.f32.mrb[0].mxu0
      %2058 = vmatprep.mubr.bf16.mxu0 0
      %2059 = vmatmul.mubr.bf16.gmra.mrb[0].mxu0 %v465
      %v2060 = vpop.f32.mrb[0].mxu0
      %v2061 = vpop.f32.mrb[0].mxu0
      %v2062 = vpop.f32.mrb[0].mxu0
      %v2063 = vadd.f32 0.0, %v2062
      %v2064 = vpop.f32.mrb[0].mxu0
      %2065 = vmatprep.mubr.bf16.mxu0 0
      %2066 = vmatmul.mubr.bf16.gmra.mrb[0].mxu0 %v466
      %v2067 = vpop.f32.mrb[0].mxu0
      %v2068 = vadd.f32 0.0, %v2067
      %v2069 = vpop.f32.mrb[0].mxu0
      %v2070 = vpop.f32.mrb[0].mxu0
      %v2071 = vadd.f32 0.0, %v2070
      %v2072 = vpop.f32.mrb[0].mxu0
      %2073 = vmatprep.mubr.bf16.mxu0 0
      %2074 = vmatmul.mubr.bf16.gmra.mrb[0].mxu0 %v467
      %v2075 = vpop.f32.mrb[0].mxu0
      %v2076 = vpop.f32.mrb[0].mxu0
      %v2077 = vpop.f32.mrb[0].mxu0
      %v2078 = vadd.f32 0.0, %v2077
      %v2079 = vpop.f32.mrb[0].mxu0
      %2080 = vmatprep.mubr.bf16.mxu0 0
      %2081 = vmatmul.mubr.bf16.gmra.mrb[0].mxu0 %v468
      %v2082 = vpop.f32.mrb[0].mxu0
      %v2083 = vadd.f32 0.0, %v2082
      %v2084 = vpop.f32.mrb[0].mxu0
      %v2085 = vpop.f32.mrb[0].mxu0
      %v2086 = vadd.f32 0.0, %v2085
      %v2087 = vpop.f32.mrb[0].mxu0
      %2088 = vmatprep.mubr.bf16.mxu0 0
      %2089 = vmatmul.mubr.bf16.gmra.mrb[0].mxu0 %v469
      %v2090 = vpop.f32.mrb[0].mxu0
      %v2091 = vpop.f32.mrb[0].mxu0
      %v2092 = vpop.f32.mrb[0].mxu0
      %v2093 = vadd.f32 0.0, %v2092
      %v2094 = vpop.f32.mrb[0].mxu0
      %2095 = vmatprep.mubr.bf16.mxu0 0
      %2096 = vmatmul.mubr.bf16.gmra.mrb[0].mxu0 %v470
      %v2097 = vpop.f32.mrb[0].mxu0
      %v2098 = vadd.f32 0.0, %v2097
      %v2099 = vpop.f32.mrb[0].mxu0
      %v2100 = vpop.f32.mrb[0].mxu0
      %v2101 = vadd.f32 0.0, %v2100
      %v2102 = vpop.f32.mrb[0].mxu0
      %2103 = vmatprep.mubr.bf16.mxu0 0
      %2104 = vmatmul.mubr.bf16.gmra.mrb[0].mxu0 %v471
      %v2105 = vpop.f32.mrb[0].mxu0
      %v2106 = vpop.f32.mrb[0].mxu0
      %v2107 = vpop.f32.mrb[0].mxu0
      %v2108 = vadd.f32 0.0, %v2107
      %v2109 = vpop.f32.mrb[0].mxu0
      %2110 = vmatprep.mubr.bf16.mxu0 0
      %2111 = vmatmul.mubr.bf16.gmra.mrb[0].mxu0 %v472
      %v2112 = vpop.f32.mrb[0].mxu0
      %v2113 = vadd.f32 0.0, %v2112
      %v2114 = vpop.f32.mrb[0].mxu0
      %v2115 = vpop.f32.mrb[0].mxu0
      %v2116 = vadd.f32 0.0, %v2115
      %v2117 = vpop.f32.mrb[0].mxu0
      %2118 = vmatprep.mubr.bf16.mxu0 0
      %2119 = vmatmul.mubr.bf16.gmra.mrb[0].mxu0 %v473
      %v2120 = vpop.f32.mrb[0].mxu0
      %v2121 = vpop.f32.mrb[0].mxu0
      %v2122 = vpop.f32.mrb[0].mxu0
      %v2123 = vadd.f32 0.0, %v2122
      %v2124 = vpop.f32.mrb[0].mxu0
      %2125 = vmatprep.mubr.bf16.mxu0 0
      %2126 = vmatmul.mubr.bf16.gmra.mrb[0].mxu0 %v474
      %v2127 = vpop.f32.mrb[0].mxu0
      %v2128 = vadd.f32 0.0, %v2127
      %v2129 = vpop.f32.mrb[0].mxu0
      %v2130 = vpop.f32.mrb[0].mxu0
      %v2131 = vadd.f32 0.0, %v2130
      %v2132 = vpop.f32.mrb[0].mxu0
      %2133 = vmatprep.mubr.bf16.mxu0 0
      %2134 = vmatmul.mubr.bf16.gmra.mrb[0].mxu0 %v475
      %v2135 = vpop.f32.mrb[0].mxu0
      %v2136 = vpop.f32.mrb[0].mxu0
      %v2137 = vpop.f32.mrb[0].mxu0
      %v2138 = vadd.f32 0.0, %v2137
      %v2139 = vpop.f32.mrb[0].mxu0
      %2140 = vmatprep.mubr.bf16.mxu0 0
      %2141 = vmatmul.mubr.bf16.gmra.mrb[0].mxu0 %v476
      %v2142 = vpop.f32.mrb[0].mxu0
      %v2143 = vadd.f32 0.0, %v2142
      %v2144 = vpop.f32.mrb[0].mxu0
      %v2145 = vpop.f32.mrb[0].mxu0
      %v2146 = vadd.f32 0.0, %v2145
      %v2147 = vpop.f32.mrb[0].mxu0
      %2148 = vmatprep.mubr.bf16.mxu0 0
      %2149 = vmatmul.mubr.bf16.gmra.mrb[0].mxu0 %v477
      %v2150 = vpop.f32.mrb[0].mxu0
      %v2151 = vpop.f32.mrb[0].mxu0
      %v2152 = vpop.f32.mrb[0].mxu0
      %v2153 = vadd.f32 0.0, %v2152
      %v2154 = vpop.f32.mrb[0].mxu0
      %2155 = vmatprep.mubr.bf16.mxu0 0
      %2156 = vmatmul.mubr.bf16.gmra.mrb[0].mxu0 %v478
      %v2157 = vpop.f32.mrb[0].mxu0
      %v2158 = vadd.f32 0.0, %v2157
      %v2159 = vpop.f32.mrb[0].mxu0
      %v2160 = vpop.f32.mrb[0].mxu0
      %v2161 = vadd.f32 0.0, %v2160
      %v2162 = vpop.f32.mrb[0].mxu0
      %2163 = vmatprep.mubr.bf16.mxu0 0
      %2164 = vmatmul.mubr.bf16.gmra.mrb[0].mxu0 %v479
      %v2165 = vpop.f32.mrb[0].mxu0
      %v2166 = vpop.f32.mrb[0].mxu0
      %v2167 = vpop.f32.mrb[0].mxu0
      %v2168 = vpop.f32.mrb[0].mxu0
      %2169 = vmatprep.mubr.bf16.mxu0 0
      %2170 = vmatmul.mubr.bf16.gmra.mrb[0].mxu0 %v480
      %v2171 = vpop.f32.mrb[0].mxu0
      %v2172 = vpop.f32.mrb[0].mxu0
      %v2173 = vpop.f32.mrb[0].mxu0
      %v2174 = vpop.f32.mrb[0].mxu0
      %2175 = vmatprep.mubr.bf16.mxu0 0
      %2176 = vmatmul.mubr.bf16.gmra.mrb[0].mxu0 %v481
      %v2177 = vpop.f32.mrb[0].mxu0
      %v2178 = vpop.f32.mrb[0].mxu0
      %v2179 = vpop.f32.mrb[0].mxu0
      %v2180 = vpop.f32.mrb[0].mxu0
      %2181 = vmatprep.mubr.bf16.mxu0 0
      %2182 = vmatmul.mubr.bf16.gmra.mrb[0].mxu0 %v482
      %v2183 = vpop.f32.mrb[0].mxu0
      %v2184 = vpop.f32.mrb[0].mxu0
      %v2185 = vpop.f32.mrb[0].mxu0
      %v2186 = vpop.f32.mrb[0].mxu0
      %2187 = vmatprep.mubr.bf16.mxu0 0
      %2188 = vmatmul.mubr.bf16.gmra.mrb[0].mxu0 %v483
      %v2189 = vpop.f32.mrb[0].mxu0
      %v2190 = vpop.f32.mrb[0].mxu0
      %v2191 = vpop.f32.mrb[0].mxu0
      %v2192 = vadd.f32 0.0, %v2191
      %v2193 = vpop.f32.mrb[0].mxu0
      %2194 = vdwg.mxu0
      %v2195 = vrot.slane %v1933, 7
      %v2196 = vrot.slane %v1936, 7
      %v2197 = vrot.slane %v1943, 7
      %v2198 = vrot.slane %v1948, 7
      %v2199 = vrot.slane %v1951, 7
      %v2200 = vrot.slane %v1958, 7
      %v2201 = vrot.slane %v1963, 7
      %v2202 = vrot.slane %v1966, 7
      %v2203 = vrot.slane %v1973, 7
      %v2204 = vrot.slane %v1978, 7
      %v2205 = vrot.slane %v1981, 7
      %v2206 = vrot.slane %v1988, 7
      %v2207 = vrot.slane %v1993, 7
      %v2208 = vrot.slane %v1996, 7
      %v2209 = vrot.slane %v2003, 7
      %v2210 = vrot.slane %v2008, 7
      %v2211 = vrot.slane %v2011, 7
      %v2212 = vrot.slane %v2018, 7
      %v2213 = vrot.slane %v2023, 7
      %v2214 = vrot.slane %v2026, 7
      %v2215 = vrot.slane %v2033, 7
      %v2216 = vrot.slane %v2038, 7
      %v2217 = vrot.slane %v2041, 7
      %v2218 = vrot.slane %v2048, 7
      %v2219 = vrot.slane %v2053, 7
      %v2220 = vrot.slane %v2056, 7
      %v2221 = vrot.slane %v2063, 7
      %v2222 = vrot.slane %v2068, 7
      %v2223 = vrot.slane %v2071, 7
      %v2224 = vrot.slane %v2078, 7
      %v2225 = vrot.slane %v2083, 7
      %v2226 = vrot.slane %v2086, 7
      %v2227 = vrot.slane %v2093, 7
      %v2228 = vrot.slane %v2098, 7
      %v2229 = vrot.slane %v2101, 7
      %v2230 = vrot.slane %v2108, 7
      %v2231 = vrot.slane %v2113, 7
      %v2232 = vrot.slane %v2116, 7
      %v2233 = vrot.slane %v2123, 7
      %v2234 = vrot.slane %v2128, 7
      %v2235 = vrot.slane %v2131, 7
      %v2236 = vrot.slane %v2138, 7
      %v2237 = vrot.slane %v2143, 7
      %v2238 = vrot.slane %v2146, 7
      %v2239 = vrot.slane %v2153, 7
      %v2240 = vrot.slane %v2158, 7
      %v2241 = vrot.slane %v2161, 7
      %v2242 = vrot.slane %v2192, 7
      %v2243 = vsel %vm915, %v2240, %v2241
      %v2244 = vsel %vm915, %v2239, %v2240
      %v2245 = vsel %vm915, %v2237, %v2238
      %v2246 = vsel %vm915, %v2236, %v2237
      %v2247 = vsel %vm915, %v2234, %v2235
      %v2248 = vsel %vm915, %v2233, %v2234
      %v2249 = vsel %vm915, %v2231, %v2232
      %v2250 = vsel %vm915, %v2230, %v2231
      %v2251 = vsel %vm915, %v2228, %v2229
      %v2252 = vsel %vm915, %v2227, %v2228
      %v2253 = vsel %vm915, %v2225, %v2226
      %v2254 = vsel %vm915, %v2224, %v2225
      %v2255 = vsel %vm915, %v2222, %v2223
      %v2256 = vsel %vm915, %v2221, %v2222
      %v2257 = vsel %vm915, %v2219, %v2220
      %v2258 = vsel %vm915, %v2218, %v2219
      %v2259 = vsel %vm915, %v2216, %v2217
      %v2260 = vsel %vm915, %v2215, %v2216
      %v2261 = vsel %vm915, %v2213, %v2214
      %v2262 = vsel %vm915, %v2212, %v2213
      %v2263 = vsel %vm915, %v2210, %v2211
      %v2264 = vsel %vm915, %v2209, %v2210
      %v2265 = vsel %vm915, %v2207, %v2208
      %v2266 = vsel %vm915, %v2206, %v2207
      %v2267 = vsel %vm915, %v2204, %v2205
      %v2268 = vsel %vm915, %v2203, %v2204
      %v2269 = vsel %vm915, %v2201, %v2202
      %v2270 = vsel %vm915, %v2200, %v2201
      %v2271 = vsel %vm915, %v2198, %v2199
      %v2272 = vsel %vm915, %v2197, %v2198
      %v2273 = vsel %vm915, %v2195, %v2196
      %v2274 = vsel %vm915, %v2242, %v2195
      %v2275 = vadd.f32 %v1801, %v2274
      %v2276 = vadd.f32 %v1802, %v2273
      %v2277 = vadd.f32 %v1803, %v2272
      %v2278 = vadd.f32 %v1804, %v2271
      %v2279 = vadd.f32 %v1805, %v2270
      %v2280 = vadd.f32 %v1806, %v2269
      %v2281 = vadd.f32 %v1807, %v2268
      %v2282 = vadd.f32 %v1808, %v2267
      %v2283 = vadd.f32 %v1809, %v2266
      %v2284 = vadd.f32 %v1810, %v2265
      %v2285 = vadd.f32 %v1811, %v2264
      %v2286 = vadd.f32 %v1812, %v2263
      %v2287 = vadd.f32 %v1813, %v2262
      %v2288 = vadd.f32 %v1814, %v2261
      %v2289 = vadd.f32 %v1815, %v2260
      %v2290 = vadd.f32 %v1816, %v2259
      %v2291 = vadd.f32 %v1817, %v2258
      %v2292 = vadd.f32 %v1818, %v2257
      %v2293 = vadd.f32 %v1819, %v2256
      %v2294 = vadd.f32 %v1820, %v2255
      %v2295 = vadd.f32 %v1821, %v2254
      %v2296 = vadd.f32 %v1822, %v2253
      %v2297 = vadd.f32 %v1823, %v2252
      %v2298 = vadd.f32 %v1824, %v2251
      %v2299 = vadd.f32 %v1825, %v2250
      %v2300 = vadd.f32 %v1826, %v2249
      %v2301 = vadd.f32 %v1827, %v2248
      %v2302 = vadd.f32 %v1828, %v2247
      %v2303 = vadd.f32 %v1829, %v2246
      %v2304 = vadd.f32 %v1830, %v2245
      %v2305 = vadd.f32 %v1831, %v2244
      %v2306 = vadd.f32 %v1832, %v2243
      %s2307 = scalar_lea.vmem %s1, 256
      %v2308 = vld [vmem:[%s2307] sm:$0xf]
      %v2309 = vld [vmem:[%s2307 + $0x4] sm:$0xf]
      %v2310 = vld [vmem:[%s2307 + $0x8] sm:$0xf]
      %v2311 = vld [vmem:[%s2307 + $0xc] sm:$0xf]
      %v2312 = vld [vmem:[%s2307 + $0x10] sm:$0xf]
      %v2313 = vld [vmem:[%s2307 + $0x14] sm:$0xf]
      %v2314 = vld [vmem:[%s2307 + $0x18] sm:$0xf]
      %v2315 = vld [vmem:[%s2307 + $0x1c] sm:$0xf]
      %v2316 = vld [vmem:[%s2307 + $0x20] sm:$0xf]
      %v2317 = vld [vmem:[%s2307 + $0x24] sm:$0xf]
      %v2318 = vld [vmem:[%s2307 + $0x28] sm:$0xf]
      %v2319 = vld [vmem:[%s2307 + $0x2c] sm:$0xf]
      %v2320 = vld [vmem:[%s2307 + $0x30] sm:$0xf]
      %v2321 = vld [vmem:[%s2307 + $0x34] sm:$0xf]
      %v2322 = vld [vmem:[%s2307 + $0x38] sm:$0xf]
      %v2323 = vld [vmem:[%s2307 + $0x3c] sm:$0xf]
      %v2340 = vunpack.c.l.b16 %v2308
      %v2341 = vunpack.c.l.b16 %v2309
      %v2342 = vunpack.c.l.b16 %v2310
      %v2343 = vunpack.c.l.b16 %v2311
      %v2344 = vunpack.c.l.b16 %v2312
      %v2345 = vunpack.c.l.b16 %v2313
      %v2346 = vunpack.c.l.b16 %v2314
      %v2347 = vunpack.c.l.b16 %v2315
      %v2348 = vunpack.c.l.b16 %v2316
      %v2349 = vunpack.c.l.b16 %v2317
      %v2350 = vunpack.c.l.b16 %v2318
      %v2351 = vunpack.c.l.b16 %v2319
      %v2352 = vunpack.c.l.b16 %v2320
      %v2353 = vunpack.c.l.b16 %v2321
      %v2354 = vunpack.c.l.b16 %v2322
      %v2355 = vunpack.c.l.b16 %v2323
      %v2356 = vpack.c.b16 %v2341, %v2340
      %v2357 = vpack.c.b16 %v2343, %v2342
      %v2358 = vpack.c.b16 %v2345, %v2344
      %v2359 = vpack.c.b16 %v2347, %v2346
      %v2360 = vpack.c.b16 %v2349, %v2348
      %v2361 = vpack.c.b16 %v2351, %v2350
      %v2362 = vpack.c.b16 %v2353, %v2352
      %v2363 = vpack.c.b16 %v2355, %v2354
      %2372 = vmatprep.subr.bf16.mxu0 0
      %2373 = vmatpush1.bf16.msra.mxu0 %v2356
      %2374 = vmatprep.subr.bf16.mxu0 0
      %2375 = vmatpush1.bf16.msra.mxu0 %v2357
      %2376 = vmatprep.subr.bf16.mxu0 0
      %2377 = vmatpush1.bf16.msra.mxu0 %v2358
      %2378 = vmatprep.subr.bf16.mxu0 0
      %2379 = vmatpush1.bf16.msra.mxu0 %v2359
      %2380 = vmatprep.subr.bf16.mxu0 0
      %2381 = vmatpush1.bf16.msra.mxu0 %v2360
      %2382 = vmatprep.subr.bf16.mxu0 0
      %2383 = vmatpush1.bf16.msra.mxu0 %v2361
      %2384 = vmatprep.subr.bf16.mxu0 0
      %2385 = vmatpush1.bf16.msra.mxu0 %v2362
      %2386 = vmatprep.subr.bf16.mxu0 0
      %2387 = vmatpush1.bf16.msra.mxu0 %v2363
      %2388 = vmatprep.subr.bf16.mxu0 0
      %2389 = vmatpush1.bf16.msra.mxu0 0
      %2390 = vmatprep.subr.bf16.mxu0 0
      %2391 = vmatpush1.bf16.msra.mxu0 0
      %2392 = vmatprep.subr.bf16.mxu0 0
      %2393 = vmatpush1.bf16.msra.mxu0 0
      %2394 = vmatprep.subr.bf16.mxu0 0
      %2395 = vmatpush1.bf16.msra.mxu0 0
      %2396 = vmatprep.subr.bf16.mxu0 0
      %2397 = vmatpush1.bf16.msra.mxu0 0
      %2398 = vmatprep.subr.bf16.mxu0 0
      %2399 = vmatpush1.bf16.msra.mxu0 0
      %2400 = vmatprep.subr.bf16.mxu0 0
      %2401 = vmatpush1.bf16.msra.mxu0 0
      %2402 = vmatprep.subr.bf16.mxu0 0
      %2403 = vmatpush1.bf16.msra.mxu0 0
      %2404 = vmatprep.mubr.bf16.mxu0 0
      %2405 = vmatmul.mubr.bf16.gmra.mrb[0].mxu0 %v448
      %v2406 = vpop.f32.mrb[0].mxu0
      %v2407 = vadd.f32 0.0, %v2406
      %v2408 = vpop.f32.mrb[0].mxu0
      %v2409 = vpop.f32.mrb[0].mxu0
      %v2410 = vadd.f32 0.0, %v2409
      %v2411 = vpop.f32.mrb[0].mxu0
      %2412 = vmatprep.mubr.bf16.mxu0 0
      %2413 = vmatmul.mubr.bf16.gmra.mrb[0].mxu0 %v449
      %v2414 = vpop.f32.mrb[0].mxu0
      %v2415 = vpop.f32.mrb[0].mxu0
      %v2416 = vpop.f32.mrb[0].mxu0
      %v2417 = vpop.f32.mrb[0].mxu0
      %2418 = vmatprep.mubr.bf16.mxu0 0
      %2419 = vmatmul.mubr.bf16.gmra.mrb[0].mxu0 %v450
      %v2420 = vpop.f32.mrb[0].mxu0
      %v2421 = vadd.f32 0.0, %v2420
      %v2422 = vpop.f32.mrb[0].mxu0
      %v2423 = vpop.f32.mrb[0].mxu0
      %v2424 = vadd.f32 0.0, %v2423
      %v2425 = vpop.f32.mrb[0].mxu0
      %2426 = vmatprep.mubr.bf16.mxu0 0
      %2427 = vmatmul.mubr.bf16.gmra.mrb[0].mxu0 %v451
      %v2428 = vpop.f32.mrb[0].mxu0
      %v2429 = vpop.f32.mrb[0].mxu0
      %v2430 = vpop.f32.mrb[0].mxu0
      %v2431 = vpop.f32.mrb[0].mxu0
      %2432 = vmatprep.mubr.bf16.mxu0 0
      %2433 = vmatmul.mubr.bf16.gmra.mrb[0].mxu0 %v452
      %v2434 = vpop.f32.mrb[0].mxu0
      %v2435 = vadd.f32 0.0, %v2434
      %v2436 = vpop.f32.mrb[0].mxu0
      %v2437 = vpop.f32.mrb[0].mxu0
      %v2438 = vadd.f32 0.0, %v2437
      %v2439 = vpop.f32.mrb[0].mxu0
      %2440 = vmatprep.mubr.bf16.mxu0 0
      %2441 = vmatmul.mubr.bf16.gmra.mrb[0].mxu0 %v453
      %v2442 = vpop.f32.mrb[0].mxu0
      %v2443 = vpop.f32.mrb[0].mxu0
      %v2444 = vpop.f32.mrb[0].mxu0
      %v2445 = vpop.f32.mrb[0].mxu0
      %2446 = vmatprep.mubr.bf16.mxu0 0
      %2447 = vmatmul.mubr.bf16.gmra.mrb[0].mxu0 %v454
      %v2448 = vpop.f32.mrb[0].mxu0
      %v2449 = vadd.f32 0.0, %v2448
      %v2450 = vpop.f32.mrb[0].mxu0
      %v2451 = vpop.f32.mrb[0].mxu0
      %v2452 = vadd.f32 0.0, %v2451
      %v2453 = vpop.f32.mrb[0].mxu0
      %2454 = vmatprep.mubr.bf16.mxu0 0
      %2455 = vmatmul.mubr.bf16.gmra.mrb[0].mxu0 %v455
      %v2456 = vpop.f32.mrb[0].mxu0
      %v2457 = vpop.f32.mrb[0].mxu0
      %v2458 = vpop.f32.mrb[0].mxu0
      %v2459 = vpop.f32.mrb[0].mxu0
      %2460 = vmatprep.mubr.bf16.mxu0 0
      %2461 = vmatmul.mubr.bf16.gmra.mrb[0].mxu0 %v456
      %v2462 = vpop.f32.mrb[0].mxu0
      %v2463 = vadd.f32 0.0, %v2462
      %v2464 = vpop.f32.mrb[0].mxu0
      %v2465 = vpop.f32.mrb[0].mxu0
      %v2466 = vadd.f32 0.0, %v2465
      %v2467 = vpop.f32.mrb[0].mxu0
      %2468 = vmatprep.mubr.bf16.mxu0 0
      %2469 = vmatmul.mubr.bf16.gmra.mrb[0].mxu0 %v457
      %v2470 = vpop.f32.mrb[0].mxu0
      %v2471 = vpop.f32.mrb[0].mxu0
      %v2472 = vpop.f32.mrb[0].mxu0
      %v2473 = vpop.f32.mrb[0].mxu0
      %2474 = vmatprep.mubr.bf16.mxu0 0
      %2475 = vmatmul.mubr.bf16.gmra.mrb[0].mxu0 %v458
      %v2476 = vpop.f32.mrb[0].mxu0
      %v2477 = vadd.f32 0.0, %v2476
      %v2478 = vpop.f32.mrb[0].mxu0
      %v2479 = vpop.f32.mrb[0].mxu0
      %v2480 = vadd.f32 0.0, %v2479
      %v2481 = vpop.f32.mrb[0].mxu0
      %2482 = vmatprep.mubr.bf16.mxu0 0
      %2483 = vmatmul.mubr.bf16.gmra.mrb[0].mxu0 %v459
      %v2484 = vpop.f32.mrb[0].mxu0
      %v2485 = vpop.f32.mrb[0].mxu0
      %v2486 = vpop.f32.mrb[0].mxu0
      %v2487 = vpop.f32.mrb[0].mxu0
      %2488 = vmatprep.mubr.bf16.mxu0 0
      %2489 = vmatmul.mubr.bf16.gmra.mrb[0].mxu0 %v460
      %v2490 = vpop.f32.mrb[0].mxu0
      %v2491 = vadd.f32 0.0, %v2490
      %v2492 = vpop.f32.mrb[0].mxu0
      %v2493 = vpop.f32.mrb[0].mxu0
      %v2494 = vadd.f32 0.0, %v2493
      %v2495 = vpop.f32.mrb[0].mxu0
      %2496 = vmatprep.mubr.bf16.mxu0 0
      %2497 = vmatmul.mubr.bf16.gmra.mrb[0].mxu0 %v461
      %v2498 = vpop.f32.mrb[0].mxu0
      %v2499 = vpop.f32.mrb[0].mxu0
      %v2500 = vpop.f32.mrb[0].mxu0
      %v2501 = vpop.f32.mrb[0].mxu0
      %2502 = vmatprep.mubr.bf16.mxu0 0
      %2503 = vmatmul.mubr.bf16.gmra.mrb[0].mxu0 %v462
      %v2504 = vpop.f32.mrb[0].mxu0
      %v2505 = vadd.f32 0.0, %v2504
      %v2506 = vpop.f32.mrb[0].mxu0
      %v2507 = vpop.f32.mrb[0].mxu0
      %v2508 = vadd.f32 0.0, %v2507
      %v2509 = vpop.f32.mrb[0].mxu0
      %2510 = vmatprep.mubr.bf16.mxu0 0
      %2511 = vmatmul.mubr.bf16.gmra.mrb[0].mxu0 %v463
      %v2512 = vpop.f32.mrb[0].mxu0
      %v2513 = vpop.f32.mrb[0].mxu0
      %v2514 = vpop.f32.mrb[0].mxu0
      %v2515 = vpop.f32.mrb[0].mxu0
      %2516 = vmatprep.mubr.bf16.mxu0 0
      %2517 = vmatmul.mubr.bf16.gmra.mrb[0].mxu0 %v464
      %v2518 = vpop.f32.mrb[0].mxu0
      %v2519 = vadd.f32 0.0, %v2518
      %v2520 = vpop.f32.mrb[0].mxu0
      %v2521 = vpop.f32.mrb[0].mxu0
      %v2522 = vadd.f32 0.0, %v2521
      %v2523 = vpop.f32.mrb[0].mxu0
      %2524 = vmatprep.mubr.bf16.mxu0 0
      %2525 = vmatmul.mubr.bf16.gmra.mrb[0].mxu0 %v465
      %v2526 = vpop.f32.mrb[0].mxu0
      %v2527 = vpop.f32.mrb[0].mxu0
      %v2528 = vpop.f32.mrb[0].mxu0
      %v2529 = vpop.f32.mrb[0].mxu0
      %2530 = vmatprep.mubr.bf16.mxu0 0
      %2531 = vmatmul.mubr.bf16.gmra.mrb[0].mxu0 %v466
      %v2532 = vpop.f32.mrb[0].mxu0
      %v2533 = vadd.f32 0.0, %v2532
      %v2534 = vpop.f32.mrb[0].mxu0
      %v2535 = vpop.f32.mrb[0].mxu0
      %v2536 = vadd.f32 0.0, %v2535
      %v2537 = vpop.f32.mrb[0].mxu0
      %2538 = vmatprep.mubr.bf16.mxu0 0
      %2539 = vmatmul.mubr.bf16.gmra.mrb[0].mxu0 %v467
      %v2540 = vpop.f32.mrb[0].mxu0
      %v2541 = vpop.f32.mrb[0].mxu0
      %v2542 = vpop.f32.mrb[0].mxu0
      %v2543 = vpop.f32.mrb[0].mxu0
      %2544 = vmatprep.mubr.bf16.mxu0 0
      %2545 = vmatmul.mubr.bf16.gmra.mrb[0].mxu0 %v468
      %v2546 = vpop.f32.mrb[0].mxu0
      %v2547 = vadd.f32 0.0, %v2546
      %v2548 = vpop.f32.mrb[0].mxu0
      %v2549 = vpop.f32.mrb[0].mxu0
      %v2550 = vadd.f32 0.0, %v2549
      %v2551 = vpop.f32.mrb[0].mxu0
      %2552 = vmatprep.mubr.bf16.mxu0 0
      %2553 = vmatmul.mubr.bf16.gmra.mrb[0].mxu0 %v469
      %v2554 = vpop.f32.mrb[0].mxu0
      %v2555 = vpop.f32.mrb[0].mxu0
      %v2556 = vpop.f32.mrb[0].mxu0
      %v2557 = vpop.f32.mrb[0].mxu0
      %2558 = vmatprep.mubr.bf16.mxu0 0
      %2559 = vmatmul.mubr.bf16.gmra.mrb[0].mxu0 %v470
      %v2560 = vpop.f32.mrb[0].mxu0
      %v2561 = vadd.f32 0.0, %v2560
      %v2562 = vpop.f32.mrb[0].mxu0
      %v2563 = vpop.f32.mrb[0].mxu0
      %v2564 = vadd.f32 0.0, %v2563
      %v2565 = vpop.f32.mrb[0].mxu0
      %2566 = vmatprep.mubr.bf16.mxu0 0
      %2567 = vmatmul.mubr.bf16.gmra.mrb[0].mxu0 %v471
      %v2568 = vpop.f32.mrb[0].mxu0
      %v2569 = vpop.f32.mrb[0].mxu0
      %v2570 = vpop.f32.mrb[0].mxu0
      %v2571 = vpop.f32.mrb[0].mxu0
      %2572 = vmatprep.mubr.bf16.mxu0 0
      %2573 = vmatmul.mubr.bf16.gmra.mrb[0].mxu0 %v472
      %v2574 = vpop.f32.mrb[0].mxu0
      %v2575 = vadd.f32 0.0, %v2574
      %v2576 = vpop.f32.mrb[0].mxu0
      %v2577 = vpop.f32.mrb[0].mxu0
      %v2578 = vadd.f32 0.0, %v2577
      %v2579 = vpop.f32.mrb[0].mxu0
      %2580 = vmatprep.mubr.bf16.mxu0 0
      %2581 = vmatmul.mubr.bf16.gmra.mrb[0].mxu0 %v473
      %v2582 = vpop.f32.mrb[0].mxu0
      %v2583 = vpop.f32.mrb[0].mxu0
      %v2584 = vpop.f32.mrb[0].mxu0
      %v2585 = vpop.f32.mrb[0].mxu0
      %2586 = vmatprep.mubr.bf16.mxu0 0
      %2587 = vmatmul.mubr.bf16.gmra.mrb[0].mxu0 %v474
      %v2588 = vpop.f32.mrb[0].mxu0
      %v2589 = vadd.f32 0.0, %v2588
      %v2590 = vpop.f32.mrb[0].mxu0
      %v2591 = vpop.f32.mrb[0].mxu0
      %v2592 = vadd.f32 0.0, %v2591
      %v2593 = vpop.f32.mrb[0].mxu0
      %2594 = vmatprep.mubr.bf16.mxu0 0
      %2595 = vmatmul.mubr.bf16.gmra.mrb[0].mxu0 %v475
      %v2596 = vpop.f32.mrb[0].mxu0
      %v2597 = vpop.f32.mrb[0].mxu0
      %v2598 = vpop.f32.mrb[0].mxu0
      %v2599 = vpop.f32.mrb[0].mxu0
      %2600 = vmatprep.mubr.bf16.mxu0 0
      %2601 = vmatmul.mubr.bf16.gmra.mrb[0].mxu0 %v476
      %v2602 = vpop.f32.mrb[0].mxu0
      %v2603 = vadd.f32 0.0, %v2602
      %v2604 = vpop.f32.mrb[0].mxu0
      %v2605 = vpop.f32.mrb[0].mxu0
      %v2606 = vadd.f32 0.0, %v2605
      %v2607 = vpop.f32.mrb[0].mxu0
      %2608 = vmatprep.mubr.bf16.mxu0 0
      %2609 = vmatmul.mubr.bf16.gmra.mrb[0].mxu0 %v477
      %v2610 = vpop.f32.mrb[0].mxu0
      %v2611 = vpop.f32.mrb[0].mxu0
      %v2612 = vpop.f32.mrb[0].mxu0
      %v2613 = vpop.f32.mrb[0].mxu0
      %2614 = vmatprep.mubr.bf16.mxu0 0
      %2615 = vmatmul.mubr.bf16.gmra.mrb[0].mxu0 %v478
      %v2616 = vpop.f32.mrb[0].mxu0
      %v2617 = vadd.f32 0.0, %v2616
      %v2618 = vpop.f32.mrb[0].mxu0
      %v2619 = vpop.f32.mrb[0].mxu0
      %v2620 = vadd.f32 0.0, %v2619
      %v2621 = vpop.f32.mrb[0].mxu0
      %2622 = vmatprep.mubr.bf16.mxu0 0
      %2623 = vmatmul.mubr.bf16.gmra.mrb[0].mxu0 %v479
      %v2624 = vpop.f32.mrb[0].mxu0
      %v2625 = vpop.f32.mrb[0].mxu0
      %v2626 = vpop.f32.mrb[0].mxu0
      %v2627 = vpop.f32.mrb[0].mxu0
      %2628 = vmatprep.mubr.bf16.mxu0 0
      %2629 = vmatmul.mubr.bf16.gmra.mrb[0].mxu0 %v480
      %v2630 = vpop.f32.mrb[0].mxu0
      %v2631 = vpop.f32.mrb[0].mxu0
      %v2632 = vpop.f32.mrb[0].mxu0
      %v2633 = vpop.f32.mrb[0].mxu0
      %2634 = vmatprep.mubr.bf16.mxu0 0
      %2635 = vmatmul.mubr.bf16.gmra.mrb[0].mxu0 %v481
      %v2636 = vpop.f32.mrb[0].mxu0
      %v2637 = vpop.f32.mrb[0].mxu0
      %v2638 = vpop.f32.mrb[0].mxu0
      %v2639 = vpop.f32.mrb[0].mxu0
      %2640 = vmatprep.mubr.bf16.mxu0 0
      %2641 = vmatmul.mubr.bf16.gmra.mrb[0].mxu0 %v482
      %v2642 = vpop.f32.mrb[0].mxu0
      %v2643 = vpop.f32.mrb[0].mxu0
      %v2644 = vpop.f32.mrb[0].mxu0
      %v2645 = vpop.f32.mrb[0].mxu0
      %2646 = vmatprep.mubr.bf16.mxu0 0
      %2647 = vmatmul.mubr.bf16.gmra.mrb[0].mxu0 %v483
      %v2648 = vpop.f32.mrb[0].mxu0
      %v2649 = vpop.f32.mrb[0].mxu0
      %v2650 = vpop.f32.mrb[0].mxu0
      %v2651 = vpop.f32.mrb[0].mxu0
      %2652 = vdwg.mxu0
      %v2653 = vadd.f32 %v2275, %v2407
      %v2654 = vadd.f32 %v2276, %v2410
      %v2655 = vadd.f32 %v2277, %v2421
      %v2656 = vadd.f32 %v2278, %v2424
      %v2657 = vadd.f32 %v2279, %v2435
      %v2658 = vadd.f32 %v2280, %v2438
      %v2659 = vadd.f32 %v2281, %v2449
      %v2660 = vadd.f32 %v2282, %v2452
      %v2661 = vadd.f32 %v2283, %v2463
      %v2662 = vadd.f32 %v2284, %v2466
      %v2663 = vadd.f32 %v2285, %v2477
      %v2664 = vadd.f32 %v2286, %v2480
      %v2665 = vadd.f32 %v2287, %v2491
      %v2666 = vadd.f32 %v2288, %v2494
      %v2667 = vadd.f32 %v2289, %v2505
      %v2668 = vadd.f32 %v2290, %v2508
      %v2669 = vadd.f32 %v2291, %v2519
      %v2670 = vadd.f32 %v2292, %v2522
      %v2671 = vadd.f32 %v2293, %v2533
      %v2672 = vadd.f32 %v2294, %v2536
      %v2673 = vadd.f32 %v2295, %v2547
      %v2674 = vadd.f32 %v2296, %v2550
      %v2675 = vadd.f32 %v2297, %v2561
      %v2676 = vadd.f32 %v2298, %v2564
      %v2677 = vadd.f32 %v2299, %v2575
      %v2678 = vadd.f32 %v2300, %v2578
      %v2679 = vadd.f32 %v2301, %v2589
      %v2680 = vadd.f32 %v2302, %v2592
      %v2681 = vadd.f32 %v2303, %v2603
      %v2682 = vadd.f32 %v2304, %v2606
      %v2683 = vadd.f32 %v2305, %v2617
      %v2684 = vadd.f32 %v2306, %v2620
      %s2685 = scalar_lea.vmem %s1, 320
      %v2686 = vld [vmem:[%s2685] sm:$0xf]
      %v2687 = vld [vmem:[%s2685 + $0x4] sm:$0xf]
      %v2688 = vld [vmem:[%s2685 + $0x8] sm:$0xf]
      %v2689 = vld [vmem:[%s2685 + $0xc] sm:$0xf]
      %v2690 = vld [vmem:[%s2685 + $0x10] sm:$0xf]
      %v2691 = vld [vmem:[%s2685 + $0x14] sm:$0xf]
      %v2692 = vld [vmem:[%s2685 + $0x18] sm:$0xf]
      %v2693 = vld [vmem:[%s2685 + $0x1c] sm:$0xf]
      %v2694 = vld [vmem:[%s2685 + $0x20] sm:$0xf]
      %v2695 = vld [vmem:[%s2685 + $0x24] sm:$0xf]
      %v2696 = vld [vmem:[%s2685 + $0x28] sm:$0xf]
      %v2697 = vld [vmem:[%s2685 + $0x2c] sm:$0xf]
      %v2698 = vld [vmem:[%s2685 + $0x30] sm:$0xf]
      %v2699 = vld [vmem:[%s2685 + $0x34] sm:$0xf]
      %v2700 = vld [vmem:[%s2685 + $0x38] sm:$0xf]
      %v2701 = vld [vmem:[%s2685 + $0x3c] sm:$0xf]
      %v2718 = vunpack.c.l.b16 %v2686
      %v2719 = vunpack.c.l.b16 %v2687
      %v2720 = vunpack.c.l.b16 %v2688
      %v2721 = vunpack.c.l.b16 %v2689
      %v2722 = vunpack.c.l.b16 %v2690
      %v2723 = vunpack.c.l.b16 %v2691
      %v2724 = vunpack.c.l.b16 %v2692
      %v2725 = vunpack.c.l.b16 %v2693
      %v2726 = vunpack.c.l.b16 %v2694
      %v2727 = vunpack.c.l.b16 %v2695
      %v2728 = vunpack.c.l.b16 %v2696
      %v2729 = vunpack.c.l.b16 %v2697
      %v2730 = vunpack.c.l.b16 %v2698
      %v2731 = vunpack.c.l.b16 %v2699
      %v2732 = vunpack.c.l.b16 %v2700
      %v2733 = vunpack.c.l.b16 %v2701
      %v2734 = vpack.c.b16 %v2719, %v2718
      %v2735 = vpack.c.b16 %v2721, %v2720
      %v2736 = vpack.c.b16 %v2723, %v2722
      %v2737 = vpack.c.b16 %v2725, %v2724
      %v2738 = vpack.c.b16 %v2727, %v2726
      %v2739 = vpack.c.b16 %v2729, %v2728
      %v2740 = vpack.c.b16 %v2731, %v2730
      %v2741 = vpack.c.b16 %v2733, %v2732
      %2750 = vmatprep.subr.bf16.mxu0 0
      %2751 = vmatpush1.bf16.msra.mxu0 %v2734
      %2752 = vmatprep.subr.bf16.mxu0 0
      %2753 = vmatpush1.bf16.msra.mxu0 %v2735
      %2754 = vmatprep.subr.bf16.mxu0 0
      %2755 = vmatpush1.bf16.msra.mxu0 %v2736
      %2756 = vmatprep.subr.bf16.mxu0 0
      %2757 = vmatpush1.bf16.msra.mxu0 %v2737
      %2758 = vmatprep.subr.bf16.mxu0 0
      %2759 = vmatpush1.bf16.msra.mxu0 %v2738
      %2760 = vmatprep.subr.bf16.mxu0 0
      %2761 = vmatpush1.bf16.msra.mxu0 %v2739
      %2762 = vmatprep.subr.bf16.mxu0 0
      %2763 = vmatpush1.bf16.msra.mxu0 %v2740
      %2764 = vmatprep.subr.bf16.mxu0 0
      %2765 = vmatpush1.bf16.msra.mxu0 %v2741
      %2766 = vmatprep.subr.bf16.mxu0 0
      %2767 = vmatpush1.bf16.msra.mxu0 0
      %2768 = vmatprep.subr.bf16.mxu0 0
      %2769 = vmatpush1.bf16.msra.mxu0 0
      %2770 = vmatprep.subr.bf16.mxu0 0
      %2771 = vmatpush1.bf16.msra.mxu0 0
      %2772 = vmatprep.subr.bf16.mxu0 0
      %2773 = vmatpush1.bf16.msra.mxu0 0
      %2774 = vmatprep.subr.bf16.mxu0 0
      %2775 = vmatpush1.bf16.msra.mxu0 0
      %2776 = vmatprep.subr.bf16.mxu0 0
      %2777 = vmatpush1.bf16.msra.mxu0 0
      %2778 = vmatprep.subr.bf16.mxu0 0
      %2779 = vmatpush1.bf16.msra.mxu0 0
      %2780 = vmatprep.subr.bf16.mxu0 0
      %2781 = vmatpush1.bf16.msra.mxu0 0
      %2782 = vmatprep.mubr.bf16.mxu0 0
      %2783 = vmatmul.mubr.bf16.gmra.mrb[0].mxu0 %v448
      %v2784 = vpop.f32.mrb[0].mxu0
      %v2785 = vadd.f32 0.0, %v2784
      %v2786 = vpop.f32.mrb[0].mxu0
      %v2787 = vpop.f32.mrb[0].mxu0
      %v2788 = vadd.f32 0.0, %v2787
      %v2789 = vpop.f32.mrb[0].mxu0
      %2790 = vmatprep.mubr.bf16.mxu0 0
      %2791 = vmatmul.mubr.bf16.gmra.mrb[0].mxu0 %v449
      %v2792 = vpop.f32.mrb[0].mxu0
      %v2793 = vadd.f32 0.0, %v2792
      %v2794 = vpop.f32.mrb[0].mxu0
      %v2795 = vpop.f32.mrb[0].mxu0
      %v2796 = vpop.f32.mrb[0].mxu0
      %2797 = vmatprep.mubr.bf16.mxu0 0
      %2798 = vmatmul.mubr.bf16.gmra.mrb[0].mxu0 %v450
      %v2799 = vpop.f32.mrb[0].mxu0
      %v2800 = vadd.f32 0.0, %v2799
      %v2801 = vpop.f32.mrb[0].mxu0
      %v2802 = vpop.f32.mrb[0].mxu0
      %v2803 = vadd.f32 0.0, %v2802
      %v2804 = vpop.f32.mrb[0].mxu0
      %2805 = vmatprep.mubr.bf16.mxu0 0
      %2806 = vmatmul.mubr.bf16.gmra.mrb[0].mxu0 %v451
      %v2807 = vpop.f32.mrb[0].mxu0
      %v2808 = vadd.f32 0.0, %v2807
      %v2809 = vpop.f32.mrb[0].mxu0
      %v2810 = vpop.f32.mrb[0].mxu0
      %v2811 = vpop.f32.mrb[0].mxu0
      %2812 = vmatprep.mubr.bf16.mxu0 0
      %2813 = vmatmul.mubr.bf16.gmra.mrb[0].mxu0 %v452
      %v2814 = vpop.f32.mrb[0].mxu0
      %v2815 = vadd.f32 0.0, %v2814
      %v2816 = vpop.f32.mrb[0].mxu0
      %v2817 = vpop.f32.mrb[0].mxu0
      %v2818 = vadd.f32 0.0, %v2817
      %v2819 = vpop.f32.mrb[0].mxu0
      %2820 = vmatprep.mubr.bf16.mxu0 0
      %2821 = vmatmul.mubr.bf16.gmra.mrb[0].mxu0 %v453
      %v2822 = vpop.f32.mrb[0].mxu0
      %v2823 = vadd.f32 0.0, %v2822
      %v2824 = vpop.f32.mrb[0].mxu0
      %v2825 = vpop.f32.mrb[0].mxu0
      %v2826 = vpop.f32.mrb[0].mxu0
      %2827 = vmatprep.mubr.bf16.mxu0 0
      %2828 = vmatmul.mubr.bf16.gmra.mrb[0].mxu0 %v454
      %v2829 = vpop.f32.mrb[0].mxu0
      %v2830 = vadd.f32 0.0, %v2829
      %v2831 = vpop.f32.mrb[0].mxu0
      %v2832 = vpop.f32.mrb[0].mxu0
      %v2833 = vadd.f32 0.0, %v2832
      %v2834 = vpop.f32.mrb[0].mxu0
      %2835 = vmatprep.mubr.bf16.mxu0 0
      %2836 = vmatmul.mubr.bf16.gmra.mrb[0].mxu0 %v455
      %v2837 = vpop.f32.mrb[0].mxu0
      %v2838 = vadd.f32 0.0, %v2837
      %v2839 = vpop.f32.mrb[0].mxu0
      %v2840 = vpop.f32.mrb[0].mxu0
      %v2841 = vpop.f32.mrb[0].mxu0
      %2842 = vmatprep.mubr.bf16.mxu0 0
      %2843 = vmatmul.mubr.bf16.gmra.mrb[0].mxu0 %v456
      %v2844 = vpop.f32.mrb[0].mxu0
      %v2845 = vadd.f32 0.0, %v2844
      %v2846 = vpop.f32.mrb[0].mxu0
      %v2847 = vpop.f32.mrb[0].mxu0
      %v2848 = vadd.f32 0.0, %v2847
      %v2849 = vpop.f32.mrb[0].mxu0
      %2850 = vmatprep.mubr.bf16.mxu0 0
      %2851 = vmatmul.mubr.bf16.gmra.mrb[0].mxu0 %v457
      %v2852 = vpop.f32.mrb[0].mxu0
      %v2853 = vadd.f32 0.0, %v2852
      %v2854 = vpop.f32.mrb[0].mxu0
      %v2855 = vpop.f32.mrb[0].mxu0
      %v2856 = vpop.f32.mrb[0].mxu0
      %2857 = vmatprep.mubr.bf16.mxu0 0
      %2858 = vmatmul.mubr.bf16.gmra.mrb[0].mxu0 %v458
      %v2859 = vpop.f32.mrb[0].mxu0
      %v2860 = vadd.f32 0.0, %v2859
      %v2861 = vpop.f32.mrb[0].mxu0
      %v2862 = vpop.f32.mrb[0].mxu0
      %v2863 = vadd.f32 0.0, %v2862
      %v2864 = vpop.f32.mrb[0].mxu0
      %2865 = vmatprep.mubr.bf16.mxu0 0
      %2866 = vmatmul.mubr.bf16.gmra.mrb[0].mxu0 %v459
      %v2867 = vpop.f32.mrb[0].mxu0
      %v2868 = vadd.f32 0.0, %v2867
      %v2869 = vpop.f32.mrb[0].mxu0
      %v2870 = vpop.f32.mrb[0].mxu0
      %v2871 = vpop.f32.mrb[0].mxu0
      %2872 = vmatprep.mubr.bf16.mxu0 0
      %2873 = vmatmul.mubr.bf16.gmra.mrb[0].mxu0 %v460
      %v2874 = vpop.f32.mrb[0].mxu0
      %v2875 = vadd.f32 0.0, %v2874
      %v2876 = vpop.f32.mrb[0].mxu0
      %v2877 = vpop.f32.mrb[0].mxu0
      %v2878 = vadd.f32 0.0, %v2877
      %v2879 = vpop.f32.mrb[0].mxu0
      %2880 = vmatprep.mubr.bf16.mxu0 0
      %2881 = vmatmul.mubr.bf16.gmra.mrb[0].mxu0 %v461
      %v2882 = vpop.f32.mrb[0].mxu0
      %v2883 = vadd.f32 0.0, %v2882
      %v2884 = vpop.f32.mrb[0].mxu0
      %v2885 = vpop.f32.mrb[0].mxu0
      %v2886 = vpop.f32.mrb[0].mxu0
      %2887 = vmatprep.mubr.bf16.mxu0 0
      %2888 = vmatmul.mubr.bf16.gmra.mrb[0].mxu0 %v462
      %v2889 = vpop.f32.mrb[0].mxu0
      %v2890 = vadd.f32 0.0, %v2889
      %v2891 = vpop.f32.mrb[0].mxu0
      %v2892 = vpop.f32.mrb[0].mxu0
      %v2893 = vadd.f32 0.0, %v2892
      %v2894 = vpop.f32.mrb[0].mxu0
      %2895 = vmatprep.mubr.bf16.mxu0 0
      %2896 = vmatmul.mubr.bf16.gmra.mrb[0].mxu0 %v463
      %v2897 = vpop.f32.mrb[0].mxu0
      %v2898 = vadd.f32 0.0, %v2897
      %v2899 = vpop.f32.mrb[0].mxu0
      %v2900 = vpop.f32.mrb[0].mxu0
      %v2901 = vpop.f32.mrb[0].mxu0
      %2902 = vmatprep.mubr.bf16.mxu0 0
      %2903 = vmatmul.mubr.bf16.gmra.mrb[0].mxu0 %v464
      %v2904 = vpop.f32.mrb[0].mxu0
      %v2905 = vadd.f32 0.0, %v2904
      %v2906 = vpop.f32.mrb[0].mxu0
      %v2907 = vpop.f32.mrb[0].mxu0
      %v2908 = vadd.f32 0.0, %v2907
      %v2909 = vpop.f32.mrb[0].mxu0
      %2910 = vmatprep.mubr.bf16.mxu0 0
      %2911 = vmatmul.mubr.bf16.gmra.mrb[0].mxu0 %v465
      %v2912 = vpop.f32.mrb[0].mxu0
      %v2913 = vadd.f32 0.0, %v2912
      %v2914 = vpop.f32.mrb[0].mxu0
      %v2915 = vpop.f32.mrb[0].mxu0
      %v2916 = vpop.f32.mrb[0].mxu0
      %2917 = vmatprep.mubr.bf16.mxu0 0
      %2918 = vmatmul.mubr.bf16.gmra.mrb[0].mxu0 %v466
      %v2919 = vpop.f32.mrb[0].mxu0
      %v2920 = vadd.f32 0.0, %v2919
      %v2921 = vpop.f32.mrb[0].mxu0
      %v2922 = vpop.f32.mrb[0].mxu0
      %v2923 = vadd.f32 0.0, %v2922
      %v2924 = vpop.f32.mrb[0].mxu0
      %2925 = vmatprep.mubr.bf16.mxu0 0
      %2926 = vmatmul.mubr.bf16.gmra.mrb[0].mxu0 %v467
      %v2927 = vpop.f32.mrb[0].mxu0
      %v2928 = vadd.f32 0.0, %v2927
      %v2929 = vpop.f32.mrb[0].mxu0
      %v2930 = vpop.f32.mrb[0].mxu0
      %v2931 = vpop.f32.mrb[0].mxu0
      %2932 = vmatprep.mubr.bf16.mxu0 0
      %2933 = vmatmul.mubr.bf16.gmra.mrb[0].mxu0 %v468
      %v2934 = vpop.f32.mrb[0].mxu0
      %v2935 = vadd.f32 0.0, %v2934
      %v2936 = vpop.f32.mrb[0].mxu0
      %v2937 = vpop.f32.mrb[0].mxu0
      %v2938 = vadd.f32 0.0, %v2937
      %v2939 = vpop.f32.mrb[0].mxu0
      %2940 = vmatprep.mubr.bf16.mxu0 0
      %2941 = vmatmul.mubr.bf16.gmra.mrb[0].mxu0 %v469
      %v2942 = vpop.f32.mrb[0].mxu0
      %v2943 = vadd.f32 0.0, %v2942
      %v2944 = vpop.f32.mrb[0].mxu0
      %v2945 = vpop.f32.mrb[0].mxu0
      %v2946 = vpop.f32.mrb[0].mxu0
      %2947 = vmatprep.mubr.bf16.mxu0 0
      %2948 = vmatmul.mubr.bf16.gmra.mrb[0].mxu0 %v470
      %v2949 = vpop.f32.mrb[0].mxu0
      %v2950 = vadd.f32 0.0, %v2949
      %v2951 = vpop.f32.mrb[0].mxu0
      %v2952 = vpop.f32.mrb[0].mxu0
      %v2953 = vadd.f32 0.0, %v2952
      %v2954 = vpop.f32.mrb[0].mxu0
      %2955 = vmatprep.mubr.bf16.mxu0 0
      %2956 = vmatmul.mubr.bf16.gmra.mrb[0].mxu0 %v471
      %v2957 = vpop.f32.mrb[0].mxu0
      %v2958 = vadd.f32 0.0, %v2957
      %v2959 = vpop.f32.mrb[0].mxu0
      %v2960 = vpop.f32.mrb[0].mxu0
      %v2961 = vpop.f32.mrb[0].mxu0
      %2962 = vmatprep.mubr.bf16.mxu0 0
      %2963 = vmatmul.mubr.bf16.gmra.mrb[0].mxu0 %v472
      %v2964 = vpop.f32.mrb[0].mxu0
      %v2965 = vadd.f32 0.0, %v2964
      %v2966 = vpop.f32.mrb[0].mxu0
      %v2967 = vpop.f32.mrb[0].mxu0
      %v2968 = vadd.f32 0.0, %v2967
      %v2969 = vpop.f32.mrb[0].mxu0
      %2970 = vmatprep.mubr.bf16.mxu0 0
      %2971 = vmatmul.mubr.bf16.gmra.mrb[0].mxu0 %v473
      %v2972 = vpop.f32.mrb[0].mxu0
      %v2973 = vadd.f32 0.0, %v2972
      %v2974 = vpop.f32.mrb[0].mxu0
      %v2975 = vpop.f32.mrb[0].mxu0
      %v2976 = vpop.f32.mrb[0].mxu0
      %2977 = vmatprep.mubr.bf16.mxu0 0
      %2978 = vmatmul.mubr.bf16.gmra.mrb[0].mxu0 %v474
      %v2979 = vpop.f32.mrb[0].mxu0
      %v2980 = vadd.f32 0.0, %v2979
      %v2981 = vpop.f32.mrb[0].mxu0
      %v2982 = vpop.f32.mrb[0].mxu0
      %v2983 = vadd.f32 0.0, %v2982
      %v2984 = vpop.f32.mrb[0].mxu0
      %2985 = vmatprep.mubr.bf16.mxu0 0
      %2986 = vmatmul.mubr.bf16.gmra.mrb[0].mxu0 %v475
      %v2987 = vpop.f32.mrb[0].mxu0
      %v2988 = vadd.f32 0.0, %v2987
      %v2989 = vpop.f32.mrb[0].mxu0
      %v2990 = vpop.f32.mrb[0].mxu0
      %v2991 = vpop.f32.mrb[0].mxu0
      %2992 = vmatprep.mubr.bf16.mxu0 0
      %2993 = vmatmul.mubr.bf16.gmra.mrb[0].mxu0 %v476
      %v2994 = vpop.f32.mrb[0].mxu0
      %v2995 = vadd.f32 0.0, %v2994
      %v2996 = vpop.f32.mrb[0].mxu0
      %v2997 = vpop.f32.mrb[0].mxu0
      %v2998 = vadd.f32 0.0, %v2997
      %v2999 = vpop.f32.mrb[0].mxu0
      %3000 = vmatprep.mubr.bf16.mxu0 0
      %3001 = vmatmul.mubr.bf16.gmra.mrb[0].mxu0 %v477
      %v3002 = vpop.f32.mrb[0].mxu0
      %v3003 = vadd.f32 0.0, %v3002
      %v3004 = vpop.f32.mrb[0].mxu0
      %v3005 = vpop.f32.mrb[0].mxu0
      %v3006 = vpop.f32.mrb[0].mxu0
      %3007 = vmatprep.mubr.bf16.mxu0 0
      %3008 = vmatmul.mubr.bf16.gmra.mrb[0].mxu0 %v478
      %v3009 = vpop.f32.mrb[0].mxu0
      %v3010 = vadd.f32 0.0, %v3009
      %v3011 = vpop.f32.mrb[0].mxu0
      %v3012 = vpop.f32.mrb[0].mxu0
      %v3013 = vadd.f32 0.0, %v3012
      %v3014 = vpop.f32.mrb[0].mxu0
      %3015 = vmatprep.mubr.bf16.mxu0 0
      %3016 = vmatmul.mubr.bf16.gmra.mrb[0].mxu0 %v479
      %v3017 = vpop.f32.mrb[0].mxu0
      %v3018 = vadd.f32 0.0, %v3017
      %v3019 = vpop.f32.mrb[0].mxu0
      %v3020 = vpop.f32.mrb[0].mxu0
      %v3021 = vpop.f32.mrb[0].mxu0
      %3022 = vmatprep.mubr.bf16.mxu0 0
      %3023 = vmatmul.mubr.bf16.gmra.mrb[0].mxu0 %v480
      %v3024 = vpop.f32.mrb[0].mxu0
      %v3025 = vpop.f32.mrb[0].mxu0
      %v3026 = vpop.f32.mrb[0].mxu0
      %v3027 = vpop.f32.mrb[0].mxu0
      %3028 = vmatprep.mubr.bf16.mxu0 0
      %3029 = vmatmul.mubr.bf16.gmra.mrb[0].mxu0 %v481
      %v3030 = vpop.f32.mrb[0].mxu0
      %v3031 = vpop.f32.mrb[0].mxu0
      %v3032 = vpop.f32.mrb[0].mxu0
      %v3033 = vpop.f32.mrb[0].mxu0
      %3034 = vmatprep.mubr.bf16.mxu0 0
      %3035 = vmatmul.mubr.bf16.gmra.mrb[0].mxu0 %v482
      %v3036 = vpop.f32.mrb[0].mxu0
      %v3037 = vpop.f32.mrb[0].mxu0
      %v3038 = vpop.f32.mrb[0].mxu0
      %v3039 = vpop.f32.mrb[0].mxu0
      %3040 = vmatprep.mubr.bf16.mxu0 0
      %3041 = vmatmul.mubr.bf16.gmra.mrb[0].mxu0 %v483
      %v3042 = vpop.f32.mrb[0].mxu0
      %v3043 = vpop.f32.mrb[0].mxu0
      %v3044 = vpop.f32.mrb[0].mxu0
      %v3045 = vpop.f32.mrb[0].mxu0
      %3046 = vdwg.mxu0
      %v3047 = vrot.slane %v2785, 1
      %v3048 = vrot.slane %v2788, 1
      %v3049 = vrot.slane %v2793, 1
      %v3050 = vrot.slane %v2800, 1
      %v3051 = vrot.slane %v2803, 1
      %v3052 = vrot.slane %v2808, 1
      %v3053 = vrot.slane %v2815, 1
      %v3054 = vrot.slane %v2818, 1
      %v3055 = vrot.slane %v2823, 1
      %v3056 = vrot.slane %v2830, 1
      %v3057 = vrot.slane %v2833, 1
      %v3058 = vrot.slane %v2838, 1
      %v3059 = vrot.slane %v2845, 1
      %v3060 = vrot.slane %v2848, 1
      %v3061 = vrot.slane %v2853, 1
      %v3062 = vrot.slane %v2860, 1
      %v3063 = vrot.slane %v2863, 1
      %v3064 = vrot.slane %v2868, 1
      %v3065 = vrot.slane %v2875, 1
      %v3066 = vrot.slane %v2878, 1
      %v3067 = vrot.slane %v2883, 1
      %v3068 = vrot.slane %v2890, 1
      %v3069 = vrot.slane %v2893, 1
      %v3070 = vrot.slane %v2898, 1
      %v3071 = vrot.slane %v2905, 1
      %v3072 = vrot.slane %v2908, 1
      %v3073 = vrot.slane %v2913, 1
      %v3074 = vrot.slane %v2920, 1
      %v3075 = vrot.slane %v2923, 1
      %v3076 = vrot.slane %v2928, 1
      %v3077 = vrot.slane %v2935, 1
      %v3078 = vrot.slane %v2938, 1
      %v3079 = vrot.slane %v2943, 1
      %v3080 = vrot.slane %v2950, 1
      %v3081 = vrot.slane %v2953, 1
      %v3082 = vrot.slane %v2958, 1
      %v3083 = vrot.slane %v2965, 1
      %v3084 = vrot.slane %v2968, 1
      %v3085 = vrot.slane %v2973, 1
      %v3086 = vrot.slane %v2980, 1
      %v3087 = vrot.slane %v2983, 1
      %v3088 = vrot.slane %v2988, 1
      %v3089 = vrot.slane %v2995, 1
      %v3090 = vrot.slane %v2998, 1
      %v3091 = vrot.slane %v3003, 1
      %v3092 = vrot.slane %v3010, 1
      %v3093 = vrot.slane %v3013, 1
      %v3094 = vrot.slane %v3018, 1
      %v3095 = vsel %vm1768, %v3093, %v3094
      %v3096 = vsel %vm1768, %v3092, %v3093
      %v3097 = vsel %vm1768, %v3090, %v3091
      %v3098 = vsel %vm1768, %v3089, %v3090
      %v3099 = vsel %vm1768, %v3087, %v3088
      %v3100 = vsel %vm1768, %v3086, %v3087
      %v3101 = vsel %vm1768, %v3084, %v3085
      %v3102 = vsel %vm1768, %v3083, %v3084
      %v3103 = vsel %vm1768, %v3081, %v3082
      %v3104 = vsel %vm1768, %v3080, %v3081
      %v3105 = vsel %vm1768, %v3078, %v3079
      %v3106 = vsel %vm1768, %v3077, %v3078
      %v3107 = vsel %vm1768, %v3075, %v3076
      %v3108 = vsel %vm1768, %v3074, %v3075
      %v3109 = vsel %vm1768, %v3072, %v3073
      %v3110 = vsel %vm1768, %v3071, %v3072
      %v3111 = vsel %vm1768, %v3069, %v3070
      %v3112 = vsel %vm1768, %v3068, %v3069
      %v3113 = vsel %vm1768, %v3066, %v3067
      %v3114 = vsel %vm1768, %v3065, %v3066
      %v3115 = vsel %vm1768, %v3063, %v3064
      %v3116 = vsel %vm1768, %v3062, %v3063
      %v3117 = vsel %vm1768, %v3060, %v3061
      %v3118 = vsel %vm1768, %v3059, %v3060
      %v3119 = vsel %vm1768, %v3057, %v3058
      %v3120 = vsel %vm1768, %v3056, %v3057
      %v3121 = vsel %vm1768, %v3054, %v3055
      %v3122 = vsel %vm1768, %v3053, %v3054
      %v3123 = vsel %vm1768, %v3051, %v3052
      %v3124 = vsel %vm1768, %v3050, %v3051
      %v3125 = vsel %vm1768, %v3048, %v3049
      %v3126 = vsel %vm1768, %v3047, %v3048
      %v3127 = vadd.f32 %v2653, %v3126
      %v3128 = vadd.f32 %v2654, %v3125
      %v3129 = vadd.f32 %v2655, %v3124
      %v3130 = vadd.f32 %v2656, %v3123
      %v3131 = vadd.f32 %v2657, %v3122
      %v3132 = vadd.f32 %v2658, %v3121
      %v3133 = vadd.f32 %v2659, %v3120
      %v3134 = vadd.f32 %v2660, %v3119
      %v3135 = vadd.f32 %v2661, %v3118
      %v3136 = vadd.f32 %v2662, %v3117
      %v3137 = vadd.f32 %v2663, %v3116
      %v3138 = vadd.f32 %v2664, %v3115
      %v3139 = vadd.f32 %v2665, %v3114
      %v3140 = vadd.f32 %v2666, %v3113
      %v3141 = vadd.f32 %v2667, %v3112
      %v3142 = vadd.f32 %v2668, %v3111
      %v3143 = vadd.f32 %v2669, %v3110
      %v3144 = vadd.f32 %v2670, %v3109
      %v3145 = vadd.f32 %v2671, %v3108
      %v3146 = vadd.f32 %v2672, %v3107
      %v3147 = vadd.f32 %v2673, %v3106
      %v3148 = vadd.f32 %v2674, %v3105
      %v3149 = vadd.f32 %v2675, %v3104
      %v3150 = vadd.f32 %v2676, %v3103
      %v3151 = vadd.f32 %v2677, %v3102
      %v3152 = vadd.f32 %v2678, %v3101
      %v3153 = vadd.f32 %v2679, %v3100
      %v3154 = vadd.f32 %v2680, %v3099
      %v3155 = vadd.f32 %v2681, %v3098
      %v3156 = vadd.f32 %v2682, %v3097
      %v3157 = vadd.f32 %v2683, %v3096
      %v3158 = vadd.f32 %v2684, %v3095
      %s3159 = scalar_lea.vmem %s1, 384
      %v3160 = vld [vmem:[%s3159] sm:$0xf]
      %v3161 = vld [vmem:[%s3159 + $0x4] sm:$0xf]
      %v3162 = vld [vmem:[%s3159 + $0x8] sm:$0xf]
      %v3163 = vld [vmem:[%s3159 + $0xc] sm:$0xf]
      %v3164 = vld [vmem:[%s3159 + $0x10] sm:$0xf]
      %v3165 = vld [vmem:[%s3159 + $0x14] sm:$0xf]
      %v3166 = vld [vmem:[%s3159 + $0x18] sm:$0xf]
      %v3167 = vld [vmem:[%s3159 + $0x1c] sm:$0xf]
      %v3168 = vld [vmem:[%s3159 + $0x20] sm:$0xf]
      %v3169 = vld [vmem:[%s3159 + $0x24] sm:$0xf]
      %v3170 = vld [vmem:[%s3159 + $0x28] sm:$0xf]
      %v3171 = vld [vmem:[%s3159 + $0x2c] sm:$0xf]
      %v3172 = vld [vmem:[%s3159 + $0x30] sm:$0xf]
      %v3173 = vld [vmem:[%s3159 + $0x34] sm:$0xf]
      %v3174 = vld [vmem:[%s3159 + $0x38] sm:$0xf]
      %v3175 = vld [vmem:[%s3159 + $0x3c] sm:$0xf]
      %v3192 = vunpack.c.l.b16 %v3160
      %v3193 = vunpack.c.l.b16 %v3161
      %v3194 = vunpack.c.l.b16 %v3162
      %v3195 = vunpack.c.l.b16 %v3163
      %v3196 = vunpack.c.l.b16 %v3164
      %v3197 = vunpack.c.l.b16 %v3165
      %v3198 = vunpack.c.l.b16 %v3166
      %v3199 = vunpack.c.l.b16 %v3167
      %v3200 = vunpack.c.l.b16 %v3168
      %v3201 = vunpack.c.l.b16 %v3169
      %v3202 = vunpack.c.l.b16 %v3170
      %v3203 = vunpack.c.l.b16 %v3171
      %v3204 = vunpack.c.l.b16 %v3172
      %v3205 = vunpack.c.l.b16 %v3173
      %v3206 = vunpack.c.l.b16 %v3174
      %v3207 = vunpack.c.l.b16 %v3175
      %v3208 = vpack.c.b16 %v3193, %v3192
      %v3209 = vpack.c.b16 %v3195, %v3194
      %v3210 = vpack.c.b16 %v3197, %v3196
      %v3211 = vpack.c.b16 %v3199, %v3198
      %v3212 = vpack.c.b16 %v3201, %v3200
      %v3213 = vpack.c.b16 %v3203, %v3202
      %v3214 = vpack.c.b16 %v3205, %v3204
      %v3215 = vpack.c.b16 %v3207, %v3206
      %3224 = vmatprep.subr.bf16.mxu0 0
      %3225 = vmatpush1.bf16.msra.mxu0 %v3208
      %3226 = vmatprep.subr.bf16.mxu0 0
      %3227 = vmatpush1.bf16.msra.mxu0 %v3209
      %3228 = vmatprep.subr.bf16.mxu0 0
      %3229 = vmatpush1.bf16.msra.mxu0 %v3210
      %3230 = vmatprep.subr.bf16.mxu0 0
      %3231 = vmatpush1.bf16.msra.mxu0 %v3211
      %3232 = vmatprep.subr.bf16.mxu0 0
      %3233 = vmatpush1.bf16.msra.mxu0 %v3212
      %3234 = vmatprep.subr.bf16.mxu0 0
      %3235 = vmatpush1.bf16.msra.mxu0 %v3213
      %3236 = vmatprep.subr.bf16.mxu0 0
      %3237 = vmatpush1.bf16.msra.mxu0 %v3214
      %3238 = vmatprep.subr.bf16.mxu0 0
      %3239 = vmatpush1.bf16.msra.mxu0 %v3215
      %3240 = vmatprep.subr.bf16.mxu0 0
      %3241 = vmatpush1.bf16.msra.mxu0 0
      %3242 = vmatprep.subr.bf16.mxu0 0
      %3243 = vmatpush1.bf16.msra.mxu0 0
      %3244 = vmatprep.subr.bf16.mxu0 0
      %3245 = vmatpush1.bf16.msra.mxu0 0
      %3246 = vmatprep.subr.bf16.mxu0 0
      %3247 = vmatpush1.bf16.msra.mxu0 0
      %3248 = vmatprep.subr.bf16.mxu0 0
      %3249 = vmatpush1.bf16.msra.mxu0 0
      %3250 = vmatprep.subr.bf16.mxu0 0
      %3251 = vmatpush1.bf16.msra.mxu0 0
      %3252 = vmatprep.subr.bf16.mxu0 0
      %3253 = vmatpush1.bf16.msra.mxu0 0
      %3254 = vmatprep.subr.bf16.mxu0 0
      %3255 = vmatpush1.bf16.msra.mxu0 0
      %3256 = vmatprep.mubr.bf16.mxu0 0
      %3257 = vmatmul.mubr.bf16.gmra.mrb[0].mxu0 %v448
      %v3258 = vpop.f32.mrb[0].mxu0
      %v3259 = vpop.f32.mrb[0].mxu0
      %v3260 = vpop.f32.mrb[0].mxu0
      %v3261 = vpop.f32.mrb[0].mxu0
      %3262 = vmatprep.mubr.bf16.mxu0 0
      %3263 = vmatmul.mubr.bf16.gmra.mrb[0].mxu0 %v449
      %v3264 = vpop.f32.mrb[0].mxu0
      %v3265 = vpop.f32.mrb[0].mxu0
      %v3266 = vpop.f32.mrb[0].mxu0
      %v3267 = vadd.f32 0.0, %v3266
      %v3268 = vpop.f32.mrb[0].mxu0
      %3269 = vmatprep.mubr.bf16.mxu0 0
      %3270 = vmatmul.mubr.bf16.gmra.mrb[0].mxu0 %v450
      %v3271 = vpop.f32.mrb[0].mxu0
      %v3272 = vadd.f32 0.0, %v3271
      %v3273 = vpop.f32.mrb[0].mxu0
      %v3274 = vpop.f32.mrb[0].mxu0
      %v3275 = vadd.f32 0.0, %v3274
      %v3276 = vpop.f32.mrb[0].mxu0
      %3277 = vmatprep.mubr.bf16.mxu0 0
      %3278 = vmatmul.mubr.bf16.gmra.mrb[0].mxu0 %v451
      %v3279 = vpop.f32.mrb[0].mxu0
      %v3280 = vpop.f32.mrb[0].mxu0
      %v3281 = vpop.f32.mrb[0].mxu0
      %v3282 = vadd.f32 0.0, %v3281
      %v3283 = vpop.f32.mrb[0].mxu0
      %3284 = vmatprep.mubr.bf16.mxu0 0
      %3285 = vmatmul.mubr.bf16.gmra.mrb[0].mxu0 %v452
      %v3286 = vpop.f32.mrb[0].mxu0
      %v3287 = vadd.f32 0.0, %v3286
      %v3288 = vpop.f32.mrb[0].mxu0
      %v3289 = vpop.f32.mrb[0].mxu0
      %v3290 = vadd.f32 0.0, %v3289
      %v3291 = vpop.f32.mrb[0].mxu0
      %3292 = vmatprep.mubr.bf16.mxu0 0
      %3293 = vmatmul.mubr.bf16.gmra.mrb[0].mxu0 %v453
      %v3294 = vpop.f32.mrb[0].mxu0
      %v3295 = vpop.f32.mrb[0].mxu0
      %v3296 = vpop.f32.mrb[0].mxu0
      %v3297 = vadd.f32 0.0, %v3296
      %v3298 = vpop.f32.mrb[0].mxu0
      %3299 = vmatprep.mubr.bf16.mxu0 0
      %3300 = vmatmul.mubr.bf16.gmra.mrb[0].mxu0 %v454
      %v3301 = vpop.f32.mrb[0].mxu0
      %v3302 = vadd.f32 0.0, %v3301
      %v3303 = vpop.f32.mrb[0].mxu0
      %v3304 = vpop.f32.mrb[0].mxu0
      %v3305 = vadd.f32 0.0, %v3304
      %v3306 = vpop.f32.mrb[0].mxu0
      %3307 = vmatprep.mubr.bf16.mxu0 0
      %3308 = vmatmul.mubr.bf16.gmra.mrb[0].mxu0 %v455
      %v3309 = vpop.f32.mrb[0].mxu0
      %v3310 = vpop.f32.mrb[0].mxu0
      %v3311 = vpop.f32.mrb[0].mxu0
      %v3312 = vadd.f32 0.0, %v3311
      %v3313 = vpop.f32.mrb[0].mxu0
      %3314 = vmatprep.mubr.bf16.mxu0 0
      %3315 = vmatmul.mubr.bf16.gmra.mrb[0].mxu0 %v456
      %v3316 = vpop.f32.mrb[0].mxu0
      %v3317 = vadd.f32 0.0, %v3316
      %v3318 = vpop.f32.mrb[0].mxu0
      %v3319 = vpop.f32.mrb[0].mxu0
      %v3320 = vadd.f32 0.0, %v3319
      %v3321 = vpop.f32.mrb[0].mxu0
      %3322 = vmatprep.mubr.bf16.mxu0 0
      %3323 = vmatmul.mubr.bf16.gmra.mrb[0].mxu0 %v457
      %v3324 = vpop.f32.mrb[0].mxu0
      %v3325 = vpop.f32.mrb[0].mxu0
      %v3326 = vpop.f32.mrb[0].mxu0
      %v3327 = vadd.f32 0.0, %v3326
      %v3328 = vpop.f32.mrb[0].mxu0
      %3329 = vmatprep.mubr.bf16.mxu0 0
      %3330 = vmatmul.mubr.bf16.gmra.mrb[0].mxu0 %v458
      %v3331 = vpop.f32.mrb[0].mxu0
      %v3332 = vadd.f32 0.0, %v3331
      %v3333 = vpop.f32.mrb[0].mxu0
      %v3334 = vpop.f32.mrb[0].mxu0
      %v3335 = vadd.f32 0.0, %v3334
      %v3336 = vpop.f32.mrb[0].mxu0
      %3337 = vmatprep.mubr.bf16.mxu0 0
      %3338 = vmatmul.mubr.bf16.gmra.mrb[0].mxu0 %v459
      %v3339 = vpop.f32.mrb[0].mxu0
      %v3340 = vpop.f32.mrb[0].mxu0
      %v3341 = vpop.f32.mrb[0].mxu0
      %v3342 = vadd.f32 0.0, %v3341
      %v3343 = vpop.f32.mrb[0].mxu0
      %3344 = vmatprep.mubr.bf16.mxu0 0
      %3345 = vmatmul.mubr.bf16.gmra.mrb[0].mxu0 %v460
      %v3346 = vpop.f32.mrb[0].mxu0
      %v3347 = vadd.f32 0.0, %v3346
      %v3348 = vpop.f32.mrb[0].mxu0
      %v3349 = vpop.f32.mrb[0].mxu0
      %v3350 = vadd.f32 0.0, %v3349
      %v3351 = vpop.f32.mrb[0].mxu0
      %3352 = vmatprep.mubr.bf16.mxu0 0
      %3353 = vmatmul.mubr.bf16.gmra.mrb[0].mxu0 %v461
      %v3354 = vpop.f32.mrb[0].mxu0
      %v3355 = vpop.f32.mrb[0].mxu0
      %v3356 = vpop.f32.mrb[0].mxu0
      %v3357 = vadd.f32 0.0, %v3356
      %v3358 = vpop.f32.mrb[0].mxu0
      %3359 = vmatprep.mubr.bf16.mxu0 0
      %3360 = vmatmul.mubr.bf16.gmra.mrb[0].mxu0 %v462
      %v3361 = vpop.f32.mrb[0].mxu0
      %v3362 = vadd.f32 0.0, %v3361
      %v3363 = vpop.f32.mrb[0].mxu0
      %v3364 = vpop.f32.mrb[0].mxu0
      %v3365 = vadd.f32 0.0, %v3364
      %v3366 = vpop.f32.mrb[0].mxu0
      %3367 = vmatprep.mubr.bf16.mxu0 0
      %3368 = vmatmul.mubr.bf16.gmra.mrb[0].mxu0 %v463
      %v3369 = vpop.f32.mrb[0].mxu0
      %v3370 = vpop.f32.mrb[0].mxu0
      %v3371 = vpop.f32.mrb[0].mxu0
      %v3372 = vadd.f32 0.0, %v3371
      %v3373 = vpop.f32.mrb[0].mxu0
      %3374 = vmatprep.mubr.bf16.mxu0 0
      %3375 = vmatmul.mubr.bf16.gmra.mrb[0].mxu0 %v464
      %v3376 = vpop.f32.mrb[0].mxu0
      %v3377 = vadd.f32 0.0, %v3376
      %v3378 = vpop.f32.mrb[0].mxu0
      %v3379 = vpop.f32.mrb[0].mxu0
      %v3380 = vadd.f32 0.0, %v3379
      %v3381 = vpop.f32.mrb[0].mxu0
      %3382 = vmatprep.mubr.bf16.mxu0 0
      %3383 = vmatmul.mubr.bf16.gmra.mrb[0].mxu0 %v465
      %v3384 = vpop.f32.mrb[0].mxu0
      %v3385 = vpop.f32.mrb[0].mxu0
      %v3386 = vpop.f32.mrb[0].mxu0
      %v3387 = vadd.f32 0.0, %v3386
      %v3388 = vpop.f32.mrb[0].mxu0
      %3389 = vmatprep.mubr.bf16.mxu0 0
      %3390 = vmatmul.mubr.bf16.gmra.mrb[0].mxu0 %v466
      %v3391 = vpop.f32.mrb[0].mxu0
      %v3392 = vadd.f32 0.0, %v3391
      %v3393 = vpop.f32.mrb[0].mxu0
      %v3394 = vpop.f32.mrb[0].mxu0
      %v3395 = vadd.f32 0.0, %v3394
      %v3396 = vpop.f32.mrb[0].mxu0
      %3397 = vmatprep.mubr.bf16.mxu0 0
      %3398 = vmatmul.mubr.bf16.gmra.mrb[0].mxu0 %v467
      %v3399 = vpop.f32.mrb[0].mxu0
      %v3400 = vpop.f32.mrb[0].mxu0
      %v3401 = vpop.f32.mrb[0].mxu0
      %v3402 = vadd.f32 0.0, %v3401
      %v3403 = vpop.f32.mrb[0].mxu0
      %3404 = vmatprep.mubr.bf16.mxu0 0
      %3405 = vmatmul.mubr.bf16.gmra.mrb[0].mxu0 %v468
      %v3406 = vpop.f32.mrb[0].mxu0
      %v3407 = vadd.f32 0.0, %v3406
      %v3408 = vpop.f32.mrb[0].mxu0
      %v3409 = vpop.f32.mrb[0].mxu0
      %v3410 = vadd.f32 0.0, %v3409
      %v3411 = vpop.f32.mrb[0].mxu0
      %3412 = vmatprep.mubr.bf16.mxu0 0
      %3413 = vmatmul.mubr.bf16.gmra.mrb[0].mxu0 %v469
      %v3414 = vpop.f32.mrb[0].mxu0
      %v3415 = vpop.f32.mrb[0].mxu0
      %v3416 = vpop.f32.mrb[0].mxu0
      %v3417 = vadd.f32 0.0, %v3416
      %v3418 = vpop.f32.mrb[0].mxu0
      %3419 = vmatprep.mubr.bf16.mxu0 0
      %3420 = vmatmul.mubr.bf16.gmra.mrb[0].mxu0 %v470
      %v3421 = vpop.f32.mrb[0].mxu0
      %v3422 = vadd.f32 0.0, %v3421
      %v3423 = vpop.f32.mrb[0].mxu0
      %v3424 = vpop.f32.mrb[0].mxu0
      %v3425 = vadd.f32 0.0, %v3424
      %v3426 = vpop.f32.mrb[0].mxu0
      %3427 = vmatprep.mubr.bf16.mxu0 0
      %3428 = vmatmul.mubr.bf16.gmra.mrb[0].mxu0 %v471
      %v3429 = vpop.f32.mrb[0].mxu0
      %v3430 = vpop.f32.mrb[0].mxu0
      %v3431 = vpop.f32.mrb[0].mxu0
      %v3432 = vadd.f32 0.0, %v3431
      %v3433 = vpop.f32.mrb[0].mxu0
      %3434 = vmatprep.mubr.bf16.mxu0 0
      %3435 = vmatmul.mubr.bf16.gmra.mrb[0].mxu0 %v472
      %v3436 = vpop.f32.mrb[0].mxu0
      %v3437 = vadd.f32 0.0, %v3436
      %v3438 = vpop.f32.mrb[0].mxu0
      %v3439 = vpop.f32.mrb[0].mxu0
      %v3440 = vadd.f32 0.0, %v3439
      %v3441 = vpop.f32.mrb[0].mxu0
      %3442 = vmatprep.mubr.bf16.mxu0 0
      %3443 = vmatmul.mubr.bf16.gmra.mrb[0].mxu0 %v473
      %v3444 = vpop.f32.mrb[0].mxu0
      %v3445 = vpop.f32.mrb[0].mxu0
      %v3446 = vpop.f32.mrb[0].mxu0
      %v3447 = vadd.f32 0.0, %v3446
      %v3448 = vpop.f32.mrb[0].mxu0
      %3449 = vmatprep.mubr.bf16.mxu0 0
      %3450 = vmatmul.mubr.bf16.gmra.mrb[0].mxu0 %v474
      %v3451 = vpop.f32.mrb[0].mxu0
      %v3452 = vadd.f32 0.0, %v3451
      %v3453 = vpop.f32.mrb[0].mxu0
      %v3454 = vpop.f32.mrb[0].mxu0
      %v3455 = vadd.f32 0.0, %v3454
      %v3456 = vpop.f32.mrb[0].mxu0
      %3457 = vmatprep.mubr.bf16.mxu0 0
      %3458 = vmatmul.mubr.bf16.gmra.mrb[0].mxu0 %v475
      %v3459 = vpop.f32.mrb[0].mxu0
      %v3460 = vpop.f32.mrb[0].mxu0
      %v3461 = vpop.f32.mrb[0].mxu0
      %v3462 = vadd.f32 0.0, %v3461
      %v3463 = vpop.f32.mrb[0].mxu0
      %3464 = vmatprep.mubr.bf16.mxu0 0
      %3465 = vmatmul.mubr.bf16.gmra.mrb[0].mxu0 %v476
      %v3466 = vpop.f32.mrb[0].mxu0
      %v3467 = vadd.f32 0.0, %v3466
      %v3468 = vpop.f32.mrb[0].mxu0
      %v3469 = vpop.f32.mrb[0].mxu0
      %v3470 = vadd.f32 0.0, %v3469
      %v3471 = vpop.f32.mrb[0].mxu0
      %3472 = vmatprep.mubr.bf16.mxu0 0
      %3473 = vmatmul.mubr.bf16.gmra.mrb[0].mxu0 %v477
      %v3474 = vpop.f32.mrb[0].mxu0
      %v3475 = vpop.f32.mrb[0].mxu0
      %v3476 = vpop.f32.mrb[0].mxu0
      %v3477 = vadd.f32 0.0, %v3476
      %v3478 = vpop.f32.mrb[0].mxu0
      %3479 = vmatprep.mubr.bf16.mxu0 0
      %3480 = vmatmul.mubr.bf16.gmra.mrb[0].mxu0 %v478
      %v3481 = vpop.f32.mrb[0].mxu0
      %v3482 = vadd.f32 0.0, %v3481
      %v3483 = vpop.f32.mrb[0].mxu0
      %v3484 = vpop.f32.mrb[0].mxu0
      %v3485 = vadd.f32 0.0, %v3484
      %v3486 = vpop.f32.mrb[0].mxu0
      %3487 = vmatprep.mubr.bf16.mxu0 0
      %3488 = vmatmul.mubr.bf16.gmra.mrb[0].mxu0 %v479
      %v3489 = vpop.f32.mrb[0].mxu0
      %v3490 = vpop.f32.mrb[0].mxu0
      %v3491 = vpop.f32.mrb[0].mxu0
      %v3492 = vadd.f32 0.0, %v3491
      %v3493 = vpop.f32.mrb[0].mxu0
      %3494 = vmatprep.mubr.bf16.mxu0 0
      %3495 = vmatmul.mubr.bf16.gmra.mrb[0].mxu0 %v480
      %v3496 = vpop.f32.mrb[0].mxu0
      %v3497 = vadd.f32 0.0, %v3496
      %v3498 = vpop.f32.mrb[0].mxu0
      %v3499 = vpop.f32.mrb[0].mxu0
      %v3500 = vadd.f32 0.0, %v3499
      %v3501 = vpop.f32.mrb[0].mxu0
      %3502 = vmatprep.mubr.bf16.mxu0 0
      %3503 = vmatmul.mubr.bf16.gmra.mrb[0].mxu0 %v481
      %v3504 = vpop.f32.mrb[0].mxu0
      %v3505 = vpop.f32.mrb[0].mxu0
      %v3506 = vpop.f32.mrb[0].mxu0
      %v3507 = vpop.f32.mrb[0].mxu0
      %3508 = vmatprep.mubr.bf16.mxu0 0
      %3509 = vmatmul.mubr.bf16.gmra.mrb[0].mxu0 %v482
      %v3510 = vpop.f32.mrb[0].mxu0
      %v3511 = vpop.f32.mrb[0].mxu0
      %v3512 = vpop.f32.mrb[0].mxu0
      %v3513 = vpop.f32.mrb[0].mxu0
      %3514 = vmatprep.mubr.bf16.mxu0 0
      %3515 = vmatmul.mubr.bf16.gmra.mrb[0].mxu0 %v483
      %v3516 = vpop.f32.mrb[0].mxu0
      %v3517 = vpop.f32.mrb[0].mxu0
      %v3518 = vpop.f32.mrb[0].mxu0
      %v3519 = vpop.f32.mrb[0].mxu0
      %3520 = vdwg.mxu0
      %v3521 = vrot.slane %v3267, 7
      %v3522 = vrot.slane %v3272, 7
      %v3523 = vrot.slane %v3275, 7
      %v3524 = vrot.slane %v3282, 7
      %v3525 = vrot.slane %v3287, 7
      %v3526 = vrot.slane %v3290, 7
      %v3527 = vrot.slane %v3297, 7
      %v3528 = vrot.slane %v3302, 7
      %v3529 = vrot.slane %v3305, 7
      %v3530 = vrot.slane %v3312, 7
      %v3531 = vrot.slane %v3317, 7
      %v3532 = vrot.slane %v3320, 7
      %v3533 = vrot.slane %v3327, 7
      %v3534 = vrot.slane %v3332, 7
      %v3535 = vrot.slane %v3335, 7
      %v3536 = vrot.slane %v3342, 7
      %v3537 = vrot.slane %v3347, 7
      %v3538 = vrot.slane %v3350, 7
      %v3539 = vrot.slane %v3357, 7
      %v3540 = vrot.slane %v3362, 7
      %v3541 = vrot.slane %v3365, 7
      %v3542 = vrot.slane %v3372, 7
      %v3543 = vrot.slane %v3377, 7
      %v3544 = vrot.slane %v3380, 7
      %v3545 = vrot.slane %v3387, 7
      %v3546 = vrot.slane %v3392, 7
      %v3547 = vrot.slane %v3395, 7
      %v3548 = vrot.slane %v3402, 7
      %v3549 = vrot.slane %v3407, 7
      %v3550 = vrot.slane %v3410, 7
      %v3551 = vrot.slane %v3417, 7
      %v3552 = vrot.slane %v3422, 7
      %v3553 = vrot.slane %v3425, 7
      %v3554 = vrot.slane %v3432, 7
      %v3555 = vrot.slane %v3437, 7
      %v3556 = vrot.slane %v3440, 7
      %v3557 = vrot.slane %v3447, 7
      %v3558 = vrot.slane %v3452, 7
      %v3559 = vrot.slane %v3455, 7
      %v3560 = vrot.slane %v3462, 7
      %v3561 = vrot.slane %v3467, 7
      %v3562 = vrot.slane %v3470, 7
      %v3563 = vrot.slane %v3477, 7
      %v3564 = vrot.slane %v3482, 7
      %v3565 = vrot.slane %v3485, 7
      %v3566 = vrot.slane %v3492, 7
      %v3567 = vrot.slane %v3497, 7
      %v3568 = vrot.slane %v3500, 7
      %v3569 = vsel %vm915, %v3567, %v3568
      %v3570 = vsel %vm915, %v3566, %v3567
      %v3571 = vsel %vm915, %v3564, %v3565
      %v3572 = vsel %vm915, %v3563, %v3564
      %v3573 = vsel %vm915, %v3561, %v3562
      %v3574 = vsel %vm915, %v3560, %v3561
      %v3575 = vsel %vm915, %v3558, %v3559
      %v3576 = vsel %vm915, %v3557, %v3558
      %v3577 = vsel %vm915, %v3555, %v3556
      %v3578 = vsel %vm915, %v3554, %v3555
      %v3579 = vsel %vm915, %v3552, %v3553
      %v3580 = vsel %vm915, %v3551, %v3552
      %v3581 = vsel %vm915, %v3549, %v3550
      %v3582 = vsel %vm915, %v3548, %v3549
      %v3583 = vsel %vm915, %v3546, %v3547
      %v3584 = vsel %vm915, %v3545, %v3546
      %v3585 = vsel %vm915, %v3543, %v3544
      %v3586 = vsel %vm915, %v3542, %v3543
      %v3587 = vsel %vm915, %v3540, %v3541
      %v3588 = vsel %vm915, %v3539, %v3540
      %v3589 = vsel %vm915, %v3537, %v3538
      %v3590 = vsel %vm915, %v3536, %v3537
      %v3591 = vsel %vm915, %v3534, %v3535
      %v3592 = vsel %vm915, %v3533, %v3534
      %v3593 = vsel %vm915, %v3531, %v3532
      %v3594 = vsel %vm915, %v3530, %v3531
      %v3595 = vsel %vm915, %v3528, %v3529
      %v3596 = vsel %vm915, %v3527, %v3528
      %v3597 = vsel %vm915, %v3525, %v3526
      %v3598 = vsel %vm915, %v3524, %v3525
      %v3599 = vsel %vm915, %v3522, %v3523
      %v3600 = vsel %vm915, %v3521, %v3522
      %v3601 = vadd.f32 %v3127, %v3600
      %v3602 = vadd.f32 %v3128, %v3599
      %v3603 = vadd.f32 %v3129, %v3598
      %v3604 = vadd.f32 %v3130, %v3597
      %v3605 = vadd.f32 %v3131, %v3596
      %v3606 = vadd.f32 %v3132, %v3595
      %v3607 = vadd.f32 %v3133, %v3594
      %v3608 = vadd.f32 %v3134, %v3593
      %v3609 = vadd.f32 %v3135, %v3592
      %v3610 = vadd.f32 %v3136, %v3591
      %v3611 = vadd.f32 %v3137, %v3590
      %v3612 = vadd.f32 %v3138, %v3589
      %v3613 = vadd.f32 %v3139, %v3588
      %v3614 = vadd.f32 %v3140, %v3587
      %v3615 = vadd.f32 %v3141, %v3586
      %v3616 = vadd.f32 %v3142, %v3585
      %v3617 = vadd.f32 %v3143, %v3584
      %v3618 = vadd.f32 %v3144, %v3583
      %v3619 = vadd.f32 %v3145, %v3582
      %v3620 = vadd.f32 %v3146, %v3581
      %v3621 = vadd.f32 %v3147, %v3580
      %v3622 = vadd.f32 %v3148, %v3579
      %v3623 = vadd.f32 %v3149, %v3578
      %v3624 = vadd.f32 %v3150, %v3577
      %v3625 = vadd.f32 %v3151, %v3576
      %v3626 = vadd.f32 %v3152, %v3575
      %v3627 = vadd.f32 %v3153, %v3574
      %v3628 = vadd.f32 %v3154, %v3573
      %v3629 = vadd.f32 %v3155, %v3572
      %v3630 = vadd.f32 %v3156, %v3571
      %v3631 = vadd.f32 %v3157, %v3570
      %v3632 = vadd.f32 %v3158, %v3569
      %s3633 = scalar_lea.vmem %s1, 448
      %v3634 = vld [vmem:[%s3633] sm:$0xf]
      %v3635 = vld [vmem:[%s3633 + $0x4] sm:$0xf]
      %v3636 = vld [vmem:[%s3633 + $0x8] sm:$0xf]
      %v3637 = vld [vmem:[%s3633 + $0xc] sm:$0xf]
      %v3638 = vld [vmem:[%s3633 + $0x10] sm:$0xf]
      %v3639 = vld [vmem:[%s3633 + $0x14] sm:$0xf]
      %v3640 = vld [vmem:[%s3633 + $0x18] sm:$0xf]
      %v3641 = vld [vmem:[%s3633 + $0x1c] sm:$0xf]
      %v3642 = vld [vmem:[%s3633 + $0x20] sm:$0xf]
      %v3643 = vld [vmem:[%s3633 + $0x24] sm:$0xf]
      %v3644 = vld [vmem:[%s3633 + $0x28] sm:$0xf]
      %v3645 = vld [vmem:[%s3633 + $0x2c] sm:$0xf]
      %v3646 = vld [vmem:[%s3633 + $0x30] sm:$0xf]
      %v3647 = vld [vmem:[%s3633 + $0x34] sm:$0xf]
      %v3648 = vld [vmem:[%s3633 + $0x38] sm:$0xf]
      %v3649 = vld [vmem:[%s3633 + $0x3c] sm:$0xf]
      %v3666 = vunpack.c.l.b16 %v3634
      %v3667 = vunpack.c.l.b16 %v3635
      %v3668 = vunpack.c.l.b16 %v3636
      %v3669 = vunpack.c.l.b16 %v3637
      %v3670 = vunpack.c.l.b16 %v3638
      %v3671 = vunpack.c.l.b16 %v3639
      %v3672 = vunpack.c.l.b16 %v3640
      %v3673 = vunpack.c.l.b16 %v3641
      %v3674 = vunpack.c.l.b16 %v3642
      %v3675 = vunpack.c.l.b16 %v3643
      %v3676 = vunpack.c.l.b16 %v3644
      %v3677 = vunpack.c.l.b16 %v3645
      %v3678 = vunpack.c.l.b16 %v3646
      %v3679 = vunpack.c.l.b16 %v3647
      %v3680 = vunpack.c.l.b16 %v3648
      %v3681 = vunpack.c.l.b16 %v3649
      %v3682 = vpack.c.b16 %v3667, %v3666
      %v3683 = vpack.c.b16 %v3669, %v3668
      %v3684 = vpack.c.b16 %v3671, %v3670
      %v3685 = vpack.c.b16 %v3673, %v3672
      %v3686 = vpack.c.b16 %v3675, %v3674
      %v3687 = vpack.c.b16 %v3677, %v3676
      %v3688 = vpack.c.b16 %v3679, %v3678
      %v3689 = vpack.c.b16 %v3681, %v3680
      %3698 = vmatprep.subr.bf16.mxu0 0
      %3699 = vmatpush1.bf16.msra.mxu0 %v3682
      %3700 = vmatprep.subr.bf16.mxu0 0
      %3701 = vmatpush1.bf16.msra.mxu0 %v3683
      %3702 = vmatprep.subr.bf16.mxu0 0
      %3703 = vmatpush1.bf16.msra.mxu0 %v3684
      %3704 = vmatprep.subr.bf16.mxu0 0
      %3705 = vmatpush1.bf16.msra.mxu0 %v3685
      %3706 = vmatprep.subr.bf16.mxu0 0
      %3707 = vmatpush1.bf16.msra.mxu0 %v3686
      %3708 = vmatprep.subr.bf16.mxu0 0
      %3709 = vmatpush1.bf16.msra.mxu0 %v3687
      %3710 = vmatprep.subr.bf16.mxu0 0
      %3711 = vmatpush1.bf16.msra.mxu0 %v3688
      %3712 = vmatprep.subr.bf16.mxu0 0
      %3713 = vmatpush1.bf16.msra.mxu0 %v3689
      %3714 = vmatprep.subr.bf16.mxu0 0
      %3715 = vmatpush1.bf16.msra.mxu0 0
      %3716 = vmatprep.subr.bf16.mxu0 0
      %3717 = vmatpush1.bf16.msra.mxu0 0
      %3718 = vmatprep.subr.bf16.mxu0 0
      %3719 = vmatpush1.bf16.msra.mxu0 0
      %3720 = vmatprep.subr.bf16.mxu0 0
      %3721 = vmatpush1.bf16.msra.mxu0 0
      %3722 = vmatprep.subr.bf16.mxu0 0
      %3723 = vmatpush1.bf16.msra.mxu0 0
      %3724 = vmatprep.subr.bf16.mxu0 0
      %3725 = vmatpush1.bf16.msra.mxu0 0
      %3726 = vmatprep.subr.bf16.mxu0 0
      %3727 = vmatpush1.bf16.msra.mxu0 0
      %3728 = vmatprep.subr.bf16.mxu0 0
      %3729 = vmatpush1.bf16.msra.mxu0 0
      %3730 = vmatprep.mubr.bf16.mxu0 0
      %3731 = vmatmul.mubr.bf16.gmra.mrb[0].mxu0 %v448
      %v3732 = vpop.f32.mrb[0].mxu0
      %v3733 = vpop.f32.mrb[0].mxu0
      %v3734 = vpop.f32.mrb[0].mxu0
      %v3735 = vpop.f32.mrb[0].mxu0
      %3736 = vmatprep.mubr.bf16.mxu0 0
      %3737 = vmatmul.mubr.bf16.gmra.mrb[0].mxu0 %v449
      %v3738 = vpop.f32.mrb[0].mxu0
      %v3739 = vpop.f32.mrb[0].mxu0
      %v3740 = vpop.f32.mrb[0].mxu0
      %v3741 = vpop.f32.mrb[0].mxu0
      %3742 = vmatprep.mubr.bf16.mxu0 0
      %3743 = vmatmul.mubr.bf16.gmra.mrb[0].mxu0 %v450
      %v3744 = vpop.f32.mrb[0].mxu0
      %v3745 = vadd.f32 0.0, %v3744
      %v3746 = vpop.f32.mrb[0].mxu0
      %v3747 = vpop.f32.mrb[0].mxu0
      %v3748 = vadd.f32 0.0, %v3747
      %v3749 = vpop.f32.mrb[0].mxu0
      %3750 = vmatprep.mubr.bf16.mxu0 0
      %3751 = vmatmul.mubr.bf16.gmra.mrb[0].mxu0 %v451
      %v3752 = vpop.f32.mrb[0].mxu0
      %v3753 = vpop.f32.mrb[0].mxu0
      %v3754 = vpop.f32.mrb[0].mxu0
      %v3755 = vpop.f32.mrb[0].mxu0
      %3756 = vmatprep.mubr.bf16.mxu0 0
      %3757 = vmatmul.mubr.bf16.gmra.mrb[0].mxu0 %v452
      %v3758 = vpop.f32.mrb[0].mxu0
      %v3759 = vadd.f32 0.0, %v3758
      %v3760 = vpop.f32.mrb[0].mxu0
      %v3761 = vpop.f32.mrb[0].mxu0
      %v3762 = vadd.f32 0.0, %v3761
      %v3763 = vpop.f32.mrb[0].mxu0
      %3764 = vmatprep.mubr.bf16.mxu0 0
      %3765 = vmatmul.mubr.bf16.gmra.mrb[0].mxu0 %v453
      %v3766 = vpop.f32.mrb[0].mxu0
      %v3767 = vpop.f32.mrb[0].mxu0
      %v3768 = vpop.f32.mrb[0].mxu0
      %v3769 = vpop.f32.mrb[0].mxu0
      %3770 = vmatprep.mubr.bf16.mxu0 0
      %3771 = vmatmul.mubr.bf16.gmra.mrb[0].mxu0 %v454
      %v3772 = vpop.f32.mrb[0].mxu0
      %v3773 = vadd.f32 0.0, %v3772
      %v3774 = vpop.f32.mrb[0].mxu0
      %v3775 = vpop.f32.mrb[0].mxu0
      %v3776 = vadd.f32 0.0, %v3775
      %v3777 = vpop.f32.mrb[0].mxu0
      %3778 = vmatprep.mubr.bf16.mxu0 0
      %3779 = vmatmul.mubr.bf16.gmra.mrb[0].mxu0 %v455
      %v3780 = vpop.f32.mrb[0].mxu0
      %v3781 = vpop.f32.mrb[0].mxu0
      %v3782 = vpop.f32.mrb[0].mxu0
      %v3783 = vpop.f32.mrb[0].mxu0
      %3784 = vmatprep.mubr.bf16.mxu0 0
      %3785 = vmatmul.mubr.bf16.gmra.mrb[0].mxu0 %v456
      %v3786 = vpop.f32.mrb[0].mxu0
      %v3787 = vadd.f32 0.0, %v3786
      %v3788 = vpop.f32.mrb[0].mxu0
      %v3789 = vpop.f32.mrb[0].mxu0
      %v3790 = vadd.f32 0.0, %v3789
      %v3791 = vpop.f32.mrb[0].mxu0
      %3792 = vmatprep.mubr.bf16.mxu0 0
      %3793 = vmatmul.mubr.bf16.gmra.mrb[0].mxu0 %v457
      %v3794 = vpop.f32.mrb[0].mxu0
      %v3795 = vpop.f32.mrb[0].mxu0
      %v3796 = vpop.f32.mrb[0].mxu0
      %v3797 = vpop.f32.mrb[0].mxu0
      %3798 = vmatprep.mubr.bf16.mxu0 0
      %3799 = vmatmul.mubr.bf16.gmra.mrb[0].mxu0 %v458
      %v3800 = vpop.f32.mrb[0].mxu0
      %v3801 = vadd.f32 0.0, %v3800
      %v3802 = vpop.f32.mrb[0].mxu0
      %v3803 = vpop.f32.mrb[0].mxu0
      %v3804 = vadd.f32 0.0, %v3803
      %v3805 = vpop.f32.mrb[0].mxu0
      %3806 = vmatprep.mubr.bf16.mxu0 0
      %3807 = vmatmul.mubr.bf16.gmra.mrb[0].mxu0 %v459
      %v3808 = vpop.f32.mrb[0].mxu0
      %v3809 = vpop.f32.mrb[0].mxu0
      %v3810 = vpop.f32.mrb[0].mxu0
      %v3811 = vpop.f32.mrb[0].mxu0
      %3812 = vmatprep.mubr.bf16.mxu0 0
      %3813 = vmatmul.mubr.bf16.gmra.mrb[0].mxu0 %v460
      %v3814 = vpop.f32.mrb[0].mxu0
      %v3815 = vadd.f32 0.0, %v3814
      %v3816 = vpop.f32.mrb[0].mxu0
      %v3817 = vpop.f32.mrb[0].mxu0
      %v3818 = vadd.f32 0.0, %v3817
      %v3819 = vpop.f32.mrb[0].mxu0
      %3820 = vmatprep.mubr.bf16.mxu0 0
      %3821 = vmatmul.mubr.bf16.gmra.mrb[0].mxu0 %v461
      %v3822 = vpop.f32.mrb[0].mxu0
      %v3823 = vpop.f32.mrb[0].mxu0
      %v3824 = vpop.f32.mrb[0].mxu0
      %v3825 = vpop.f32.mrb[0].mxu0
      %3826 = vmatprep.mubr.bf16.mxu0 0
      %3827 = vmatmul.mubr.bf16.gmra.mrb[0].mxu0 %v462
      %v3828 = vpop.f32.mrb[0].mxu0
      %v3829 = vadd.f32 0.0, %v3828
      %v3830 = vpop.f32.mrb[0].mxu0
      %v3831 = vpop.f32.mrb[0].mxu0
      %v3832 = vadd.f32 0.0, %v3831
      %v3833 = vpop.f32.mrb[0].mxu0
      %3834 = vmatprep.mubr.bf16.mxu0 0
      %3835 = vmatmul.mubr.bf16.gmra.mrb[0].mxu0 %v463
      %v3836 = vpop.f32.mrb[0].mxu0
      %v3837 = vpop.f32.mrb[0].mxu0
      %v3838 = vpop.f32.mrb[0].mxu0
      %v3839 = vpop.f32.mrb[0].mxu0
      %3840 = vmatprep.mubr.bf16.mxu0 0
      %3841 = vmatmul.mubr.bf16.gmra.mrb[0].mxu0 %v464
      %v3842 = vpop.f32.mrb[0].mxu0
      %v3843 = vadd.f32 0.0, %v3842
      %v3844 = vpop.f32.mrb[0].mxu0
      %v3845 = vpop.f32.mrb[0].mxu0
      %v3846 = vadd.f32 0.0, %v3845
      %v3847 = vpop.f32.mrb[0].mxu0
      %3848 = vmatprep.mubr.bf16.mxu0 0
      %3849 = vmatmul.mubr.bf16.gmra.mrb[0].mxu0 %v465
      %v3850 = vpop.f32.mrb[0].mxu0
      %v3851 = vpop.f32.mrb[0].mxu0
      %v3852 = vpop.f32.mrb[0].mxu0
      %v3853 = vpop.f32.mrb[0].mxu0
      %3854 = vmatprep.mubr.bf16.mxu0 0
      %3855 = vmatmul.mubr.bf16.gmra.mrb[0].mxu0 %v466
      %v3856 = vpop.f32.mrb[0].mxu0
      %v3857 = vadd.f32 0.0, %v3856
      %v3858 = vpop.f32.mrb[0].mxu0
      %v3859 = vpop.f32.mrb[0].mxu0
      %v3860 = vadd.f32 0.0, %v3859
      %v3861 = vpop.f32.mrb[0].mxu0
      %3862 = vmatprep.mubr.bf16.mxu0 0
      %3863 = vmatmul.mubr.bf16.gmra.mrb[0].mxu0 %v467
      %v3864 = vpop.f32.mrb[0].mxu0
      %v3865 = vpop.f32.mrb[0].mxu0
      %v3866 = vpop.f32.mrb[0].mxu0
      %v3867 = vpop.f32.mrb[0].mxu0
      %3868 = vmatprep.mubr.bf16.mxu0 0
      %3869 = vmatmul.mubr.bf16.gmra.mrb[0].mxu0 %v468
      %v3870 = vpop.f32.mrb[0].mxu0
      %v3871 = vadd.f32 0.0, %v3870
      %v3872 = vpop.f32.mrb[0].mxu0
      %v3873 = vpop.f32.mrb[0].mxu0
      %v3874 = vadd.f32 0.0, %v3873
      %v3875 = vpop.f32.mrb[0].mxu0
      %3876 = vmatprep.mubr.bf16.mxu0 0
      %3877 = vmatmul.mubr.bf16.gmra.mrb[0].mxu0 %v469
      %v3878 = vpop.f32.mrb[0].mxu0
      %v3879 = vpop.f32.mrb[0].mxu0
      %v3880 = vpop.f32.mrb[0].mxu0
      %v3881 = vpop.f32.mrb[0].mxu0
      %3882 = vmatprep.mubr.bf16.mxu0 0
      %3883 = vmatmul.mubr.bf16.gmra.mrb[0].mxu0 %v470
      %v3884 = vpop.f32.mrb[0].mxu0
      %v3885 = vadd.f32 0.0, %v3884
      %v3886 = vpop.f32.mrb[0].mxu0
      %v3887 = vpop.f32.mrb[0].mxu0
      %v3888 = vadd.f32 0.0, %v3887
      %v3889 = vpop.f32.mrb[0].mxu0
      %3890 = vmatprep.mubr.bf16.mxu0 0
      %3891 = vmatmul.mubr.bf16.gmra.mrb[0].mxu0 %v471
      %v3892 = vpop.f32.mrb[0].mxu0
      %v3893 = vpop.f32.mrb[0].mxu0
      %v3894 = vpop.f32.mrb[0].mxu0
      %v3895 = vpop.f32.mrb[0].mxu0
      %3896 = vmatprep.mubr.bf16.mxu0 0
      %3897 = vmatmul.mubr.bf16.gmra.mrb[0].mxu0 %v472
      %v3898 = vpop.f32.mrb[0].mxu0
      %v3899 = vadd.f32 0.0, %v3898
      %v3900 = vpop.f32.mrb[0].mxu0
      %v3901 = vpop.f32.mrb[0].mxu0
      %v3902 = vadd.f32 0.0, %v3901
      %v3903 = vpop.f32.mrb[0].mxu0
      %3904 = vmatprep.mubr.bf16.mxu0 0
      %3905 = vmatmul.mubr.bf16.gmra.mrb[0].mxu0 %v473
      %v3906 = vpop.f32.mrb[0].mxu0
      %v3907 = vpop.f32.mrb[0].mxu0
      %v3908 = vpop.f32.mrb[0].mxu0
      %v3909 = vpop.f32.mrb[0].mxu0
      %3910 = vmatprep.mubr.bf16.mxu0 0
      %3911 = vmatmul.mubr.bf16.gmra.mrb[0].mxu0 %v474
      %v3912 = vpop.f32.mrb[0].mxu0
      %v3913 = vadd.f32 0.0, %v3912
      %v3914 = vpop.f32.mrb[0].mxu0
      %v3915 = vpop.f32.mrb[0].mxu0
      %v3916 = vadd.f32 0.0, %v3915
      %v3917 = vpop.f32.mrb[0].mxu0
      %3918 = vmatprep.mubr.bf16.mxu0 0
      %3919 = vmatmul.mubr.bf16.gmra.mrb[0].mxu0 %v475
      %v3920 = vpop.f32.mrb[0].mxu0
      %v3921 = vpop.f32.mrb[0].mxu0
      %v3922 = vpop.f32.mrb[0].mxu0
      %v3923 = vpop.f32.mrb[0].mxu0
      %3924 = vmatprep.mubr.bf16.mxu0 0
      %3925 = vmatmul.mubr.bf16.gmra.mrb[0].mxu0 %v476
      %v3926 = vpop.f32.mrb[0].mxu0
      %v3927 = vadd.f32 0.0, %v3926
      %v3928 = vpop.f32.mrb[0].mxu0
      %v3929 = vpop.f32.mrb[0].mxu0
      %v3930 = vadd.f32 0.0, %v3929
      %v3931 = vpop.f32.mrb[0].mxu0
      %3932 = vmatprep.mubr.bf16.mxu0 0
      %3933 = vmatmul.mubr.bf16.gmra.mrb[0].mxu0 %v477
      %v3934 = vpop.f32.mrb[0].mxu0
      %v3935 = vpop.f32.mrb[0].mxu0
      %v3936 = vpop.f32.mrb[0].mxu0
      %v3937 = vpop.f32.mrb[0].mxu0
      %3938 = vmatprep.mubr.bf16.mxu0 0
      %3939 = vmatmul.mubr.bf16.gmra.mrb[0].mxu0 %v478
      %v3940 = vpop.f32.mrb[0].mxu0
      %v3941 = vadd.f32 0.0, %v3940
      %v3942 = vpop.f32.mrb[0].mxu0
      %v3943 = vpop.f32.mrb[0].mxu0
      %v3944 = vadd.f32 0.0, %v3943
      %v3945 = vpop.f32.mrb[0].mxu0
      %3946 = vmatprep.mubr.bf16.mxu0 0
      %3947 = vmatmul.mubr.bf16.gmra.mrb[0].mxu0 %v479
      %v3948 = vpop.f32.mrb[0].mxu0
      %v3949 = vpop.f32.mrb[0].mxu0
      %v3950 = vpop.f32.mrb[0].mxu0
      %v3951 = vpop.f32.mrb[0].mxu0
      %3952 = vmatprep.mubr.bf16.mxu0 0
      %3953 = vmatmul.mubr.bf16.gmra.mrb[0].mxu0 %v480
      %v3954 = vpop.f32.mrb[0].mxu0
      %v3955 = vadd.f32 0.0, %v3954
      %v3956 = vpop.f32.mrb[0].mxu0
      %v3957 = vpop.f32.mrb[0].mxu0
      %v3958 = vadd.f32 0.0, %v3957
      %v3959 = vpop.f32.mrb[0].mxu0
      %3960 = vmatprep.mubr.bf16.mxu0 0
      %3961 = vmatmul.mubr.bf16.gmra.mrb[0].mxu0 %v481
      %v3962 = vpop.f32.mrb[0].mxu0
      %v3963 = vpop.f32.mrb[0].mxu0
      %v3964 = vpop.f32.mrb[0].mxu0
      %v3965 = vpop.f32.mrb[0].mxu0
      %3966 = vmatprep.mubr.bf16.mxu0 0
      %3967 = vmatmul.mubr.bf16.gmra.mrb[0].mxu0 %v482
      %v3968 = vpop.f32.mrb[0].mxu0
      %v3969 = vpop.f32.mrb[0].mxu0
      %v3970 = vpop.f32.mrb[0].mxu0
      %v3971 = vpop.f32.mrb[0].mxu0
      %3972 = vmatprep.mubr.bf16.mxu0 0
      %3973 = vmatmul.mubr.bf16.gmra.mrb[0].mxu0 %v483
      %v3974 = vpop.f32.mrb[0].mxu0
      %v3975 = vpop.f32.mrb[0].mxu0
      %v3976 = vpop.f32.mrb[0].mxu0
      %v3977 = vpop.f32.mrb[0].mxu0
      %3978 = vdwg.mxu0
      %v3979 = vadd.f32 %v3601, %v3745
      %v3980 = vadd.f32 %v3602, %v3748
      %v3981 = vadd.f32 %v3603, %v3759
      %v3982 = vadd.f32 %v3604, %v3762
      %v3983 = vadd.f32 %v3605, %v3773
      %v3984 = vadd.f32 %v3606, %v3776
      %v3985 = vadd.f32 %v3607, %v3787
      %v3986 = vadd.f32 %v3608, %v3790
      %v3987 = vadd.f32 %v3609, %v3801
      %v3988 = vadd.f32 %v3610, %v3804
      %v3989 = vadd.f32 %v3611, %v3815
      %v3990 = vadd.f32 %v3612, %v3818
      %v3991 = vadd.f32 %v3613, %v3829
      %v3992 = vadd.f32 %v3614, %v3832
      %v3993 = vadd.f32 %v3615, %v3843
      %v3994 = vadd.f32 %v3616, %v3846
      %v3995 = vadd.f32 %v3617, %v3857
      %v3996 = vadd.f32 %v3618, %v3860
      %v3997 = vadd.f32 %v3619, %v3871
      %v3998 = vadd.f32 %v3620, %v3874
      %v3999 = vadd.f32 %v3621, %v3885
      %v4000 = vadd.f32 %v3622, %v3888
      %v4001 = vadd.f32 %v3623, %v3899
      %v4002 = vadd.f32 %v3624, %v3902
      %v4003 = vadd.f32 %v3625, %v3913
      %v4004 = vadd.f32 %v3626, %v3916
      %v4005 = vadd.f32 %v3627, %v3927
      %v4006 = vadd.f32 %v3628, %v3930
      %v4007 = vadd.f32 %v3629, %v3941
      %v4008 = vadd.f32 %v3630, %v3944
      %v4009 = vadd.f32 %v3631, %v3955
      %v4010 = vadd.f32 %v3632, %v3958
      %s4011 = scalar_lea.vmem %s1, 512
      %v4012 = vld [vmem:[%s4011] sm:$0xf]
      %v4013 = vld [vmem:[%s4011 + $0x4] sm:$0xf]
      %v4014 = vld [vmem:[%s4011 + $0x8] sm:$0xf]
      %v4015 = vld [vmem:[%s4011 + $0xc] sm:$0xf]
      %v4016 = vld [vmem:[%s4011 + $0x10] sm:$0xf]
      %v4017 = vld [vmem:[%s4011 + $0x14] sm:$0xf]
      %v4018 = vld [vmem:[%s4011 + $0x18] sm:$0xf]
      %v4019 = vld [vmem:[%s4011 + $0x1c] sm:$0xf]
      %v4020 = vld [vmem:[%s4011 + $0x20] sm:$0xf]
      %v4021 = vld [vmem:[%s4011 + $0x24] sm:$0xf]
      %v4022 = vld [vmem:[%s4011 + $0x28] sm:$0xf]
      %v4023 = vld [vmem:[%s4011 + $0x2c] sm:$0xf]
      %v4024 = vld [vmem:[%s4011 + $0x30] sm:$0xf]
      %v4025 = vld [vmem:[%s4011 + $0x34] sm:$0xf]
      %v4026 = vld [vmem:[%s4011 + $0x38] sm:$0xf]
      %v4027 = vld [vmem:[%s4011 + $0x3c] sm:$0xf]
      %v4044 = vunpack.c.l.b16 %v4012
      %v4045 = vunpack.c.l.b16 %v4013
      %v4046 = vunpack.c.l.b16 %v4014
      %v4047 = vunpack.c.l.b16 %v4015
      %v4048 = vunpack.c.l.b16 %v4016
      %v4049 = vunpack.c.l.b16 %v4017
      %v4050 = vunpack.c.l.b16 %v4018
      %v4051 = vunpack.c.l.b16 %v4019
      %v4052 = vunpack.c.l.b16 %v4020
      %v4053 = vunpack.c.l.b16 %v4021
      %v4054 = vunpack.c.l.b16 %v4022
      %v4055 = vunpack.c.l.b16 %v4023
      %v4056 = vunpack.c.l.b16 %v4024
      %v4057 = vunpack.c.l.b16 %v4025
      %v4058 = vunpack.c.l.b16 %v4026
      %v4059 = vunpack.c.l.b16 %v4027
      %v4060 = vpack.c.b16 %v4045, %v4044
      %v4061 = vpack.c.b16 %v4047, %v4046
      %v4062 = vpack.c.b16 %v4049, %v4048
      %v4063 = vpack.c.b16 %v4051, %v4050
      %v4064 = vpack.c.b16 %v4053, %v4052
      %v4065 = vpack.c.b16 %v4055, %v4054
      %v4066 = vpack.c.b16 %v4057, %v4056
      %v4067 = vpack.c.b16 %v4059, %v4058
      %4076 = vmatprep.subr.bf16.mxu0 0
      %4077 = vmatpush1.bf16.msra.mxu0 %v4060
      %4078 = vmatprep.subr.bf16.mxu0 0
      %4079 = vmatpush1.bf16.msra.mxu0 %v4061
      %4080 = vmatprep.subr.bf16.mxu0 0
      %4081 = vmatpush1.bf16.msra.mxu0 %v4062
      %4082 = vmatprep.subr.bf16.mxu0 0
      %4083 = vmatpush1.bf16.msra.mxu0 %v4063
      %4084 = vmatprep.subr.bf16.mxu0 0
      %4085 = vmatpush1.bf16.msra.mxu0 %v4064
      %4086 = vmatprep.subr.bf16.mxu0 0
      %4087 = vmatpush1.bf16.msra.mxu0 %v4065
      %4088 = vmatprep.subr.bf16.mxu0 0
      %4089 = vmatpush1.bf16.msra.mxu0 %v4066
      %4090 = vmatprep.subr.bf16.mxu0 0
      %4091 = vmatpush1.bf16.msra.mxu0 %v4067
      %4092 = vmatprep.subr.bf16.mxu0 0
      %4093 = vmatpush1.bf16.msra.mxu0 0
      %4094 = vmatprep.subr.bf16.mxu0 0
      %4095 = vmatpush1.bf16.msra.mxu0 0
      %4096 = vmatprep.subr.bf16.mxu0 0
      %4097 = vmatpush1.bf16.msra.mxu0 0
      %4098 = vmatprep.subr.bf16.mxu0 0
      %4099 = vmatpush1.bf16.msra.mxu0 0
      %4100 = vmatprep.subr.bf16.mxu0 0
      %4101 = vmatpush1.bf16.msra.mxu0 0
      %4102 = vmatprep.subr.bf16.mxu0 0
      %4103 = vmatpush1.bf16.msra.mxu0 0
      %4104 = vmatprep.subr.bf16.mxu0 0
      %4105 = vmatpush1.bf16.msra.mxu0 0
      %4106 = vmatprep.subr.bf16.mxu0 0
      %4107 = vmatpush1.bf16.msra.mxu0 0
      %4108 = vmatprep.mubr.bf16.mxu0 0
      %4109 = vmatmul.mubr.bf16.gmra.mrb[0].mxu0 %v448
      %v4110 = vpop.f32.mrb[0].mxu0
      %v4111 = vpop.f32.mrb[0].mxu0
      %v4112 = vpop.f32.mrb[0].mxu0
      %v4113 = vpop.f32.mrb[0].mxu0
      %4114 = vmatprep.mubr.bf16.mxu0 0
      %4115 = vmatmul.mubr.bf16.gmra.mrb[0].mxu0 %v449
      %v4116 = vpop.f32.mrb[0].mxu0
      %v4117 = vpop.f32.mrb[0].mxu0
      %v4118 = vpop.f32.mrb[0].mxu0
      %v4119 = vpop.f32.mrb[0].mxu0
      %4120 = vmatprep.mubr.bf16.mxu0 0
      %4121 = vmatmul.mubr.bf16.gmra.mrb[0].mxu0 %v450
      %v4122 = vpop.f32.mrb[0].mxu0
      %v4123 = vadd.f32 0.0, %v4122
      %v4124 = vpop.f32.mrb[0].mxu0
      %v4125 = vpop.f32.mrb[0].mxu0
      %v4126 = vadd.f32 0.0, %v4125
      %v4127 = vpop.f32.mrb[0].mxu0
      %4128 = vmatprep.mubr.bf16.mxu0 0
      %4129 = vmatmul.mubr.bf16.gmra.mrb[0].mxu0 %v451
      %v4130 = vpop.f32.mrb[0].mxu0
      %v4131 = vadd.f32 0.0, %v4130
      %v4132 = vpop.f32.mrb[0].mxu0
      %v4133 = vpop.f32.mrb[0].mxu0
      %v4134 = vpop.f32.mrb[0].mxu0
      %4135 = vmatprep.mubr.bf16.mxu0 0
      %4136 = vmatmul.mubr.bf16.gmra.mrb[0].mxu0 %v452
      %v4137 = vpop.f32.mrb[0].mxu0
      %v4138 = vadd.f32 0.0, %v4137
      %v4139 = vpop.f32.mrb[0].mxu0
      %v4140 = vpop.f32.mrb[0].mxu0
      %v4141 = vadd.f32 0.0, %v4140
      %v4142 = vpop.f32.mrb[0].mxu0
      %4143 = vmatprep.mubr.bf16.mxu0 0
      %4144 = vmatmul.mubr.bf16.gmra.mrb[0].mxu0 %v453
      %v4145 = vpop.f32.mrb[0].mxu0
      %v4146 = vadd.f32 0.0, %v4145
      %v4147 = vpop.f32.mrb[0].mxu0
      %v4148 = vpop.f32.mrb[0].mxu0
      %v4149 = vpop.f32.mrb[0].mxu0
      %4150 = vmatprep.mubr.bf16.mxu0 0
      %4151 = vmatmul.mubr.bf16.gmra.mrb[0].mxu0 %v454
      %v4152 = vpop.f32.mrb[0].mxu0
      %v4153 = vadd.f32 0.0, %v4152
      %v4154 = vpop.f32.mrb[0].mxu0
      %v4155 = vpop.f32.mrb[0].mxu0
      %v4156 = vadd.f32 0.0, %v4155
      %v4157 = vpop.f32.mrb[0].mxu0
      %4158 = vmatprep.mubr.bf16.mxu0 0
      %4159 = vmatmul.mubr.bf16.gmra.mrb[0].mxu0 %v455
      %v4160 = vpop.f32.mrb[0].mxu0
      %v4161 = vadd.f32 0.0, %v4160
      %v4162 = vpop.f32.mrb[0].mxu0
      %v4163 = vpop.f32.mrb[0].mxu0
      %v4164 = vpop.f32.mrb[0].mxu0
      %4165 = vmatprep.mubr.bf16.mxu0 0
      %4166 = vmatmul.mubr.bf16.gmra.mrb[0].mxu0 %v456
      %v4167 = vpop.f32.mrb[0].mxu0
      %v4168 = vadd.f32 0.0, %v4167
      %v4169 = vpop.f32.mrb[0].mxu0
      %v4170 = vpop.f32.mrb[0].mxu0
      %v4171 = vadd.f32 0.0, %v4170
      %v4172 = vpop.f32.mrb[0].mxu0
      %4173 = vmatprep.mubr.bf16.mxu0 0
      %4174 = vmatmul.mubr.bf16.gmra.mrb[0].mxu0 %v457
      %v4175 = vpop.f32.mrb[0].mxu0
      %v4176 = vadd.f32 0.0, %v4175
      %v4177 = vpop.f32.mrb[0].mxu0
      %v4178 = vpop.f32.mrb[0].mxu0
      %v4179 = vpop.f32.mrb[0].mxu0
      %4180 = vmatprep.mubr.bf16.mxu0 0
      %4181 = vmatmul.mubr.bf16.gmra.mrb[0].mxu0 %v458
      %v4182 = vpop.f32.mrb[0].mxu0
      %v4183 = vadd.f32 0.0, %v4182
      %v4184 = vpop.f32.mrb[0].mxu0
      %v4185 = vpop.f32.mrb[0].mxu0
      %v4186 = vadd.f32 0.0, %v4185
      %v4187 = vpop.f32.mrb[0].mxu0
      %4188 = vmatprep.mubr.bf16.mxu0 0
      %4189 = vmatmul.mubr.bf16.gmra.mrb[0].mxu0 %v459
      %v4190 = vpop.f32.mrb[0].mxu0
      %v4191 = vadd.f32 0.0, %v4190
      %v4192 = vpop.f32.mrb[0].mxu0
      %v4193 = vpop.f32.mrb[0].mxu0
      %v4194 = vpop.f32.mrb[0].mxu0
      %4195 = vmatprep.mubr.bf16.mxu0 0
      %4196 = vmatmul.mubr.bf16.gmra.mrb[0].mxu0 %v460
      %v4197 = vpop.f32.mrb[0].mxu0
      %v4198 = vadd.f32 0.0, %v4197
      %v4199 = vpop.f32.mrb[0].mxu0
      %v4200 = vpop.f32.mrb[0].mxu0
      %v4201 = vadd.f32 0.0, %v4200
      %v4202 = vpop.f32.mrb[0].mxu0
      %4203 = vmatprep.mubr.bf16.mxu0 0
      %4204 = vmatmul.mubr.bf16.gmra.mrb[0].mxu0 %v461
      %v4205 = vpop.f32.mrb[0].mxu0
      %v4206 = vadd.f32 0.0, %v4205
      %v4207 = vpop.f32.mrb[0].mxu0
      %v4208 = vpop.f32.mrb[0].mxu0
      %v4209 = vpop.f32.mrb[0].mxu0
      %4210 = vmatprep.mubr.bf16.mxu0 0
      %4211 = vmatmul.mubr.bf16.gmra.mrb[0].mxu0 %v462
      %v4212 = vpop.f32.mrb[0].mxu0
      %v4213 = vadd.f32 0.0, %v4212
      %v4214 = vpop.f32.mrb[0].mxu0
      %v4215 = vpop.f32.mrb[0].mxu0
      %v4216 = vadd.f32 0.0, %v4215
      %v4217 = vpop.f32.mrb[0].mxu0
      %4218 = vmatprep.mubr.bf16.mxu0 0
      %4219 = vmatmul.mubr.bf16.gmra.mrb[0].mxu0 %v463
      %v4220 = vpop.f32.mrb[0].mxu0
      %v4221 = vadd.f32 0.0, %v4220
      %v4222 = vpop.f32.mrb[0].mxu0
      %v4223 = vpop.f32.mrb[0].mxu0
      %v4224 = vpop.f32.mrb[0].mxu0
      %4225 = vmatprep.mubr.bf16.mxu0 0
      %4226 = vmatmul.mubr.bf16.gmra.mrb[0].mxu0 %v464
      %v4227 = vpop.f32.mrb[0].mxu0
      %v4228 = vadd.f32 0.0, %v4227
      %v4229 = vpop.f32.mrb[0].mxu0
      %v4230 = vpop.f32.mrb[0].mxu0
      %v4231 = vadd.f32 0.0, %v4230
      %v4232 = vpop.f32.mrb[0].mxu0
      %4233 = vmatprep.mubr.bf16.mxu0 0
      %4234 = vmatmul.mubr.bf16.gmra.mrb[0].mxu0 %v465
      %v4235 = vpop.f32.mrb[0].mxu0
      %v4236 = vadd.f32 0.0, %v4235
      %v4237 = vpop.f32.mrb[0].mxu0
      %v4238 = vpop.f32.mrb[0].mxu0
      %v4239 = vpop.f32.mrb[0].mxu0
      %4240 = vmatprep.mubr.bf16.mxu0 0
      %4241 = vmatmul.mubr.bf16.gmra.mrb[0].mxu0 %v466
      %v4242 = vpop.f32.mrb[0].mxu0
      %v4243 = vadd.f32 0.0, %v4242
      %v4244 = vpop.f32.mrb[0].mxu0
      %v4245 = vpop.f32.mrb[0].mxu0
      %v4246 = vadd.f32 0.0, %v4245
      %v4247 = vpop.f32.mrb[0].mxu0
      %4248 = vmatprep.mubr.bf16.mxu0 0
      %4249 = vmatmul.mubr.bf16.gmra.mrb[0].mxu0 %v467
      %v4250 = vpop.f32.mrb[0].mxu0
      %v4251 = vadd.f32 0.0, %v4250
      %v4252 = vpop.f32.mrb[0].mxu0
      %v4253 = vpop.f32.mrb[0].mxu0
      %v4254 = vpop.f32.mrb[0].mxu0
      %4255 = vmatprep.mubr.bf16.mxu0 0
      %4256 = vmatmul.mubr.bf16.gmra.mrb[0].mxu0 %v468
      %v4257 = vpop.f32.mrb[0].mxu0
      %v4258 = vadd.f32 0.0, %v4257
      %v4259 = vpop.f32.mrb[0].mxu0
      %v4260 = vpop.f32.mrb[0].mxu0
      %v4261 = vadd.f32 0.0, %v4260
      %v4262 = vpop.f32.mrb[0].mxu0
      %4263 = vmatprep.mubr.bf16.mxu0 0
      %4264 = vmatmul.mubr.bf16.gmra.mrb[0].mxu0 %v469
      %v4265 = vpop.f32.mrb[0].mxu0
      %v4266 = vadd.f32 0.0, %v4265
      %v4267 = vpop.f32.mrb[0].mxu0
      %v4268 = vpop.f32.mrb[0].mxu0
      %v4269 = vpop.f32.mrb[0].mxu0
      %4270 = vmatprep.mubr.bf16.mxu0 0
      %4271 = vmatmul.mubr.bf16.gmra.mrb[0].mxu0 %v470
      %v4272 = vpop.f32.mrb[0].mxu0
      %v4273 = vadd.f32 0.0, %v4272
      %v4274 = vpop.f32.mrb[0].mxu0
      %v4275 = vpop.f32.mrb[0].mxu0
      %v4276 = vadd.f32 0.0, %v4275
      %v4277 = vpop.f32.mrb[0].mxu0
      %4278 = vmatprep.mubr.bf16.mxu0 0
      %4279 = vmatmul.mubr.bf16.gmra.mrb[0].mxu0 %v471
      %v4280 = vpop.f32.mrb[0].mxu0
      %v4281 = vadd.f32 0.0, %v4280
      %v4282 = vpop.f32.mrb[0].mxu0
      %v4283 = vpop.f32.mrb[0].mxu0
      %v4284 = vpop.f32.mrb[0].mxu0
      %4285 = vmatprep.mubr.bf16.mxu0 0
      %4286 = vmatmul.mubr.bf16.gmra.mrb[0].mxu0 %v472
      %v4287 = vpop.f32.mrb[0].mxu0
      %v4288 = vadd.f32 0.0, %v4287
      %v4289 = vpop.f32.mrb[0].mxu0
      %v4290 = vpop.f32.mrb[0].mxu0
      %v4291 = vadd.f32 0.0, %v4290
      %v4292 = vpop.f32.mrb[0].mxu0
      %4293 = vmatprep.mubr.bf16.mxu0 0
      %4294 = vmatmul.mubr.bf16.gmra.mrb[0].mxu0 %v473
      %v4295 = vpop.f32.mrb[0].mxu0
      %v4296 = vadd.f32 0.0, %v4295
      %v4297 = vpop.f32.mrb[0].mxu0
      %v4298 = vpop.f32.mrb[0].mxu0
      %v4299 = vpop.f32.mrb[0].mxu0
      %4300 = vmatprep.mubr.bf16.mxu0 0
      %4301 = vmatmul.mubr.bf16.gmra.mrb[0].mxu0 %v474
      %v4302 = vpop.f32.mrb[0].mxu0
      %v4303 = vadd.f32 0.0, %v4302
      %v4304 = vpop.f32.mrb[0].mxu0
      %v4305 = vpop.f32.mrb[0].mxu0
      %v4306 = vadd.f32 0.0, %v4305
      %v4307 = vpop.f32.mrb[0].mxu0
      %4308 = vmatprep.mubr.bf16.mxu0 0
      %4309 = vmatmul.mubr.bf16.gmra.mrb[0].mxu0 %v475
      %v4310 = vpop.f32.mrb[0].mxu0
      %v4311 = vadd.f32 0.0, %v4310
      %v4312 = vpop.f32.mrb[0].mxu0
      %v4313 = vpop.f32.mrb[0].mxu0
      %v4314 = vpop.f32.mrb[0].mxu0
      %4315 = vmatprep.mubr.bf16.mxu0 0
      %4316 = vmatmul.mubr.bf16.gmra.mrb[0].mxu0 %v476
      %v4317 = vpop.f32.mrb[0].mxu0
      %v4318 = vadd.f32 0.0, %v4317
      %v4319 = vpop.f32.mrb[0].mxu0
      %v4320 = vpop.f32.mrb[0].mxu0
      %v4321 = vadd.f32 0.0, %v4320
      %v4322 = vpop.f32.mrb[0].mxu0
      %4323 = vmatprep.mubr.bf16.mxu0 0
      %4324 = vmatmul.mubr.bf16.gmra.mrb[0].mxu0 %v477
      %v4325 = vpop.f32.mrb[0].mxu0
      %v4326 = vadd.f32 0.0, %v4325
      %v4327 = vpop.f32.mrb[0].mxu0
      %v4328 = vpop.f32.mrb[0].mxu0
      %v4329 = vpop.f32.mrb[0].mxu0
      %4330 = vmatprep.mubr.bf16.mxu0 0
      %4331 = vmatmul.mubr.bf16.gmra.mrb[0].mxu0 %v478
      %v4332 = vpop.f32.mrb[0].mxu0
      %v4333 = vadd.f32 0.0, %v4332
      %v4334 = vpop.f32.mrb[0].mxu0
      %v4335 = vpop.f32.mrb[0].mxu0
      %v4336 = vadd.f32 0.0, %v4335
      %v4337 = vpop.f32.mrb[0].mxu0
      %4338 = vmatprep.mubr.bf16.mxu0 0
      %4339 = vmatmul.mubr.bf16.gmra.mrb[0].mxu0 %v479
      %v4340 = vpop.f32.mrb[0].mxu0
      %v4341 = vadd.f32 0.0, %v4340
      %v4342 = vpop.f32.mrb[0].mxu0
      %v4343 = vpop.f32.mrb[0].mxu0
      %v4344 = vpop.f32.mrb[0].mxu0
      %4345 = vmatprep.mubr.bf16.mxu0 0
      %4346 = vmatmul.mubr.bf16.gmra.mrb[0].mxu0 %v480
      %v4347 = vpop.f32.mrb[0].mxu0
      %v4348 = vadd.f32 0.0, %v4347
      %v4349 = vpop.f32.mrb[0].mxu0
      %v4350 = vpop.f32.mrb[0].mxu0
      %v4351 = vadd.f32 0.0, %v4350
      %v4352 = vpop.f32.mrb[0].mxu0
      %4353 = vmatprep.mubr.bf16.mxu0 0
      %4354 = vmatmul.mubr.bf16.gmra.mrb[0].mxu0 %v481
      %v4355 = vpop.f32.mrb[0].mxu0
      %v4356 = vadd.f32 0.0, %v4355
      %v4357 = vpop.f32.mrb[0].mxu0
      %v4358 = vpop.f32.mrb[0].mxu0
      %v4359 = vpop.f32.mrb[0].mxu0
      %4360 = vmatprep.mubr.bf16.mxu0 0
      %4361 = vmatmul.mubr.bf16.gmra.mrb[0].mxu0 %v482
      %v4362 = vpop.f32.mrb[0].mxu0
      %v4363 = vpop.f32.mrb[0].mxu0
      %v4364 = vpop.f32.mrb[0].mxu0
      %v4365 = vpop.f32.mrb[0].mxu0
      %4366 = vmatprep.mubr.bf16.mxu0 0
      %4367 = vmatmul.mubr.bf16.gmra.mrb[0].mxu0 %v483
      %v4368 = vpop.f32.mrb[0].mxu0
      %v4369 = vpop.f32.mrb[0].mxu0
      %v4370 = vpop.f32.mrb[0].mxu0
      %v4371 = vpop.f32.mrb[0].mxu0
      %4372 = vdwg.mxu0
      %v4373 = vrot.slane %v4123, 1
      %v4374 = vrot.slane %v4126, 1
      %v4375 = vrot.slane %v4131, 1
      %v4376 = vrot.slane %v4138, 1
      %v4377 = vrot.slane %v4141, 1
      %v4378 = vrot.slane %v4146, 1
      %v4379 = vrot.slane %v4153, 1
      %v4380 = vrot.slane %v4156, 1
      %v4381 = vrot.slane %v4161, 1
      %v4382 = vrot.slane %v4168, 1
      %v4383 = vrot.slane %v4171, 1
      %v4384 = vrot.slane %v4176, 1
      %v4385 = vrot.slane %v4183, 1
      %v4386 = vrot.slane %v4186, 1
      %v4387 = vrot.slane %v4191, 1
      %v4388 = vrot.slane %v4198, 1
      %v4389 = vrot.slane %v4201, 1
      %v4390 = vrot.slane %v4206, 1
      %v4391 = vrot.slane %v4213, 1
      %v4392 = vrot.slane %v4216, 1
      %v4393 = vrot.slane %v4221, 1
      %v4394 = vrot.slane %v4228, 1
      %v4395 = vrot.slane %v4231, 1
      %v4396 = vrot.slane %v4236, 1
      %v4397 = vrot.slane %v4243, 1
      %v4398 = vrot.slane %v4246, 1
      %v4399 = vrot.slane %v4251, 1
      %v4400 = vrot.slane %v4258, 1
      %v4401 = vrot.slane %v4261, 1
      %v4402 = vrot.slane %v4266, 1
      %v4403 = vrot.slane %v4273, 1
      %v4404 = vrot.slane %v4276, 1
      %v4405 = vrot.slane %v4281, 1
      %v4406 = vrot.slane %v4288, 1
      %v4407 = vrot.slane %v4291, 1
      %v4408 = vrot.slane %v4296, 1
      %v4409 = vrot.slane %v4303, 1
      %v4410 = vrot.slane %v4306, 1
      %v4411 = vrot.slane %v4311, 1
      %v4412 = vrot.slane %v4318, 1
      %v4413 = vrot.slane %v4321, 1
      %v4414 = vrot.slane %v4326, 1
      %v4415 = vrot.slane %v4333, 1
      %v4416 = vrot.slane %v4336, 1
      %v4417 = vrot.slane %v4341, 1
      %v4418 = vrot.slane %v4348, 1
      %v4419 = vrot.slane %v4351, 1
      %v4420 = vrot.slane %v4356, 1
      %v4421 = vsel %vm1768, %v4419, %v4420
      %v4422 = vsel %vm1768, %v4418, %v4419
      %v4423 = vsel %vm1768, %v4416, %v4417
      %v4424 = vsel %vm1768, %v4415, %v4416
      %v4425 = vsel %vm1768, %v4413, %v4414
      %v4426 = vsel %vm1768, %v4412, %v4413
      %v4427 = vsel %vm1768, %v4410, %v4411
      %v4428 = vsel %vm1768, %v4409, %v4410
      %v4429 = vsel %vm1768, %v4407, %v4408
      %v4430 = vsel %vm1768, %v4406, %v4407
      %v4431 = vsel %vm1768, %v4404, %v4405
      %v4432 = vsel %vm1768, %v4403, %v4404
      %v4433 = vsel %vm1768, %v4401, %v4402
      %v4434 = vsel %vm1768, %v4400, %v4401
      %v4435 = vsel %vm1768, %v4398, %v4399
      %v4436 = vsel %vm1768, %v4397, %v4398
      %v4437 = vsel %vm1768, %v4395, %v4396
      %v4438 = vsel %vm1768, %v4394, %v4395
      %v4439 = vsel %vm1768, %v4392, %v4393
      %v4440 = vsel %vm1768, %v4391, %v4392
      %v4441 = vsel %vm1768, %v4389, %v4390
      %v4442 = vsel %vm1768, %v4388, %v4389
      %v4443 = vsel %vm1768, %v4386, %v4387
      %v4444 = vsel %vm1768, %v4385, %v4386
      %v4445 = vsel %vm1768, %v4383, %v4384
      %v4446 = vsel %vm1768, %v4382, %v4383
      %v4447 = vsel %vm1768, %v4380, %v4381
      %v4448 = vsel %vm1768, %v4379, %v4380
      %v4449 = vsel %vm1768, %v4377, %v4378
      %v4450 = vsel %vm1768, %v4376, %v4377
      %v4451 = vsel %vm1768, %v4374, %v4375
      %v4452 = vsel %vm1768, %v4373, %v4374
      %v4453 = vadd.f32 %v3979, %v4452
      %v4454 = vadd.f32 %v3980, %v4451
      %v4455 = vadd.f32 %v3981, %v4450
      %v4456 = vadd.f32 %v3982, %v4449
      %v4457 = vadd.f32 %v3983, %v4448
      %v4458 = vadd.f32 %v3984, %v4447
      %v4459 = vadd.f32 %v3985, %v4446
      %v4460 = vadd.f32 %v3986, %v4445
      %v4461 = vadd.f32 %v3987, %v4444
      %v4462 = vadd.f32 %v3988, %v4443
      %v4463 = vadd.f32 %v3989, %v4442
      %v4464 = vadd.f32 %v3990, %v4441
      %v4465 = vadd.f32 %v3991, %v4440
      %v4466 = vadd.f32 %v3992, %v4439
      %v4467 = vadd.f32 %v3993, %v4438
      %v4468 = vadd.f32 %v3994, %v4437
      %v4469 = vadd.f32 %v3995, %v4436
      %v4470 = vadd.f32 %v3996, %v4435
      %v4471 = vadd.f32 %v3997, %v4434
      %v4472 = vadd.f32 %v3998, %v4433
      %v4473 = vadd.f32 %v3999, %v4432
      %v4474 = vadd.f32 %v4000, %v4431
      %v4475 = vadd.f32 %v4001, %v4430
      %v4476 = vadd.f32 %v4002, %v4429
      %v4477 = vadd.f32 %v4003, %v4428
      %v4478 = vadd.f32 %v4004, %v4427
      %v4479 = vadd.f32 %v4005, %v4426
      %v4480 = vadd.f32 %v4006, %v4425
      %v4481 = vadd.f32 %v4007, %v4424
      %v4482 = vadd.f32 %v4008, %v4423
      %v4483 = vadd.f32 %v4009, %v4422
      %v4484 = vadd.f32 %v4010, %v4421
      %v4485 = vpack.c.bf16 %v4454, %v4453
      %v4486 = vpack.c.bf16 %v4456, %v4455
      %v4487 = vpack.c.bf16 %v4458, %v4457
      %v4488 = vpack.c.bf16 %v4460, %v4459
      %v4489 = vpack.c.bf16 %v4462, %v4461
      %v4490 = vpack.c.bf16 %v4464, %v4463
      %v4491 = vpack.c.bf16 %v4466, %v4465
      %v4492 = vpack.c.bf16 %v4468, %v4467
      %v4493 = vpack.c.bf16 %v4470, %v4469
      %v4494 = vpack.c.bf16 %v4472, %v4471
      %v4495 = vpack.c.bf16 %v4474, %v4473
      %v4496 = vpack.c.bf16 %v4476, %v4475
      %v4497 = vpack.c.bf16 %v4478, %v4477
      %v4498 = vpack.c.bf16 %v4480, %v4479
      %v4499 = vpack.c.bf16 %v4482, %v4481
      %v4500 = vpack.c.bf16 %v4484, %v4483
      %v4517 = vunpack.c.l.b16 %v4485
      %v4518 = vunpack.c.h.b16 %v4485
      %v4519 = vunpack.c.l.b16 %v4486
      %v4520 = vunpack.c.h.b16 %v4486
      %v4521 = vunpack.c.l.b16 %v4487
      %v4522 = vunpack.c.h.b16 %v4487
      %v4523 = vunpack.c.l.b16 %v4488
      %v4524 = vunpack.c.h.b16 %v4488
      %v4525 = vunpack.c.l.b16 %v4489
      %v4526 = vunpack.c.h.b16 %v4489
      %v4527 = vunpack.c.l.b16 %v4490
      %v4528 = vunpack.c.h.b16 %v4490
      %v4529 = vunpack.c.l.b16 %v4491
      %v4530 = vunpack.c.h.b16 %v4491
      %v4531 = vunpack.c.l.b16 %v4492
      %v4532 = vunpack.c.h.b16 %v4492
      %v4533 = vunpack.c.l.b16 %v4493
      %v4534 = vunpack.c.h.b16 %v4493
      %v4535 = vunpack.c.l.b16 %v4494
      %v4536 = vunpack.c.h.b16 %v4494
      %v4537 = vunpack.c.l.b16 %v4495
      %v4538 = vunpack.c.h.b16 %v4495
      %v4539 = vunpack.c.l.b16 %v4496
      %v4540 = vunpack.c.h.b16 %v4496
      %v4541 = vunpack.c.l.b16 %v4497
      %v4542 = vunpack.c.h.b16 %v4497
      %v4543 = vunpack.c.l.b16 %v4498
      %v4544 = vunpack.c.h.b16 %v4498
      %v4545 = vunpack.c.l.b16 %v4499
      %v4546 = vunpack.c.h.b16 %v4499
      %v4547 = vunpack.c.l.b16 %v4500
      %v4548 = vunpack.c.h.b16 %v4500
      %v4549 = vpack.c.b16 %v4517, %v4517
      %v4550 = vpack.c.b16 %v4518, %v4518
      %v4551 = vpack.c.b16 %v4519, %v4519
      %v4552 = vpack.c.b16 %v4520, %v4520
      %v4553 = vpack.c.b16 %v4521, %v4521
      %v4554 = vpack.c.b16 %v4522, %v4522
      %v4555 = vpack.c.b16 %v4523, %v4523
      %v4556 = vpack.c.b16 %v4524, %v4524
      %v4557 = vpack.c.b16 %v4525, %v4525
      %v4558 = vpack.c.b16 %v4526, %v4526
      %v4559 = vpack.c.b16 %v4527, %v4527
      %v4560 = vpack.c.b16 %v4528, %v4528
      %v4561 = vpack.c.b16 %v4529, %v4529
      %v4562 = vpack.c.b16 %v4530, %v4530
      %v4563 = vpack.c.b16 %v4531, %v4531
      %v4564 = vpack.c.b16 %v4532, %v4532
      %v4565 = vpack.c.b16 %v4533, %v4533
      %v4566 = vpack.c.b16 %v4534, %v4534
      %v4567 = vpack.c.b16 %v4535, %v4535
      %v4568 = vpack.c.b16 %v4536, %v4536
      %v4569 = vpack.c.b16 %v4537, %v4537
      %v4570 = vpack.c.b16 %v4538, %v4538
      %v4571 = vpack.c.b16 %v4539, %v4539
      %v4572 = vpack.c.b16 %v4540, %v4540
      %v4573 = vpack.c.b16 %v4541, %v4541
      %v4574 = vpack.c.b16 %v4542, %v4542
      %v4575 = vpack.c.b16 %v4543, %v4543
      %v4576 = vpack.c.b16 %v4544, %v4544
      %v4577 = vpack.c.b16 %v4545, %v4545
      %v4578 = vpack.c.b16 %v4546, %v4546
      %v4579 = vpack.c.b16 %v4547, %v4547
      %v4580 = vpack.c.b16 %v4548, %v4548
      %4613 = vst [vmem:[%s208] sm:$0xf] %v4549
      %4614 = vst [vmem:[%s208 + $0x4] sm:$0xf] %v4550
      %4615 = vst [vmem:[%s208 + $0x8] sm:$0xf] %v4551
      %4616 = vst [vmem:[%s208 + $0xc] sm:$0xf] %v4552
      %4617 = vst [vmem:[%s208 + $0x10] sm:$0xf] %v4553
      %4618 = vst [vmem:[%s208 + $0x14] sm:$0xf] %v4554
      %4619 = vst [vmem:[%s208 + $0x18] sm:$0xf] %v4555
      %4620 = vst [vmem:[%s208 + $0x1c] sm:$0xf] %v4556
      %4621 = vst [vmem:[%s208 + $0x20] sm:$0xf] %v4557
      %4622 = vst [vmem:[%s208 + $0x24] sm:$0xf] %v4558
      %4623 = vst [vmem:[%s208 + $0x28] sm:$0xf] %v4559
      %4624 = vst [vmem:[%s208 + $0x2c] sm:$0xf] %v4560
      %4625 = vst [vmem:[%s208 + $0x30] sm:$0xf] %v4561
      %4626 = vst [vmem:[%s208 + $0x34] sm:$0xf] %v4562
      %4627 = vst [vmem:[%s208 + $0x38] sm:$0xf] %v4563
      %4628 = vst [vmem:[%s208 + $0x3c] sm:$0xf] %v4564
      %4629 = vst [vmem:[%s208 + $0x40] sm:$0xf] %v4565
      %4630 = vst [vmem:[%s208 + $0x44] sm:$0xf] %v4566
      %4631 = vst [vmem:[%s208 + $0x48] sm:$0xf] %v4567
      %4632 = vst [vmem:[%s208 + $0x4c] sm:$0xf] %v4568
      %4633 = vst [vmem:[%s208 + $0x50] sm:$0xf] %v4569
      %4634 = vst [vmem:[%s208 + $0x54] sm:$0xf] %v4570
      %4635 = vst [vmem:[%s208 + $0x58] sm:$0xf] %v4571
      %4636 = vst [vmem:[%s208 + $0x5c] sm:$0xf] %v4572
      %4637 = vst [vmem:[%s208 + $0x60] sm:$0xf] %v4573
      %4638 = vst [vmem:[%s208 + $0x64] sm:$0xf] %v4574
      %4639 = vst [vmem:[%s208 + $0x68] sm:$0xf] %v4575
      %4640 = vst [vmem:[%s208 + $0x6c] sm:$0xf] %v4576
      %4641 = vst [vmem:[%s208 + $0x70] sm:$0xf] %v4577
      %4642 = vst [vmem:[%s208 + $0x74] sm:$0xf] %v4578
      %4643 = vst [vmem:[%s208 + $0x78] sm:$0xf] %v4579
      %4644 = vst [vmem:[%s208 + $0x7c] sm:$0xf] %v4580
      %v4645 = vadd.f32 %v4453, %v4454
      %v4646 = vadd.f32 %v4645, %v4455
      %v4647 = vadd.f32 %v4646, %v4456
      %v4648 = vadd.f32 %v4647, %v4457
      %v4649 = vadd.f32 %v4648, %v4458
      %v4650 = vadd.f32 %v4649, %v4459
      %v4651 = vadd.f32 %v4650, %v4460
      %v4652 = vadd.f32 %v4651, %v4461
      %v4653 = vadd.f32 %v4652, %v4462
      %v4654 = vadd.f32 %v4653, %v4463
      %v4655 = vadd.f32 %v4654, %v4464
      %v4656 = vadd.f32 %v4655, %v4465
      %v4657 = vadd.f32 %v4656, %v4466
      %v4658 = vadd.f32 %v4657, %v4467
      %v4659 = vadd.f32 %v4658, %v4468
      %v4660 = vadd.f32 %v4659, %v4469
      %v4661 = vadd.f32 %v4660, %v4470
      %v4662 = vadd.f32 %v4661, %v4471
      %v4663 = vadd.f32 %v4662, %v4472
      %v4664 = vadd.f32 %v4663, %v4473
      %v4665 = vadd.f32 %v4664, %v4474
      %v4666 = vadd.f32 %v4665, %v4475
      %v4667 = vadd.f32 %v4666, %v4476
      %v4668 = vadd.f32 %v4667, %v4477
      %v4669 = vadd.f32 %v4668, %v4478
      %v4670 = vadd.f32 %v4669, %v4479
      %v4671 = vadd.f32 %v4670, %v4480
      %v4672 = vadd.f32 %v4671, %v4481
      %v4673 = vadd.f32 %v4672, %v4482
      %v4674 = vadd.f32 %v4673, %v4483
      %v4675 = vadd.f32 %v4674, %v4484
      %v4676 = vrot.slane %v4675, 4
      %v4677 = vadd.f32 %v4675, %v4676
      %v4678 = vrot.slane %v4677, 2
      %v4679 = vadd.f32 %v4677, %v4678
      %v4680 = vrot.slane %v4679, 1
      %v4681 = vadd.f32 %v4679, %v4680
      %4682 = vst [vmem:[%s211] sm:$0x1] %v4681
      %v4683 = vmul.f32 %v4453, %v4453
      %v4684 = vmul.f32 %v4454, %v4454
      %v4685 = vmul.f32 %v4455, %v4455
      %v4686 = vmul.f32 %v4456, %v4456
      %v4687 = vmul.f32 %v4457, %v4457
      %v4688 = vmul.f32 %v4458, %v4458
      %v4689 = vmul.f32 %v4459, %v4459
      %v4690 = vmul.f32 %v4460, %v4460
      %v4691 = vmul.f32 %v4461, %v4461
      %v4692 = vmul.f32 %v4462, %v4462
      %v4693 = vmul.f32 %v4463, %v4463
      %v4694 = vmul.f32 %v4464, %v4464
      %v4695 = vmul.f32 %v4465, %v4465
      %v4696 = vmul.f32 %v4466, %v4466
      %v4697 = vmul.f32 %v4467, %v4467
      %v4698 = vmul.f32 %v4468, %v4468
      %v4699 = vmul.f32 %v4469, %v4469
      %v4700 = vmul.f32 %v4470, %v4470
      %v4701 = vmul.f32 %v4471, %v4471
      %v4702 = vmul.f32 %v4472, %v4472
      %v4703 = vmul.f32 %v4473, %v4473
      %v4704 = vmul.f32 %v4474, %v4474
      %v4705 = vmul.f32 %v4475, %v4475
      %v4706 = vmul.f32 %v4476, %v4476
      %v4707 = vmul.f32 %v4477, %v4477
      %v4708 = vmul.f32 %v4478, %v4478
      %v4709 = vmul.f32 %v4479, %v4479
      %v4710 = vmul.f32 %v4480, %v4480
      %v4711 = vmul.f32 %v4481, %v4481
      %v4712 = vmul.f32 %v4482, %v4482
      %v4713 = vmul.f32 %v4483, %v4483
      %v4714 = vmul.f32 %v4484, %v4484
      %v4715 = vadd.f32 %v4683, %v4684
      %v4716 = vadd.f32 %v4715, %v4685
      %v4717 = vadd.f32 %v4716, %v4686
      %v4718 = vadd.f32 %v4717, %v4687
      %v4719 = vadd.f32 %v4718, %v4688
      %v4720 = vadd.f32 %v4719, %v4689
      %v4721 = vadd.f32 %v4720, %v4690
      %v4722 = vadd.f32 %v4721, %v4691
      %v4723 = vadd.f32 %v4722, %v4692
      %v4724 = vadd.f32 %v4723, %v4693
      %v4725 = vadd.f32 %v4724, %v4694
      %v4726 = vadd.f32 %v4725, %v4695
      %v4727 = vadd.f32 %v4726, %v4696
      %v4728 = vadd.f32 %v4727, %v4697
      %v4729 = vadd.f32 %v4728, %v4698
      %v4730 = vadd.f32 %v4729, %v4699
      %v4731 = vadd.f32 %v4730, %v4700
      %v4732 = vadd.f32 %v4731, %v4701
      %v4733 = vadd.f32 %v4732, %v4702
      %v4734 = vadd.f32 %v4733, %v4703
      %v4735 = vadd.f32 %v4734, %v4704
      %v4736 = vadd.f32 %v4735, %v4705
      %v4737 = vadd.f32 %v4736, %v4706
      %v4738 = vadd.f32 %v4737, %v4707
      %v4739 = vadd.f32 %v4738, %v4708
      %v4740 = vadd.f32 %v4739, %v4709
      %v4741 = vadd.f32 %v4740, %v4710
      %v4742 = vadd.f32 %v4741, %v4711
      %v4743 = vadd.f32 %v4742, %v4712
      %v4744 = vadd.f32 %v4743, %v4713
      %v4745 = vadd.f32 %v4744, %v4714
      %v4746 = vrot.slane %v4745, 4
      %v4747 = vadd.f32 %v4745, %v4746
      %v4748 = vrot.slane %v4747, 2
      %v4749 = vadd.f32 %v4747, %v4748
      %v4750 = vrot.slane %v4749, 1
      %v4751 = vadd.f32 %v4749, %v4750
      %4752 = vst [vmem:[%s214] sm:$0x1] %v4751
      %p4753 = scmp.lt.s32.totalorder %s16, 1
      %s4754 = scalar_select %p4753, %s16, 1
      %s4755 = smul.addr %s4754, 32
      %s4756 = smul.addr %s4755, 4
      %s4757 = scalar_lea.vmem %s2, %s4756
      %p4758 = scmp.lt.s32.totalorder %s16, 1
      %s4759 = scalar_select %p4758, %s16, 1
      %s4760 = scalar_lea.vmem %s3, %s4759
      %p4761 = scmp.lt.s32.totalorder %s16, 1
      %s4762 = scalar_select %p4761, %s16, 1
      %s4763 = scalar_lea.vmem %s4, %s4762
      // Predicated region
      $region29: #{residual_block_forward.4} parent=27 // pred_check
        %p4764 = pneg %p81
      $region30: #{residual_block_forward.4} parent=27 // pred_check_branch
        %4766 = sbr.rel (%p4764) target = $region32
      $region31: #{residual_block_forward.4} parent=27 // pred_region
        _
      $region32: #{residual_block_forward.4} parent=27 // pred_fallthru
        _
      // Predicated region
      $region33: #{residual_block_forward.4} parent=27 // pred_check
        %p4767 = pneg %p107
      $region34: #{residual_block_forward.4} parent=27 // pred_check_branch
        %4769 = sbr.rel (%p4767) target = $region36
      $region35: #{residual_block_forward.4} parent=27 // pred_region
        _
      $region36: #{residual_block_forward.4} parent=27 // pred_fallthru
        _
      // Predicated region
      $region37: #{residual_block_forward.4} parent=27 // pred_check
        %p4770 = pneg %p133
      $region38: #{residual_block_forward.4} parent=27 // pred_check_branch
        %4772 = sbr.rel (%p4770) target = $region40
      $region39: #{residual_block_forward.4} parent=27 // pred_region
        _
      $region40: #{residual_block_forward.4} parent=27 // pred_fallthru
        _
    $region28: #{residual_block_forward.4} parent=5 // pred_fallthru
      _
    %p4773 = scmp.le.s32.totalorder 2, %s11
    // Predicated region
    $region41: #{residual_block_forward.4} parent=5 // pred_check
      %p4774 = pneg %p4773
    $region42: #{residual_block_forward.4} parent=5 // pred_check_branch
      %4776 = sbr.rel (%p4774) target = $region44
    $region43: #{residual_block_forward.4} parent=5 // pred_region
      %s4777 = ssub.s32 %s11, 2
      // Predicated region
      $region45: #{residual_block_forward.4} parent=43 // pred_check
        %p4778 = pneg %p87
      $region46: #{residual_block_forward.4} parent=43 // pred_check_branch
        %4780 = sbr.rel (%p4778) target = $region48
      $region47: #{residual_block_forward.4} parent=43 // pred_region
        %p4781 = scmp.lt.s32.totalorder %s17, 1
        %s4782 = scalar_select %p4781, %s17, 1
        %s4783 = smul.addr %s4782, 32
        %s4784 = smul.addr %s4783, 4
        %s4785 = scalar_lea.vmem %s2, %s4784
      $region48: #{residual_block_forward.4} parent=43 // pred_fallthru
        _
      // Predicated region
      $region49: #{residual_block_forward.4} parent=43 // pred_check
        %p4786 = pneg %p113
      $region50: #{residual_block_forward.4} parent=43 // pred_check_branch
        %4788 = sbr.rel (%p4786) target = $region52
      $region51: #{residual_block_forward.4} parent=43 // pred_region
        %p4789 = scmp.lt.s32.totalorder %s17, 1
        %s4790 = scalar_select %p4789, %s17, 1
        %s4791 = scalar_lea.vmem %s3, %s4790
      $region52: #{residual_block_forward.4} parent=43 // pred_fallthru
        _
      // Predicated region
      $region53: #{residual_block_forward.4} parent=43 // pred_check
        %p4792 = pneg %p139
      $region54: #{residual_block_forward.4} parent=43 // pred_check_branch
        %4794 = sbr.rel (%p4792) target = $region56
      $region55: #{residual_block_forward.4} parent=43 // pred_region
        %p4795 = scmp.lt.s32.totalorder %s17, 1
        %s4796 = scalar_select %p4795, %s17, 1
        %s4797 = scalar_lea.vmem %s4, %s4796
      $region56: #{residual_block_forward.4} parent=43 // pred_fallthru
        _
    $region44: #{residual_block_forward.4} parent=5 // pred_fallthru
      _
  $region6: #{residual_block_forward.4} parent=0 // loop_footer
    %s15 = sadd.s32 1, %s11
  $region7: #{residual_block_forward.4} parent=0 // loop_footer_branch
    %10 = sbr.rel target = $region3
  $region8: #{residual_block_forward.4} parent=0 // loop_exit
    _

</llo_original>
